<compile_context>
chip_gen: v7x
topology: tpu7x:2x2x1
jax: 0.10.0
libtpu: 0.0.40
codegen_flags: <defaults>
</compile_context>

<pallas_src>
import functools

import jax
import jax.numpy as jnp
from jax.experimental import pallas as pl
from jax.experimental.pallas import tpu as pltpu


# ----------------------------------------------------------------------------
# Helpers
# ----------------------------------------------------------------------------
def _round_up(x, m):
    return (x + m - 1) // m * m


def _pick_tm(m):
    if m >= 4096:
        return 1024
    if m >= 1024:
        return 512
    return max(16, _round_up(m, 16))


def _vmem_capacity_bytes():
    try:
        return int(pltpu.get_tpu_info().vmem_capacity_bytes)
    except Exception:
        return 64 * 1024 * 1024   # conservative (v7x per-core VMEM)


_VMEM_CAP = _vmem_capacity_bytes()


# ----------------------------------------------------------------------------
# Fused whole-layer kernel: GEMM + batch stats + BN affine + activation,
# with the f32 GEMM result resident in VMEM scratch (no HBM round trip).
# ----------------------------------------------------------------------------
def _fused_layer_kernel(a_ref, b_ref, gamma_ref, beta_ref, o_ref,
                        y_ref, sum_ref, ssq_ref, sb_ref,
                        *, m_valid, has_bn, act, eps):
    p = pl.program_id(0)   # 0: GEMM + stats, 1: affine + activation
    j = pl.program_id(1)   # M-tile index

    if has_bn:
        @pl.when(jnp.logical_and(p == 0, j == 0))
        def _init_stats():
            sum_ref[...] = jnp.zeros_like(sum_ref)
            ssq_ref[...] = jnp.zeros_like(ssq_ref)

    @pl.when(p == 0)
    def _gemm_phase():
        y = jnp.dot(a_ref[...], b_ref[...], preferred_element_type=jnp.float32)
        y_ref[j] = y                                   # stays in VMEM
        if has_bn:
            sum_ref[...] += jnp.sum(y, axis=0, keepdims=True)
            ssq_ref[...] += jnp.sum(y * y, axis=0, keepdims=True)

    if has_bn:
        @pl.when(jnp.logical_and(p == 1, j == 0))
        def _fold_stats():
            inv_m = 1.0 / m_valid                      # zero-padded rows add 0
            mean = sum_ref[...] * inv_m
            var = jnp.maximum(ssq_ref[...] * inv_m - mean * mean, 0.0)
            scale = gamma_ref[...] * jax.lax.rsqrt(var + eps)
            sb_ref[0] = scale
            sb_ref[1] = beta_ref[...] - mean * scale

    @pl.when(p == 1)
    def _act_phase():
        y = y_ref[j]
        z = y * sb_ref[0] + sb_ref[1] if has_bn else y
        if act == "lrelu":
            z = jnp.where(z >= 0.0, z, 0.2 * z)
        else:  # sigmoid
            z = 1.0 / (1.0 + jnp.exp(-z))
        o_ref[...] = z.astype(o_ref.dtype)


def _fused_layer(a_pad, b_pad, gamma_p, beta_p, m_valid, out_dtype, act, has_bn,
                 eps, tm, vmem_limit):
    mp, kp = a_pad.shape
    np_ = b_pad.shape[1]
    g = mp // tm
    kern = functools.partial(_fused_layer_kernel, m_valid=float(m_valid),
                             has_bn=has_bn, act=act, eps=eps)
    return pl.pallas_call(
        kern,
        out_shape=jax.ShapeDtypeStruct((mp, np_), out_dtype),
        grid_spec=pltpu.PrefetchScalarGridSpec(
            num_scalar_prefetch=0,
            grid=(2, g),
            in_specs=[pl.BlockSpec((tm, kp), lambda p, j: ((1 - p) * j, 0)),
                      pl.BlockSpec((kp, np_), lambda p, j: (0, 0)),   # B resident
                      pl.BlockSpec((1, np_), lambda p, j: (0, 0)),
                      pl.BlockSpec((1, np_), lambda p, j: (0, 0))],
            # Phase 0 keeps the output block pinned at 0 (never flushed until it
            # is actually written in phase 1); phase 1 writes block j.
            out_specs=pl.BlockSpec((tm, np_), lambda p, j: (p * j, 0)),
            scratch_shapes=[pltpu.VMEM((g, tm, np_), jnp.float32),   # resident y
                            pltpu.VMEM((1, np_), jnp.float32),       # sum
                            pltpu.VMEM((1, np_), jnp.float32),       # sum of sq
                            pltpu.VMEM((2, 1, np_), jnp.float32)]),  # scale/bias
        compiler_params=pltpu.CompilerParams(
            dimension_semantics=("arbitrary", "arbitrary"),
            vmem_limit_bytes=vmem_limit),
    )(a_pad, b_pad, gamma_p, beta_p)


# ----------------------------------------------------------------------------
# Fallback for very large M (y slab does not fit VMEM): tiled GEMM with bf16
# intermediate + fused per-block stats, then fused affine + activation pass.
# ----------------------------------------------------------------------------
def _gemm_stats_kernel(a_ref, b_ref, y_ref, sum_ref, ssq_ref):
    y = jnp.dot(a_ref[...], b_ref[...], preferred_element_type=jnp.float32)
    y_ref[...] = y.astype(y_ref.dtype)              # bf16 intermediate to HBM
    s = jnp.sum(y, axis=0, keepdims=True)           # (1, np_) from f32 accum
    ss = jnp.sum(y * y, axis=0, keepdims=True)
    sum_ref[...] = jnp.broadcast_to(s, sum_ref.shape)    # (1, 8, np_)
    ssq_ref[...] = jnp.broadcast_to(ss, ssq_ref.shape)


def _bn_act_kernel(y_ref, scale_ref, bias_ref, o_ref, *, act):
    z = y_ref[...].astype(jnp.float32) * scale_ref[...] + bias_ref[...]
    if act == "lrelu":
        z = jnp.where(z >= 0.0, z, 0.2 * z)
    else:  # sigmoid
        z = 1.0 / (1.0 + jnp.exp(-z))
    o_ref[...] = z.astype(o_ref.dtype)


def _tiled_layer(a_pad, b_pad, gamma_p, beta_p, m_valid, out_dtype, act, has_bn,
                 eps, tm):
    mp, kp = a_pad.shape
    np_ = b_pad.shape[1]
    g = mp // tm

    y, sums, ssqs = pl.pallas_call(
        _gemm_stats_kernel,
        out_shape=(jax.ShapeDtypeStruct((mp, np_), jnp.bfloat16),
                   jax.ShapeDtypeStruct((g, 8, np_), jnp.float32),
                   jax.ShapeDtypeStruct((g, 8, np_), jnp.float32)),
        grid_spec=pltpu.PrefetchScalarGridSpec(
            num_scalar_prefetch=0,
            grid=(g,),
            in_specs=[pl.BlockSpec((tm, kp), lambda i: (i, 0)),
                      pl.BlockSpec((kp, np_), lambda i: (0, 0))],   # B resident
            out_specs=[pl.BlockSpec((tm, np_), lambda i: (i, 0)),
                       pl.BlockSpec((1, 8, np_), lambda i: (i, 0, 0)),
                       pl.BlockSpec((1, 8, np_), lambda i: (i, 0, 0))]),
        compiler_params=pltpu.CompilerParams(
            dimension_semantics=("parallel",)),
    )(a_pad, b_pad)

    if has_bn:
        inv_m = 1.0 / float(m_valid)
        total_sum = sums.sum(axis=(0, 1)) * 0.125    # each block broadcast x8
        total_ssq = ssqs.sum(axis=(0, 1)) * 0.125
        mean = total_sum * inv_m
        var = jnp.maximum(total_ssq * inv_m - mean * mean, 0.0)
        scale = gamma_p[0] * jax.lax.rsqrt(var + eps)
        bias = beta_p[0] - mean * scale
    else:
        scale = jnp.ones((np_,), jnp.float32)
        bias = jnp.zeros((np_,), jnp.float32)

    return pl.pallas_call(
        functools.partial(_bn_act_kernel, act=act),
        out_shape=jax.ShapeDtypeStruct((mp, np_), out_dtype),
        grid_spec=pltpu.PrefetchScalarGridSpec(
            num_scalar_prefetch=0,
            grid=(g,),
            in_specs=[pl.BlockSpec((tm, np_), lambda i: (i, 0)),
                      pl.BlockSpec((1, np_), lambda i: (0, 0)),
                      pl.BlockSpec((1, np_), lambda i: (0, 0))],
            out_specs=pl.BlockSpec((tm, np_), lambda i: (i, 0))),
        compiler_params=pltpu.CompilerParams(
            dimension_semantics=("parallel",)),
    )(y, scale.reshape(1, np_), bias.reshape(1, np_))


# ----------------------------------------------------------------------------
# One Conv2d (+ BN + activation) layer via im2col GEMM
# ----------------------------------------------------------------------------
def _conv_layer(x_nhwc, w, gamma, beta, stride, padding, act, has_bn, out_dtype,
                eps=1e-5, fused_vmem_budget=None):
    n, h, wd, cin = x_nhwc.shape
    cout, _, kh, kw = w.shape
    s, p = stride, padding
    ho = (h + 2 * p - kh) // s + 1
    wo = (wd + 2 * p - kw) // s + 1
    m = n * ho * wo
    k = kh * kw * cin

    # XLA glue: spatial pad + patch extraction in bf16, ordered (kh, kw, cin).
    # TODO(synk): move this im2col inside the kernel (strided DMA from the padded
    # NHWC input in HBM) to remove the kh*kw/s^2 traffic amplification.
    xb = x_nhwc.astype(jnp.bfloat16)
    xp = jnp.pad(xb, ((0, 0), (p, p), (p, p), (0, 0)))
    patches = [xp[:, i:i + (ho - 1) * s + 1:s, j:j + (wo - 1) * s + 1:s, :]
               for i in range(kh) for j in range(kw)]
    a = jnp.stack(patches, axis=3).reshape(m, k)

    np_ = _round_up(cout, 128)
    kp = _round_up(k, 128)
    tm = _pick_tm(m)
    mp = _round_up(m, tm)

    a_pad = jnp.zeros((mp, kp), jnp.bfloat16).at[:m, :k].set(a)
    b_mat = jnp.transpose(w, (2, 3, 1, 0)).reshape(k, cout).astype(jnp.bfloat16)
    b_pad = jnp.zeros((kp, np_), jnp.bfloat16).at[:k, :cout].set(b_mat)

    if has_bn:
        gamma_p = jnp.zeros((1, np_), jnp.float32).at[0, :cout].set(gamma)
        beta_p = jnp.zeros((1, np_), jnp.float32).at[0, :cout].set(beta)
    else:
        gamma_p = jnp.ones((1, np_), jnp.float32)
        beta_p = jnp.zeros((1, np_), jnp.float32)

    # VMEM byte budget for the single-call, y-resident fused path.
    cap = fused_vmem_budget if fused_vmem_budget is not None else _VMEM_CAP
    out_bytes = jnp.dtype(out_dtype).itemsize
    need = (mp * np_ * 4                 # resident f32 y scratch
            + 2 * tm * kp * 2            # double-buffered A tiles (bf16)
            + 2 * kp * np_ * 2           # B (bf16, conservatively x2)
            + 2 * tm * np_ * out_bytes   # output blocks
            + 16 * np_ * 4)              # gamma/beta/stats/scale-bias
    if need <= int(cap * 0.75):
        vmem_limit = int(min(cap * 0.9, max(need + (8 << 20), 32 << 20)))
        out = _fused_layer(a_pad, b_pad, gamma_p, beta_p, m, out_dtype, act,
                           has_bn, eps, tm, vmem_limit)
    else:
        out = _tiled_layer(a_pad, b_pad, gamma_p, beta_p, m, out_dtype, act,
                           has_bn, eps, tm)

    return out[:m, :cout].reshape(n, ho, wo, cout)


# ----------------------------------------------------------------------------
# Discriminator: parameters + forward
# ----------------------------------------------------------------------------
def init_discriminator_params(key, ndf):
    specs = [  # (Cin, Cout, k, stride, pad, has_bn, act)
        (3,       ndf,     5, 3, 1, True,  "lrelu"),
        (ndf,     ndf * 2, 4, 2, 1, True,  "lrelu"),
        (ndf * 2, ndf * 4, 4, 2, 1, True,  "lrelu"),
        (ndf * 4, ndf * 8, 4, 2, 1, True,  "lrelu"),
        (ndf * 8, 1,       4, 1, 0, False, "sigmoid"),
    ]
    params = []
    for (cin, cout, kk, s, p, has_bn, act) in specs:
        key, kw_, kg_ = jax.random.split(key, 3)
        w = 0.02 * jax.random.normal(kw_, (cout, cin, kk, kk), jnp.float32)
        if has_bn:
            gamma = 1.0 + 0.02 * jax.random.normal(kg_, (cout,), jnp.float32)
            beta = jnp.zeros((cout,), jnp.float32)
        else:
            gamma, beta = None, None
        params.append({"w": w, "gamma": gamma, "beta": beta,
                       "stride": s, "pad": p, "act": act})
    return params


def discriminator_forward(x_nchw, params, fused_vmem_budget=None):
    x = jnp.transpose(x_nchw, (0, 2, 3, 1)).astype(jnp.bfloat16)   # NCHW -> NHWC
    n_layers = len(params)
    for idx, layer in enumerate(params):
        is_last = idx == n_layers - 1
        out_dtype = jnp.float32 if is_last else jnp.bfloat16
        x = _conv_layer(x, layer["w"], layer["gamma"], layer["beta"],
                        layer["stride"], layer["pad"], layer["act"],
                        has_bn=layer["gamma"] is not None,
                        out_dtype=out_dtype,
                        fused_vmem_budget=fused_vmem_budget)
    return jnp.transpose(x, (0, 3, 1, 2)).astype(jnp.float32)      # NHWC -> NCHW


# ----------------------------------------------------------------------------
# Plain-JAX reference (same bf16 conv operands, f32 accumulate / BN / act)
# ----------------------------------------------------------------------------
def reference_forward(x_nchw, params, eps=1e-5):
    x = x_nchw
    for layer in params:
        w = layer["w"]
        s, p = layer["stride"], layer["pad"]
        y = jax.lax.conv_general_dilated(
            x.astype(jnp.bfloat16), w.astype(jnp.bfloat16),
            window_strides=(s, s), padding=((p, p), (p, p)),
            dimension_numbers=("NCHW", "OIHW", "NCHW"),
            preferred_element_type=jnp.float32)
        if layer["gamma"] is not None:
            mean = jnp.mean(y, axis=(0, 2, 3), keepdims=True)
            var = jnp.maximum(
                jnp.mean(y * y, axis=(0, 2, 3), keepdims=True) - mean * mean, 0.0)
            g = layer["gamma"].reshape(1, -1, 1, 1)
            b = layer["beta"].reshape(1, -1, 1, 1)
            y = (y - mean) * jax.lax.rsqrt(var + eps) * g + b
            y = jnp.where(y >= 0.0, y, 0.2 * y)
        else:
            y = 1.0 / (1.0 + jnp.exp(-y))
        x = y
    return x


# ----------------------------------------------------------------------------
# Demo
# ----------------------------------------------------------------------------
if __name__ == "__main__":
    ndf, batch = 8, 2
    key = jax.random.PRNGKey(0)
    k_param, k_x = jax.random.split(key)

    params = init_discriminator_params(k_param, ndf)
    x = jax.random.normal(k_x, (batch, 3, 96, 96), jnp.float32)  # 96->32->16->8->4->1

    # Main path: fused, y-resident layers.
    fwd = jax.jit(lambda xx: discriminator_forward(xx, params))
    out = jax.block_until_ready(fwd(x))

    assert out.shape == (batch, 1, 1, 1), out.shape
    assert bool(jnp.all(jnp.isfinite(out)))
    assert bool(jnp.all((out > 0.0) & (out < 1.0)))   # sigmoid range

    ref = jax.block_until_ready(jax.jit(lambda xx: reference_forward(xx, params))(x))
    assert bool(jnp.allclose(out, ref, atol=2e-2, rtol=2e-2))

    # Also exercise the large-M fallback (bf16-intermediate tiled path) by
    # forcing the fused-path VMEM budget to zero.
    fwd_tiled = jax.jit(
        lambda xx: discriminator_forward(xx, params, fused_vmem_budget=0))
    out_t = jax.block_until_ready(fwd_tiled(x))
    assert out_t.shape == (batch, 1, 1, 1)
    assert bool(jnp.all(jnp.isfinite(out_t)))
    assert bool(jnp.allclose(out_t, ref, atol=3e-2, rtol=3e-2))

    print("KERNEL_OK")
</pallas_src>

<mosaic_0001>
module attributes {stable_mosaic.version = 11 : i64} {
  func.func @_fused_layer_kernel(%arg0: i32, %arg1: i32, %arg2: memref<512x128xbf16, #tpu.memory_space<vmem>>, %arg3: memref<128x128xbf16, #tpu.memory_space<vmem>>, %arg4: memref<1x128xf32, #tpu.memory_space<vmem>>, %arg5: memref<1x128xf32, #tpu.memory_space<vmem>>, %arg6: memref<512x128xbf16, #tpu.memory_space<vmem>>, %arg7: memref<4x512x128xf32, #tpu.memory_space<vmem>>, %arg8: memref<1x128xf32, #tpu.memory_space<vmem>>, %arg9: memref<1x128xf32, #tpu.memory_space<vmem>>, %arg10: memref<2x1x128xf32, #tpu.memory_space<vmem>>) attributes {dimension_semantics = [#tpu.dimension_semantics<arbitrary>, #tpu.dimension_semantics<arbitrary>], iteration_bounds = array<i64: 2, 4>, scalar_prefetch = 0 : i64, scratch_operands = 4 : i64, tpu.core_type = #tpu.core_type<tc>, window_params = [{transform_indices = @transform_0, window_bounds = array<i64: 512, 128>}, {pipeline_mode = #tpu.pipeline_mode<synchronous>, transform_indices = @transform_1, window_bounds = array<i64: 128, 128>}, {pipeline_mode = #tpu.pipeline_mode<synchronous>, transform_indices = @transform_2, window_bounds = array<i64: 1, 128>}, {pipeline_mode = #tpu.pipeline_mode<synchronous>, transform_indices = @transform_3, window_bounds = array<i64: 1, 128>}, {transform_indices = @transform_4, window_bounds = array<i64: 512, 128>}]} {
    %c0_i32 = arith.constant 0 : i32
    %0 = arith.cmpi eq, %arg0, %c0_i32 : i32
    %c0_i32_0 = arith.constant 0 : i32
    %1 = arith.cmpi eq, %arg1, %c0_i32_0 : i32
    %2 = arith.andi %0, %1 : i1
    %3 = arith.extui %2 : i1 to i32
    %c0_i32_1 = arith.constant 0 : i32
    %4 = arith.cmpi ne, %3, %c0_i32_1 : i32
    scf.if %4 {
      %cst = arith.constant 0.000000e+00 : f32
      %16 = vector.broadcast %cst : f32 to vector<1x128xf32>
      %c0 = arith.constant 0 : index
      %c0_8 = arith.constant 0 : index
      %17 = vector.load %arg8[%c0, %c0_8] : memref<1x128xf32, #tpu.memory_space<vmem>>, vector<1x128xf32>
      tpu.vector_store %arg8[%c0, %c0_8], %16 {strides = array<i32>} : memref<1x128xf32, #tpu.memory_space<vmem>>, vector<1x128xf32>,
      %cst_9 = arith.constant 0.000000e+00 : f32
      %18 = vector.broadcast %cst_9 : f32 to vector<1x128xf32>
      %c0_10 = arith.constant 0 : index
      %c0_11 = arith.constant 0 : index
      %19 = vector.load %arg9[%c0_10, %c0_11] : memref<1x128xf32, #tpu.memory_space<vmem>>, vector<1x128xf32>
      tpu.vector_store %arg9[%c0_10, %c0_11], %18 {strides = array<i32>} : memref<1x128xf32, #tpu.memory_space<vmem>>, vector<1x128xf32>,
    } else {
    }
    %c0_i32_2 = arith.constant 0 : i32
    %5 = arith.cmpi eq, %arg0, %c0_i32_2 : i32
    %6 = arith.extui %5 : i1 to i32
    %c0_i32_3 = arith.constant 0 : i32
    %7 = arith.cmpi ne, %6, %c0_i32_3 : i32
    scf.if %7 {
      %c0 = arith.constant 0 : index
      %c0_8 = arith.constant 0 : index
      %16 = vector.load %arg2[%c0, %c0_8] : memref<512x128xbf16, #tpu.memory_space<vmem>>, vector<512x128xbf16>
      %c0_9 = arith.constant 0 : index
      %c0_10 = arith.constant 0 : index
      %17 = vector.load %arg3[%c0_9, %c0_10] : memref<128x128xbf16, #tpu.memory_space<vmem>>, vector<128x128xbf16>
      %cst = arith.constant dense<0.000000e+00> : vector<512x128xf32>
      %18 = tpu.matmul %16, %17, %cst {dimension_numbers = #tpu.dot_dimension_numbers<[1], [0], [0], [1], [0, 0, 1, 1], [], []>} : vector<512x128xbf16>, vector<128x128xbf16>, vector<512x128xf32> -> vector<512x128xf32>
      %19 = arith.index_cast %arg1 : i32 to index
      %c0_11 = arith.constant 0 : index
      %c0_12 = arith.constant 0 : index
      %20 = vector.load %arg7[%19, %c0_11, %c0_12] : memref<4x512x128xf32, #tpu.memory_space<vmem>>, vector<1x512x128xf32>
      %21 = vector.shape_cast %20 : vector<1x512x128xf32> to vector<512x128xf32>
      %22 = vector.shape_cast %18 : vector<512x128xf32> to vector<1x512x128xf32>
      tpu.vector_store %arg7[%19, %c0_11, %c0_12], %22 {strides = array<i32>} : memref<4x512x128xf32, #tpu.memory_space<vmem>>, vector<1x512x128xf32>,
      %c0_13 = arith.constant 0 : index
      %c0_14 = arith.constant 0 : index
      %23 = vector.load %arg8[%c0_13, %c0_14] : memref<1x128xf32, #tpu.memory_space<vmem>>, vector<1x128xf32>
      %cst_15 = arith.constant dense<0.000000e+00> : vector<128xf32>
      %24 = vector.multi_reduction <add>, %18, %cst_15 [0] : vector<512x128xf32> to vector<128xf32>
      %25 = vector.shape_cast %24 : vector<128xf32> to vector<1x128xf32>
      %26 = arith.addf %23, %25 : vector<1x128xf32>
      %c0_16 = arith.constant 0 : index
      %c0_17 = arith.constant 0 : index
      %27 = vector.load %arg8[%c0_16, %c0_17] : memref<1x128xf32, #tpu.memory_space<vmem>>, vector<1x128xf32>
      tpu.vector_store %arg8[%c0_16, %c0_17], %26 {strides = array<i32>} : memref<1x128xf32, #tpu.memory_space<vmem>>, vector<1x128xf32>,
      %c0_18 = arith.constant 0 : index
      %c0_19 = arith.constant 0 : index
      %28 = vector.load %arg9[%c0_18, %c0_19] : memref<1x128xf32, #tpu.memory_space<vmem>>, vector<1x128xf32>
      %29 = arith.mulf %18, %18 : vector<512x128xf32>
      %cst_20 = arith.constant dense<0.000000e+00> : vector<128xf32>
      %30 = vector.multi_reduction <add>, %29, %cst_20 [0] : vector<512x128xf32> to vector<128xf32>
      %31 = vector.shape_cast %30 : vector<128xf32> to vector<1x128xf32>
      %32 = arith.addf %28, %31 : vector<1x128xf32>
      %c0_21 = arith.constant 0 : index
      %c0_22 = arith.constant 0 : index
      %33 = vector.load %arg9[%c0_21, %c0_22] : memref<1x128xf32, #tpu.memory_space<vmem>>, vector<1x128xf32>
      tpu.vector_store %arg9[%c0_21, %c0_22], %32 {strides = array<i32>} : memref<1x128xf32, #tpu.memory_space<vmem>>, vector<1x128xf32>,
    } else {
    }
    %c1_i32 = arith.constant 1 : i32
    %8 = arith.cmpi eq, %arg0, %c1_i32 : i32
    %c0_i32_4 = arith.constant 0 : i32
    %9 = arith.cmpi eq, %arg1, %c0_i32_4 : i32
    %10 = arith.andi %8, %9 : i1
    %11 = arith.extui %10 : i1 to i32
    %c0_i32_5 = arith.constant 0 : i32
    %12 = arith.cmpi ne, %11, %c0_i32_5 : i32
    scf.if %12 {
      %c0 = arith.constant 0 : index
      %c0_8 = arith.constant 0 : index
      %16 = vector.load %arg8[%c0, %c0_8] : memref<1x128xf32, #tpu.memory_space<vmem>>, vector<1x128xf32>
      %cst = arith.constant 4.8828125E-4 : f32
      %17 = vector.broadcast %cst : f32 to vector<1x128xf32>
      %18 = arith.mulf %16, %17 : vector<1x128xf32>
      %c0_9 = arith.constant 0 : index
      %c0_10 = arith.constant 0 : index
      %19 = vector.load %arg9[%c0_9, %c0_10] : memref<1x128xf32, #tpu.memory_space<vmem>>, vector<1x128xf32>
      %cst_11 = arith.constant 4.8828125E-4 : f32
      %20 = vector.broadcast %cst_11 : f32 to vector<1x128xf32>
      %21 = arith.mulf %19, %20 : vector<1x128xf32>
      %22 = arith.mulf %18, %18 : vector<1x128xf32>
      %23 = arith.subf %21, %22 : vector<1x128xf32>
      %cst_12 = arith.constant 0.000000e+00 : f32
      %24 = vector.broadcast %cst_12 : f32 to vector<1x128xf32>
      %25 = arith.maximumf %23, %24 : vector<1x128xf32>
      %c0_13 = arith.constant 0 : index
      %c0_14 = arith.constant 0 : index
      %26 = vector.load %arg4[%c0_13, %c0_14] : memref<1x128xf32, #tpu.memory_space<vmem>>, vector<1x128xf32>
      %cst_15 = arith.constant 9.99999974E-6 : f32
      %27 = vector.broadcast %cst_15 : f32 to vector<1x128xf32>
      %28 = arith.addf %25, %27 : vector<1x128xf32>
      %29 = math.rsqrt %28 : vector<1x128xf32>
      %30 = arith.mulf %26, %29 : vector<1x128xf32>
      %c0_16 = arith.constant 0 : index
      %c0_17 = arith.constant 0 : index
      %c0_18 = arith.constant 0 : index
      %31 = vector.load %arg10[%c0_16, %c0_17, %c0_18] : memref<2x1x128xf32, #tpu.memory_space<vmem>>, vector<1x1x128xf32>
      %32 = vector.shape_cast %31 : vector<1x1x128xf32> to vector<1x128xf32>
      %33 = vector.shape_cast %30 : vector<1x128xf32> to vector<1x1x128xf32>
      tpu.vector_store %arg10[%c0_16, %c0_17, %c0_18], %33 {strides = array<i32>} : memref<2x1x128xf32, #tpu.memory_space<vmem>>, vector<1x1x128xf32>,
      %c0_19 = arith.constant 0 : index
      %c0_20 = arith.constant 0 : index
      %34 = vector.load %arg5[%c0_19, %c0_20] : memref<1x128xf32, #tpu.memory_space<vmem>>, vector<1x128xf32>
      %35 = arith.mulf %18, %30 : vector<1x128xf32>
      %36 = arith.subf %34, %35 : vector<1x128xf32>
      %c1 = arith.constant 1 : index
      %c0_21 = arith.constant 0 : index
      %c0_22 = arith.constant 0 : index
      %37 = vector.load %arg10[%c1, %c0_21, %c0_22] : memref<2x1x128xf32, #tpu.memory_space<vmem>>, vector<1x1x128xf32>
      %38 = vector.shape_cast %37 : vector<1x1x128xf32> to vector<1x128xf32>
      %39 = vector.shape_cast %36 : vector<1x128xf32> to vector<1x1x128xf32>
      tpu.vector_store %arg10[%c1, %c0_21, %c0_22], %39 {strides = array<i32>} : memref<2x1x128xf32, #tpu.memory_space<vmem>>, vector<1x1x128xf32>,
    } else {
    }
    %c1_i32_6 = arith.constant 1 : i32
    %13 = arith.cmpi eq, %arg0, %c1_i32_6 : i32
    %14 = arith.extui %13 : i1 to i32
    %c0_i32_7 = arith.constant 0 : i32
    %15 = arith.cmpi ne, %14, %c0_i32_7 : i32
    scf.if %15 {
      %16 = arith.index_cast %arg1 : i32 to index
      %c0 = arith.constant 0 : index
      %c0_8 = arith.constant 0 : index
      %17 = vector.load %arg7[%16, %c0, %c0_8] : memref<4x512x128xf32, #tpu.memory_space<vmem>>, vector<1x512x128xf32>
      %18 = vector.shape_cast %17 : vector<1x512x128xf32> to vector<512x128xf32>
      %c0_9 = arith.constant 0 : index
      %c0_10 = arith.constant 0 : index
      %c0_11 = arith.constant 0 : index
      %19 = vector.load %arg10[%c0_9, %c0_10, %c0_11] : memref<2x1x128xf32, #tpu.memory_space<vmem>>, vector<1x1x128xf32>
      %20 = vector.shape_cast %19 : vector<1x1x128xf32> to vector<1x128xf32>
      %21 = vector.broadcast %20 : vector<1x128xf32> to vector<512x128xf32>
      %22 = arith.mulf %18, %21 : vector<512x128xf32>
      %c1 = arith.constant 1 : index
      %c0_12 = arith.constant 0 : index
      %c0_13 = arith.constant 0 : index
      %23 = vector.load %arg10[%c1, %c0_12, %c0_13] : memref<2x1x128xf32, #tpu.memory_space<vmem>>, vector<1x1x128xf32>
      %24 = vector.shape_cast %23 : vector<1x1x128xf32> to vector<1x128xf32>
      %25 = vector.broadcast %24 : vector<1x128xf32> to vector<512x128xf32>
      %26 = arith.addf %22, %25 : vector<512x128xf32>
      %cst = arith.constant 0.000000e+00 : f32
      %27 = vector.broadcast %cst : f32 to vector<512x128xf32>
      %28 = arith.cmpf oge, %26, %27 : vector<512x128xf32>
      %cst_14 = arith.constant 2.000000e-01 : f32
      %29 = vector.broadcast %cst_14 : f32 to vector<512x128xf32>
      %30 = arith.mulf %29, %26 : vector<512x128xf32>
      %31 = arith.select %28, %26, %30 : vector<512x128xi1>, vector<512x128xf32>
      %32 = arith.truncf %31 : vector<512x128xf32> to vector<512x128xbf16>
      %c0_15 = arith.constant 0 : index
      %c0_16 = arith.constant 0 : index
      %33 = vector.load %arg6[%c0_15, %c0_16] : memref<512x128xbf16, #tpu.memory_space<vmem>>, vector<512x128xbf16>
      tpu.vector_store %arg6[%c0_15, %c0_16], %32 {strides = array<i32>} : memref<512x128xbf16, #tpu.memory_space<vmem>>, vector<512x128xbf16>,
    } else {
    }
    return
  }
  func.func @transform_0(%arg0: i32, %arg1: i32) -> (i32, i32) {
    %c1_i32 = arith.constant 1 : i32
    %0 = arith.subi %c1_i32, %arg0 : i32
    %1 = arith.muli %0, %arg1 : i32
    %c0_i32 = arith.constant 0 : i32
    %c0_i32_0 = arith.constant 0 : i32
    return %1, %c0_i32 : i32, i32
  }
  func.func @transform_1(%arg0: i32, %arg1: i32) -> (i32, i32) {
    %c0_i32 = arith.constant 0 : i32
    %c0_i32_0 = arith.constant 0 : i32
    %c0_i32_1 = arith.constant 0 : i32
    return %c0_i32, %c0_i32_0 : i32, i32
  }
  func.func @transform_2(%arg0: i32, %arg1: i32) -> (i32, i32) {
    %c0_i32 = arith.constant 0 : i32
    %c0_i32_0 = arith.constant 0 : i32
    %c0_i32_1 = arith.constant 0 : i32
    return %c0_i32, %c0_i32_0 : i32, i32
  }
  func.func @transform_3(%arg0: i32, %arg1: i32) -> (i32, i32) {
    %c0_i32 = arith.constant 0 : i32
    %c0_i32_0 = arith.constant 0 : i32
    %c0_i32_1 = arith.constant 0 : i32
    return %c0_i32, %c0_i32_0 : i32, i32
  }
  func.func @transform_4(%arg0: i32, %arg1: i32) -> (i32, i32) {
    %0 = arith.muli %arg0, %arg1 : i32
    %c0_i32 = arith.constant 0 : i32
    %c0_i32_0 = arith.constant 0 : i32
    return %0, %c0_i32 : i32, i32
  }
}

module attributes {stable_mosaic.version = 11 : i64} {
  func.func @_fused_layer_kernel(%arg0: i32, %arg1: i32, %arg2: memref<512x128xbf16, #tpu.memory_space<vmem>>, %arg3: memref<128x128xbf16, #tpu.memory_space<vmem>>, %arg4: memref<1x128xf32, #tpu.memory_space<vmem>>, %arg5: memref<1x128xf32, #tpu.memory_space<vmem>>, %arg6: memref<512x128xbf16, #tpu.memory_space<vmem>>, %arg7: memref<1x512x128xf32, #tpu.memory_space<vmem>>, %arg8: memref<1x128xf32, #tpu.memory_space<vmem>>, %arg9: memref<1x128xf32, #tpu.memory_space<vmem>>, %arg10: memref<2x1x128xf32, #tpu.memory_space<vmem>>) attributes {dimension_semantics = [#tpu.dimension_semantics<arbitrary>, #tpu.dimension_semantics<arbitrary>], iteration_bounds = array<i64: 2, 1>, scalar_prefetch = 0 : i64, scratch_operands = 4 : i64, tpu.core_type = #tpu.core_type<tc>, window_params = [{transform_indices = @transform_0, window_bounds = array<i64: 512, 128>}, {pipeline_mode = #tpu.pipeline_mode<synchronous>, transform_indices = @transform_1, window_bounds = array<i64: 128, 128>}, {pipeline_mode = #tpu.pipeline_mode<synchronous>, transform_indices = @transform_2, window_bounds = array<i64: 1, 128>}, {pipeline_mode = #tpu.pipeline_mode<synchronous>, transform_indices = @transform_3, window_bounds = array<i64: 1, 128>}, {transform_indices = @transform_4, window_bounds = array<i64: 512, 128>}]} {
    %c0_i32 = arith.constant 0 : i32
    %0 = arith.cmpi eq, %arg0, %c0_i32 : i32
    %c0_i32_0 = arith.constant 0 : i32
    %1 = arith.cmpi eq, %arg1, %c0_i32_0 : i32
    %2 = arith.andi %0, %1 : i1
    %3 = arith.extui %2 : i1 to i32
    %c0_i32_1 = arith.constant 0 : i32
    %4 = arith.cmpi ne, %3, %c0_i32_1 : i32
    scf.if %4 {
      %cst = arith.constant 0.000000e+00 : f32
      %16 = vector.broadcast %cst : f32 to vector<1x128xf32>
      %c0 = arith.constant 0 : index
      %c0_8 = arith.constant 0 : index
      %17 = vector.load %arg8[%c0, %c0_8] : memref<1x128xf32, #tpu.memory_space<vmem>>, vector<1x128xf32>
      tpu.vector_store %arg8[%c0, %c0_8], %16 {strides = array<i32>} : memref<1x128xf32, #tpu.memory_space<vmem>>, vector<1x128xf32>,
      %cst_9 = arith.constant 0.000000e+00 : f32
      %18 = vector.broadcast %cst_9 : f32 to vector<1x128xf32>
      %c0_10 = arith.constant 0 : index
      %c0_11 = arith.constant 0 : index
      %19 = vector.load %arg9[%c0_10, %c0_11] : memref<1x128xf32, #tpu.memory_space<vmem>>, vector<1x128xf32>
      tpu.vector_store %arg9[%c0_10, %c0_11], %18 {strides = array<i32>} : memref<1x128xf32, #tpu.memory_space<vmem>>, vector<1x128xf32>,
    } else {
    }
    %c0_i32_2 = arith.constant 0 : i32
    %5 = arith.cmpi eq, %arg0, %c0_i32_2 : i32
    %6 = arith.extui %5 : i1 to i32
    %c0_i32_3 = arith.constant 0 : i32
    %7 = arith.cmpi ne, %6, %c0_i32_3 : i32
    scf.if %7 {
      %c0 = arith.constant 0 : index
      %c0_8 = arith.constant 0 : index
      %16 = vector.load %arg2[%c0, %c0_8] : memref<512x128xbf16, #tpu.memory_space<vmem>>, vector<512x128xbf16>
      %c0_9 = arith.constant 0 : index
      %c0_10 = arith.constant 0 : index
      %17 = vector.load %arg3[%c0_9, %c0_10] : memref<128x128xbf16, #tpu.memory_space<vmem>>, vector<128x128xbf16>
      %cst = arith.constant dense<0.000000e+00> : vector<512x128xf32>
      %18 = tpu.matmul %16, %17, %cst {dimension_numbers = #tpu.dot_dimension_numbers<[1], [0], [0], [1], [0, 0, 1, 1], [], []>} : vector<512x128xbf16>, vector<128x128xbf16>, vector<512x128xf32> -> vector<512x128xf32>
      %19 = arith.index_cast %arg1 : i32 to index
      %c0_11 = arith.constant 0 : index
      %c0_12 = arith.constant 0 : index
      %20 = vector.load %arg7[%19, %c0_11, %c0_12] : memref<1x512x128xf32, #tpu.memory_space<vmem>>, vector<1x512x128xf32>
      %21 = vector.shape_cast %20 : vector<1x512x128xf32> to vector<512x128xf32>
      %22 = vector.shape_cast %18 : vector<512x128xf32> to vector<1x512x128xf32>
      tpu.vector_store %arg7[%19, %c0_11, %c0_12], %22 {strides = array<i32>} : memref<1x512x128xf32, #tpu.memory_space<vmem>>, vector<1x512x128xf32>,
      %c0_13 = arith.constant 0 : index
      %c0_14 = arith.constant 0 : index
      %23 = vector.load %arg8[%c0_13, %c0_14] : memref<1x128xf32, #tpu.memory_space<vmem>>, vector<1x128xf32>
      %cst_15 = arith.constant dense<0.000000e+00> : vector<128xf32>
      %24 = vector.multi_reduction <add>, %18, %cst_15 [0] : vector<512x128xf32> to vector<128xf32>
      %25 = vector.shape_cast %24 : vector<128xf32> to vector<1x128xf32>
      %26 = arith.addf %23, %25 : vector<1x128xf32>
      %c0_16 = arith.constant 0 : index
      %c0_17 = arith.constant 0 : index
      %27 = vector.load %arg8[%c0_16, %c0_17] : memref<1x128xf32, #tpu.memory_space<vmem>>, vector<1x128xf32>
      tpu.vector_store %arg8[%c0_16, %c0_17], %26 {strides = array<i32>} : memref<1x128xf32, #tpu.memory_space<vmem>>, vector<1x128xf32>,
      %c0_18 = arith.constant 0 : index
      %c0_19 = arith.constant 0 : index
      %28 = vector.load %arg9[%c0_18, %c0_19] : memref<1x128xf32, #tpu.memory_space<vmem>>, vector<1x128xf32>
      %29 = arith.mulf %18, %18 : vector<512x128xf32>
      %cst_20 = arith.constant dense<0.000000e+00> : vector<128xf32>
      %30 = vector.multi_reduction <add>, %29, %cst_20 [0] : vector<512x128xf32> to vector<128xf32>
      %31 = vector.shape_cast %30 : vector<128xf32> to vector<1x128xf32>
      %32 = arith.addf %28, %31 : vector<1x128xf32>
      %c0_21 = arith.constant 0 : index
      %c0_22 = arith.constant 0 : index
      %33 = vector.load %arg9[%c0_21, %c0_22] : memref<1x128xf32, #tpu.memory_space<vmem>>, vector<1x128xf32>
      tpu.vector_store %arg9[%c0_21, %c0_22], %32 {strides = array<i32>} : memref<1x128xf32, #tpu.memory_space<vmem>>, vector<1x128xf32>,
    } else {
    }
    %c1_i32 = arith.constant 1 : i32
    %8 = arith.cmpi eq, %arg0, %c1_i32 : i32
    %c0_i32_4 = arith.constant 0 : i32
    %9 = arith.cmpi eq, %arg1, %c0_i32_4 : i32
    %10 = arith.andi %8, %9 : i1
    %11 = arith.extui %10 : i1 to i32
    %c0_i32_5 = arith.constant 0 : i32
    %12 = arith.cmpi ne, %11, %c0_i32_5 : i32
    scf.if %12 {
      %c0 = arith.constant 0 : index
      %c0_8 = arith.constant 0 : index
      %16 = vector.load %arg8[%c0, %c0_8] : memref<1x128xf32, #tpu.memory_space<vmem>>, vector<1x128xf32>
      %cst = arith.constant 0.001953125 : f32
      %17 = vector.broadcast %cst : f32 to vector<1x128xf32>
      %18 = arith.mulf %16, %17 : vector<1x128xf32>
      %c0_9 = arith.constant 0 : index
      %c0_10 = arith.constant 0 : index
      %19 = vector.load %arg9[%c0_9, %c0_10] : memref<1x128xf32, #tpu.memory_space<vmem>>, vector<1x128xf32>
      %cst_11 = arith.constant 0.001953125 : f32
      %20 = vector.broadcast %cst_11 : f32 to vector<1x128xf32>
      %21 = arith.mulf %19, %20 : vector<1x128xf32>
      %22 = arith.mulf %18, %18 : vector<1x128xf32>
      %23 = arith.subf %21, %22 : vector<1x128xf32>
      %cst_12 = arith.constant 0.000000e+00 : f32
      %24 = vector.broadcast %cst_12 : f32 to vector<1x128xf32>
      %25 = arith.maximumf %23, %24 : vector<1x128xf32>
      %c0_13 = arith.constant 0 : index
      %c0_14 = arith.constant 0 : index
      %26 = vector.load %arg4[%c0_13, %c0_14] : memref<1x128xf32, #tpu.memory_space<vmem>>, vector<1x128xf32>
      %cst_15 = arith.constant 9.99999974E-6 : f32
      %27 = vector.broadcast %cst_15 : f32 to vector<1x128xf32>
      %28 = arith.addf %25, %27 : vector<1x128xf32>
      %29 = math.rsqrt %28 : vector<1x128xf32>
      %30 = arith.mulf %26, %29 : vector<1x128xf32>
      %c0_16 = arith.constant 0 : index
      %c0_17 = arith.constant 0 : index
      %c0_18 = arith.constant 0 : index
      %31 = vector.load %arg10[%c0_16, %c0_17, %c0_18] : memref<2x1x128xf32, #tpu.memory_space<vmem>>, vector<1x1x128xf32>
      %32 = vector.shape_cast %31 : vector<1x1x128xf32> to vector<1x128xf32>
      %33 = vector.shape_cast %30 : vector<1x128xf32> to vector<1x1x128xf32>
      tpu.vector_store %arg10[%c0_16, %c0_17, %c0_18], %33 {strides = array<i32>} : memref<2x1x128xf32, #tpu.memory_space<vmem>>, vector<1x1x128xf32>,
      %c0_19 = arith.constant 0 : index
      %c0_20 = arith.constant 0 : index
      %34 = vector.load %arg5[%c0_19, %c0_20] : memref<1x128xf32, #tpu.memory_space<vmem>>, vector<1x128xf32>
      %35 = arith.mulf %18, %30 : vector<1x128xf32>
      %36 = arith.subf %34, %35 : vector<1x128xf32>
      %c1 = arith.constant 1 : index
      %c0_21 = arith.constant 0 : index
      %c0_22 = arith.constant 0 : index
      %37 = vector.load %arg10[%c1, %c0_21, %c0_22] : memref<2x1x128xf32, #tpu.memory_space<vmem>>, vector<1x1x128xf32>
      %38 = vector.shape_cast %37 : vector<1x1x128xf32> to vector<1x128xf32>
      %39 = vector.shape_cast %36 : vector<1x128xf32> to vector<1x1x128xf32>
      tpu.vector_store %arg10[%c1, %c0_21, %c0_22], %39 {strides = array<i32>} : memref<2x1x128xf32, #tpu.memory_space<vmem>>, vector<1x1x128xf32>,
    } else {
    }
    %c1_i32_6 = arith.constant 1 : i32
    %13 = arith.cmpi eq, %arg0, %c1_i32_6 : i32
    %14 = arith.extui %13 : i1 to i32
    %c0_i32_7 = arith.constant 0 : i32
    %15 = arith.cmpi ne, %14, %c0_i32_7 : i32
    scf.if %15 {
      %16 = arith.index_cast %arg1 : i32 to index
      %c0 = arith.constant 0 : index
      %c0_8 = arith.constant 0 : index
      %17 = vector.load %arg7[%16, %c0, %c0_8] : memref<1x512x128xf32, #tpu.memory_space<vmem>>, vector<1x512x128xf32>
      %18 = vector.shape_cast %17 : vector<1x512x128xf32> to vector<512x128xf32>
      %c0_9 = arith.constant 0 : index
      %c0_10 = arith.constant 0 : index
      %c0_11 = arith.constant 0 : index
      %19 = vector.load %arg10[%c0_9, %c0_10, %c0_11] : memref<2x1x128xf32, #tpu.memory_space<vmem>>, vector<1x1x128xf32>
      %20 = vector.shape_cast %19 : vector<1x1x128xf32> to vector<1x128xf32>
      %21 = vector.broadcast %20 : vector<1x128xf32> to vector<512x128xf32>
      %22 = arith.mulf %18, %21 : vector<512x128xf32>
      %c1 = arith.constant 1 : index
      %c0_12 = arith.constant 0 : index
      %c0_13 = arith.constant 0 : index
      %23 = vector.load %arg10[%c1, %c0_12, %c0_13] : memref<2x1x128xf32, #tpu.memory_space<vmem>>, vector<1x1x128xf32>
      %24 = vector.shape_cast %23 : vector<1x1x128xf32> to vector<1x128xf32>
      %25 = vector.broadcast %24 : vector<1x128xf32> to vector<512x128xf32>
      %26 = arith.addf %22, %25 : vector<512x128xf32>
      %cst = arith.constant 0.000000e+00 : f32
      %27 = vector.broadcast %cst : f32 to vector<512x128xf32>
      %28 = arith.cmpf oge, %26, %27 : vector<512x128xf32>
      %cst_14 = arith.constant 2.000000e-01 : f32
      %29 = vector.broadcast %cst_14 : f32 to vector<512x128xf32>
      %30 = arith.mulf %29, %26 : vector<512x128xf32>
      %31 = arith.select %28, %26, %30 : vector<512x128xi1>, vector<512x128xf32>
      %32 = arith.truncf %31 : vector<512x128xf32> to vector<512x128xbf16>
      %c0_15 = arith.constant 0 : index
      %c0_16 = arith.constant 0 : index
      %33 = vector.load %arg6[%c0_15, %c0_16] : memref<512x128xbf16, #tpu.memory_space<vmem>>, vector<512x128xbf16>
      tpu.vector_store %arg6[%c0_15, %c0_16], %32 {strides = array<i32>} : memref<512x128xbf16, #tpu.memory_space<vmem>>, vector<512x128xbf16>,
    } else {
    }
    return
  }
  func.func @transform_0(%arg0: i32, %arg1: i32) -> (i32, i32) {
    %c1_i32 = arith.constant 1 : i32
    %0 = arith.subi %c1_i32, %arg0 : i32
    %1 = arith.muli %0, %arg1 : i32
    %c0_i32 = arith.constant 0 : i32
    %c0_i32_0 = arith.constant 0 : i32
    return %1, %c0_i32 : i32, i32
  }
  func.func @transform_1(%arg0: i32, %arg1: i32) -> (i32, i32) {
    %c0_i32 = arith.constant 0 : i32
    %c0_i32_0 = arith.constant 0 : i32
    %c0_i32_1 = arith.constant 0 : i32
    return %c0_i32, %c0_i32_0 : i32, i32
  }
  func.func @transform_2(%arg0: i32, %arg1: i32) -> (i32, i32) {
    %c0_i32 = arith.constant 0 : i32
    %c0_i32_0 = arith.constant 0 : i32
    %c0_i32_1 = arith.constant 0 : i32
    return %c0_i32, %c0_i32_0 : i32, i32
  }
  func.func @transform_3(%arg0: i32, %arg1: i32) -> (i32, i32) {
    %c0_i32 = arith.constant 0 : i32
    %c0_i32_0 = arith.constant 0 : i32
    %c0_i32_1 = arith.constant 0 : i32
    return %c0_i32, %c0_i32_0 : i32, i32
  }
  func.func @transform_4(%arg0: i32, %arg1: i32) -> (i32, i32) {
    %0 = arith.muli %arg0, %arg1 : i32
    %c0_i32 = arith.constant 0 : i32
    %c0_i32_0 = arith.constant 0 : i32
    return %0, %c0_i32 : i32, i32
  }
}

module attributes {stable_mosaic.version = 11 : i64} {
  func.func @_fused_layer_kernel(%arg0: i32, %arg1: i32, %arg2: memref<128x256xbf16, #tpu.memory_space<vmem>>, %arg3: memref<256x128xbf16, #tpu.memory_space<vmem>>, %arg4: memref<1x128xf32, #tpu.memory_space<vmem>>, %arg5: memref<1x128xf32, #tpu.memory_space<vmem>>, %arg6: memref<128x128xbf16, #tpu.memory_space<vmem>>, %arg7: memref<1x128x128xf32, #tpu.memory_space<vmem>>, %arg8: memref<1x128xf32, #tpu.memory_space<vmem>>, %arg9: memref<1x128xf32, #tpu.memory_space<vmem>>, %arg10: memref<2x1x128xf32, #tpu.memory_space<vmem>>) attributes {dimension_semantics = [#tpu.dimension_semantics<arbitrary>, #tpu.dimension_semantics<arbitrary>], iteration_bounds = array<i64: 2, 1>, scalar_prefetch = 0 : i64, scratch_operands = 4 : i64, tpu.core_type = #tpu.core_type<tc>, window_params = [{transform_indices = @transform_0, window_bounds = array<i64: 128, 256>}, {pipeline_mode = #tpu.pipeline_mode<synchronous>, transform_indices = @transform_1, window_bounds = array<i64: 256, 128>}, {pipeline_mode = #tpu.pipeline_mode<synchronous>, transform_indices = @transform_2, window_bounds = array<i64: 1, 128>}, {pipeline_mode = #tpu.pipeline_mode<synchronous>, transform_indices = @transform_3, window_bounds = array<i64: 1, 128>}, {transform_indices = @transform_4, window_bounds = array<i64: 128, 128>}]} {
    %c0_i32 = arith.constant 0 : i32
    %0 = arith.cmpi eq, %arg0, %c0_i32 : i32
    %c0_i32_0 = arith.constant 0 : i32
    %1 = arith.cmpi eq, %arg1, %c0_i32_0 : i32
    %2 = arith.andi %0, %1 : i1
    %3 = arith.extui %2 : i1 to i32
    %c0_i32_1 = arith.constant 0 : i32
    %4 = arith.cmpi ne, %3, %c0_i32_1 : i32
    scf.if %4 {
      %cst = arith.constant 0.000000e+00 : f32
      %16 = vector.broadcast %cst : f32 to vector<1x128xf32>
      %c0 = arith.constant 0 : index
      %c0_8 = arith.constant 0 : index
      %17 = vector.load %arg8[%c0, %c0_8] : memref<1x128xf32, #tpu.memory_space<vmem>>, vector<1x128xf32>
      tpu.vector_store %arg8[%c0, %c0_8], %16 {strides = array<i32>} : memref<1x128xf32, #tpu.memory_space<vmem>>, vector<1x128xf32>,
      %cst_9 = arith.constant 0.000000e+00 : f32
      %18 = vector.broadcast %cst_9 : f32 to vector<1x128xf32>
      %c0_10 = arith.constant 0 : index
      %c0_11 = arith.constant 0 : index
      %19 = vector.load %arg9[%c0_10, %c0_11] : memref<1x128xf32, #tpu.memory_space<vmem>>, vector<1x128xf32>
      tpu.vector_store %arg9[%c0_10, %c0_11], %18 {strides = array<i32>} : memref<1x128xf32, #tpu.memory_space<vmem>>, vector<1x128xf32>,
    } else {
    }
    %c0_i32_2 = arith.constant 0 : i32
    %5 = arith.cmpi eq, %arg0, %c0_i32_2 : i32
    %6 = arith.extui %5 : i1 to i32
    %c0_i32_3 = arith.constant 0 : i32
    %7 = arith.cmpi ne, %6, %c0_i32_3 : i32
    scf.if %7 {
      %c0 = arith.constant 0 : index
      %c0_8 = arith.constant 0 : index
      %16 = vector.load %arg2[%c0, %c0_8] : memref<128x256xbf16, #tpu.memory_space<vmem>>, vector<128x256xbf16>
      %c0_9 = arith.constant 0 : index
      %c0_10 = arith.constant 0 : index
      %17 = vector.load %arg3[%c0_9, %c0_10] : memref<256x128xbf16, #tpu.memory_space<vmem>>, vector<256x128xbf16>
      %cst = arith.constant dense<0.000000e+00> : vector<128x128xf32>
      %18 = tpu.matmul %16, %17, %cst {dimension_numbers = #tpu.dot_dimension_numbers<[1], [0], [0], [1], [0, 0, 1, 1], [], []>} : vector<128x256xbf16>, vector<256x128xbf16>, vector<128x128xf32> -> vector<128x128xf32>
      %19 = arith.index_cast %arg1 : i32 to index
      %c0_11 = arith.constant 0 : index
      %c0_12 = arith.constant 0 : index
      %20 = vector.load %arg7[%19, %c0_11, %c0_12] : memref<1x128x128xf32, #tpu.memory_space<vmem>>, vector<1x128x128xf32>
      %21 = vector.shape_cast %20 : vector<1x128x128xf32> to vector<128x128xf32>
      %22 = vector.shape_cast %18 : vector<128x128xf32> to vector<1x128x128xf32>
      tpu.vector_store %arg7[%19, %c0_11, %c0_12], %22 {strides = array<i32>} : memref<1x128x128xf32, #tpu.memory_space<vmem>>, vector<1x128x128xf32>,
      %c0_13 = arith.constant 0 : index
      %c0_14 = arith.constant 0 : index
      %23 = vector.load %arg8[%c0_13, %c0_14] : memref<1x128xf32, #tpu.memory_space<vmem>>, vector<1x128xf32>
      %cst_15 = arith.constant dense<0.000000e+00> : vector<128xf32>
      %24 = vector.multi_reduction <add>, %18, %cst_15 [0] : vector<128x128xf32> to vector<128xf32>
      %25 = vector.shape_cast %24 : vector<128xf32> to vector<1x128xf32>
      %26 = arith.addf %23, %25 : vector<1x128xf32>
      %c0_16 = arith.constant 0 : index
      %c0_17 = arith.constant 0 : index
      %27 = vector.load %arg8[%c0_16, %c0_17] : memref<1x128xf32, #tpu.memory_space<vmem>>, vector<1x128xf32>
      tpu.vector_store %arg8[%c0_16, %c0_17], %26 {strides = array<i32>} : memref<1x128xf32, #tpu.memory_space<vmem>>, vector<1x128xf32>,
      %c0_18 = arith.constant 0 : index
      %c0_19 = arith.constant 0 : index
      %28 = vector.load %arg9[%c0_18, %c0_19] : memref<1x128xf32, #tpu.memory_space<vmem>>, vector<1x128xf32>
      %29 = arith.mulf %18, %18 : vector<128x128xf32>
      %cst_20 = arith.constant dense<0.000000e+00> : vector<128xf32>
      %30 = vector.multi_reduction <add>, %29, %cst_20 [0] : vector<128x128xf32> to vector<128xf32>
      %31 = vector.shape_cast %30 : vector<128xf32> to vector<1x128xf32>
      %32 = arith.addf %28, %31 : vector<1x128xf32>
      %c0_21 = arith.constant 0 : index
      %c0_22 = arith.constant 0 : index
      %33 = vector.load %arg9[%c0_21, %c0_22] : memref<1x128xf32, #tpu.memory_space<vmem>>, vector<1x128xf32>
      tpu.vector_store %arg9[%c0_21, %c0_22], %32 {strides = array<i32>} : memref<1x128xf32, #tpu.memory_space<vmem>>, vector<1x128xf32>,
    } else {
    }
    %c1_i32 = arith.constant 1 : i32
    %8 = arith.cmpi eq, %arg0, %c1_i32 : i32
    %c0_i32_4 = arith.constant 0 : i32
    %9 = arith.cmpi eq, %arg1, %c0_i32_4 : i32
    %10 = arith.andi %8, %9 : i1
    %11 = arith.extui %10 : i1 to i32
    %c0_i32_5 = arith.constant 0 : i32
    %12 = arith.cmpi ne, %11, %c0_i32_5 : i32
    scf.if %12 {
      %c0 = arith.constant 0 : index
      %c0_8 = arith.constant 0 : index
      %16 = vector.load %arg8[%c0, %c0_8] : memref<1x128xf32, #tpu.memory_space<vmem>>, vector<1x128xf32>
      %cst = arith.constant 7.812500e-03 : f32
      %17 = vector.broadcast %cst : f32 to vector<1x128xf32>
      %18 = arith.mulf %16, %17 : vector<1x128xf32>
      %c0_9 = arith.constant 0 : index
      %c0_10 = arith.constant 0 : index
      %19 = vector.load %arg9[%c0_9, %c0_10] : memref<1x128xf32, #tpu.memory_space<vmem>>, vector<1x128xf32>
      %cst_11 = arith.constant 7.812500e-03 : f32
      %20 = vector.broadcast %cst_11 : f32 to vector<1x128xf32>
      %21 = arith.mulf %19, %20 : vector<1x128xf32>
      %22 = arith.mulf %18, %18 : vector<1x128xf32>
      %23 = arith.subf %21, %22 : vector<1x128xf32>
      %cst_12 = arith.constant 0.000000e+00 : f32
      %24 = vector.broadcast %cst_12 : f32 to vector<1x128xf32>
      %25 = arith.maximumf %23, %24 : vector<1x128xf32>
      %c0_13 = arith.constant 0 : index
      %c0_14 = arith.constant 0 : index
      %26 = vector.load %arg4[%c0_13, %c0_14] : memref<1x128xf32, #tpu.memory_space<vmem>>, vector<1x128xf32>
      %cst_15 = arith.constant 9.99999974E-6 : f32
      %27 = vector.broadcast %cst_15 : f32 to vector<1x128xf32>
      %28 = arith.addf %25, %27 : vector<1x128xf32>
      %29 = math.rsqrt %28 : vector<1x128xf32>
      %30 = arith.mulf %26, %29 : vector<1x128xf32>
      %c0_16 = arith.constant 0 : index
      %c0_17 = arith.constant 0 : index
      %c0_18 = arith.constant 0 : index
      %31 = vector.load %arg10[%c0_16, %c0_17, %c0_18] : memref<2x1x128xf32, #tpu.memory_space<vmem>>, vector<1x1x128xf32>
      %32 = vector.shape_cast %31 : vector<1x1x128xf32> to vector<1x128xf32>
      %33 = vector.shape_cast %30 : vector<1x128xf32> to vector<1x1x128xf32>
      tpu.vector_store %arg10[%c0_16, %c0_17, %c0_18], %33 {strides = array<i32>} : memref<2x1x128xf32, #tpu.memory_space<vmem>>, vector<1x1x128xf32>,
      %c0_19 = arith.constant 0 : index
      %c0_20 = arith.constant 0 : index
      %34 = vector.load %arg5[%c0_19, %c0_20] : memref<1x128xf32, #tpu.memory_space<vmem>>, vector<1x128xf32>
      %35 = arith.mulf %18, %30 : vector<1x128xf32>
      %36 = arith.subf %34, %35 : vector<1x128xf32>
      %c1 = arith.constant 1 : index
      %c0_21 = arith.constant 0 : index
      %c0_22 = arith.constant 0 : index
      %37 = vector.load %arg10[%c1, %c0_21, %c0_22] : memref<2x1x128xf32, #tpu.memory_space<vmem>>, vector<1x1x128xf32>
      %38 = vector.shape_cast %37 : vector<1x1x128xf32> to vector<1x128xf32>
      %39 = vector.shape_cast %36 : vector<1x128xf32> to vector<1x1x128xf32>
      tpu.vector_store %arg10[%c1, %c0_21, %c0_22], %39 {strides = array<i32>} : memref<2x1x128xf32, #tpu.memory_space<vmem>>, vector<1x1x128xf32>,
    } else {
    }
    %c1_i32_6 = arith.constant 1 : i32
    %13 = arith.cmpi eq, %arg0, %c1_i32_6 : i32
    %14 = arith.extui %13 : i1 to i32
    %c0_i32_7 = arith.constant 0 : i32
    %15 = arith.cmpi ne, %14, %c0_i32_7 : i32
    scf.if %15 {
      %16 = arith.index_cast %arg1 : i32 to index
      %c0 = arith.constant 0 : index
      %c0_8 = arith.constant 0 : index
      %17 = vector.load %arg7[%16, %c0, %c0_8] : memref<1x128x128xf32, #tpu.memory_space<vmem>>, vector<1x128x128xf32>
      %18 = vector.shape_cast %17 : vector<1x128x128xf32> to vector<128x128xf32>
      %c0_9 = arith.constant 0 : index
      %c0_10 = arith.constant 0 : index
      %c0_11 = arith.constant 0 : index
      %19 = vector.load %arg10[%c0_9, %c0_10, %c0_11] : memref<2x1x128xf32, #tpu.memory_space<vmem>>, vector<1x1x128xf32>
      %20 = vector.shape_cast %19 : vector<1x1x128xf32> to vector<1x128xf32>
      %21 = vector.broadcast %20 : vector<1x128xf32> to vector<128x128xf32>
      %22 = arith.mulf %18, %21 : vector<128x128xf32>
      %c1 = arith.constant 1 : index
      %c0_12 = arith.constant 0 : index
      %c0_13 = arith.constant 0 : index
      %23 = vector.load %arg10[%c1, %c0_12, %c0_13] : memref<2x1x128xf32, #tpu.memory_space<vmem>>, vector<1x1x128xf32>
      %24 = vector.shape_cast %23 : vector<1x1x128xf32> to vector<1x128xf32>
      %25 = vector.broadcast %24 : vector<1x128xf32> to vector<128x128xf32>
      %26 = arith.addf %22, %25 : vector<128x128xf32>
      %cst = arith.constant 0.000000e+00 : f32
      %27 = vector.broadcast %cst : f32 to vector<128x128xf32>
      %28 = arith.cmpf oge, %26, %27 : vector<128x128xf32>
      %cst_14 = arith.constant 2.000000e-01 : f32
      %29 = vector.broadcast %cst_14 : f32 to vector<128x128xf32>
      %30 = arith.mulf %29, %26 : vector<128x128xf32>
      %31 = arith.select %28, %26, %30 : vector<128x128xi1>, vector<128x128xf32>
      %32 = arith.truncf %31 : vector<128x128xf32> to vector<128x128xbf16>
      %c0_15 = arith.constant 0 : index
      %c0_16 = arith.constant 0 : index
      %33 = vector.load %arg6[%c0_15, %c0_16] : memref<128x128xbf16, #tpu.memory_space<vmem>>, vector<128x128xbf16>
      tpu.vector_store %arg6[%c0_15, %c0_16], %32 {strides = array<i32>} : memref<128x128xbf16, #tpu.memory_space<vmem>>, vector<128x128xbf16>,
    } else {
    }
    return
  }
  func.func @transform_0(%arg0: i32, %arg1: i32) -> (i32, i32) {
    %c1_i32 = arith.constant 1 : i32
    %0 = arith.subi %c1_i32, %arg0 : i32
    %1 = arith.muli %0, %arg1 : i32
    %c0_i32 = arith.constant 0 : i32
    %c0_i32_0 = arith.constant 0 : i32
    return %1, %c0_i32 : i32, i32
  }
  func.func @transform_1(%arg0: i32, %arg1: i32) -> (i32, i32) {
    %c0_i32 = arith.constant 0 : i32
    %c0_i32_0 = arith.constant 0 : i32
    %c0_i32_1 = arith.constant 0 : i32
    return %c0_i32, %c0_i32_0 : i32, i32
  }
  func.func @transform_2(%arg0: i32, %arg1: i32) -> (i32, i32) {
    %c0_i32 = arith.constant 0 : i32
    %c0_i32_0 = arith.constant 0 : i32
    %c0_i32_1 = arith.constant 0 : i32
    return %c0_i32, %c0_i32_0 : i32, i32
  }
  func.func @transform_3(%arg0: i32, %arg1: i32) -> (i32, i32) {
    %c0_i32 = arith.constant 0 : i32
    %c0_i32_0 = arith.constant 0 : i32
    %c0_i32_1 = arith.constant 0 : i32
    return %c0_i32, %c0_i32_0 : i32, i32
  }
  func.func @transform_4(%arg0: i32, %arg1: i32) -> (i32, i32) {
    %0 = arith.muli %arg0, %arg1 : i32
    %c0_i32 = arith.constant 0 : i32
    %c0_i32_0 = arith.constant 0 : i32
    return %0, %c0_i32 : i32, i32
  }
}

module attributes {stable_mosaic.version = 11 : i64} {
  func.func @_fused_layer_kernel(%arg0: i32, %arg1: i32, %arg2: memref<32x512xbf16, #tpu.memory_space<vmem>>, %arg3: memref<512x128xbf16, #tpu.memory_space<vmem>>, %arg4: memref<1x128xf32, #tpu.memory_space<vmem>>, %arg5: memref<1x128xf32, #tpu.memory_space<vmem>>, %arg6: memref<32x128xbf16, #tpu.memory_space<vmem>>, %arg7: memref<1x32x128xf32, #tpu.memory_space<vmem>>, %arg8: memref<1x128xf32, #tpu.memory_space<vmem>>, %arg9: memref<1x128xf32, #tpu.memory_space<vmem>>, %arg10: memref<2x1x128xf32, #tpu.memory_space<vmem>>) attributes {dimension_semantics = [#tpu.dimension_semantics<arbitrary>, #tpu.dimension_semantics<arbitrary>], iteration_bounds = array<i64: 2, 1>, scalar_prefetch = 0 : i64, scratch_operands = 4 : i64, tpu.core_type = #tpu.core_type<tc>, window_params = [{transform_indices = @transform_0, window_bounds = array<i64: 32, 512>}, {pipeline_mode = #tpu.pipeline_mode<synchronous>, transform_indices = @transform_1, window_bounds = array<i64: 512, 128>}, {pipeline_mode = #tpu.pipeline_mode<synchronous>, transform_indices = @transform_2, window_bounds = array<i64: 1, 128>}, {pipeline_mode = #tpu.pipeline_mode<synchronous>, transform_indices = @transform_3, window_bounds = array<i64: 1, 128>}, {transform_indices = @transform_4, window_bounds = array<i64: 32, 128>}]} {
    %c0_i32 = arith.constant 0 : i32
    %0 = arith.cmpi eq, %arg0, %c0_i32 : i32
    %c0_i32_0 = arith.constant 0 : i32
    %1 = arith.cmpi eq, %arg1, %c0_i32_0 : i32
    %2 = arith.andi %0, %1 : i1
    %3 = arith.extui %2 : i1 to i32
    %c0_i32_1 = arith.constant 0 : i32
    %4 = arith.cmpi ne, %3, %c0_i32_1 : i32
    scf.if %4 {
      %cst = arith.constant 0.000000e+00 : f32
      %16 = vector.broadcast %cst : f32 to vector<1x128xf32>
      %c0 = arith.constant 0 : index
      %c0_8 = arith.constant 0 : index
      %17 = vector.load %arg8[%c0, %c0_8] : memref<1x128xf32, #tpu.memory_space<vmem>>, vector<1x128xf32>
      tpu.vector_store %arg8[%c0, %c0_8], %16 {strides = array<i32>} : memref<1x128xf32, #tpu.memory_space<vmem>>, vector<1x128xf32>,
      %cst_9 = arith.constant 0.000000e+00 : f32
      %18 = vector.broadcast %cst_9 : f32 to vector<1x128xf32>
      %c0_10 = arith.constant 0 : index
      %c0_11 = arith.constant 0 : index
      %19 = vector.load %arg9[%c0_10, %c0_11] : memref<1x128xf32, #tpu.memory_space<vmem>>, vector<1x128xf32>
      tpu.vector_store %arg9[%c0_10, %c0_11], %18 {strides = array<i32>} : memref<1x128xf32, #tpu.memory_space<vmem>>, vector<1x128xf32>,
    } else {
    }
    %c0_i32_2 = arith.constant 0 : i32
    %5 = arith.cmpi eq, %arg0, %c0_i32_2 : i32
    %6 = arith.extui %5 : i1 to i32
    %c0_i32_3 = arith.constant 0 : i32
    %7 = arith.cmpi ne, %6, %c0_i32_3 : i32
    scf.if %7 {
      %c0 = arith.constant 0 : index
      %c0_8 = arith.constant 0 : index
      %16 = vector.load %arg2[%c0, %c0_8] : memref<32x512xbf16, #tpu.memory_space<vmem>>, vector<32x512xbf16>
      %c0_9 = arith.constant 0 : index
      %c0_10 = arith.constant 0 : index
      %17 = vector.load %arg3[%c0_9, %c0_10] : memref<512x128xbf16, #tpu.memory_space<vmem>>, vector<512x128xbf16>
      %cst = arith.constant dense<0.000000e+00> : vector<32x128xf32>
      %18 = tpu.matmul %16, %17, %cst {dimension_numbers = #tpu.dot_dimension_numbers<[1], [0], [0], [1], [0, 0, 1, 1], [], []>} : vector<32x512xbf16>, vector<512x128xbf16>, vector<32x128xf32> -> vector<32x128xf32>
      %19 = arith.index_cast %arg1 : i32 to index
      %c0_11 = arith.constant 0 : index
      %c0_12 = arith.constant 0 : index
      %20 = vector.load %arg7[%19, %c0_11, %c0_12] : memref<1x32x128xf32, #tpu.memory_space<vmem>>, vector<1x32x128xf32>
      %21 = vector.shape_cast %20 : vector<1x32x128xf32> to vector<32x128xf32>
      %22 = vector.shape_cast %18 : vector<32x128xf32> to vector<1x32x128xf32>
      tpu.vector_store %arg7[%19, %c0_11, %c0_12], %22 {strides = array<i32>} : memref<1x32x128xf32, #tpu.memory_space<vmem>>, vector<1x32x128xf32>,
      %c0_13 = arith.constant 0 : index
      %c0_14 = arith.constant 0 : index
      %23 = vector.load %arg8[%c0_13, %c0_14] : memref<1x128xf32, #tpu.memory_space<vmem>>, vector<1x128xf32>
      %cst_15 = arith.constant dense<0.000000e+00> : vector<128xf32>
      %24 = vector.multi_reduction <add>, %18, %cst_15 [0] : vector<32x128xf32> to vector<128xf32>
      %25 = vector.shape_cast %24 : vector<128xf32> to vector<1x128xf32>
      %26 = arith.addf %23, %25 : vector<1x128xf32>
      %c0_16 = arith.constant 0 : index
      %c0_17 = arith.constant 0 : index
      %27 = vector.load %arg8[%c0_16, %c0_17] : memref<1x128xf32, #tpu.memory_space<vmem>>, vector<1x128xf32>
      tpu.vector_store %arg8[%c0_16, %c0_17], %26 {strides = array<i32>} : memref<1x128xf32, #tpu.memory_space<vmem>>, vector<1x128xf32>,
      %c0_18 = arith.constant 0 : index
      %c0_19 = arith.constant 0 : index
      %28 = vector.load %arg9[%c0_18, %c0_19] : memref<1x128xf32, #tpu.memory_space<vmem>>, vector<1x128xf32>
      %29 = arith.mulf %18, %18 : vector<32x128xf32>
      %cst_20 = arith.constant dense<0.000000e+00> : vector<128xf32>
      %30 = vector.multi_reduction <add>, %29, %cst_20 [0] : vector<32x128xf32> to vector<128xf32>
      %31 = vector.shape_cast %30 : vector<128xf32> to vector<1x128xf32>
      %32 = arith.addf %28, %31 : vector<1x128xf32>
      %c0_21 = arith.constant 0 : index
      %c0_22 = arith.constant 0 : index
      %33 = vector.load %arg9[%c0_21, %c0_22] : memref<1x128xf32, #tpu.memory_space<vmem>>, vector<1x128xf32>
      tpu.vector_store %arg9[%c0_21, %c0_22], %32 {strides = array<i32>} : memref<1x128xf32, #tpu.memory_space<vmem>>, vector<1x128xf32>,
    } else {
    }
    %c1_i32 = arith.constant 1 : i32
    %8 = arith.cmpi eq, %arg0, %c1_i32 : i32
    %c0_i32_4 = arith.constant 0 : i32
    %9 = arith.cmpi eq, %arg1, %c0_i32_4 : i32
    %10 = arith.andi %8, %9 : i1
    %11 = arith.extui %10 : i1 to i32
    %c0_i32_5 = arith.constant 0 : i32
    %12 = arith.cmpi ne, %11, %c0_i32_5 : i32
    scf.if %12 {
      %c0 = arith.constant 0 : index
      %c0_8 = arith.constant 0 : index
      %16 = vector.load %arg8[%c0, %c0_8] : memref<1x128xf32, #tpu.memory_space<vmem>>, vector<1x128xf32>
      %cst = arith.constant 3.125000e-02 : f32
      %17 = vector.broadcast %cst : f32 to vector<1x128xf32>
      %18 = arith.mulf %16, %17 : vector<1x128xf32>
      %c0_9 = arith.constant 0 : index
      %c0_10 = arith.constant 0 : index
      %19 = vector.load %arg9[%c0_9, %c0_10] : memref<1x128xf32, #tpu.memory_space<vmem>>, vector<1x128xf32>
      %cst_11 = arith.constant 3.125000e-02 : f32
      %20 = vector.broadcast %cst_11 : f32 to vector<1x128xf32>
      %21 = arith.mulf %19, %20 : vector<1x128xf32>
      %22 = arith.mulf %18, %18 : vector<1x128xf32>
      %23 = arith.subf %21, %22 : vector<1x128xf32>
      %cst_12 = arith.constant 0.000000e+00 : f32
      %24 = vector.broadcast %cst_12 : f32 to vector<1x128xf32>
      %25 = arith.maximumf %23, %24 : vector<1x128xf32>
      %c0_13 = arith.constant 0 : index
      %c0_14 = arith.constant 0 : index
      %26 = vector.load %arg4[%c0_13, %c0_14] : memref<1x128xf32, #tpu.memory_space<vmem>>, vector<1x128xf32>
      %cst_15 = arith.constant 9.99999974E-6 : f32
      %27 = vector.broadcast %cst_15 : f32 to vector<1x128xf32>
      %28 = arith.addf %25, %27 : vector<1x128xf32>
      %29 = math.rsqrt %28 : vector<1x128xf32>
      %30 = arith.mulf %26, %29 : vector<1x128xf32>
      %c0_16 = arith.constant 0 : index
      %c0_17 = arith.constant 0 : index
      %c0_18 = arith.constant 0 : index
      %31 = vector.load %arg10[%c0_16, %c0_17, %c0_18] : memref<2x1x128xf32, #tpu.memory_space<vmem>>, vector<1x1x128xf32>
      %32 = vector.shape_cast %31 : vector<1x1x128xf32> to vector<1x128xf32>
      %33 = vector.shape_cast %30 : vector<1x128xf32> to vector<1x1x128xf32>
      tpu.vector_store %arg10[%c0_16, %c0_17, %c0_18], %33 {strides = array<i32>} : memref<2x1x128xf32, #tpu.memory_space<vmem>>, vector<1x1x128xf32>,
      %c0_19 = arith.constant 0 : index
      %c0_20 = arith.constant 0 : index
      %34 = vector.load %arg5[%c0_19, %c0_20] : memref<1x128xf32, #tpu.memory_space<vmem>>, vector<1x128xf32>
      %35 = arith.mulf %18, %30 : vector<1x128xf32>
      %36 = arith.subf %34, %35 : vector<1x128xf32>
      %c1 = arith.constant 1 : index
      %c0_21 = arith.constant 0 : index
      %c0_22 = arith.constant 0 : index
      %37 = vector.load %arg10[%c1, %c0_21, %c0_22] : memref<2x1x128xf32, #tpu.memory_space<vmem>>, vector<1x1x128xf32>
      %38 = vector.shape_cast %37 : vector<1x1x128xf32> to vector<1x128xf32>
      %39 = vector.shape_cast %36 : vector<1x128xf32> to vector<1x1x128xf32>
      tpu.vector_store %arg10[%c1, %c0_21, %c0_22], %39 {strides = array<i32>} : memref<2x1x128xf32, #tpu.memory_space<vmem>>, vector<1x1x128xf32>,
    } else {
    }
    %c1_i32_6 = arith.constant 1 : i32
    %13 = arith.cmpi eq, %arg0, %c1_i32_6 : i32
    %14 = arith.extui %13 : i1 to i32
    %c0_i32_7 = arith.constant 0 : i32
    %15 = arith.cmpi ne, %14, %c0_i32_7 : i32
    scf.if %15 {
      %16 = arith.index_cast %arg1 : i32 to index
      %c0 = arith.constant 0 : index
      %c0_8 = arith.constant 0 : index
      %17 = vector.load %arg7[%16, %c0, %c0_8] : memref<1x32x128xf32, #tpu.memory_space<vmem>>, vector<1x32x128xf32>
      %18 = vector.shape_cast %17 : vector<1x32x128xf32> to vector<32x128xf32>
      %c0_9 = arith.constant 0 : index
      %c0_10 = arith.constant 0 : index
      %c0_11 = arith.constant 0 : index
      %19 = vector.load %arg10[%c0_9, %c0_10, %c0_11] : memref<2x1x128xf32, #tpu.memory_space<vmem>>, vector<1x1x128xf32>
      %20 = vector.shape_cast %19 : vector<1x1x128xf32> to vector<1x128xf32>
      %21 = vector.broadcast %20 : vector<1x128xf32> to vector<32x128xf32>
      %22 = arith.mulf %18, %21 : vector<32x128xf32>
      %c1 = arith.constant 1 : index
      %c0_12 = arith.constant 0 : index
      %c0_13 = arith.constant 0 : index
      %23 = vector.load %arg10[%c1, %c0_12, %c0_13] : memref<2x1x128xf32, #tpu.memory_space<vmem>>, vector<1x1x128xf32>
      %24 = vector.shape_cast %23 : vector<1x1x128xf32> to vector<1x128xf32>
      %25 = vector.broadcast %24 : vector<1x128xf32> to vector<32x128xf32>
      %26 = arith.addf %22, %25 : vector<32x128xf32>
      %cst = arith.constant 0.000000e+00 : f32
      %27 = vector.broadcast %cst : f32 to vector<32x128xf32>
      %28 = arith.cmpf oge, %26, %27 : vector<32x128xf32>
      %cst_14 = arith.constant 2.000000e-01 : f32
      %29 = vector.broadcast %cst_14 : f32 to vector<32x128xf32>
      %30 = arith.mulf %29, %26 : vector<32x128xf32>
      %31 = arith.select %28, %26, %30 : vector<32x128xi1>, vector<32x128xf32>
      %32 = arith.truncf %31 : vector<32x128xf32> to vector<32x128xbf16>
      %c0_15 = arith.constant 0 : index
      %c0_16 = arith.constant 0 : index
      %33 = vector.load %arg6[%c0_15, %c0_16] : memref<32x128xbf16, #tpu.memory_space<vmem>>, vector<32x128xbf16>
      tpu.vector_store %arg6[%c0_15, %c0_16], %32 {strides = array<i32>} : memref<32x128xbf16, #tpu.memory_space<vmem>>, vector<32x128xbf16>,
    } else {
    }
    return
  }
  func.func @transform_0(%arg0: i32, %arg1: i32) -> (i32, i32) {
    %c1_i32 = arith.constant 1 : i32
    %0 = arith.subi %c1_i32, %arg0 : i32
    %1 = arith.muli %0, %arg1 : i32
    %c0_i32 = arith.constant 0 : i32
    %c0_i32_0 = arith.constant 0 : i32
    return %1, %c0_i32 : i32, i32
  }
  func.func @transform_1(%arg0: i32, %arg1: i32) -> (i32, i32) {
    %c0_i32 = arith.constant 0 : i32
    %c0_i32_0 = arith.constant 0 : i32
    %c0_i32_1 = arith.constant 0 : i32
    return %c0_i32, %c0_i32_0 : i32, i32
  }
  func.func @transform_2(%arg0: i32, %arg1: i32) -> (i32, i32) {
    %c0_i32 = arith.constant 0 : i32
    %c0_i32_0 = arith.constant 0 : i32
    %c0_i32_1 = arith.constant 0 : i32
    return %c0_i32, %c0_i32_0 : i32, i32
  }
  func.func @transform_3(%arg0: i32, %arg1: i32) -> (i32, i32) {
    %c0_i32 = arith.constant 0 : i32
    %c0_i32_0 = arith.constant 0 : i32
    %c0_i32_1 = arith.constant 0 : i32
    return %c0_i32, %c0_i32_0 : i32, i32
  }
  func.func @transform_4(%arg0: i32, %arg1: i32) -> (i32, i32) {
    %0 = arith.muli %arg0, %arg1 : i32
    %c0_i32 = arith.constant 0 : i32
    %c0_i32_0 = arith.constant 0 : i32
    return %0, %c0_i32 : i32, i32
  }
}

module attributes {stable_mosaic.version = 11 : i64} {
  func.func @_fused_layer_kernel(%arg0: i32, %arg1: i32, %arg2: memref<16x1024xbf16, #tpu.memory_space<vmem>>, %arg3: memref<1024x128xbf16, #tpu.memory_space<vmem>>, %arg4: memref<1x128xf32, #tpu.memory_space<vmem>>, %arg5: memref<1x128xf32, #tpu.memory_space<vmem>>, %arg6: memref<16x128xf32, #tpu.memory_space<vmem>>, %arg7: memref<1x16x128xf32, #tpu.memory_space<vmem>>, %arg8: memref<1x128xf32, #tpu.memory_space<vmem>>, %arg9: memref<1x128xf32, #tpu.memory_space<vmem>>, %arg10: memref<2x1x128xf32, #tpu.memory_space<vmem>>) attributes {dimension_semantics = [#tpu.dimension_semantics<arbitrary>, #tpu.dimension_semantics<arbitrary>], iteration_bounds = array<i64: 2, 1>, scalar_prefetch = 0 : i64, scratch_operands = 4 : i64, tpu.core_type = #tpu.core_type<tc>, window_params = [{transform_indices = @transform_0, window_bounds = array<i64: 16, 1024>}, {pipeline_mode = #tpu.pipeline_mode<synchronous>, transform_indices = @transform_1, window_bounds = array<i64: 1024, 128>}, {pipeline_mode = #tpu.pipeline_mode<synchronous>, transform_indices = @transform_2, window_bounds = array<i64: 1, 128>}, {pipeline_mode = #tpu.pipeline_mode<synchronous>, transform_indices = @transform_3, window_bounds = array<i64: 1, 128>}, {transform_indices = @transform_4, window_bounds = array<i64: 16, 128>}]} {
    %c0_i32 = arith.constant 0 : i32
    %0 = arith.cmpi eq, %arg0, %c0_i32 : i32
    %1 = arith.extui %0 : i1 to i32
    %c0_i32_0 = arith.constant 0 : i32
    %2 = arith.cmpi ne, %1, %c0_i32_0 : i32
    scf.if %2 {
      %c0 = arith.constant 0 : index
      %c0_2 = arith.constant 0 : index
      %6 = vector.load %arg2[%c0, %c0_2] : memref<16x1024xbf16, #tpu.memory_space<vmem>>, vector<16x1024xbf16>
      %c0_3 = arith.constant 0 : index
      %c0_4 = arith.constant 0 : index
      %7 = vector.load %arg3[%c0_3, %c0_4] : memref<1024x128xbf16, #tpu.memory_space<vmem>>, vector<1024x128xbf16>
      %cst = arith.constant dense<0.000000e+00> : vector<16x128xf32>
      %8 = tpu.matmul %6, %7, %cst {dimension_numbers = #tpu.dot_dimension_numbers<[1], [0], [0], [1], [0, 0, 1, 1], [], []>} : vector<16x1024xbf16>, vector<1024x128xbf16>, vector<16x128xf32> -> vector<16x128xf32>
      %9 = arith.index_cast %arg1 : i32 to index
      %c0_5 = arith.constant 0 : index
      %c0_6 = arith.constant 0 : index
      %10 = vector.load %arg7[%9, %c0_5, %c0_6] : memref<1x16x128xf32, #tpu.memory_space<vmem>>, vector<1x16x128xf32>
      %11 = vector.shape_cast %10 : vector<1x16x128xf32> to vector<16x128xf32>
      %12 = vector.shape_cast %8 : vector<16x128xf32> to vector<1x16x128xf32>
      tpu.vector_store %arg7[%9, %c0_5, %c0_6], %12 {strides = array<i32>} : memref<1x16x128xf32, #tpu.memory_space<vmem>>, vector<1x16x128xf32>,
    } else {
    }
    %c1_i32 = arith.constant 1 : i32
    %3 = arith.cmpi eq, %arg0, %c1_i32 : i32
    %4 = arith.extui %3 : i1 to i32
    %c0_i32_1 = arith.constant 0 : i32
    %5 = arith.cmpi ne, %4, %c0_i32_1 : i32
    scf.if %5 {
      %6 = arith.index_cast %arg1 : i32 to index
      %c0 = arith.constant 0 : index
      %c0_2 = arith.constant 0 : index
      %7 = vector.load %arg7[%6, %c0, %c0_2] : memref<1x16x128xf32, #tpu.memory_space<vmem>>, vector<1x16x128xf32>
      %8 = vector.shape_cast %7 : vector<1x16x128xf32> to vector<16x128xf32>
      %cst = arith.constant 0.000000e+00 : f32
      %9 = vector.broadcast %cst : f32 to vector<16x128xf32>
      %10 = arith.subf %9, %8 : vector<16x128xf32>
      %11 = math.exp %10 : vector<16x128xf32>
      %cst_3 = arith.constant 1.000000e+00 : f32
      %12 = vector.broadcast %cst_3 : f32 to vector<16x128xf32>
      %13 = arith.addf %12, %11 : vector<16x128xf32>
      %cst_4 = arith.constant 1.000000e+00 : f32
      %14 = vector.broadcast %cst_4 : f32 to vector<16x128xf32>
      %15 = arith.divf %14, %13 : vector<16x128xf32>
      %c0_5 = arith.constant 0 : index
      %c0_6 = arith.constant 0 : index
      %16 = vector.load %arg6[%c0_5, %c0_6] : memref<16x128xf32, #tpu.memory_space<vmem>>, vector<16x128xf32>
      tpu.vector_store %arg6[%c0_5, %c0_6], %15 {strides = array<i32>} : memref<16x128xf32, #tpu.memory_space<vmem>>, vector<16x128xf32>,
    } else {
    }
    return
  }
  func.func @transform_0(%arg0: i32, %arg1: i32) -> (i32, i32) {
    %c1_i32 = arith.constant 1 : i32
    %0 = arith.subi %c1_i32, %arg0 : i32
    %1 = arith.muli %0, %arg1 : i32
    %c0_i32 = arith.constant 0 : i32
    %c0_i32_0 = arith.constant 0 : i32
    return %1, %c0_i32 : i32, i32
  }
  func.func @transform_1(%arg0: i32, %arg1: i32) -> (i32, i32) {
    %c0_i32 = arith.constant 0 : i32
    %c0_i32_0 = arith.constant 0 : i32
    %c0_i32_1 = arith.constant 0 : i32
    return %c0_i32, %c0_i32_0 : i32, i32
  }
  func.func @transform_2(%arg0: i32, %arg1: i32) -> (i32, i32) {
    %c0_i32 = arith.constant 0 : i32
    %c0_i32_0 = arith.constant 0 : i32
    %c0_i32_1 = arith.constant 0 : i32
    return %c0_i32, %c0_i32_0 : i32, i32
  }
  func.func @transform_3(%arg0: i32, %arg1: i32) -> (i32, i32) {
    %c0_i32 = arith.constant 0 : i32
    %c0_i32_0 = arith.constant 0 : i32
    %c0_i32_1 = arith.constant 0 : i32
    return %c0_i32, %c0_i32_0 : i32, i32
  }
  func.func @transform_4(%arg0: i32, %arg1: i32) -> (i32, i32) {
    %0 = arith.muli %arg0, %arg1 : i32
    %c0_i32 = arith.constant 0 : i32
    %c0_i32_0 = arith.constant 0 : i32
    return %0, %c0_i32 : i32, i32
  }
}

</mosaic_0001>

<llo_original>
// kernel: _lambda_.5
$region0: #{_lambda_.5}
  #allocation0 [shape = 'u32[]', space=smem, size = 0x4, offset = 0x4, fixed_abs, tag = 'smem constant byte address 0x4 - core index']
  #allocation1 [shape = 'u32[144,128]{1,0:T(1,128)}', space=vmem, size = 0x12000, scoped, tag = 'internal scratch']
  #allocation2 [shape = 'f32[4,512,128]{2,1,0:T(8,128)}', space=vmem, size = 0x100000, scoped, tag = 'scratch operand']
  #allocation3 [shape = 'f32[1,128]{1,0:T(1,128)}', space=vmem, size = 0x200, scoped, tag = 'scratch operand']
  #allocation4 [shape = 'f32[1,128]{1,0:T(1,128)}', space=vmem, size = 0x200, scoped, tag = 'scratch operand']
  #allocation5 [shape = 'f32[2,1,128]{2,1,0:T(1,128)}', space=vmem, size = 0x400, scoped, tag = 'scratch operand']
  %s0 = inlined_call_operand.vmem [shape: bf16[2048,128], index: 0, kind: input, shape index: {}]
  %s1 = inlined_call_operand.vmem [shape: bf16[128,128], index: 1, kind: input, shape index: {}]
  %s2 = inlined_call_operand.vmem [shape: f32[1,128], index: 2, kind: input, shape index: {}]
  %s3 = inlined_call_operand.vmem [shape: f32[1,128], index: 3, kind: input, shape index: {}]
  %s4 = inlined_call_operand.vmem [shape: bf16[2048,128], index: 4, kind: output, shape index: {}]
  %s5 = sld [smem:[#allocation0]]
  $region65: #{_lambda_.5} parent=0
    _
  %s7 = ssub.s32 1, %s5
  %s8 = scalar_select 0, %s7, %s5
  loop: start=0, step=1, limit=10
  $region2: #{_lambda_.5} parent=0 // loop_pre_header
    _
  $region3: #{_lambda_.5} parent=0 // loop_header
    %s10 = sphi 0, %s14
    %p11 = scmp.ge.s32.totalorder %s10, 10
    %s17 = sphi 0, %s29
    %s18 = sphi 0, %s25
    %s19 = sphi 0, %s17
    %s20 = sphi 0, %s18
    %s21 = sphi 0, %s19
    %s22 = sphi 0, %s20
    %s36 = sphi 0, %s38
    %s39 = sphi 0, %s36
    %s40 = sphi 0, %s39
    %s56 = sphi 0, %s40
    %s60 = sphi 0, %s60
    %s62 = sphi 0, %s60
    %s63 = sphi 0, %s62
    %s77 = sphi 0, %s63
    %s81 = sphi 0, %s81
    %s83 = sphi 0, %s81
    %s84 = sphi 0, %s83
    %s98 = sphi 0, %s84
    %s102 = sphi 0, %s102
    %s104 = sphi 0, %s102
    %s105 = sphi 0, %s104
    %s119 = sphi 0, %s105
    %s127 = sphi 0, %s129
    %s130 = sphi 0, %s127
    %s131 = sphi 0, %s130
    %s147 = sphi 0, %s131
  $region4: #{_lambda_.5} parent=0 // loop_header_branch
    %13 = sbr.rel (%p11) target = $region8
  $region5: #{_lambda_.5} parent=0 // loop_body
    %s15 = ssub.s32 %s10, 1
    %s16 = ssub.s32 %s10, 2
    %s23 = sadd.s32 1, %s18
    %p24 = scmp.ge.s32.totalorder %s23, 4
    %s25 = scalar_select %p24, 0, %s23
    %s26 = sadd.s32 1, %s17
    %s27 = scalar_select %p24, %s26, %s17
    %p28 = scmp.ge.s32.totalorder %s27, 2
    %s29 = scalar_select %p28, 0, %s27
    %s30 = ssub.s32 1, %s17
    %s31 = smul.u32 %s30, %s18
    %s32 = ssub.s32 1, %s29
    %s33 = smul.u32 %s32, %s25
    %s34 = ssub.s32 %s31, %s33
    %p35 = scmp.eq.s32.totalorder %s34, 0
    %s37 = sadd.s32 %s36, 1
    %s38 = scalar_select %p35, %s36, %s37
    %p41 = pneg %p35
    %p42 = scmp.eq.s32.totalorder %s10, 7
    %p43 = por %p41, %p42
    %p44 = scmp.ne.s32.totalorder %s36, %s39
    %p45 = scmp.eq.s32.totalorder %s10, 0
    %p46 = por %p44, %p45
    %p47 = scmp.ne.s32.totalorder %s36, %s39
    %p48 = scmp.eq.s32.totalorder %s15, 7
    %p49 = por %p47, %p48
    %p50 = scmp.ne.s32.totalorder %s39, %s40
    %p51 = scmp.eq.s32.totalorder %s15, 0
    %p52 = por %p50, %p51
    %p53 = scmp.ne.s32.totalorder %s39, %s40
    %p54 = scmp.eq.s32.totalorder %s16, 7
    %p55 = por %p53, %p54
    %p57 = scmp.ne.s32.totalorder %s40, %s56
    %p58 = scmp.eq.s32.totalorder %s16, 0
    %p59 = por %p57, %p58
    %s61 = sadd.s32 %s60, 1
    %p64 = scmp.eq.s32.totalorder %s10, 7
    %p65 = scmp.ne.s32.totalorder %s60, %s62
    %p66 = scmp.eq.s32.totalorder %s10, 0
    %p67 = por %p65, %p66
    %p68 = scmp.ne.s32.totalorder %s60, %s62
    %p69 = scmp.eq.s32.totalorder %s15, 7
    %p70 = por %p68, %p69
    %p71 = scmp.ne.s32.totalorder %s62, %s63
    %p72 = scmp.eq.s32.totalorder %s15, 0
    %p73 = por %p71, %p72
    %p74 = scmp.ne.s32.totalorder %s62, %s63
    %p75 = scmp.eq.s32.totalorder %s16, 7
    %p76 = por %p74, %p75
    %p78 = scmp.ne.s32.totalorder %s63, %s77
    %p79 = scmp.eq.s32.totalorder %s16, 0
    %p80 = por %p78, %p79
    %s82 = sadd.s32 %s81, 1
    %p85 = scmp.eq.s32.totalorder %s10, 7
    %p86 = scmp.ne.s32.totalorder %s81, %s83
    %p87 = scmp.eq.s32.totalorder %s10, 0
    %p88 = por %p86, %p87
    %p89 = scmp.ne.s32.totalorder %s81, %s83
    %p90 = scmp.eq.s32.totalorder %s15, 7
    %p91 = por %p89, %p90
    %p92 = scmp.ne.s32.totalorder %s83, %s84
    %p93 = scmp.eq.s32.totalorder %s15, 0
    %p94 = por %p92, %p93
    %p95 = scmp.ne.s32.totalorder %s83, %s84
    %p96 = scmp.eq.s32.totalorder %s16, 7
    %p97 = por %p95, %p96
    %p99 = scmp.ne.s32.totalorder %s84, %s98
    %p100 = scmp.eq.s32.totalorder %s16, 0
    %p101 = por %p99, %p100
    %s103 = sadd.s32 %s102, 1
    %p106 = scmp.eq.s32.totalorder %s10, 7
    %p107 = scmp.ne.s32.totalorder %s102, %s104
    %p108 = scmp.eq.s32.totalorder %s10, 0
    %p109 = por %p107, %p108
    %p110 = scmp.ne.s32.totalorder %s102, %s104
    %p111 = scmp.eq.s32.totalorder %s15, 7
    %p112 = por %p110, %p111
    %p113 = scmp.ne.s32.totalorder %s104, %s105
    %p114 = scmp.eq.s32.totalorder %s15, 0
    %p115 = por %p113, %p114
    %p116 = scmp.ne.s32.totalorder %s104, %s105
    %p117 = scmp.eq.s32.totalorder %s16, 7
    %p118 = por %p116, %p117
    %p120 = scmp.ne.s32.totalorder %s105, %s119
    %p121 = scmp.eq.s32.totalorder %s16, 0
    %p122 = por %p120, %p121
    %s123 = smul.u32 %s17, %s18
    %s124 = smul.u32 %s29, %s25
    %s125 = ssub.s32 %s123, %s124
    %p126 = scmp.eq.s32.totalorder %s125, 0
    %s128 = sadd.s32 %s127, 1
    %s129 = scalar_select %p126, %s127, %s128
    %p132 = pneg %p126
    %p133 = scmp.eq.s32.totalorder %s10, 7
    %p134 = por %p132, %p133
    %p135 = scmp.ne.s32.totalorder %s127, %s130
    %p136 = scmp.eq.s32.totalorder %s10, 0
    %p137 = por %p135, %p136
    %p138 = scmp.ne.s32.totalorder %s127, %s130
    %p139 = scmp.eq.s32.totalorder %s15, 7
    %p140 = por %p138, %p139
    %p141 = scmp.ne.s32.totalorder %s130, %s131
    %p142 = scmp.eq.s32.totalorder %s15, 0
    %p143 = por %p141, %p142
    %p144 = scmp.ne.s32.totalorder %s130, %s131
    %p145 = scmp.eq.s32.totalorder %s16, 7
    %p146 = por %p144, %p145
    %p148 = scmp.ne.s32.totalorder %s131, %s147
    %p149 = scmp.eq.s32.totalorder %s16, 0
    %p150 = por %p148, %p149
    %p151 = scmp.le.s32.totalorder 1, %s10
    %p152 = scmp.lt.s32.totalorder %s10, 9
    %p153 = pnand %p151, %p152
    %p154 = pneg %p153
    // Predicated region
    $region9: #{_lambda_.5} parent=5 // pred_check
      _
    $region10: #{_lambda_.5} parent=5 // pred_check_branch
      %156 = sbr.rel (%p153) target = $region12
    $region11: #{_lambda_.5} parent=5 // pred_region
      %s157 = ssub.s32 %s10, 1
      // Predicated region
      $region13: #{_lambda_.5} parent=11 // pred_check
        %p158 = pneg %p73
      $region14: #{_lambda_.5} parent=11 // pred_check_branch
        %160 = sbr.rel (%p158) target = $region16
      $region15: #{_lambda_.5} parent=11 // pred_region
        _
      $region16: #{_lambda_.5} parent=11 // pred_fallthru
        _
      // Predicated region
      $region17: #{_lambda_.5} parent=11 // pred_check
        %p161 = pneg %p94
      $region18: #{_lambda_.5} parent=11 // pred_check_branch
        %163 = sbr.rel (%p161) target = $region20
      $region19: #{_lambda_.5} parent=11 // pred_region
        _
      $region20: #{_lambda_.5} parent=11 // pred_fallthru
        _
      // Predicated region
      $region21: #{_lambda_.5} parent=11 // pred_check
        %p164 = pneg %p115
      $region22: #{_lambda_.5} parent=11 // pred_check_branch
        %166 = sbr.rel (%p164) target = $region24
      $region23: #{_lambda_.5} parent=11 // pred_region
        _
      $region24: #{_lambda_.5} parent=11 // pred_fallthru
        _
    $region12: #{_lambda_.5} parent=5 // pred_fallthru
      _
    %p167 = scmp.lt.s32.totalorder %s10, 8
    // Predicated region
    $region25: #{_lambda_.5} parent=5 // pred_check
      %p168 = pneg %p167
    $region26: #{_lambda_.5} parent=5 // pred_check_branch
      %170 = sbr.rel (%p168) target = $region28
    $region27: #{_lambda_.5} parent=5 // pred_region
      // Predicated region
      $region29: #{_lambda_.5} parent=27 // pred_check
        %p171 = pneg %p46
      $region30: #{_lambda_.5} parent=27 // pred_check_branch
        %173 = sbr.rel (%p171) target = $region32
      $region31: #{_lambda_.5} parent=27 // pred_region
        %s174 = ssub.s32 1, %s17
        %s175 = smul.u32 %s174, %s18
        %s176 = smul.u32 64, %s175
        %p177 = scmp.lt.s32.totalorder %s176, 255
        %s178 = scalar_select %p177, %s176, 255
        %s179 = smul.addr %s178, 4
        %s180 = scalar_lea.vmem %s0, %s179
        %s181 = ssub.s32 1, %s17
        %s182 = smul.u32 %s181, %s18
        %s183 = smul.u32 64, %s182
      $region32: #{_lambda_.5} parent=27 // pred_fallthru
        _
    $region28: #{_lambda_.5} parent=5 // pred_fallthru
      _
    %p184 = scmp.le.s32.totalorder 1, %s10
    %p185 = scmp.lt.s32.totalorder %s10, 9
    %p186 = pnand %p184, %p185
    %p187 = pneg %p186
    // Predicated region
    $region33: #{_lambda_.5} parent=5 // pred_check
      _
    $region34: #{_lambda_.5} parent=5 // pred_check_branch
      %189 = sbr.rel (%p186) target = $region36
    $region35: #{_lambda_.5} parent=5 // pred_region
      %s190 = ssub.s32 %s10, 1
      %s191 = ssub.s32 1, %s19
      %s192 = smul.u32 %s191, %s20
      %s193 = smul.u32 64, %s192
      %p194 = scmp.lt.s32.totalorder %s193, 255
      %s195 = scalar_select %p194, %s193, 255
      %s196 = smul.addr %s195, 4
      %s197 = scalar_lea.vmem %s0, %s196
      %p198 = pneg %p52
      %p199 = pneg %p49
      %p200 = pneg %p73
      %p201 = pneg %p70
      %p202 = pneg %p94
      %p203 = pneg %p91
      %p204 = pneg %p115
      %p205 = pneg %p112
      %p206 = pneg %p143
      %p207 = pneg %p140
      %s208 = smul.u32 %s19, %s20
      %s209 = smul.u32 64, %s208
      %p210 = scmp.lt.s32.totalorder %s209, 255
      %s211 = scalar_select %p210, %s209, 255
      %s212 = smul.addr %s211, 4
      %s213 = scalar_lea.vmem %s4, %s212
      %s214 = ssub.s32 1, %s19
      %s215 = smul.u32 %s214, %s20
      %s216 = smul.u32 64, %s215
      %p217 = scmp.lt.s32.totalorder %s216, 255
      %s218 = scalar_select %p217, %s216, 255
      %s219 = smul.addr %s218, 4
      %s220 = scalar_lea.vmem %s0, %s219
      %s221 = ssub.s32 1, %s19
      %s222 = smul.u32 %s221, %s20
      %s223 = smul.u32 64, %s222
      %s224 = smul.u32 %s19, %s20
      %s225 = smul.u32 64, %s224
      %p226 = scmp.lt.s32.totalorder %s225, 255
      %s227 = scalar_select %p226, %s225, 255
      %s228 = smul.addr %s227, 4
      %s229 = scalar_lea.vmem %s4, %s228
      %s230 = smul.u32 %s19, %s20
      %s231 = smul.u32 64, %s230
      %p233 = scmp.eq.s32.totalorder %s19, 0
      %p234 = scmp.eq.s32.totalorder %s20, 0
      %p235 = pnand %p233, %p234
      %p236 = pneg %p235
      // Predicated region
      $region37: #{_lambda_.5} parent=35 // pred_check
        _
      $region38: #{_lambda_.5} parent=35 // pred_check_branch
        %238 = sbr.rel (%p235) target = $region40
      $region39: #{_lambda_.5} parent=35 // pred_region
        %239 = vst [vmem:[#allocation3] sm:$0x1] 0.0
        %240 = vst [vmem:[#allocation4] sm:$0x1] 0.0
      $region40: #{_lambda_.5} parent=35 // pred_fallthru
        _
      // Predicated region
      $region41: #{_lambda_.5} parent=35 // pred_check
        %p241 = pneg %p233
      $region42: #{_lambda_.5} parent=35 // pred_check_branch
        %243 = sbr.rel (%p241) target = $region44
      $region43: #{_lambda_.5} parent=35 // pred_region
        %v244 = vld [vmem:[%s220] sm:$0xf]
        %v245 = vld [vmem:[%s220 + $0x4] sm:$0xf]
        %v246 = vld [vmem:[%s220 + $0x8] sm:$0xf]
        %v247 = vld [vmem:[%s220 + $0xc] sm:$0xf]
        %v248 = vld [vmem:[%s220 + $0x10] sm:$0xf]
        %v249 = vld [vmem:[%s220 + $0x14] sm:$0xf]
        %v250 = vld [vmem:[%s220 + $0x18] sm:$0xf]
        %v251 = vld [vmem:[%s220 + $0x1c] sm:$0xf]
        %v252 = vld [vmem:[%s220 + $0x20] sm:$0xf]
        %v253 = vld [vmem:[%s220 + $0x24] sm:$0xf]
        %v254 = vld [vmem:[%s220 + $0x28] sm:$0xf]
        %v255 = vld [vmem:[%s220 + $0x2c] sm:$0xf]
        %v256 = vld [vmem:[%s220 + $0x30] sm:$0xf]
        %v257 = vld [vmem:[%s220 + $0x34] sm:$0xf]
        %v258 = vld [vmem:[%s220 + $0x38] sm:$0xf]
        %v259 = vld [vmem:[%s220 + $0x3c] sm:$0xf]
        %v260 = vld [vmem:[%s220 + $0x40] sm:$0xf]
        %v261 = vld [vmem:[%s220 + $0x44] sm:$0xf]
        %v262 = vld [vmem:[%s220 + $0x48] sm:$0xf]
        %v263 = vld [vmem:[%s220 + $0x4c] sm:$0xf]
        %v264 = vld [vmem:[%s220 + $0x50] sm:$0xf]
        %v265 = vld [vmem:[%s220 + $0x54] sm:$0xf]
        %v266 = vld [vmem:[%s220 + $0x58] sm:$0xf]
        %v267 = vld [vmem:[%s220 + $0x5c] sm:$0xf]
        %v268 = vld [vmem:[%s220 + $0x60] sm:$0xf]
        %v269 = vld [vmem:[%s220 + $0x64] sm:$0xf]
        %v270 = vld [vmem:[%s220 + $0x68] sm:$0xf]
        %v271 = vld [vmem:[%s220 + $0x6c] sm:$0xf]
        %v272 = vld [vmem:[%s220 + $0x70] sm:$0xf]
        %v273 = vld [vmem:[%s220 + $0x74] sm:$0xf]
        %v274 = vld [vmem:[%s220 + $0x78] sm:$0xf]
        %v275 = vld [vmem:[%s220 + $0x7c] sm:$0xf]
        %v276 = vld [vmem:[%s220 + $0x80] sm:$0xf]
        %v277 = vld [vmem:[%s220 + $0x84] sm:$0xf]
        %v278 = vld [vmem:[%s220 + $0x88] sm:$0xf]
        %v279 = vld [vmem:[%s220 + $0x8c] sm:$0xf]
        %v280 = vld [vmem:[%s220 + $0x90] sm:$0xf]
        %v281 = vld [vmem:[%s220 + $0x94] sm:$0xf]
        %v282 = vld [vmem:[%s220 + $0x98] sm:$0xf]
        %v283 = vld [vmem:[%s220 + $0x9c] sm:$0xf]
        %v284 = vld [vmem:[%s220 + $0xa0] sm:$0xf]
        %v285 = vld [vmem:[%s220 + $0xa4] sm:$0xf]
        %v286 = vld [vmem:[%s220 + $0xa8] sm:$0xf]
        %v287 = vld [vmem:[%s220 + $0xac] sm:$0xf]
        %v288 = vld [vmem:[%s220 + $0xb0] sm:$0xf]
        %v289 = vld [vmem:[%s220 + $0xb4] sm:$0xf]
        %v290 = vld [vmem:[%s220 + $0xb8] sm:$0xf]
        %v291 = vld [vmem:[%s220 + $0xbc] sm:$0xf]
        %v292 = vld [vmem:[%s220 + $0xc0] sm:$0xf]
        %v293 = vld [vmem:[%s220 + $0xc4] sm:$0xf]
        %v294 = vld [vmem:[%s220 + $0xc8] sm:$0xf]
        %v295 = vld [vmem:[%s220 + $0xcc] sm:$0xf]
        %v296 = vld [vmem:[%s220 + $0xd0] sm:$0xf]
        %v297 = vld [vmem:[%s220 + $0xd4] sm:$0xf]
        %v298 = vld [vmem:[%s220 + $0xd8] sm:$0xf]
        %v299 = vld [vmem:[%s220 + $0xdc] sm:$0xf]
        %v300 = vld [vmem:[%s220 + $0xe0] sm:$0xf]
        %v301 = vld [vmem:[%s220 + $0xe4] sm:$0xf]
        %v302 = vld [vmem:[%s220 + $0xe8] sm:$0xf]
        %v303 = vld [vmem:[%s220 + $0xec] sm:$0xf]
        %v304 = vld [vmem:[%s220 + $0xf0] sm:$0xf]
        %v305 = vld [vmem:[%s220 + $0xf4] sm:$0xf]
        %v306 = vld [vmem:[%s220 + $0xf8] sm:$0xf]
        %v307 = vld [vmem:[%s220 + $0xfc] sm:$0xf]
        %v308 = vld [vmem:[%s1] sm:$0xf]
        %v309 = vld [vmem:[%s1 + $0x4] sm:$0xf]
        %v310 = vld [vmem:[%s1 + $0x8] sm:$0xf]
        %v311 = vld [vmem:[%s1 + $0xc] sm:$0xf]
        %v312 = vld [vmem:[%s1 + $0x10] sm:$0xf]
        %v313 = vld [vmem:[%s1 + $0x14] sm:$0xf]
        %v314 = vld [vmem:[%s1 + $0x18] sm:$0xf]
        %v315 = vld [vmem:[%s1 + $0x1c] sm:$0xf]
        %v316 = vld [vmem:[%s1 + $0x20] sm:$0xf]
        %v317 = vld [vmem:[%s1 + $0x24] sm:$0xf]
        %v318 = vld [vmem:[%s1 + $0x28] sm:$0xf]
        %v319 = vld [vmem:[%s1 + $0x2c] sm:$0xf]
        %v320 = vld [vmem:[%s1 + $0x30] sm:$0xf]
        %v321 = vld [vmem:[%s1 + $0x34] sm:$0xf]
        %v322 = vld [vmem:[%s1 + $0x38] sm:$0xf]
        %v323 = vld [vmem:[%s1 + $0x3c] sm:$0xf]
        %v388 = vunpack.c.l.b16 %v244
        %v389 = vunpack.c.l.b16 %v245
        %v390 = vunpack.c.l.b16 %v246
        %v391 = vunpack.c.l.b16 %v247
        %v392 = vunpack.c.l.b16 %v248
        %v393 = vunpack.c.l.b16 %v249
        %v394 = vunpack.c.l.b16 %v250
        %v395 = vunpack.c.l.b16 %v251
        %v396 = vunpack.c.l.b16 %v252
        %v397 = vunpack.c.l.b16 %v253
        %v398 = vunpack.c.l.b16 %v254
        %v399 = vunpack.c.l.b16 %v255
        %v400 = vunpack.c.l.b16 %v256
        %v401 = vunpack.c.l.b16 %v257
        %v402 = vunpack.c.l.b16 %v258
        %v403 = vunpack.c.l.b16 %v259
        %v404 = vunpack.c.l.b16 %v260
        %v405 = vunpack.c.l.b16 %v261
        %v406 = vunpack.c.l.b16 %v262
        %v407 = vunpack.c.l.b16 %v263
        %v408 = vunpack.c.l.b16 %v264
        %v409 = vunpack.c.l.b16 %v265
        %v410 = vunpack.c.l.b16 %v266
        %v411 = vunpack.c.l.b16 %v267
        %v412 = vunpack.c.l.b16 %v268
        %v413 = vunpack.c.l.b16 %v269
        %v414 = vunpack.c.l.b16 %v270
        %v415 = vunpack.c.l.b16 %v271
        %v416 = vunpack.c.l.b16 %v272
        %v417 = vunpack.c.l.b16 %v273
        %v418 = vunpack.c.l.b16 %v274
        %v419 = vunpack.c.l.b16 %v275
        %v420 = vunpack.c.l.b16 %v276
        %v421 = vunpack.c.l.b16 %v277
        %v422 = vunpack.c.l.b16 %v278
        %v423 = vunpack.c.l.b16 %v279
        %v424 = vunpack.c.l.b16 %v280
        %v425 = vunpack.c.l.b16 %v281
        %v426 = vunpack.c.l.b16 %v282
        %v427 = vunpack.c.l.b16 %v283
        %v428 = vunpack.c.l.b16 %v284
        %v429 = vunpack.c.l.b16 %v285
        %v430 = vunpack.c.l.b16 %v286
        %v431 = vunpack.c.l.b16 %v287
        %v432 = vunpack.c.l.b16 %v288
        %v433 = vunpack.c.l.b16 %v289
        %v434 = vunpack.c.l.b16 %v290
        %v435 = vunpack.c.l.b16 %v291
        %v436 = vunpack.c.l.b16 %v292
        %v437 = vunpack.c.l.b16 %v293
        %v438 = vunpack.c.l.b16 %v294
        %v439 = vunpack.c.l.b16 %v295
        %v440 = vunpack.c.l.b16 %v296
        %v441 = vunpack.c.l.b16 %v297
        %v442 = vunpack.c.l.b16 %v298
        %v443 = vunpack.c.l.b16 %v299
        %v444 = vunpack.c.l.b16 %v300
        %v445 = vunpack.c.l.b16 %v301
        %v446 = vunpack.c.l.b16 %v302
        %v447 = vunpack.c.l.b16 %v303
        %v448 = vunpack.c.l.b16 %v304
        %v449 = vunpack.c.l.b16 %v305
        %v450 = vunpack.c.l.b16 %v306
        %v451 = vunpack.c.l.b16 %v307
        %v452 = vpack.c.b16 %v389, %v388
        %v453 = vpack.c.b16 %v391, %v390
        %v454 = vpack.c.b16 %v393, %v392
        %v455 = vpack.c.b16 %v395, %v394
        %v456 = vpack.c.b16 %v397, %v396
        %v457 = vpack.c.b16 %v399, %v398
        %v458 = vpack.c.b16 %v401, %v400
        %v459 = vpack.c.b16 %v403, %v402
        %v460 = vpack.c.b16 %v405, %v404
        %v461 = vpack.c.b16 %v407, %v406
        %v462 = vpack.c.b16 %v409, %v408
        %v463 = vpack.c.b16 %v411, %v410
        %v464 = vpack.c.b16 %v413, %v412
        %v465 = vpack.c.b16 %v415, %v414
        %v466 = vpack.c.b16 %v417, %v416
        %v467 = vpack.c.b16 %v419, %v418
        %v468 = vpack.c.b16 %v421, %v420
        %v469 = vpack.c.b16 %v423, %v422
        %v470 = vpack.c.b16 %v425, %v424
        %v471 = vpack.c.b16 %v427, %v426
        %v472 = vpack.c.b16 %v429, %v428
        %v473 = vpack.c.b16 %v431, %v430
        %v474 = vpack.c.b16 %v433, %v432
        %v475 = vpack.c.b16 %v435, %v434
        %v476 = vpack.c.b16 %v437, %v436
        %v477 = vpack.c.b16 %v439, %v438
        %v478 = vpack.c.b16 %v441, %v440
        %v479 = vpack.c.b16 %v443, %v442
        %v480 = vpack.c.b16 %v445, %v444
        %v481 = vpack.c.b16 %v447, %v446
        %v482 = vpack.c.b16 %v449, %v448
        %v483 = vpack.c.b16 %v451, %v450
        %v532 = vunpack.c.l.b16 %v308
        %v533 = vunpack.c.l.b16 %v309
        %v534 = vunpack.c.l.b16 %v310
        %v535 = vunpack.c.l.b16 %v311
        %v536 = vunpack.c.l.b16 %v312
        %v537 = vunpack.c.l.b16 %v313
        %v538 = vunpack.c.l.b16 %v314
        %v539 = vunpack.c.l.b16 %v315
        %v540 = vunpack.c.l.b16 %v316
        %v541 = vunpack.c.l.b16 %v317
        %v542 = vunpack.c.l.b16 %v318
        %v543 = vunpack.c.l.b16 %v319
        %v544 = vunpack.c.l.b16 %v320
        %v545 = vunpack.c.l.b16 %v321
        %v546 = vunpack.c.l.b16 %v322
        %v547 = vunpack.c.l.b16 %v323
        %v548 = vpack.c.b16 %v533, %v532
        %v549 = vpack.c.b16 %v535, %v534
        %v550 = vpack.c.b16 %v537, %v536
        %v551 = vpack.c.b16 %v539, %v538
        %v552 = vpack.c.b16 %v541, %v540
        %v553 = vpack.c.b16 %v543, %v542
        %v554 = vpack.c.b16 %v545, %v544
        %v555 = vpack.c.b16 %v547, %v546
        %564 = vmatprep.subr.bf16.mxu0 0
        %565 = vmatpush1.bf16.msra.mxu0 %v548
        %566 = vmatprep.subr.bf16.mxu0 0
        %567 = vmatpush1.bf16.msra.mxu0 %v549
        %568 = vmatprep.subr.bf16.mxu0 0
        %569 = vmatpush1.bf16.msra.mxu0 %v550
        %570 = vmatprep.subr.bf16.mxu0 0
        %571 = vmatpush1.bf16.msra.mxu0 %v551
        %572 = vmatprep.subr.bf16.mxu0 0
        %573 = vmatpush1.bf16.msra.mxu0 %v552
        %574 = vmatprep.subr.bf16.mxu0 0
        %575 = vmatpush1.bf16.msra.mxu0 %v553
        %576 = vmatprep.subr.bf16.mxu0 0
        %577 = vmatpush1.bf16.msra.mxu0 %v554
        %578 = vmatprep.subr.bf16.mxu0 0
        %579 = vmatpush1.bf16.msra.mxu0 %v555
        %580 = vmatprep.subr.bf16.mxu0 0
        %581 = vmatpush1.bf16.msra.mxu0 0
        %582 = vmatprep.subr.bf16.mxu0 0
        %583 = vmatpush1.bf16.msra.mxu0 0
        %584 = vmatprep.subr.bf16.mxu0 0
        %585 = vmatpush1.bf16.msra.mxu0 0
        %586 = vmatprep.subr.bf16.mxu0 0
        %587 = vmatpush1.bf16.msra.mxu0 0
        %588 = vmatprep.subr.bf16.mxu0 0
        %589 = vmatpush1.bf16.msra.mxu0 0
        %590 = vmatprep.subr.bf16.mxu0 0
        %591 = vmatpush1.bf16.msra.mxu0 0
        %592 = vmatprep.subr.bf16.mxu0 0
        %593 = vmatpush1.bf16.msra.mxu0 0
        %594 = vmatprep.subr.bf16.mxu0 0
        %595 = vmatpush1.bf16.msra.mxu0 0
        %596 = vmatprep.mubr.bf16.mxu0 0
        %597 = vmatmul.mubr.bf16.gmra.mrb[0].mxu0 %v452
        %v598 = vpop.f32.mrb[0].mxu0
        %v599 = vadd.f32 0.0, %v598
        %v600 = vpop.f32.mrb[0].mxu0
        %v601 = vpop.f32.mrb[0].mxu0
        %v602 = vadd.f32 0.0, %v601
        %v603 = vpop.f32.mrb[0].mxu0
        %604 = vmatprep.mubr.bf16.mxu0 0
        %605 = vmatmul.mubr.bf16.gmra.mrb[0].mxu0 %v453
        %v606 = vpop.f32.mrb[0].mxu0
        %v607 = vadd.f32 0.0, %v606
        %v608 = vpop.f32.mrb[0].mxu0
        %v609 = vpop.f32.mrb[0].mxu0
        %v610 = vadd.f32 0.0, %v609
        %v611 = vpop.f32.mrb[0].mxu0
        %612 = vmatprep.mubr.bf16.mxu0 0
        %613 = vmatmul.mubr.bf16.gmra.mrb[0].mxu0 %v454
        %v614 = vpop.f32.mrb[0].mxu0
        %v615 = vadd.f32 0.0, %v614
        %v616 = vpop.f32.mrb[0].mxu0
        %v617 = vpop.f32.mrb[0].mxu0
        %v618 = vadd.f32 0.0, %v617
        %v619 = vpop.f32.mrb[0].mxu0
        %620 = vmatprep.mubr.bf16.mxu0 0
        %621 = vmatmul.mubr.bf16.gmra.mrb[0].mxu0 %v455
        %v622 = vpop.f32.mrb[0].mxu0
        %v623 = vadd.f32 0.0, %v622
        %v624 = vpop.f32.mrb[0].mxu0
        %v625 = vpop.f32.mrb[0].mxu0
        %v626 = vadd.f32 0.0, %v625
        %v627 = vpop.f32.mrb[0].mxu0
        %628 = vmatprep.mubr.bf16.mxu0 0
        %629 = vmatmul.mubr.bf16.gmra.mrb[0].mxu0 %v456
        %v630 = vpop.f32.mrb[0].mxu0
        %v631 = vadd.f32 0.0, %v630
        %v632 = vpop.f32.mrb[0].mxu0
        %v633 = vpop.f32.mrb[0].mxu0
        %v634 = vadd.f32 0.0, %v633
        %v635 = vpop.f32.mrb[0].mxu0
        %636 = vmatprep.mubr.bf16.mxu0 0
        %637 = vmatmul.mubr.bf16.gmra.mrb[0].mxu0 %v457
        %v638 = vpop.f32.mrb[0].mxu0
        %v639 = vadd.f32 0.0, %v638
        %v640 = vpop.f32.mrb[0].mxu0
        %v641 = vpop.f32.mrb[0].mxu0
        %v642 = vadd.f32 0.0, %v641
        %v643 = vpop.f32.mrb[0].mxu0
        %644 = vmatprep.mubr.bf16.mxu0 0
        %645 = vmatmul.mubr.bf16.gmra.mrb[0].mxu0 %v458
        %v646 = vpop.f32.mrb[0].mxu0
        %v647 = vadd.f32 0.0, %v646
        %v648 = vpop.f32.mrb[0].mxu0
        %v649 = vpop.f32.mrb[0].mxu0
        %v650 = vadd.f32 0.0, %v649
        %v651 = vpop.f32.mrb[0].mxu0
        %652 = vmatprep.mubr.bf16.mxu0 0
        %653 = vmatmul.mubr.bf16.gmra.mrb[0].mxu0 %v459
        %v654 = vpop.f32.mrb[0].mxu0
        %v655 = vadd.f32 0.0, %v654
        %v656 = vpop.f32.mrb[0].mxu0
        %v657 = vpop.f32.mrb[0].mxu0
        %v658 = vadd.f32 0.0, %v657
        %v659 = vpop.f32.mrb[0].mxu0
        %660 = vmatprep.mubr.bf16.mxu0 0
        %661 = vmatmul.mubr.bf16.gmra.mrb[0].mxu0 %v460
        %v662 = vpop.f32.mrb[0].mxu0
        %v663 = vadd.f32 0.0, %v662
        %v664 = vpop.f32.mrb[0].mxu0
        %v665 = vpop.f32.mrb[0].mxu0
        %v666 = vadd.f32 0.0, %v665
        %v667 = vpop.f32.mrb[0].mxu0
        %668 = vmatprep.mubr.bf16.mxu0 0
        %669 = vmatmul.mubr.bf16.gmra.mrb[0].mxu0 %v461
        %v670 = vpop.f32.mrb[0].mxu0
        %v671 = vadd.f32 0.0, %v670
        %v672 = vpop.f32.mrb[0].mxu0
        %v673 = vpop.f32.mrb[0].mxu0
        %v674 = vadd.f32 0.0, %v673
        %v675 = vpop.f32.mrb[0].mxu0
        %676 = vmatprep.mubr.bf16.mxu0 0
        %677 = vmatmul.mubr.bf16.gmra.mrb[0].mxu0 %v462
        %v678 = vpop.f32.mrb[0].mxu0
        %v679 = vadd.f32 0.0, %v678
        %v680 = vpop.f32.mrb[0].mxu0
        %v681 = vpop.f32.mrb[0].mxu0
        %v682 = vadd.f32 0.0, %v681
        %v683 = vpop.f32.mrb[0].mxu0
        %684 = vmatprep.mubr.bf16.mxu0 0
        %685 = vmatmul.mubr.bf16.gmra.mrb[0].mxu0 %v463
        %v686 = vpop.f32.mrb[0].mxu0
        %v687 = vadd.f32 0.0, %v686
        %v688 = vpop.f32.mrb[0].mxu0
        %v689 = vpop.f32.mrb[0].mxu0
        %v690 = vadd.f32 0.0, %v689
        %v691 = vpop.f32.mrb[0].mxu0
        %692 = vmatprep.mubr.bf16.mxu0 0
        %693 = vmatmul.mubr.bf16.gmra.mrb[0].mxu0 %v464
        %v694 = vpop.f32.mrb[0].mxu0
        %v695 = vadd.f32 0.0, %v694
        %v696 = vpop.f32.mrb[0].mxu0
        %v697 = vpop.f32.mrb[0].mxu0
        %v698 = vadd.f32 0.0, %v697
        %v699 = vpop.f32.mrb[0].mxu0
        %700 = vmatprep.mubr.bf16.mxu0 0
        %701 = vmatmul.mubr.bf16.gmra.mrb[0].mxu0 %v465
        %v702 = vpop.f32.mrb[0].mxu0
        %v703 = vadd.f32 0.0, %v702
        %v704 = vpop.f32.mrb[0].mxu0
        %v705 = vpop.f32.mrb[0].mxu0
        %v706 = vadd.f32 0.0, %v705
        %v707 = vpop.f32.mrb[0].mxu0
        %708 = vmatprep.mubr.bf16.mxu0 0
        %709 = vmatmul.mubr.bf16.gmra.mrb[0].mxu0 %v466
        %v710 = vpop.f32.mrb[0].mxu0
        %v711 = vadd.f32 0.0, %v710
        %v712 = vpop.f32.mrb[0].mxu0
        %v713 = vpop.f32.mrb[0].mxu0
        %v714 = vadd.f32 0.0, %v713
        %v715 = vpop.f32.mrb[0].mxu0
        %716 = vmatprep.mubr.bf16.mxu0 0
        %717 = vmatmul.mubr.bf16.gmra.mrb[0].mxu0 %v467
        %v718 = vpop.f32.mrb[0].mxu0
        %v719 = vadd.f32 0.0, %v718
        %v720 = vpop.f32.mrb[0].mxu0
        %v721 = vpop.f32.mrb[0].mxu0
        %v722 = vadd.f32 0.0, %v721
        %v723 = vpop.f32.mrb[0].mxu0
        %724 = vmatprep.mubr.bf16.mxu0 0
        %725 = vmatmul.mubr.bf16.gmra.mrb[0].mxu0 %v468
        %v726 = vpop.f32.mrb[0].mxu0
        %v727 = vadd.f32 0.0, %v726
        %v728 = vpop.f32.mrb[0].mxu0
        %v729 = vpop.f32.mrb[0].mxu0
        %v730 = vadd.f32 0.0, %v729
        %v731 = vpop.f32.mrb[0].mxu0
        %732 = vmatprep.mubr.bf16.mxu0 0
        %733 = vmatmul.mubr.bf16.gmra.mrb[0].mxu0 %v469
        %v734 = vpop.f32.mrb[0].mxu0
        %v735 = vadd.f32 0.0, %v734
        %v736 = vpop.f32.mrb[0].mxu0
        %v737 = vpop.f32.mrb[0].mxu0
        %v738 = vadd.f32 0.0, %v737
        %v739 = vpop.f32.mrb[0].mxu0
        %740 = vmatprep.mubr.bf16.mxu0 0
        %741 = vmatmul.mubr.bf16.gmra.mrb[0].mxu0 %v470
        %v742 = vpop.f32.mrb[0].mxu0
        %v743 = vadd.f32 0.0, %v742
        %v744 = vpop.f32.mrb[0].mxu0
        %v745 = vpop.f32.mrb[0].mxu0
        %v746 = vadd.f32 0.0, %v745
        %v747 = vpop.f32.mrb[0].mxu0
        %748 = vmatprep.mubr.bf16.mxu0 0
        %749 = vmatmul.mubr.bf16.gmra.mrb[0].mxu0 %v471
        %v750 = vpop.f32.mrb[0].mxu0
        %v751 = vadd.f32 0.0, %v750
        %v752 = vpop.f32.mrb[0].mxu0
        %v753 = vpop.f32.mrb[0].mxu0
        %v754 = vadd.f32 0.0, %v753
        %v755 = vpop.f32.mrb[0].mxu0
        %756 = vmatprep.mubr.bf16.mxu0 0
        %757 = vmatmul.mubr.bf16.gmra.mrb[0].mxu0 %v472
        %v758 = vpop.f32.mrb[0].mxu0
        %v759 = vadd.f32 0.0, %v758
        %v760 = vpop.f32.mrb[0].mxu0
        %v761 = vpop.f32.mrb[0].mxu0
        %v762 = vadd.f32 0.0, %v761
        %v763 = vpop.f32.mrb[0].mxu0
        %764 = vmatprep.mubr.bf16.mxu0 0
        %765 = vmatmul.mubr.bf16.gmra.mrb[0].mxu0 %v473
        %v766 = vpop.f32.mrb[0].mxu0
        %v767 = vadd.f32 0.0, %v766
        %v768 = vpop.f32.mrb[0].mxu0
        %v769 = vpop.f32.mrb[0].mxu0
        %v770 = vadd.f32 0.0, %v769
        %v771 = vpop.f32.mrb[0].mxu0
        %772 = vmatprep.mubr.bf16.mxu0 0
        %773 = vmatmul.mubr.bf16.gmra.mrb[0].mxu0 %v474
        %v774 = vpop.f32.mrb[0].mxu0
        %v775 = vadd.f32 0.0, %v774
        %v776 = vpop.f32.mrb[0].mxu0
        %v777 = vpop.f32.mrb[0].mxu0
        %v778 = vadd.f32 0.0, %v777
        %v779 = vpop.f32.mrb[0].mxu0
        %780 = vmatprep.mubr.bf16.mxu0 0
        %781 = vmatmul.mubr.bf16.gmra.mrb[0].mxu0 %v475
        %v782 = vpop.f32.mrb[0].mxu0
        %v783 = vadd.f32 0.0, %v782
        %v784 = vpop.f32.mrb[0].mxu0
        %v785 = vpop.f32.mrb[0].mxu0
        %v786 = vadd.f32 0.0, %v785
        %v787 = vpop.f32.mrb[0].mxu0
        %788 = vmatprep.mubr.bf16.mxu0 0
        %789 = vmatmul.mubr.bf16.gmra.mrb[0].mxu0 %v476
        %v790 = vpop.f32.mrb[0].mxu0
        %v791 = vadd.f32 0.0, %v790
        %v792 = vpop.f32.mrb[0].mxu0
        %v793 = vpop.f32.mrb[0].mxu0
        %v794 = vadd.f32 0.0, %v793
        %v795 = vpop.f32.mrb[0].mxu0
        %796 = vmatprep.mubr.bf16.mxu0 0
        %797 = vmatmul.mubr.bf16.gmra.mrb[0].mxu0 %v477
        %v798 = vpop.f32.mrb[0].mxu0
        %v799 = vadd.f32 0.0, %v798
        %v800 = vpop.f32.mrb[0].mxu0
        %v801 = vpop.f32.mrb[0].mxu0
        %v802 = vadd.f32 0.0, %v801
        %v803 = vpop.f32.mrb[0].mxu0
        %804 = vmatprep.mubr.bf16.mxu0 0
        %805 = vmatmul.mubr.bf16.gmra.mrb[0].mxu0 %v478
        %v806 = vpop.f32.mrb[0].mxu0
        %v807 = vadd.f32 0.0, %v806
        %v808 = vpop.f32.mrb[0].mxu0
        %v809 = vpop.f32.mrb[0].mxu0
        %v810 = vadd.f32 0.0, %v809
        %v811 = vpop.f32.mrb[0].mxu0
        %812 = vmatprep.mubr.bf16.mxu0 0
        %813 = vmatmul.mubr.bf16.gmra.mrb[0].mxu0 %v479
        %v814 = vpop.f32.mrb[0].mxu0
        %v815 = vadd.f32 0.0, %v814
        %v816 = vpop.f32.mrb[0].mxu0
        %v817 = vpop.f32.mrb[0].mxu0
        %v818 = vadd.f32 0.0, %v817
        %v819 = vpop.f32.mrb[0].mxu0
        %820 = vmatprep.mubr.bf16.mxu0 0
        %821 = vmatmul.mubr.bf16.gmra.mrb[0].mxu0 %v480
        %v822 = vpop.f32.mrb[0].mxu0
        %v823 = vadd.f32 0.0, %v822
        %v824 = vpop.f32.mrb[0].mxu0
        %v825 = vpop.f32.mrb[0].mxu0
        %v826 = vadd.f32 0.0, %v825
        %v827 = vpop.f32.mrb[0].mxu0
        %828 = vmatprep.mubr.bf16.mxu0 0
        %829 = vmatmul.mubr.bf16.gmra.mrb[0].mxu0 %v481
        %v830 = vpop.f32.mrb[0].mxu0
        %v831 = vadd.f32 0.0, %v830
        %v832 = vpop.f32.mrb[0].mxu0
        %v833 = vpop.f32.mrb[0].mxu0
        %v834 = vadd.f32 0.0, %v833
        %v835 = vpop.f32.mrb[0].mxu0
        %836 = vmatprep.mubr.bf16.mxu0 0
        %837 = vmatmul.mubr.bf16.gmra.mrb[0].mxu0 %v482
        %v838 = vpop.f32.mrb[0].mxu0
        %v839 = vadd.f32 0.0, %v838
        %v840 = vpop.f32.mrb[0].mxu0
        %v841 = vpop.f32.mrb[0].mxu0
        %v842 = vadd.f32 0.0, %v841
        %v843 = vpop.f32.mrb[0].mxu0
        %844 = vmatprep.mubr.bf16.mxu0 0
        %845 = vmatmul.mubr.bf16.gmra.mrb[0].mxu0 %v483
        %v846 = vpop.f32.mrb[0].mxu0
        %v847 = vadd.f32 0.0, %v846
        %v848 = vpop.f32.mrb[0].mxu0
        %v849 = vpop.f32.mrb[0].mxu0
        %v850 = vadd.f32 0.0, %v849
        %v851 = vpop.f32.mrb[0].mxu0
        %852 = vdwg.mxu0
        %s853 = smul.u32 %s20, 512
        %s854 = scalar_lea.vmem [#allocation2], %s853
        %855 = vst [vmem:[%s854] sm:$0xff] %v599
        %856 = vst [vmem:[%s854 + $0x8] sm:$0xff] %v602
        %857 = vst [vmem:[%s854 + $0x10] sm:$0xff] %v607
        %858 = vst [vmem:[%s854 + $0x18] sm:$0xff] %v610
        %859 = vst [vmem:[%s854 + $0x20] sm:$0xff] %v615
        %860 = vst [vmem:[%s854 + $0x28] sm:$0xff] %v618
        %861 = vst [vmem:[%s854 + $0x30] sm:$0xff] %v623
        %862 = vst [vmem:[%s854 + $0x38] sm:$0xff] %v626
        %863 = vst [vmem:[%s854 + $0x40] sm:$0xff] %v631
        %864 = vst [vmem:[%s854 + $0x48] sm:$0xff] %v634
        %865 = vst [vmem:[%s854 + $0x50] sm:$0xff] %v639
        %866 = vst [vmem:[%s854 + $0x58] sm:$0xff] %v642
        %867 = vst [vmem:[%s854 + $0x60] sm:$0xff] %v647
        %868 = vst [vmem:[%s854 + $0x68] sm:$0xff] %v650
        %869 = vst [vmem:[%s854 + $0x70] sm:$0xff] %v655
        %870 = vst [vmem:[%s854 + $0x78] sm:$0xff] %v658
        %871 = vst [vmem:[%s854 + $0x80] sm:$0xff] %v663
        %872 = vst [vmem:[%s854 + $0x88] sm:$0xff] %v666
        %873 = vst [vmem:[%s854 + $0x90] sm:$0xff] %v671
        %874 = vst [vmem:[%s854 + $0x98] sm:$0xff] %v674
        %875 = vst [vmem:[%s854 + $0xa0] sm:$0xff] %v679
        %876 = vst [vmem:[%s854 + $0xa8] sm:$0xff] %v682
        %877 = vst [vmem:[%s854 + $0xb0] sm:$0xff] %v687
        %878 = vst [vmem:[%s854 + $0xb8] sm:$0xff] %v690
        %879 = vst [vmem:[%s854 + $0xc0] sm:$0xff] %v695
        %880 = vst [vmem:[%s854 + $0xc8] sm:$0xff] %v698
        %881 = vst [vmem:[%s854 + $0xd0] sm:$0xff] %v703
        %882 = vst [vmem:[%s854 + $0xd8] sm:$0xff] %v706
        %883 = vst [vmem:[%s854 + $0xe0] sm:$0xff] %v711
        %884 = vst [vmem:[%s854 + $0xe8] sm:$0xff] %v714
        %885 = vst [vmem:[%s854 + $0xf0] sm:$0xff] %v719
        %886 = vst [vmem:[%s854 + $0xf8] sm:$0xff] %v722
        %887 = vst [vmem:[%s854 + $0x100] sm:$0xff] %v727
        %888 = vst [vmem:[%s854 + $0x108] sm:$0xff] %v730
        %889 = vst [vmem:[%s854 + $0x110] sm:$0xff] %v735
        %890 = vst [vmem:[%s854 + $0x118] sm:$0xff] %v738
        %891 = vst [vmem:[%s854 + $0x120] sm:$0xff] %v743
        %892 = vst [vmem:[%s854 + $0x128] sm:$0xff] %v746
        %893 = vst [vmem:[%s854 + $0x130] sm:$0xff] %v751
        %894 = vst [vmem:[%s854 + $0x138] sm:$0xff] %v754
        %895 = vst [vmem:[%s854 + $0x140] sm:$0xff] %v759
        %896 = vst [vmem:[%s854 + $0x148] sm:$0xff] %v762
        %897 = vst [vmem:[%s854 + $0x150] sm:$0xff] %v767
        %898 = vst [vmem:[%s854 + $0x158] sm:$0xff] %v770
        %899 = vst [vmem:[%s854 + $0x160] sm:$0xff] %v775
        %900 = vst [vmem:[%s854 + $0x168] sm:$0xff] %v778
        %901 = vst [vmem:[%s854 + $0x170] sm:$0xff] %v783
        %902 = vst [vmem:[%s854 + $0x178] sm:$0xff] %v786
        %903 = vst [vmem:[%s854 + $0x180] sm:$0xff] %v791
        %904 = vst [vmem:[%s854 + $0x188] sm:$0xff] %v794
        %905 = vst [vmem:[%s854 + $0x190] sm:$0xff] %v799
        %906 = vst [vmem:[%s854 + $0x198] sm:$0xff] %v802
        %907 = vst [vmem:[%s854 + $0x1a0] sm:$0xff] %v807
        %908 = vst [vmem:[%s854 + $0x1a8] sm:$0xff] %v810
        %909 = vst [vmem:[%s854 + $0x1b0] sm:$0xff] %v815
        %910 = vst [vmem:[%s854 + $0x1b8] sm:$0xff] %v818
        %911 = vst [vmem:[%s854 + $0x1c0] sm:$0xff] %v823
        %912 = vst [vmem:[%s854 + $0x1c8] sm:$0xff] %v826
        %913 = vst [vmem:[%s854 + $0x1d0] sm:$0xff] %v831
        %914 = vst [vmem:[%s854 + $0x1d8] sm:$0xff] %v834
        %915 = vst [vmem:[%s854 + $0x1e0] sm:$0xff] %v839
        %916 = vst [vmem:[%s854 + $0x1e8] sm:$0xff] %v842
        %917 = vst [vmem:[%s854 + $0x1f0] sm:$0xff] %v847
        %918 = vst [vmem:[%s854 + $0x1f8] sm:$0xff] %v850
        %v919 = vld [vmem:[#allocation3] sm:$0x1]
        %v920 = vadd.f32 %v599, %v602
        %v921 = vadd.f32 %v920, %v607
        %v922 = vadd.f32 %v921, %v610
        %v923 = vadd.f32 %v922, %v615
        %v924 = vadd.f32 %v923, %v618
        %v925 = vadd.f32 %v924, %v623
        %v926 = vadd.f32 %v925, %v626
        %v927 = vadd.f32 %v926, %v631
        %v928 = vadd.f32 %v927, %v634
        %v929 = vadd.f32 %v928, %v639
        %v930 = vadd.f32 %v929, %v642
        %v931 = vadd.f32 %v930, %v647
        %v932 = vadd.f32 %v931, %v650
        %v933 = vadd.f32 %v932, %v655
        %v934 = vadd.f32 %v933, %v658
        %v935 = vadd.f32 %v934, %v663
        %v936 = vadd.f32 %v935, %v666
        %v937 = vadd.f32 %v936, %v671
        %v938 = vadd.f32 %v937, %v674
        %v939 = vadd.f32 %v938, %v679
        %v940 = vadd.f32 %v939, %v682
        %v941 = vadd.f32 %v940, %v687
        %v942 = vadd.f32 %v941, %v690
        %v943 = vadd.f32 %v942, %v695
        %v944 = vadd.f32 %v943, %v698
        %v945 = vadd.f32 %v944, %v703
        %v946 = vadd.f32 %v945, %v706
        %v947 = vadd.f32 %v946, %v711
        %v948 = vadd.f32 %v947, %v714
        %v949 = vadd.f32 %v948, %v719
        %v950 = vadd.f32 %v949, %v722
        %v951 = vadd.f32 %v950, %v727
        %v952 = vadd.f32 %v951, %v730
        %v953 = vadd.f32 %v952, %v735
        %v954 = vadd.f32 %v953, %v738
        %v955 = vadd.f32 %v954, %v743
        %v956 = vadd.f32 %v955, %v746
        %v957 = vadd.f32 %v956, %v751
        %v958 = vadd.f32 %v957, %v754
        %v959 = vadd.f32 %v958, %v759
        %v960 = vadd.f32 %v959, %v762
        %v961 = vadd.f32 %v960, %v767
        %v962 = vadd.f32 %v961, %v770
        %v963 = vadd.f32 %v962, %v775
        %v964 = vadd.f32 %v963, %v778
        %v965 = vadd.f32 %v964, %v783
        %v966 = vadd.f32 %v965, %v786
        %v967 = vadd.f32 %v966, %v791
        %v968 = vadd.f32 %v967, %v794
        %v969 = vadd.f32 %v968, %v799
        %v970 = vadd.f32 %v969, %v802
        %v971 = vadd.f32 %v970, %v807
        %v972 = vadd.f32 %v971, %v810
        %v973 = vadd.f32 %v972, %v815
        %v974 = vadd.f32 %v973, %v818
        %v975 = vadd.f32 %v974, %v823
        %v976 = vadd.f32 %v975, %v826
        %v977 = vadd.f32 %v976, %v831
        %v978 = vadd.f32 %v977, %v834
        %v979 = vadd.f32 %v978, %v839
        %v980 = vadd.f32 %v979, %v842
        %v981 = vadd.f32 %v980, %v847
        %v982 = vadd.f32 %v981, %v850
        %v983 = vrot.slane %v982, 4
        %v984 = vadd.f32 %v982, %v983
        %v985 = vrot.slane %v984, 2
        %v986 = vadd.f32 %v984, %v985
        %v987 = vrot.slane %v986, 1
        %v988 = vadd.f32 %v986, %v987
        %v989 = vadd.f32 %v919, %v988
        %990 = vst [vmem:[#allocation3] sm:$0x1] %v989
        %v991 = vld [vmem:[#allocation4] sm:$0x1]
        %v992 = vmul.f32 %v599, %v599
        %v993 = vmul.f32 %v602, %v602
        %v994 = vmul.f32 %v607, %v607
        %v995 = vmul.f32 %v610, %v610
        %v996 = vmul.f32 %v615, %v615
        %v997 = vmul.f32 %v618, %v618
        %v998 = vmul.f32 %v623, %v623
        %v999 = vmul.f32 %v626, %v626
        %v1000 = vmul.f32 %v631, %v631
        %v1001 = vmul.f32 %v634, %v634
        %v1002 = vmul.f32 %v639, %v639
        %v1003 = vmul.f32 %v642, %v642
        %v1004 = vmul.f32 %v647, %v647
        %v1005 = vmul.f32 %v650, %v650
        %v1006 = vmul.f32 %v655, %v655
        %v1007 = vmul.f32 %v658, %v658
        %v1008 = vmul.f32 %v663, %v663
        %v1009 = vmul.f32 %v666, %v666
        %v1010 = vmul.f32 %v671, %v671
        %v1011 = vmul.f32 %v674, %v674
        %v1012 = vmul.f32 %v679, %v679
        %v1013 = vmul.f32 %v682, %v682
        %v1014 = vmul.f32 %v687, %v687
        %v1015 = vmul.f32 %v690, %v690
        %v1016 = vmul.f32 %v695, %v695
        %v1017 = vmul.f32 %v698, %v698
        %v1018 = vmul.f32 %v703, %v703
        %v1019 = vmul.f32 %v706, %v706
        %v1020 = vmul.f32 %v711, %v711
        %v1021 = vmul.f32 %v714, %v714
        %v1022 = vmul.f32 %v719, %v719
        %v1023 = vmul.f32 %v722, %v722
        %v1024 = vmul.f32 %v727, %v727
        %v1025 = vmul.f32 %v730, %v730
        %v1026 = vmul.f32 %v735, %v735
        %v1027 = vmul.f32 %v738, %v738
        %v1028 = vmul.f32 %v743, %v743
        %v1029 = vmul.f32 %v746, %v746
        %v1030 = vmul.f32 %v751, %v751
        %v1031 = vmul.f32 %v754, %v754
        %v1032 = vmul.f32 %v759, %v759
        %v1033 = vmul.f32 %v762, %v762
        %v1034 = vmul.f32 %v767, %v767
        %v1035 = vmul.f32 %v770, %v770
        %v1036 = vmul.f32 %v775, %v775
        %v1037 = vmul.f32 %v778, %v778
        %v1038 = vmul.f32 %v783, %v783
        %v1039 = vmul.f32 %v786, %v786
        %v1040 = vmul.f32 %v791, %v791
        %v1041 = vmul.f32 %v794, %v794
        %v1042 = vmul.f32 %v799, %v799
        %v1043 = vmul.f32 %v802, %v802
        %v1044 = vmul.f32 %v807, %v807
        %v1045 = vmul.f32 %v810, %v810
        %v1046 = vmul.f32 %v815, %v815
        %v1047 = vmul.f32 %v818, %v818
        %v1048 = vmul.f32 %v823, %v823
        %v1049 = vmul.f32 %v826, %v826
        %v1050 = vmul.f32 %v831, %v831
        %v1051 = vmul.f32 %v834, %v834
        %v1052 = vmul.f32 %v839, %v839
        %v1053 = vmul.f32 %v842, %v842
        %v1054 = vmul.f32 %v847, %v847
        %v1055 = vmul.f32 %v850, %v850
        %v1056 = vadd.f32 %v992, %v993
        %v1057 = vadd.f32 %v1056, %v994
        %v1058 = vadd.f32 %v1057, %v995
        %v1059 = vadd.f32 %v1058, %v996
        %v1060 = vadd.f32 %v1059, %v997
        %v1061 = vadd.f32 %v1060, %v998
        %v1062 = vadd.f32 %v1061, %v999
        %v1063 = vadd.f32 %v1062, %v1000
        %v1064 = vadd.f32 %v1063, %v1001
        %v1065 = vadd.f32 %v1064, %v1002
        %v1066 = vadd.f32 %v1065, %v1003
        %v1067 = vadd.f32 %v1066, %v1004
        %v1068 = vadd.f32 %v1067, %v1005
        %v1069 = vadd.f32 %v1068, %v1006
        %v1070 = vadd.f32 %v1069, %v1007
        %v1071 = vadd.f32 %v1070, %v1008
        %v1072 = vadd.f32 %v1071, %v1009
        %v1073 = vadd.f32 %v1072, %v1010
        %v1074 = vadd.f32 %v1073, %v1011
        %v1075 = vadd.f32 %v1074, %v1012
        %v1076 = vadd.f32 %v1075, %v1013
        %v1077 = vadd.f32 %v1076, %v1014
        %v1078 = vadd.f32 %v1077, %v1015
        %v1079 = vadd.f32 %v1078, %v1016
        %v1080 = vadd.f32 %v1079, %v1017
        %v1081 = vadd.f32 %v1080, %v1018
        %v1082 = vadd.f32 %v1081, %v1019
        %v1083 = vadd.f32 %v1082, %v1020
        %v1084 = vadd.f32 %v1083, %v1021
        %v1085 = vadd.f32 %v1084, %v1022
        %v1086 = vadd.f32 %v1085, %v1023
        %v1087 = vadd.f32 %v1086, %v1024
        %v1088 = vadd.f32 %v1087, %v1025
        %v1089 = vadd.f32 %v1088, %v1026
        %v1090 = vadd.f32 %v1089, %v1027
        %v1091 = vadd.f32 %v1090, %v1028
        %v1092 = vadd.f32 %v1091, %v1029
        %v1093 = vadd.f32 %v1092, %v1030
        %v1094 = vadd.f32 %v1093, %v1031
        %v1095 = vadd.f32 %v1094, %v1032
        %v1096 = vadd.f32 %v1095, %v1033
        %v1097 = vadd.f32 %v1096, %v1034
        %v1098 = vadd.f32 %v1097, %v1035
        %v1099 = vadd.f32 %v1098, %v1036
        %v1100 = vadd.f32 %v1099, %v1037
        %v1101 = vadd.f32 %v1100, %v1038
        %v1102 = vadd.f32 %v1101, %v1039
        %v1103 = vadd.f32 %v1102, %v1040
        %v1104 = vadd.f32 %v1103, %v1041
        %v1105 = vadd.f32 %v1104, %v1042
        %v1106 = vadd.f32 %v1105, %v1043
        %v1107 = vadd.f32 %v1106, %v1044
        %v1108 = vadd.f32 %v1107, %v1045
        %v1109 = vadd.f32 %v1108, %v1046
        %v1110 = vadd.f32 %v1109, %v1047
        %v1111 = vadd.f32 %v1110, %v1048
        %v1112 = vadd.f32 %v1111, %v1049
        %v1113 = vadd.f32 %v1112, %v1050
        %v1114 = vadd.f32 %v1113, %v1051
        %v1115 = vadd.f32 %v1114, %v1052
        %v1116 = vadd.f32 %v1115, %v1053
        %v1117 = vadd.f32 %v1116, %v1054
        %v1118 = vadd.f32 %v1117, %v1055
        %v1119 = vrot.slane %v1118, 4
        %v1120 = vadd.f32 %v1118, %v1119
        %v1121 = vrot.slane %v1120, 2
        %v1122 = vadd.f32 %v1120, %v1121
        %v1123 = vrot.slane %v1122, 1
        %v1124 = vadd.f32 %v1122, %v1123
        %v1125 = vadd.f32 %v991, %v1124
        %1126 = vst [vmem:[#allocation4] sm:$0x1] %v1125
      $region44: #{_lambda_.5} parent=35 // pred_fallthru
        _
      %p1127 = scmp.eq.s32.totalorder %s19, 1
      %p1128 = pnand %p1127, %p234
      %p1129 = pneg %p1128
      // Predicated region
      $region45: #{_lambda_.5} parent=35 // pred_check
        _
      $region46: #{_lambda_.5} parent=35 // pred_check_branch
        %1131 = sbr.rel (%p1128) target = $region48
      $region47: #{_lambda_.5} parent=35 // pred_region
        %v1132 = vld [vmem:[#allocation3] sm:$0x1]
        %v1133 = vmul.f32 %v1132, 0.00048828125
        %v1134 = vld [vmem:[#allocation4] sm:$0x1]
        %v1135 = vmul.f32 %v1134, 0.00048828125
        %v1136 = vmul.f32 %v1133, %v1133
        %v1137 = vsub.f32 %v1135, %v1136
        %v1138 = vmax.f32 %v1137, 0.0
        %v1139 = vld [vmem:[%s2] sm:$0x1]
        %v1140 = vadd.f32 %v1138, 1e-05
        %v1141 = vrsqrt.pop %v1140
        %v1142 = vmul.f32 %v1139, %v1141
        %1143 = vst [vmem:[#allocation5] sm:$0x1] %v1142
        %v1144 = vld [vmem:[%s3] sm:$0x1]
        %v1145 = vmul.f32 %v1133, %v1142
        %v1146 = vsub.f32 %v1144, %v1145
        %s1147 = scalar_lea.vmem [#allocation5], 1
        %1148 = vst [vmem:[%s1147] sm:$0x1] %v1146
      $region48: #{_lambda_.5} parent=35 // pred_fallthru
        _
      // Predicated region
      $region49: #{_lambda_.5} parent=35 // pred_check
        %p1149 = pneg %p1127
      $region50: #{_lambda_.5} parent=35 // pred_check_branch
        %1151 = sbr.rel (%p1149) target = $region52
      $region51: #{_lambda_.5} parent=35 // pred_region
        %s1152 = smul.u32 %s20, 512
        %s1153 = scalar_lea.vmem [#allocation2], %s1152
        %v1154 = vld [vmem:[%s1153] sm:$0xff]
        %v1155 = vld [vmem:[%s1153 + $0x8] sm:$0xff]
        %v1156 = vld [vmem:[%s1153 + $0x10] sm:$0xff]
        %v1157 = vld [vmem:[%s1153 + $0x18] sm:$0xff]
        %v1158 = vld [vmem:[%s1153 + $0x20] sm:$0xff]
        %v1159 = vld [vmem:[%s1153 + $0x28] sm:$0xff]
        %v1160 = vld [vmem:[%s1153 + $0x30] sm:$0xff]
        %v1161 = vld [vmem:[%s1153 + $0x38] sm:$0xff]
        %v1162 = vld [vmem:[%s1153 + $0x40] sm:$0xff]
        %v1163 = vld [vmem:[%s1153 + $0x48] sm:$0xff]
        %v1164 = vld [vmem:[%s1153 + $0x50] sm:$0xff]
        %v1165 = vld [vmem:[%s1153 + $0x58] sm:$0xff]
        %v1166 = vld [vmem:[%s1153 + $0x60] sm:$0xff]
        %v1167 = vld [vmem:[%s1153 + $0x68] sm:$0xff]
        %v1168 = vld [vmem:[%s1153 + $0x70] sm:$0xff]
        %v1169 = vld [vmem:[%s1153 + $0x78] sm:$0xff]
        %v1170 = vld [vmem:[%s1153 + $0x80] sm:$0xff]
        %v1171 = vld [vmem:[%s1153 + $0x88] sm:$0xff]
        %v1172 = vld [vmem:[%s1153 + $0x90] sm:$0xff]
        %v1173 = vld [vmem:[%s1153 + $0x98] sm:$0xff]
        %v1174 = vld [vmem:[%s1153 + $0xa0] sm:$0xff]
        %v1175 = vld [vmem:[%s1153 + $0xa8] sm:$0xff]
        %v1176 = vld [vmem:[%s1153 + $0xb0] sm:$0xff]
        %v1177 = vld [vmem:[%s1153 + $0xb8] sm:$0xff]
        %v1178 = vld [vmem:[%s1153 + $0xc0] sm:$0xff]
        %v1179 = vld [vmem:[%s1153 + $0xc8] sm:$0xff]
        %v1180 = vld [vmem:[%s1153 + $0xd0] sm:$0xff]
        %v1181 = vld [vmem:[%s1153 + $0xd8] sm:$0xff]
        %v1182 = vld [vmem:[%s1153 + $0xe0] sm:$0xff]
        %v1183 = vld [vmem:[%s1153 + $0xe8] sm:$0xff]
        %v1184 = vld [vmem:[%s1153 + $0xf0] sm:$0xff]
        %v1185 = vld [vmem:[%s1153 + $0xf8] sm:$0xff]
        %v1186 = vld [vmem:[%s1153 + $0x100] sm:$0xff]
        %v1187 = vld [vmem:[%s1153 + $0x108] sm:$0xff]
        %v1188 = vld [vmem:[%s1153 + $0x110] sm:$0xff]
        %v1189 = vld [vmem:[%s1153 + $0x118] sm:$0xff]
        %v1190 = vld [vmem:[%s1153 + $0x120] sm:$0xff]
        %v1191 = vld [vmem:[%s1153 + $0x128] sm:$0xff]
        %v1192 = vld [vmem:[%s1153 + $0x130] sm:$0xff]
        %v1193 = vld [vmem:[%s1153 + $0x138] sm:$0xff]
        %v1194 = vld [vmem:[%s1153 + $0x140] sm:$0xff]
        %v1195 = vld [vmem:[%s1153 + $0x148] sm:$0xff]
        %v1196 = vld [vmem:[%s1153 + $0x150] sm:$0xff]
        %v1197 = vld [vmem:[%s1153 + $0x158] sm:$0xff]
        %v1198 = vld [vmem:[%s1153 + $0x160] sm:$0xff]
        %v1199 = vld [vmem:[%s1153 + $0x168] sm:$0xff]
        %v1200 = vld [vmem:[%s1153 + $0x170] sm:$0xff]
        %v1201 = vld [vmem:[%s1153 + $0x178] sm:$0xff]
        %v1202 = vld [vmem:[%s1153 + $0x180] sm:$0xff]
        %v1203 = vld [vmem:[%s1153 + $0x188] sm:$0xff]
        %v1204 = vld [vmem:[%s1153 + $0x190] sm:$0xff]
        %v1205 = vld [vmem:[%s1153 + $0x198] sm:$0xff]
        %v1206 = vld [vmem:[%s1153 + $0x1a0] sm:$0xff]
        %v1207 = vld [vmem:[%s1153 + $0x1a8] sm:$0xff]
        %v1208 = vld [vmem:[%s1153 + $0x1b0] sm:$0xff]
        %v1209 = vld [vmem:[%s1153 + $0x1b8] sm:$0xff]
        %v1210 = vld [vmem:[%s1153 + $0x1c0] sm:$0xff]
        %v1211 = vld [vmem:[%s1153 + $0x1c8] sm:$0xff]
        %v1212 = vld [vmem:[%s1153 + $0x1d0] sm:$0xff]
        %v1213 = vld [vmem:[%s1153 + $0x1d8] sm:$0xff]
        %v1214 = vld [vmem:[%s1153 + $0x1e0] sm:$0xff]
        %v1215 = vld [vmem:[%s1153 + $0x1e8] sm:$0xff]
        %v1216 = vld [vmem:[%s1153 + $0x1f0] sm:$0xff]
        %v1217 = vld [vmem:[%s1153 + $0x1f8] sm:$0xff]
        %v1218 = vld [vmem:[#allocation5] sm:$0x1]
        %v1220 = vlaneseq
        %v1221 = vshrl.u32 %v1220, 7
        %v1222 = vsub.s32 0, %v1221
        %v1223 = vrot.slane %v1218, %v1222
        %v1225 = vmul.f32 %v1154, %v1223
        %v1226 = vmul.f32 %v1155, %v1223
        %v1227 = vmul.f32 %v1156, %v1223
        %v1228 = vmul.f32 %v1157, %v1223
        %v1229 = vmul.f32 %v1158, %v1223
        %v1230 = vmul.f32 %v1159, %v1223
        %v1231 = vmul.f32 %v1160, %v1223
        %v1232 = vmul.f32 %v1161, %v1223
        %v1233 = vmul.f32 %v1162, %v1223
        %v1234 = vmul.f32 %v1163, %v1223
        %v1235 = vmul.f32 %v1164, %v1223
        %v1236 = vmul.f32 %v1165, %v1223
        %v1237 = vmul.f32 %v1166, %v1223
        %v1238 = vmul.f32 %v1167, %v1223
        %v1239 = vmul.f32 %v1168, %v1223
        %v1240 = vmul.f32 %v1169, %v1223
        %v1241 = vmul.f32 %v1170, %v1223
        %v1242 = vmul.f32 %v1171, %v1223
        %v1243 = vmul.f32 %v1172, %v1223
        %v1244 = vmul.f32 %v1173, %v1223
        %v1245 = vmul.f32 %v1174, %v1223
        %v1246 = vmul.f32 %v1175, %v1223
        %v1247 = vmul.f32 %v1176, %v1223
        %v1248 = vmul.f32 %v1177, %v1223
        %v1249 = vmul.f32 %v1178, %v1223
        %v1250 = vmul.f32 %v1179, %v1223
        %v1251 = vmul.f32 %v1180, %v1223
        %v1252 = vmul.f32 %v1181, %v1223
        %v1253 = vmul.f32 %v1182, %v1223
        %v1254 = vmul.f32 %v1183, %v1223
        %v1255 = vmul.f32 %v1184, %v1223
        %v1256 = vmul.f32 %v1185, %v1223
        %v1257 = vmul.f32 %v1186, %v1223
        %v1258 = vmul.f32 %v1187, %v1223
        %v1259 = vmul.f32 %v1188, %v1223
        %v1260 = vmul.f32 %v1189, %v1223
        %v1261 = vmul.f32 %v1190, %v1223
        %v1262 = vmul.f32 %v1191, %v1223
        %v1263 = vmul.f32 %v1192, %v1223
        %v1264 = vmul.f32 %v1193, %v1223
        %v1265 = vmul.f32 %v1194, %v1223
        %v1266 = vmul.f32 %v1195, %v1223
        %v1267 = vmul.f32 %v1196, %v1223
        %v1268 = vmul.f32 %v1197, %v1223
        %v1269 = vmul.f32 %v1198, %v1223
        %v1270 = vmul.f32 %v1199, %v1223
        %v1271 = vmul.f32 %v1200, %v1223
        %v1272 = vmul.f32 %v1201, %v1223
        %v1273 = vmul.f32 %v1202, %v1223
        %v1274 = vmul.f32 %v1203, %v1223
        %v1275 = vmul.f32 %v1204, %v1223
        %v1276 = vmul.f32 %v1205, %v1223
        %v1277 = vmul.f32 %v1206, %v1223
        %v1278 = vmul.f32 %v1207, %v1223
        %v1279 = vmul.f32 %v1208, %v1223
        %v1280 = vmul.f32 %v1209, %v1223
        %v1281 = vmul.f32 %v1210, %v1223
        %v1282 = vmul.f32 %v1211, %v1223
        %v1283 = vmul.f32 %v1212, %v1223
        %v1284 = vmul.f32 %v1213, %v1223
        %v1285 = vmul.f32 %v1214, %v1223
        %v1286 = vmul.f32 %v1215, %v1223
        %v1287 = vmul.f32 %v1216, %v1223
        %v1288 = vmul.f32 %v1217, %v1223
        %s1289 = scalar_lea.vmem [#allocation5], 1
        %v1290 = vld [vmem:[%s1289] sm:$0x1]
        %v1292 = vlaneseq
        %v1293 = vshrl.u32 %v1292, 7
        %v1294 = vsub.s32 0, %v1293
        %v1295 = vrot.slane %v1290, %v1294
        %v1297 = vadd.f32 %v1225, %v1295
        %v1298 = vadd.f32 %v1226, %v1295
        %v1299 = vadd.f32 %v1227, %v1295
        %v1300 = vadd.f32 %v1228, %v1295
        %v1301 = vadd.f32 %v1229, %v1295
        %v1302 = vadd.f32 %v1230, %v1295
        %v1303 = vadd.f32 %v1231, %v1295
        %v1304 = vadd.f32 %v1232, %v1295
        %v1305 = vadd.f32 %v1233, %v1295
        %v1306 = vadd.f32 %v1234, %v1295
        %v1307 = vadd.f32 %v1235, %v1295
        %v1308 = vadd.f32 %v1236, %v1295
        %v1309 = vadd.f32 %v1237, %v1295
        %v1310 = vadd.f32 %v1238, %v1295
        %v1311 = vadd.f32 %v1239, %v1295
        %v1312 = vadd.f32 %v1240, %v1295
        %v1313 = vadd.f32 %v1241, %v1295
        %v1314 = vadd.f32 %v1242, %v1295
        %v1315 = vadd.f32 %v1243, %v1295
        %v1316 = vadd.f32 %v1244, %v1295
        %v1317 = vadd.f32 %v1245, %v1295
        %v1318 = vadd.f32 %v1246, %v1295
        %v1319 = vadd.f32 %v1247, %v1295
        %v1320 = vadd.f32 %v1248, %v1295
        %v1321 = vadd.f32 %v1249, %v1295
        %v1322 = vadd.f32 %v1250, %v1295
        %v1323 = vadd.f32 %v1251, %v1295
        %v1324 = vadd.f32 %v1252, %v1295
        %v1325 = vadd.f32 %v1253, %v1295
        %v1326 = vadd.f32 %v1254, %v1295
        %v1327 = vadd.f32 %v1255, %v1295
        %v1328 = vadd.f32 %v1256, %v1295
        %v1329 = vadd.f32 %v1257, %v1295
        %v1330 = vadd.f32 %v1258, %v1295
        %v1331 = vadd.f32 %v1259, %v1295
        %v1332 = vadd.f32 %v1260, %v1295
        %v1333 = vadd.f32 %v1261, %v1295
        %v1334 = vadd.f32 %v1262, %v1295
        %v1335 = vadd.f32 %v1263, %v1295
        %v1336 = vadd.f32 %v1264, %v1295
        %v1337 = vadd.f32 %v1265, %v1295
        %v1338 = vadd.f32 %v1266, %v1295
        %v1339 = vadd.f32 %v1267, %v1295
        %v1340 = vadd.f32 %v1268, %v1295
        %v1341 = vadd.f32 %v1269, %v1295
        %v1342 = vadd.f32 %v1270, %v1295
        %v1343 = vadd.f32 %v1271, %v1295
        %v1344 = vadd.f32 %v1272, %v1295
        %v1345 = vadd.f32 %v1273, %v1295
        %v1346 = vadd.f32 %v1274, %v1295
        %v1347 = vadd.f32 %v1275, %v1295
        %v1348 = vadd.f32 %v1276, %v1295
        %v1349 = vadd.f32 %v1277, %v1295
        %v1350 = vadd.f32 %v1278, %v1295
        %v1351 = vadd.f32 %v1279, %v1295
        %v1352 = vadd.f32 %v1280, %v1295
        %v1353 = vadd.f32 %v1281, %v1295
        %v1354 = vadd.f32 %v1282, %v1295
        %v1355 = vadd.f32 %v1283, %v1295
        %v1356 = vadd.f32 %v1284, %v1295
        %v1357 = vadd.f32 %v1285, %v1295
        %v1358 = vadd.f32 %v1286, %v1295
        %v1359 = vadd.f32 %v1287, %v1295
        %v1360 = vadd.f32 %v1288, %v1295
        %vm1361 = vcmp.ge.f32.partialorder %v1297, 0.0
        %vm1362 = vcmp.ge.f32.partialorder %v1298, 0.0
        %vm1363 = vcmp.ge.f32.partialorder %v1299, 0.0
        %vm1364 = vcmp.ge.f32.partialorder %v1300, 0.0
        %vm1365 = vcmp.ge.f32.partialorder %v1301, 0.0
        %vm1366 = vcmp.ge.f32.partialorder %v1302, 0.0
        %vm1367 = vcmp.ge.f32.partialorder %v1303, 0.0
        %vm1368 = vcmp.ge.f32.partialorder %v1304, 0.0
        %vm1369 = vcmp.ge.f32.partialorder %v1305, 0.0
        %vm1370 = vcmp.ge.f32.partialorder %v1306, 0.0
        %vm1371 = vcmp.ge.f32.partialorder %v1307, 0.0
        %vm1372 = vcmp.ge.f32.partialorder %v1308, 0.0
        %vm1373 = vcmp.ge.f32.partialorder %v1309, 0.0
        %vm1374 = vcmp.ge.f32.partialorder %v1310, 0.0
        %vm1375 = vcmp.ge.f32.partialorder %v1311, 0.0
        %vm1376 = vcmp.ge.f32.partialorder %v1312, 0.0
        %vm1377 = vcmp.ge.f32.partialorder %v1313, 0.0
        %vm1378 = vcmp.ge.f32.partialorder %v1314, 0.0
        %vm1379 = vcmp.ge.f32.partialorder %v1315, 0.0
        %vm1380 = vcmp.ge.f32.partialorder %v1316, 0.0
        %vm1381 = vcmp.ge.f32.partialorder %v1317, 0.0
        %vm1382 = vcmp.ge.f32.partialorder %v1318, 0.0
        %vm1383 = vcmp.ge.f32.partialorder %v1319, 0.0
        %vm1384 = vcmp.ge.f32.partialorder %v1320, 0.0
        %vm1385 = vcmp.ge.f32.partialorder %v1321, 0.0
        %vm1386 = vcmp.ge.f32.partialorder %v1322, 0.0
        %vm1387 = vcmp.ge.f32.partialorder %v1323, 0.0
        %vm1388 = vcmp.ge.f32.partialorder %v1324, 0.0
        %vm1389 = vcmp.ge.f32.partialorder %v1325, 0.0
        %vm1390 = vcmp.ge.f32.partialorder %v1326, 0.0
        %vm1391 = vcmp.ge.f32.partialorder %v1327, 0.0
        %vm1392 = vcmp.ge.f32.partialorder %v1328, 0.0
        %vm1393 = vcmp.ge.f32.partialorder %v1329, 0.0
        %vm1394 = vcmp.ge.f32.partialorder %v1330, 0.0
        %vm1395 = vcmp.ge.f32.partialorder %v1331, 0.0
        %vm1396 = vcmp.ge.f32.partialorder %v1332, 0.0
        %vm1397 = vcmp.ge.f32.partialorder %v1333, 0.0
        %vm1398 = vcmp.ge.f32.partialorder %v1334, 0.0
        %vm1399 = vcmp.ge.f32.partialorder %v1335, 0.0
        %vm1400 = vcmp.ge.f32.partialorder %v1336, 0.0
        %vm1401 = vcmp.ge.f32.partialorder %v1337, 0.0
        %vm1402 = vcmp.ge.f32.partialorder %v1338, 0.0
        %vm1403 = vcmp.ge.f32.partialorder %v1339, 0.0
        %vm1404 = vcmp.ge.f32.partialorder %v1340, 0.0
        %vm1405 = vcmp.ge.f32.partialorder %v1341, 0.0
        %vm1406 = vcmp.ge.f32.partialorder %v1342, 0.0
        %vm1407 = vcmp.ge.f32.partialorder %v1343, 0.0
        %vm1408 = vcmp.ge.f32.partialorder %v1344, 0.0
        %vm1409 = vcmp.ge.f32.partialorder %v1345, 0.0
        %vm1410 = vcmp.ge.f32.partialorder %v1346, 0.0
        %vm1411 = vcmp.ge.f32.partialorder %v1347, 0.0
        %vm1412 = vcmp.ge.f32.partialorder %v1348, 0.0
        %vm1413 = vcmp.ge.f32.partialorder %v1349, 0.0
        %vm1414 = vcmp.ge.f32.partialorder %v1350, 0.0
        %vm1415 = vcmp.ge.f32.partialorder %v1351, 0.0
        %vm1416 = vcmp.ge.f32.partialorder %v1352, 0.0
        %vm1417 = vcmp.ge.f32.partialorder %v1353, 0.0
        %vm1418 = vcmp.ge.f32.partialorder %v1354, 0.0
        %vm1419 = vcmp.ge.f32.partialorder %v1355, 0.0
        %vm1420 = vcmp.ge.f32.partialorder %v1356, 0.0
        %vm1421 = vcmp.ge.f32.partialorder %v1357, 0.0
        %vm1422 = vcmp.ge.f32.partialorder %v1358, 0.0
        %vm1423 = vcmp.ge.f32.partialorder %v1359, 0.0
        %vm1424 = vcmp.ge.f32.partialorder %v1360, 0.0
        %v1425 = vmul.f32 %v1297, 0.2
        %v1426 = vmul.f32 %v1298, 0.2
        %v1427 = vmul.f32 %v1299, 0.2
        %v1428 = vmul.f32 %v1300, 0.2
        %v1429 = vmul.f32 %v1301, 0.2
        %v1430 = vmul.f32 %v1302, 0.2
        %v1431 = vmul.f32 %v1303, 0.2
        %v1432 = vmul.f32 %v1304, 0.2
        %v1433 = vmul.f32 %v1305, 0.2
        %v1434 = vmul.f32 %v1306, 0.2
        %v1435 = vmul.f32 %v1307, 0.2
        %v1436 = vmul.f32 %v1308, 0.2
        %v1437 = vmul.f32 %v1309, 0.2
        %v1438 = vmul.f32 %v1310, 0.2
        %v1439 = vmul.f32 %v1311, 0.2
        %v1440 = vmul.f32 %v1312, 0.2
        %v1441 = vmul.f32 %v1313, 0.2
        %v1442 = vmul.f32 %v1314, 0.2
        %v1443 = vmul.f32 %v1315, 0.2
        %v1444 = vmul.f32 %v1316, 0.2
        %v1445 = vmul.f32 %v1317, 0.2
        %v1446 = vmul.f32 %v1318, 0.2
        %v1447 = vmul.f32 %v1319, 0.2
        %v1448 = vmul.f32 %v1320, 0.2
        %v1449 = vmul.f32 %v1321, 0.2
        %v1450 = vmul.f32 %v1322, 0.2
        %v1451 = vmul.f32 %v1323, 0.2
        %v1452 = vmul.f32 %v1324, 0.2
        %v1453 = vmul.f32 %v1325, 0.2
        %v1454 = vmul.f32 %v1326, 0.2
        %v1455 = vmul.f32 %v1327, 0.2
        %v1456 = vmul.f32 %v1328, 0.2
        %v1457 = vmul.f32 %v1329, 0.2
        %v1458 = vmul.f32 %v1330, 0.2
        %v1459 = vmul.f32 %v1331, 0.2
        %v1460 = vmul.f32 %v1332, 0.2
        %v1461 = vmul.f32 %v1333, 0.2
        %v1462 = vmul.f32 %v1334, 0.2
        %v1463 = vmul.f32 %v1335, 0.2
        %v1464 = vmul.f32 %v1336, 0.2
        %v1465 = vmul.f32 %v1337, 0.2
        %v1466 = vmul.f32 %v1338, 0.2
        %v1467 = vmul.f32 %v1339, 0.2
        %v1468 = vmul.f32 %v1340, 0.2
        %v1469 = vmul.f32 %v1341, 0.2
        %v1470 = vmul.f32 %v1342, 0.2
        %v1471 = vmul.f32 %v1343, 0.2
        %v1472 = vmul.f32 %v1344, 0.2
        %v1473 = vmul.f32 %v1345, 0.2
        %v1474 = vmul.f32 %v1346, 0.2
        %v1475 = vmul.f32 %v1347, 0.2
        %v1476 = vmul.f32 %v1348, 0.2
        %v1477 = vmul.f32 %v1349, 0.2
        %v1478 = vmul.f32 %v1350, 0.2
        %v1479 = vmul.f32 %v1351, 0.2
        %v1480 = vmul.f32 %v1352, 0.2
        %v1481 = vmul.f32 %v1353, 0.2
        %v1482 = vmul.f32 %v1354, 0.2
        %v1483 = vmul.f32 %v1355, 0.2
        %v1484 = vmul.f32 %v1356, 0.2
        %v1485 = vmul.f32 %v1357, 0.2
        %v1486 = vmul.f32 %v1358, 0.2
        %v1487 = vmul.f32 %v1359, 0.2
        %v1488 = vmul.f32 %v1360, 0.2
        %v1489 = vsel %vm1361, %v1297, %v1425
        %v1490 = vsel %vm1362, %v1298, %v1426
        %v1491 = vsel %vm1363, %v1299, %v1427
        %v1492 = vsel %vm1364, %v1300, %v1428
        %v1493 = vsel %vm1365, %v1301, %v1429
        %v1494 = vsel %vm1366, %v1302, %v1430
        %v1495 = vsel %vm1367, %v1303, %v1431
        %v1496 = vsel %vm1368, %v1304, %v1432
        %v1497 = vsel %vm1369, %v1305, %v1433
        %v1498 = vsel %vm1370, %v1306, %v1434
        %v1499 = vsel %vm1371, %v1307, %v1435
        %v1500 = vsel %vm1372, %v1308, %v1436
        %v1501 = vsel %vm1373, %v1309, %v1437
        %v1502 = vsel %vm1374, %v1310, %v1438
        %v1503 = vsel %vm1375, %v1311, %v1439
        %v1504 = vsel %vm1376, %v1312, %v1440
        %v1505 = vsel %vm1377, %v1313, %v1441
        %v1506 = vsel %vm1378, %v1314, %v1442
        %v1507 = vsel %vm1379, %v1315, %v1443
        %v1508 = vsel %vm1380, %v1316, %v1444
        %v1509 = vsel %vm1381, %v1317, %v1445
        %v1510 = vsel %vm1382, %v1318, %v1446
        %v1511 = vsel %vm1383, %v1319, %v1447
        %v1512 = vsel %vm1384, %v1320, %v1448
        %v1513 = vsel %vm1385, %v1321, %v1449
        %v1514 = vsel %vm1386, %v1322, %v1450
        %v1515 = vsel %vm1387, %v1323, %v1451
        %v1516 = vsel %vm1388, %v1324, %v1452
        %v1517 = vsel %vm1389, %v1325, %v1453
        %v1518 = vsel %vm1390, %v1326, %v1454
        %v1519 = vsel %vm1391, %v1327, %v1455
        %v1520 = vsel %vm1392, %v1328, %v1456
        %v1521 = vsel %vm1393, %v1329, %v1457
        %v1522 = vsel %vm1394, %v1330, %v1458
        %v1523 = vsel %vm1395, %v1331, %v1459
        %v1524 = vsel %vm1396, %v1332, %v1460
        %v1525 = vsel %vm1397, %v1333, %v1461
        %v1526 = vsel %vm1398, %v1334, %v1462
        %v1527 = vsel %vm1399, %v1335, %v1463
        %v1528 = vsel %vm1400, %v1336, %v1464
        %v1529 = vsel %vm1401, %v1337, %v1465
        %v1530 = vsel %vm1402, %v1338, %v1466
        %v1531 = vsel %vm1403, %v1339, %v1467
        %v1532 = vsel %vm1404, %v1340, %v1468
        %v1533 = vsel %vm1405, %v1341, %v1469
        %v1534 = vsel %vm1406, %v1342, %v1470
        %v1535 = vsel %vm1407, %v1343, %v1471
        %v1536 = vsel %vm1408, %v1344, %v1472
        %v1537 = vsel %vm1409, %v1345, %v1473
        %v1538 = vsel %vm1410, %v1346, %v1474
        %v1539 = vsel %vm1411, %v1347, %v1475
        %v1540 = vsel %vm1412, %v1348, %v1476
        %v1541 = vsel %vm1413, %v1349, %v1477
        %v1542 = vsel %vm1414, %v1350, %v1478
        %v1543 = vsel %vm1415, %v1351, %v1479
        %v1544 = vsel %vm1416, %v1352, %v1480
        %v1545 = vsel %vm1417, %v1353, %v1481
        %v1546 = vsel %vm1418, %v1354, %v1482
        %v1547 = vsel %vm1419, %v1355, %v1483
        %v1548 = vsel %vm1420, %v1356, %v1484
        %v1549 = vsel %vm1421, %v1357, %v1485
        %v1550 = vsel %vm1422, %v1358, %v1486
        %v1551 = vsel %vm1423, %v1359, %v1487
        %v1552 = vsel %vm1424, %v1360, %v1488
        %v1553 = vpack.c.bf16 %v1490, %v1489
        %v1554 = vpack.c.bf16 %v1492, %v1491
        %v1555 = vpack.c.bf16 %v1494, %v1493
        %v1556 = vpack.c.bf16 %v1496, %v1495
        %v1557 = vpack.c.bf16 %v1498, %v1497
        %v1558 = vpack.c.bf16 %v1500, %v1499
        %v1559 = vpack.c.bf16 %v1502, %v1501
        %v1560 = vpack.c.bf16 %v1504, %v1503
        %v1561 = vpack.c.bf16 %v1506, %v1505
        %v1562 = vpack.c.bf16 %v1508, %v1507
        %v1563 = vpack.c.bf16 %v1510, %v1509
        %v1564 = vpack.c.bf16 %v1512, %v1511
        %v1565 = vpack.c.bf16 %v1514, %v1513
        %v1566 = vpack.c.bf16 %v1516, %v1515
        %v1567 = vpack.c.bf16 %v1518, %v1517
        %v1568 = vpack.c.bf16 %v1520, %v1519
        %v1569 = vpack.c.bf16 %v1522, %v1521
        %v1570 = vpack.c.bf16 %v1524, %v1523
        %v1571 = vpack.c.bf16 %v1526, %v1525
        %v1572 = vpack.c.bf16 %v1528, %v1527
        %v1573 = vpack.c.bf16 %v1530, %v1529
        %v1574 = vpack.c.bf16 %v1532, %v1531
        %v1575 = vpack.c.bf16 %v1534, %v1533
        %v1576 = vpack.c.bf16 %v1536, %v1535
        %v1577 = vpack.c.bf16 %v1538, %v1537
        %v1578 = vpack.c.bf16 %v1540, %v1539
        %v1579 = vpack.c.bf16 %v1542, %v1541
        %v1580 = vpack.c.bf16 %v1544, %v1543
        %v1581 = vpack.c.bf16 %v1546, %v1545
        %v1582 = vpack.c.bf16 %v1548, %v1547
        %v1583 = vpack.c.bf16 %v1550, %v1549
        %v1584 = vpack.c.bf16 %v1552, %v1551
        %v1617 = vunpack.c.l.b16 %v1553
        %v1618 = vunpack.c.h.b16 %v1553
        %v1619 = vunpack.c.l.b16 %v1554
        %v1620 = vunpack.c.h.b16 %v1554
        %v1621 = vunpack.c.l.b16 %v1555
        %v1622 = vunpack.c.h.b16 %v1555
        %v1623 = vunpack.c.l.b16 %v1556
        %v1624 = vunpack.c.h.b16 %v1556
        %v1625 = vunpack.c.l.b16 %v1557
        %v1626 = vunpack.c.h.b16 %v1557
        %v1627 = vunpack.c.l.b16 %v1558
        %v1628 = vunpack.c.h.b16 %v1558
        %v1629 = vunpack.c.l.b16 %v1559
        %v1630 = vunpack.c.h.b16 %v1559
        %v1631 = vunpack.c.l.b16 %v1560
        %v1632 = vunpack.c.h.b16 %v1560
        %v1633 = vunpack.c.l.b16 %v1561
        %v1634 = vunpack.c.h.b16 %v1561
        %v1635 = vunpack.c.l.b16 %v1562
        %v1636 = vunpack.c.h.b16 %v1562
        %v1637 = vunpack.c.l.b16 %v1563
        %v1638 = vunpack.c.h.b16 %v1563
        %v1639 = vunpack.c.l.b16 %v1564
        %v1640 = vunpack.c.h.b16 %v1564
        %v1641 = vunpack.c.l.b16 %v1565
        %v1642 = vunpack.c.h.b16 %v1565
        %v1643 = vunpack.c.l.b16 %v1566
        %v1644 = vunpack.c.h.b16 %v1566
        %v1645 = vunpack.c.l.b16 %v1567
        %v1646 = vunpack.c.h.b16 %v1567
        %v1647 = vunpack.c.l.b16 %v1568
        %v1648 = vunpack.c.h.b16 %v1568
        %v1649 = vunpack.c.l.b16 %v1569
        %v1650 = vunpack.c.h.b16 %v1569
        %v1651 = vunpack.c.l.b16 %v1570
        %v1652 = vunpack.c.h.b16 %v1570
        %v1653 = vunpack.c.l.b16 %v1571
        %v1654 = vunpack.c.h.b16 %v1571
        %v1655 = vunpack.c.l.b16 %v1572
        %v1656 = vunpack.c.h.b16 %v1572
        %v1657 = vunpack.c.l.b16 %v1573
        %v1658 = vunpack.c.h.b16 %v1573
        %v1659 = vunpack.c.l.b16 %v1574
        %v1660 = vunpack.c.h.b16 %v1574
        %v1661 = vunpack.c.l.b16 %v1575
        %v1662 = vunpack.c.h.b16 %v1575
        %v1663 = vunpack.c.l.b16 %v1576
        %v1664 = vunpack.c.h.b16 %v1576
        %v1665 = vunpack.c.l.b16 %v1577
        %v1666 = vunpack.c.h.b16 %v1577
        %v1667 = vunpack.c.l.b16 %v1578
        %v1668 = vunpack.c.h.b16 %v1578
        %v1669 = vunpack.c.l.b16 %v1579
        %v1670 = vunpack.c.h.b16 %v1579
        %v1671 = vunpack.c.l.b16 %v1580
        %v1672 = vunpack.c.h.b16 %v1580
        %v1673 = vunpack.c.l.b16 %v1581
        %v1674 = vunpack.c.h.b16 %v1581
        %v1675 = vunpack.c.l.b16 %v1582
        %v1676 = vunpack.c.h.b16 %v1582
        %v1677 = vunpack.c.l.b16 %v1583
        %v1678 = vunpack.c.h.b16 %v1583
        %v1679 = vunpack.c.l.b16 %v1584
        %v1680 = vunpack.c.h.b16 %v1584
        %v1681 = vpack.c.b16 %v1617, %v1617
        %v1682 = vpack.c.b16 %v1618, %v1618
        %v1683 = vpack.c.b16 %v1619, %v1619
        %v1684 = vpack.c.b16 %v1620, %v1620
        %v1685 = vpack.c.b16 %v1621, %v1621
        %v1686 = vpack.c.b16 %v1622, %v1622
        %v1687 = vpack.c.b16 %v1623, %v1623
        %v1688 = vpack.c.b16 %v1624, %v1624
        %v1689 = vpack.c.b16 %v1625, %v1625
        %v1690 = vpack.c.b16 %v1626, %v1626
        %v1691 = vpack.c.b16 %v1627, %v1627
        %v1692 = vpack.c.b16 %v1628, %v1628
        %v1693 = vpack.c.b16 %v1629, %v1629
        %v1694 = vpack.c.b16 %v1630, %v1630
        %v1695 = vpack.c.b16 %v1631, %v1631
        %v1696 = vpack.c.b16 %v1632, %v1632
        %v1697 = vpack.c.b16 %v1633, %v1633
        %v1698 = vpack.c.b16 %v1634, %v1634
        %v1699 = vpack.c.b16 %v1635, %v1635
        %v1700 = vpack.c.b16 %v1636, %v1636
        %v1701 = vpack.c.b16 %v1637, %v1637
        %v1702 = vpack.c.b16 %v1638, %v1638
        %v1703 = vpack.c.b16 %v1639, %v1639
        %v1704 = vpack.c.b16 %v1640, %v1640
        %v1705 = vpack.c.b16 %v1641, %v1641
        %v1706 = vpack.c.b16 %v1642, %v1642
        %v1707 = vpack.c.b16 %v1643, %v1643
        %v1708 = vpack.c.b16 %v1644, %v1644
        %v1709 = vpack.c.b16 %v1645, %v1645
        %v1710 = vpack.c.b16 %v1646, %v1646
        %v1711 = vpack.c.b16 %v1647, %v1647
        %v1712 = vpack.c.b16 %v1648, %v1648
        %v1713 = vpack.c.b16 %v1649, %v1649
        %v1714 = vpack.c.b16 %v1650, %v1650
        %v1715 = vpack.c.b16 %v1651, %v1651
        %v1716 = vpack.c.b16 %v1652, %v1652
        %v1717 = vpack.c.b16 %v1653, %v1653
        %v1718 = vpack.c.b16 %v1654, %v1654
        %v1719 = vpack.c.b16 %v1655, %v1655
        %v1720 = vpack.c.b16 %v1656, %v1656
        %v1721 = vpack.c.b16 %v1657, %v1657
        %v1722 = vpack.c.b16 %v1658, %v1658
        %v1723 = vpack.c.b16 %v1659, %v1659
        %v1724 = vpack.c.b16 %v1660, %v1660
        %v1725 = vpack.c.b16 %v1661, %v1661
        %v1726 = vpack.c.b16 %v1662, %v1662
        %v1727 = vpack.c.b16 %v1663, %v1663
        %v1728 = vpack.c.b16 %v1664, %v1664
        %v1729 = vpack.c.b16 %v1665, %v1665
        %v1730 = vpack.c.b16 %v1666, %v1666
        %v1731 = vpack.c.b16 %v1667, %v1667
        %v1732 = vpack.c.b16 %v1668, %v1668
        %v1733 = vpack.c.b16 %v1669, %v1669
        %v1734 = vpack.c.b16 %v1670, %v1670
        %v1735 = vpack.c.b16 %v1671, %v1671
        %v1736 = vpack.c.b16 %v1672, %v1672
        %v1737 = vpack.c.b16 %v1673, %v1673
        %v1738 = vpack.c.b16 %v1674, %v1674
        %v1739 = vpack.c.b16 %v1675, %v1675
        %v1740 = vpack.c.b16 %v1676, %v1676
        %v1741 = vpack.c.b16 %v1677, %v1677
        %v1742 = vpack.c.b16 %v1678, %v1678
        %v1743 = vpack.c.b16 %v1679, %v1679
        %v1744 = vpack.c.b16 %v1680, %v1680
        %1809 = vst [vmem:[%s229] sm:$0xf] %v1681
        %1810 = vst [vmem:[%s229 + $0x4] sm:$0xf] %v1682
        %1811 = vst [vmem:[%s229 + $0x8] sm:$0xf] %v1683
        %1812 = vst [vmem:[%s229 + $0xc] sm:$0xf] %v1684
        %1813 = vst [vmem:[%s229 + $0x10] sm:$0xf] %v1685
        %1814 = vst [vmem:[%s229 + $0x14] sm:$0xf] %v1686
        %1815 = vst [vmem:[%s229 + $0x18] sm:$0xf] %v1687
        %1816 = vst [vmem:[%s229 + $0x1c] sm:$0xf] %v1688
        %1817 = vst [vmem:[%s229 + $0x20] sm:$0xf] %v1689
        %1818 = vst [vmem:[%s229 + $0x24] sm:$0xf] %v1690
        %1819 = vst [vmem:[%s229 + $0x28] sm:$0xf] %v1691
        %1820 = vst [vmem:[%s229 + $0x2c] sm:$0xf] %v1692
        %1821 = vst [vmem:[%s229 + $0x30] sm:$0xf] %v1693
        %1822 = vst [vmem:[%s229 + $0x34] sm:$0xf] %v1694
        %1823 = vst [vmem:[%s229 + $0x38] sm:$0xf] %v1695
        %1824 = vst [vmem:[%s229 + $0x3c] sm:$0xf] %v1696
        %1825 = vst [vmem:[%s229 + $0x40] sm:$0xf] %v1697
        %1826 = vst [vmem:[%s229 + $0x44] sm:$0xf] %v1698
        %1827 = vst [vmem:[%s229 + $0x48] sm:$0xf] %v1699
        %1828 = vst [vmem:[%s229 + $0x4c] sm:$0xf] %v1700
        %1829 = vst [vmem:[%s229 + $0x50] sm:$0xf] %v1701
        %1830 = vst [vmem:[%s229 + $0x54] sm:$0xf] %v1702
        %1831 = vst [vmem:[%s229 + $0x58] sm:$0xf] %v1703
        %1832 = vst [vmem:[%s229 + $0x5c] sm:$0xf] %v1704
        %1833 = vst [vmem:[%s229 + $0x60] sm:$0xf] %v1705
        %1834 = vst [vmem:[%s229 + $0x64] sm:$0xf] %v1706
        %1835 = vst [vmem:[%s229 + $0x68] sm:$0xf] %v1707
        %1836 = vst [vmem:[%s229 + $0x6c] sm:$0xf] %v1708
        %1837 = vst [vmem:[%s229 + $0x70] sm:$0xf] %v1709
        %1838 = vst [vmem:[%s229 + $0x74] sm:$0xf] %v1710
        %1839 = vst [vmem:[%s229 + $0x78] sm:$0xf] %v1711
        %1840 = vst [vmem:[%s229 + $0x7c] sm:$0xf] %v1712
        %1841 = vst [vmem:[%s229 + $0x80] sm:$0xf] %v1713
        %1842 = vst [vmem:[%s229 + $0x84] sm:$0xf] %v1714
        %1843 = vst [vmem:[%s229 + $0x88] sm:$0xf] %v1715
        %1844 = vst [vmem:[%s229 + $0x8c] sm:$0xf] %v1716
        %1845 = vst [vmem:[%s229 + $0x90] sm:$0xf] %v1717
        %1846 = vst [vmem:[%s229 + $0x94] sm:$0xf] %v1718
        %1847 = vst [vmem:[%s229 + $0x98] sm:$0xf] %v1719
        %1848 = vst [vmem:[%s229 + $0x9c] sm:$0xf] %v1720
        %1849 = vst [vmem:[%s229 + $0xa0] sm:$0xf] %v1721
        %1850 = vst [vmem:[%s229 + $0xa4] sm:$0xf] %v1722
        %1851 = vst [vmem:[%s229 + $0xa8] sm:$0xf] %v1723
        %1852 = vst [vmem:[%s229 + $0xac] sm:$0xf] %v1724
        %1853 = vst [vmem:[%s229 + $0xb0] sm:$0xf] %v1725
        %1854 = vst [vmem:[%s229 + $0xb4] sm:$0xf] %v1726
        %1855 = vst [vmem:[%s229 + $0xb8] sm:$0xf] %v1727
        %1856 = vst [vmem:[%s229 + $0xbc] sm:$0xf] %v1728
        %1857 = vst [vmem:[%s229 + $0xc0] sm:$0xf] %v1729
        %1858 = vst [vmem:[%s229 + $0xc4] sm:$0xf] %v1730
        %1859 = vst [vmem:[%s229 + $0xc8] sm:$0xf] %v1731
        %1860 = vst [vmem:[%s229 + $0xcc] sm:$0xf] %v1732
        %1861 = vst [vmem:[%s229 + $0xd0] sm:$0xf] %v1733
        %1862 = vst [vmem:[%s229 + $0xd4] sm:$0xf] %v1734
        %1863 = vst [vmem:[%s229 + $0xd8] sm:$0xf] %v1735
        %1864 = vst [vmem:[%s229 + $0xdc] sm:$0xf] %v1736
        %1865 = vst [vmem:[%s229 + $0xe0] sm:$0xf] %v1737
        %1866 = vst [vmem:[%s229 + $0xe4] sm:$0xf] %v1738
        %1867 = vst [vmem:[%s229 + $0xe8] sm:$0xf] %v1739
        %1868 = vst [vmem:[%s229 + $0xec] sm:$0xf] %v1740
        %1869 = vst [vmem:[%s229 + $0xf0] sm:$0xf] %v1741
        %1870 = vst [vmem:[%s229 + $0xf4] sm:$0xf] %v1742
        %1871 = vst [vmem:[%s229 + $0xf8] sm:$0xf] %v1743
        %1872 = vst [vmem:[%s229 + $0xfc] sm:$0xf] %v1744
      $region52: #{_lambda_.5} parent=35 // pred_fallthru
        _
      %s1873 = smul.u32 %s19, %s20
      %s1874 = smul.u32 64, %s1873
      %p1875 = scmp.lt.s32.totalorder %s1874, 255
      %s1876 = scalar_select %p1875, %s1874, 255
      %s1877 = smul.addr %s1876, 4
      %s1878 = scalar_lea.vmem %s4, %s1877
      // Predicated region
      $region53: #{_lambda_.5} parent=35 // pred_check
        %p1879 = pneg %p140
      $region54: #{_lambda_.5} parent=35 // pred_check_branch
        %1881 = sbr.rel (%p1879) target = $region56
      $region55: #{_lambda_.5} parent=35 // pred_region
        %s1882 = smul.u32 %s19, %s20
        %s1883 = smul.u32 64, %s1882
      $region56: #{_lambda_.5} parent=35 // pred_fallthru
        _
    $region36: #{_lambda_.5} parent=5 // pred_fallthru
      _
    %p1884 = scmp.le.s32.totalorder 2, %s10
    // Predicated region
    $region57: #{_lambda_.5} parent=5 // pred_check
      %p1885 = pneg %p1884
    $region58: #{_lambda_.5} parent=5 // pred_check_branch
      %1887 = sbr.rel (%p1885) target = $region60
    $region59: #{_lambda_.5} parent=5 // pred_region
      %s1888 = ssub.s32 %s10, 2
      // Predicated region
      $region61: #{_lambda_.5} parent=59 // pred_check
        %p1889 = pneg %p146
      $region62: #{_lambda_.5} parent=59 // pred_check_branch
        %1891 = sbr.rel (%p1889) target = $region64
      $region63: #{_lambda_.5} parent=59 // pred_region
        %s1892 = smul.u32 %s21, %s22
        %s1893 = smul.u32 64, %s1892
        %p1894 = scmp.lt.s32.totalorder %s1893, 255
        %s1895 = scalar_select %p1894, %s1893, 255
        %s1896 = smul.addr %s1895, 4
        %s1897 = scalar_lea.vmem %s4, %s1896
      $region64: #{_lambda_.5} parent=59 // pred_fallthru
        _
    $region60: #{_lambda_.5} parent=5 // pred_fallthru
      _
  $region6: #{_lambda_.5} parent=0 // loop_footer
    %s14 = sadd.s32 1, %s10
  $region7: #{_lambda_.5} parent=0 // loop_footer_branch
    %9 = sbr.rel target = $region3
  $region8: #{_lambda_.5} parent=0 // loop_exit
    _

// kernel: _lambda_.6
$region0: #{_lambda_.6}
  #allocation0 [shape = 'u32[]', space=smem, size = 0x4, offset = 0x4, fixed_abs, tag = 'smem constant byte address 0x4 - core index']
  #allocation1 [shape = 'u32[144,128]{1,0:T(1,128)}', space=vmem, size = 0x12000, scoped, tag = 'internal scratch']
  #allocation2 [shape = 'f32[1,512,128]{2,1,0:T(8,128)}', space=vmem, size = 0x40000, scoped, tag = 'scratch operand']
  #allocation3 [shape = 'f32[1,128]{1,0:T(1,128)}', space=vmem, size = 0x200, scoped, tag = 'scratch operand']
  #allocation4 [shape = 'f32[1,128]{1,0:T(1,128)}', space=vmem, size = 0x200, scoped, tag = 'scratch operand']
  #allocation5 [shape = 'f32[2,1,128]{2,1,0:T(1,128)}', space=vmem, size = 0x400, scoped, tag = 'scratch operand']
  %s0 = inlined_call_operand.vmem [shape: bf16[512,128], index: 0, kind: input, shape index: {}]
  %s1 = inlined_call_operand.vmem [shape: bf16[128,128], index: 1, kind: input, shape index: {}]
  %s2 = inlined_call_operand.vmem [shape: f32[1,128], index: 2, kind: input, shape index: {}]
  %s3 = inlined_call_operand.vmem [shape: f32[1,128], index: 3, kind: input, shape index: {}]
  %s4 = inlined_call_operand.vmem [shape: bf16[512,128], index: 4, kind: output, shape index: {}]
  %s5 = sld [smem:[#allocation0]]
  $region65: #{_lambda_.6} parent=0
    _
  %s7 = ssub.s32 1, %s5
  %s8 = scalar_select 0, %s7, %s5
  loop: start=0, step=1, limit=4
  $region2: #{_lambda_.6} parent=0 // loop_pre_header
    _
  $region3: #{_lambda_.6} parent=0 // loop_header
    %s10 = sphi 0, %s14
    %p11 = scmp.ge.s32.totalorder %s10, 4
    %s17 = sphi 0, %s29
    %s18 = sphi 0, %s25
    %s19 = sphi 0, %s17
    %s20 = sphi 0, %s18
    %s21 = sphi 0, %s19
    %s22 = sphi 0, %s20
    %s36 = sphi 0, %s38
    %s39 = sphi 0, %s36
    %s40 = sphi 0, %s39
    %s56 = sphi 0, %s40
    %s60 = sphi 0, %s60
    %s62 = sphi 0, %s60
    %s63 = sphi 0, %s62
    %s77 = sphi 0, %s63
    %s81 = sphi 0, %s81
    %s83 = sphi 0, %s81
    %s84 = sphi 0, %s83
    %s98 = sphi 0, %s84
    %s102 = sphi 0, %s102
    %s104 = sphi 0, %s102
    %s105 = sphi 0, %s104
    %s119 = sphi 0, %s105
    %s127 = sphi 0, %s129
    %s130 = sphi 0, %s127
    %s131 = sphi 0, %s130
    %s147 = sphi 0, %s131
  $region4: #{_lambda_.6} parent=0 // loop_header_branch
    %13 = sbr.rel (%p11) target = $region8
  $region5: #{_lambda_.6} parent=0 // loop_body
    %s15 = ssub.s32 %s10, 1
    %s16 = ssub.s32 %s10, 2
    %s23 = sadd.s32 1, %s18
    %p24 = scmp.ge.s32.totalorder %s23, 1
    %s25 = scalar_select %p24, 0, %s23
    %s26 = sadd.s32 1, %s17
    %s27 = scalar_select %p24, %s26, %s17
    %p28 = scmp.ge.s32.totalorder %s27, 2
    %s29 = scalar_select %p28, 0, %s27
    %s30 = ssub.s32 1, %s17
    %s31 = smul.u32 %s30, %s18
    %s32 = ssub.s32 1, %s29
    %s33 = smul.u32 %s32, %s25
    %s34 = ssub.s32 %s31, %s33
    %p35 = scmp.eq.s32.totalorder %s34, 0
    %s37 = sadd.s32 %s36, 1
    %s38 = scalar_select %p35, %s36, %s37
    %p41 = pneg %p35
    %p42 = scmp.eq.s32.totalorder %s10, 1
    %p43 = por %p41, %p42
    %p44 = scmp.ne.s32.totalorder %s36, %s39
    %p45 = scmp.eq.s32.totalorder %s10, 0
    %p46 = por %p44, %p45
    %p47 = scmp.ne.s32.totalorder %s36, %s39
    %p48 = scmp.eq.s32.totalorder %s15, 1
    %p49 = por %p47, %p48
    %p50 = scmp.ne.s32.totalorder %s39, %s40
    %p51 = scmp.eq.s32.totalorder %s15, 0
    %p52 = por %p50, %p51
    %p53 = scmp.ne.s32.totalorder %s39, %s40
    %p54 = scmp.eq.s32.totalorder %s16, 1
    %p55 = por %p53, %p54
    %p57 = scmp.ne.s32.totalorder %s40, %s56
    %p58 = scmp.eq.s32.totalorder %s16, 0
    %p59 = por %p57, %p58
    %s61 = sadd.s32 %s60, 1
    %p64 = scmp.eq.s32.totalorder %s10, 1
    %p65 = scmp.ne.s32.totalorder %s60, %s62
    %p66 = scmp.eq.s32.totalorder %s10, 0
    %p67 = por %p65, %p66
    %p68 = scmp.ne.s32.totalorder %s60, %s62
    %p69 = scmp.eq.s32.totalorder %s15, 1
    %p70 = por %p68, %p69
    %p71 = scmp.ne.s32.totalorder %s62, %s63
    %p72 = scmp.eq.s32.totalorder %s15, 0
    %p73 = por %p71, %p72
    %p74 = scmp.ne.s32.totalorder %s62, %s63
    %p75 = scmp.eq.s32.totalorder %s16, 1
    %p76 = por %p74, %p75
    %p78 = scmp.ne.s32.totalorder %s63, %s77
    %p79 = scmp.eq.s32.totalorder %s16, 0
    %p80 = por %p78, %p79
    %s82 = sadd.s32 %s81, 1
    %p85 = scmp.eq.s32.totalorder %s10, 1
    %p86 = scmp.ne.s32.totalorder %s81, %s83
    %p87 = scmp.eq.s32.totalorder %s10, 0
    %p88 = por %p86, %p87
    %p89 = scmp.ne.s32.totalorder %s81, %s83
    %p90 = scmp.eq.s32.totalorder %s15, 1
    %p91 = por %p89, %p90
    %p92 = scmp.ne.s32.totalorder %s83, %s84
    %p93 = scmp.eq.s32.totalorder %s15, 0
    %p94 = por %p92, %p93
    %p95 = scmp.ne.s32.totalorder %s83, %s84
    %p96 = scmp.eq.s32.totalorder %s16, 1
    %p97 = por %p95, %p96
    %p99 = scmp.ne.s32.totalorder %s84, %s98
    %p100 = scmp.eq.s32.totalorder %s16, 0
    %p101 = por %p99, %p100
    %s103 = sadd.s32 %s102, 1
    %p106 = scmp.eq.s32.totalorder %s10, 1
    %p107 = scmp.ne.s32.totalorder %s102, %s104
    %p108 = scmp.eq.s32.totalorder %s10, 0
    %p109 = por %p107, %p108
    %p110 = scmp.ne.s32.totalorder %s102, %s104
    %p111 = scmp.eq.s32.totalorder %s15, 1
    %p112 = por %p110, %p111
    %p113 = scmp.ne.s32.totalorder %s104, %s105
    %p114 = scmp.eq.s32.totalorder %s15, 0
    %p115 = por %p113, %p114
    %p116 = scmp.ne.s32.totalorder %s104, %s105
    %p117 = scmp.eq.s32.totalorder %s16, 1
    %p118 = por %p116, %p117
    %p120 = scmp.ne.s32.totalorder %s105, %s119
    %p121 = scmp.eq.s32.totalorder %s16, 0
    %p122 = por %p120, %p121
    %s123 = smul.u32 %s17, %s18
    %s124 = smul.u32 %s29, %s25
    %s125 = ssub.s32 %s123, %s124
    %p126 = scmp.eq.s32.totalorder %s125, 0
    %s128 = sadd.s32 %s127, 1
    %s129 = scalar_select %p126, %s127, %s128
    %p132 = pneg %p126
    %p133 = scmp.eq.s32.totalorder %s10, 1
    %p134 = por %p132, %p133
    %p135 = scmp.ne.s32.totalorder %s127, %s130
    %p136 = scmp.eq.s32.totalorder %s10, 0
    %p137 = por %p135, %p136
    %p138 = scmp.ne.s32.totalorder %s127, %s130
    %p139 = scmp.eq.s32.totalorder %s15, 1
    %p140 = por %p138, %p139
    %p141 = scmp.ne.s32.totalorder %s130, %s131
    %p142 = scmp.eq.s32.totalorder %s15, 0
    %p143 = por %p141, %p142
    %p144 = scmp.ne.s32.totalorder %s130, %s131
    %p145 = scmp.eq.s32.totalorder %s16, 1
    %p146 = por %p144, %p145
    %p148 = scmp.ne.s32.totalorder %s131, %s147
    %p149 = scmp.eq.s32.totalorder %s16, 0
    %p150 = por %p148, %p149
    %p151 = scmp.le.s32.totalorder 1, %s10
    %p152 = scmp.lt.s32.totalorder %s10, 3
    %p153 = pnand %p151, %p152
    %p154 = pneg %p153
    // Predicated region
    $region9: #{_lambda_.6} parent=5 // pred_check
      _
    $region10: #{_lambda_.6} parent=5 // pred_check_branch
      %156 = sbr.rel (%p153) target = $region12
    $region11: #{_lambda_.6} parent=5 // pred_region
      %s157 = ssub.s32 %s10, 1
      // Predicated region
      $region13: #{_lambda_.6} parent=11 // pred_check
        %p158 = pneg %p73
      $region14: #{_lambda_.6} parent=11 // pred_check_branch
        %160 = sbr.rel (%p158) target = $region16
      $region15: #{_lambda_.6} parent=11 // pred_region
        _
      $region16: #{_lambda_.6} parent=11 // pred_fallthru
        _
      // Predicated region
      $region17: #{_lambda_.6} parent=11 // pred_check
        %p161 = pneg %p94
      $region18: #{_lambda_.6} parent=11 // pred_check_branch
        %163 = sbr.rel (%p161) target = $region20
      $region19: #{_lambda_.6} parent=11 // pred_region
        _
      $region20: #{_lambda_.6} parent=11 // pred_fallthru
        _
      // Predicated region
      $region21: #{_lambda_.6} parent=11 // pred_check
        %p164 = pneg %p115
      $region22: #{_lambda_.6} parent=11 // pred_check_branch
        %166 = sbr.rel (%p164) target = $region24
      $region23: #{_lambda_.6} parent=11 // pred_region
        _
      $region24: #{_lambda_.6} parent=11 // pred_fallthru
        _
    $region12: #{_lambda_.6} parent=5 // pred_fallthru
      _
    %p167 = scmp.lt.s32.totalorder %s10, 2
    // Predicated region
    $region25: #{_lambda_.6} parent=5 // pred_check
      %p168 = pneg %p167
    $region26: #{_lambda_.6} parent=5 // pred_check_branch
      %170 = sbr.rel (%p168) target = $region28
    $region27: #{_lambda_.6} parent=5 // pred_region
      // Predicated region
      $region29: #{_lambda_.6} parent=27 // pred_check
        %p171 = pneg %p46
      $region30: #{_lambda_.6} parent=27 // pred_check_branch
        %173 = sbr.rel (%p171) target = $region32
      $region31: #{_lambda_.6} parent=27 // pred_region
        %s174 = ssub.s32 1, %s17
        %s175 = smul.u32 %s174, %s18
        %s176 = smul.u32 64, %s175
        %p177 = scmp.lt.s32.totalorder %s176, 63
        %s178 = scalar_select %p177, %s176, 63
        %s179 = smul.addr %s178, 4
        %s180 = scalar_lea.vmem %s0, %s179
        %s181 = ssub.s32 1, %s17
        %s182 = smul.u32 %s181, %s18
        %s183 = smul.u32 64, %s182
      $region32: #{_lambda_.6} parent=27 // pred_fallthru
        _
    $region28: #{_lambda_.6} parent=5 // pred_fallthru
      _
    %p184 = scmp.le.s32.totalorder 1, %s10
    %p185 = scmp.lt.s32.totalorder %s10, 3
    %p186 = pnand %p184, %p185
    %p187 = pneg %p186
    // Predicated region
    $region33: #{_lambda_.6} parent=5 // pred_check
      _
    $region34: #{_lambda_.6} parent=5 // pred_check_branch
      %189 = sbr.rel (%p186) target = $region36
    $region35: #{_lambda_.6} parent=5 // pred_region
      %s190 = ssub.s32 %s10, 1
      %s191 = ssub.s32 1, %s19
      %s192 = smul.u32 %s191, %s20
      %s193 = smul.u32 64, %s192
      %p194 = scmp.lt.s32.totalorder %s193, 63
      %s195 = scalar_select %p194, %s193, 63
      %s196 = smul.addr %s195, 4
      %s197 = scalar_lea.vmem %s0, %s196
      %p198 = pneg %p52
      %p199 = pneg %p49
      %p200 = pneg %p73
      %p201 = pneg %p70
      %p202 = pneg %p94
      %p203 = pneg %p91
      %p204 = pneg %p115
      %p205 = pneg %p112
      %p206 = pneg %p143
      %p207 = pneg %p140
      %s208 = smul.u32 %s19, %s20
      %s209 = smul.u32 64, %s208
      %p210 = scmp.lt.s32.totalorder %s209, 63
      %s211 = scalar_select %p210, %s209, 63
      %s212 = smul.addr %s211, 4
      %s213 = scalar_lea.vmem %s4, %s212
      %s214 = ssub.s32 1, %s19
      %s215 = smul.u32 %s214, %s20
      %s216 = smul.u32 64, %s215
      %p217 = scmp.lt.s32.totalorder %s216, 63
      %s218 = scalar_select %p217, %s216, 63
      %s219 = smul.addr %s218, 4
      %s220 = scalar_lea.vmem %s0, %s219
      %s221 = ssub.s32 1, %s19
      %s222 = smul.u32 %s221, %s20
      %s223 = smul.u32 64, %s222
      %s224 = smul.u32 %s19, %s20
      %s225 = smul.u32 64, %s224
      %p226 = scmp.lt.s32.totalorder %s225, 63
      %s227 = scalar_select %p226, %s225, 63
      %s228 = smul.addr %s227, 4
      %s229 = scalar_lea.vmem %s4, %s228
      %s230 = smul.u32 %s19, %s20
      %s231 = smul.u32 64, %s230
      %p233 = scmp.eq.s32.totalorder %s19, 0
      %p234 = scmp.eq.s32.totalorder %s20, 0
      %p235 = pnand %p233, %p234
      %p236 = pneg %p235
      // Predicated region
      $region37: #{_lambda_.6} parent=35 // pred_check
        _
      $region38: #{_lambda_.6} parent=35 // pred_check_branch
        %238 = sbr.rel (%p235) target = $region40
      $region39: #{_lambda_.6} parent=35 // pred_region
        %239 = vst [vmem:[#allocation3] sm:$0x1] 0.0
        %240 = vst [vmem:[#allocation4] sm:$0x1] 0.0
      $region40: #{_lambda_.6} parent=35 // pred_fallthru
        _
      // Predicated region
      $region41: #{_lambda_.6} parent=35 // pred_check
        %p241 = pneg %p233
      $region42: #{_lambda_.6} parent=35 // pred_check_branch
        %243 = sbr.rel (%p241) target = $region44
      $region43: #{_lambda_.6} parent=35 // pred_region
        %v244 = vld [vmem:[%s220] sm:$0xf]
        %v245 = vld [vmem:[%s220 + $0x4] sm:$0xf]
        %v246 = vld [vmem:[%s220 + $0x8] sm:$0xf]
        %v247 = vld [vmem:[%s220 + $0xc] sm:$0xf]
        %v248 = vld [vmem:[%s220 + $0x10] sm:$0xf]
        %v249 = vld [vmem:[%s220 + $0x14] sm:$0xf]
        %v250 = vld [vmem:[%s220 + $0x18] sm:$0xf]
        %v251 = vld [vmem:[%s220 + $0x1c] sm:$0xf]
        %v252 = vld [vmem:[%s220 + $0x20] sm:$0xf]
        %v253 = vld [vmem:[%s220 + $0x24] sm:$0xf]
        %v254 = vld [vmem:[%s220 + $0x28] sm:$0xf]
        %v255 = vld [vmem:[%s220 + $0x2c] sm:$0xf]
        %v256 = vld [vmem:[%s220 + $0x30] sm:$0xf]
        %v257 = vld [vmem:[%s220 + $0x34] sm:$0xf]
        %v258 = vld [vmem:[%s220 + $0x38] sm:$0xf]
        %v259 = vld [vmem:[%s220 + $0x3c] sm:$0xf]
        %v260 = vld [vmem:[%s220 + $0x40] sm:$0xf]
        %v261 = vld [vmem:[%s220 + $0x44] sm:$0xf]
        %v262 = vld [vmem:[%s220 + $0x48] sm:$0xf]
        %v263 = vld [vmem:[%s220 + $0x4c] sm:$0xf]
        %v264 = vld [vmem:[%s220 + $0x50] sm:$0xf]
        %v265 = vld [vmem:[%s220 + $0x54] sm:$0xf]
        %v266 = vld [vmem:[%s220 + $0x58] sm:$0xf]
        %v267 = vld [vmem:[%s220 + $0x5c] sm:$0xf]
        %v268 = vld [vmem:[%s220 + $0x60] sm:$0xf]
        %v269 = vld [vmem:[%s220 + $0x64] sm:$0xf]
        %v270 = vld [vmem:[%s220 + $0x68] sm:$0xf]
        %v271 = vld [vmem:[%s220 + $0x6c] sm:$0xf]
        %v272 = vld [vmem:[%s220 + $0x70] sm:$0xf]
        %v273 = vld [vmem:[%s220 + $0x74] sm:$0xf]
        %v274 = vld [vmem:[%s220 + $0x78] sm:$0xf]
        %v275 = vld [vmem:[%s220 + $0x7c] sm:$0xf]
        %v276 = vld [vmem:[%s220 + $0x80] sm:$0xf]
        %v277 = vld [vmem:[%s220 + $0x84] sm:$0xf]
        %v278 = vld [vmem:[%s220 + $0x88] sm:$0xf]
        %v279 = vld [vmem:[%s220 + $0x8c] sm:$0xf]
        %v280 = vld [vmem:[%s220 + $0x90] sm:$0xf]
        %v281 = vld [vmem:[%s220 + $0x94] sm:$0xf]
        %v282 = vld [vmem:[%s220 + $0x98] sm:$0xf]
        %v283 = vld [vmem:[%s220 + $0x9c] sm:$0xf]
        %v284 = vld [vmem:[%s220 + $0xa0] sm:$0xf]
        %v285 = vld [vmem:[%s220 + $0xa4] sm:$0xf]
        %v286 = vld [vmem:[%s220 + $0xa8] sm:$0xf]
        %v287 = vld [vmem:[%s220 + $0xac] sm:$0xf]
        %v288 = vld [vmem:[%s220 + $0xb0] sm:$0xf]
        %v289 = vld [vmem:[%s220 + $0xb4] sm:$0xf]
        %v290 = vld [vmem:[%s220 + $0xb8] sm:$0xf]
        %v291 = vld [vmem:[%s220 + $0xbc] sm:$0xf]
        %v292 = vld [vmem:[%s220 + $0xc0] sm:$0xf]
        %v293 = vld [vmem:[%s220 + $0xc4] sm:$0xf]
        %v294 = vld [vmem:[%s220 + $0xc8] sm:$0xf]
        %v295 = vld [vmem:[%s220 + $0xcc] sm:$0xf]
        %v296 = vld [vmem:[%s220 + $0xd0] sm:$0xf]
        %v297 = vld [vmem:[%s220 + $0xd4] sm:$0xf]
        %v298 = vld [vmem:[%s220 + $0xd8] sm:$0xf]
        %v299 = vld [vmem:[%s220 + $0xdc] sm:$0xf]
        %v300 = vld [vmem:[%s220 + $0xe0] sm:$0xf]
        %v301 = vld [vmem:[%s220 + $0xe4] sm:$0xf]
        %v302 = vld [vmem:[%s220 + $0xe8] sm:$0xf]
        %v303 = vld [vmem:[%s220 + $0xec] sm:$0xf]
        %v304 = vld [vmem:[%s220 + $0xf0] sm:$0xf]
        %v305 = vld [vmem:[%s220 + $0xf4] sm:$0xf]
        %v306 = vld [vmem:[%s220 + $0xf8] sm:$0xf]
        %v307 = vld [vmem:[%s220 + $0xfc] sm:$0xf]
        %v308 = vld [vmem:[%s1] sm:$0xf]
        %v309 = vld [vmem:[%s1 + $0x4] sm:$0xf]
        %v310 = vld [vmem:[%s1 + $0x8] sm:$0xf]
        %v311 = vld [vmem:[%s1 + $0xc] sm:$0xf]
        %v312 = vld [vmem:[%s1 + $0x10] sm:$0xf]
        %v313 = vld [vmem:[%s1 + $0x14] sm:$0xf]
        %v314 = vld [vmem:[%s1 + $0x18] sm:$0xf]
        %v315 = vld [vmem:[%s1 + $0x1c] sm:$0xf]
        %v316 = vld [vmem:[%s1 + $0x20] sm:$0xf]
        %v317 = vld [vmem:[%s1 + $0x24] sm:$0xf]
        %v318 = vld [vmem:[%s1 + $0x28] sm:$0xf]
        %v319 = vld [vmem:[%s1 + $0x2c] sm:$0xf]
        %v320 = vld [vmem:[%s1 + $0x30] sm:$0xf]
        %v321 = vld [vmem:[%s1 + $0x34] sm:$0xf]
        %v322 = vld [vmem:[%s1 + $0x38] sm:$0xf]
        %v323 = vld [vmem:[%s1 + $0x3c] sm:$0xf]
        %v388 = vunpack.c.l.b16 %v244
        %v389 = vunpack.c.l.b16 %v245
        %v390 = vunpack.c.l.b16 %v246
        %v391 = vunpack.c.l.b16 %v247
        %v392 = vunpack.c.l.b16 %v248
        %v393 = vunpack.c.l.b16 %v249
        %v394 = vunpack.c.l.b16 %v250
        %v395 = vunpack.c.l.b16 %v251
        %v396 = vunpack.c.l.b16 %v252
        %v397 = vunpack.c.l.b16 %v253
        %v398 = vunpack.c.l.b16 %v254
        %v399 = vunpack.c.l.b16 %v255
        %v400 = vunpack.c.l.b16 %v256
        %v401 = vunpack.c.l.b16 %v257
        %v402 = vunpack.c.l.b16 %v258
        %v403 = vunpack.c.l.b16 %v259
        %v404 = vunpack.c.l.b16 %v260
        %v405 = vunpack.c.l.b16 %v261
        %v406 = vunpack.c.l.b16 %v262
        %v407 = vunpack.c.l.b16 %v263
        %v408 = vunpack.c.l.b16 %v264
        %v409 = vunpack.c.l.b16 %v265
        %v410 = vunpack.c.l.b16 %v266
        %v411 = vunpack.c.l.b16 %v267
        %v412 = vunpack.c.l.b16 %v268
        %v413 = vunpack.c.l.b16 %v269
        %v414 = vunpack.c.l.b16 %v270
        %v415 = vunpack.c.l.b16 %v271
        %v416 = vunpack.c.l.b16 %v272
        %v417 = vunpack.c.l.b16 %v273
        %v418 = vunpack.c.l.b16 %v274
        %v419 = vunpack.c.l.b16 %v275
        %v420 = vunpack.c.l.b16 %v276
        %v421 = vunpack.c.l.b16 %v277
        %v422 = vunpack.c.l.b16 %v278
        %v423 = vunpack.c.l.b16 %v279
        %v424 = vunpack.c.l.b16 %v280
        %v425 = vunpack.c.l.b16 %v281
        %v426 = vunpack.c.l.b16 %v282
        %v427 = vunpack.c.l.b16 %v283
        %v428 = vunpack.c.l.b16 %v284
        %v429 = vunpack.c.l.b16 %v285
        %v430 = vunpack.c.l.b16 %v286
        %v431 = vunpack.c.l.b16 %v287
        %v432 = vunpack.c.l.b16 %v288
        %v433 = vunpack.c.l.b16 %v289
        %v434 = vunpack.c.l.b16 %v290
        %v435 = vunpack.c.l.b16 %v291
        %v436 = vunpack.c.l.b16 %v292
        %v437 = vunpack.c.l.b16 %v293
        %v438 = vunpack.c.l.b16 %v294
        %v439 = vunpack.c.l.b16 %v295
        %v440 = vunpack.c.l.b16 %v296
        %v441 = vunpack.c.l.b16 %v297
        %v442 = vunpack.c.l.b16 %v298
        %v443 = vunpack.c.l.b16 %v299
        %v444 = vunpack.c.l.b16 %v300
        %v445 = vunpack.c.l.b16 %v301
        %v446 = vunpack.c.l.b16 %v302
        %v447 = vunpack.c.l.b16 %v303
        %v448 = vunpack.c.l.b16 %v304
        %v449 = vunpack.c.l.b16 %v305
        %v450 = vunpack.c.l.b16 %v306
        %v451 = vunpack.c.l.b16 %v307
        %v452 = vpack.c.b16 %v389, %v388
        %v453 = vpack.c.b16 %v391, %v390
        %v454 = vpack.c.b16 %v393, %v392
        %v455 = vpack.c.b16 %v395, %v394
        %v456 = vpack.c.b16 %v397, %v396
        %v457 = vpack.c.b16 %v399, %v398
        %v458 = vpack.c.b16 %v401, %v400
        %v459 = vpack.c.b16 %v403, %v402
        %v460 = vpack.c.b16 %v405, %v404
        %v461 = vpack.c.b16 %v407, %v406
        %v462 = vpack.c.b16 %v409, %v408
        %v463 = vpack.c.b16 %v411, %v410
        %v464 = vpack.c.b16 %v413, %v412
        %v465 = vpack.c.b16 %v415, %v414
        %v466 = vpack.c.b16 %v417, %v416
        %v467 = vpack.c.b16 %v419, %v418
        %v468 = vpack.c.b16 %v421, %v420
        %v469 = vpack.c.b16 %v423, %v422
        %v470 = vpack.c.b16 %v425, %v424
        %v471 = vpack.c.b16 %v427, %v426
        %v472 = vpack.c.b16 %v429, %v428
        %v473 = vpack.c.b16 %v431, %v430
        %v474 = vpack.c.b16 %v433, %v432
        %v475 = vpack.c.b16 %v435, %v434
        %v476 = vpack.c.b16 %v437, %v436
        %v477 = vpack.c.b16 %v439, %v438
        %v478 = vpack.c.b16 %v441, %v440
        %v479 = vpack.c.b16 %v443, %v442
        %v480 = vpack.c.b16 %v445, %v444
        %v481 = vpack.c.b16 %v447, %v446
        %v482 = vpack.c.b16 %v449, %v448
        %v483 = vpack.c.b16 %v451, %v450
        %v532 = vunpack.c.l.b16 %v308
        %v533 = vunpack.c.l.b16 %v309
        %v534 = vunpack.c.l.b16 %v310
        %v535 = vunpack.c.l.b16 %v311
        %v536 = vunpack.c.l.b16 %v312
        %v537 = vunpack.c.l.b16 %v313
        %v538 = vunpack.c.l.b16 %v314
        %v539 = vunpack.c.l.b16 %v315
        %v540 = vunpack.c.l.b16 %v316
        %v541 = vunpack.c.l.b16 %v317
        %v542 = vunpack.c.l.b16 %v318
        %v543 = vunpack.c.l.b16 %v319
        %v544 = vunpack.c.l.b16 %v320
        %v545 = vunpack.c.l.b16 %v321
        %v546 = vunpack.c.l.b16 %v322
        %v547 = vunpack.c.l.b16 %v323
        %v548 = vpack.c.b16 %v533, %v532
        %v549 = vpack.c.b16 %v535, %v534
        %v550 = vpack.c.b16 %v537, %v536
        %v551 = vpack.c.b16 %v539, %v538
        %v552 = vpack.c.b16 %v541, %v540
        %v553 = vpack.c.b16 %v543, %v542
        %v554 = vpack.c.b16 %v545, %v544
        %v555 = vpack.c.b16 %v547, %v546
        %564 = vmatprep.subr.bf16.mxu0 0
        %565 = vmatpush1.bf16.msra.mxu0 %v548
        %566 = vmatprep.subr.bf16.mxu0 0
        %567 = vmatpush1.bf16.msra.mxu0 %v549
        %568 = vmatprep.subr.bf16.mxu0 0
        %569 = vmatpush1.bf16.msra.mxu0 %v550
        %570 = vmatprep.subr.bf16.mxu0 0
        %571 = vmatpush1.bf16.msra.mxu0 %v551
        %572 = vmatprep.subr.bf16.mxu0 0
        %573 = vmatpush1.bf16.msra.mxu0 %v552
        %574 = vmatprep.subr.bf16.mxu0 0
        %575 = vmatpush1.bf16.msra.mxu0 %v553
        %576 = vmatprep.subr.bf16.mxu0 0
        %577 = vmatpush1.bf16.msra.mxu0 %v554
        %578 = vmatprep.subr.bf16.mxu0 0
        %579 = vmatpush1.bf16.msra.mxu0 %v555
        %580 = vmatprep.subr.bf16.mxu0 0
        %581 = vmatpush1.bf16.msra.mxu0 0
        %582 = vmatprep.subr.bf16.mxu0 0
        %583 = vmatpush1.bf16.msra.mxu0 0
        %584 = vmatprep.subr.bf16.mxu0 0
        %585 = vmatpush1.bf16.msra.mxu0 0
        %586 = vmatprep.subr.bf16.mxu0 0
        %587 = vmatpush1.bf16.msra.mxu0 0
        %588 = vmatprep.subr.bf16.mxu0 0
        %589 = vmatpush1.bf16.msra.mxu0 0
        %590 = vmatprep.subr.bf16.mxu0 0
        %591 = vmatpush1.bf16.msra.mxu0 0
        %592 = vmatprep.subr.bf16.mxu0 0
        %593 = vmatpush1.bf16.msra.mxu0 0
        %594 = vmatprep.subr.bf16.mxu0 0
        %595 = vmatpush1.bf16.msra.mxu0 0
        %596 = vmatprep.mubr.bf16.mxu0 0
        %597 = vmatmul.mubr.bf16.gmra.mrb[0].mxu0 %v452
        %v598 = vpop.f32.mrb[0].mxu0
        %v599 = vadd.f32 0.0, %v598
        %v600 = vpop.f32.mrb[0].mxu0
        %v601 = vpop.f32.mrb[0].mxu0
        %v602 = vadd.f32 0.0, %v601
        %v603 = vpop.f32.mrb[0].mxu0
        %604 = vmatprep.mubr.bf16.mxu0 0
        %605 = vmatmul.mubr.bf16.gmra.mrb[0].mxu0 %v453
        %v606 = vpop.f32.mrb[0].mxu0
        %v607 = vadd.f32 0.0, %v606
        %v608 = vpop.f32.mrb[0].mxu0
        %v609 = vpop.f32.mrb[0].mxu0
        %v610 = vadd.f32 0.0, %v609
        %v611 = vpop.f32.mrb[0].mxu0
        %612 = vmatprep.mubr.bf16.mxu0 0
        %613 = vmatmul.mubr.bf16.gmra.mrb[0].mxu0 %v454
        %v614 = vpop.f32.mrb[0].mxu0
        %v615 = vadd.f32 0.0, %v614
        %v616 = vpop.f32.mrb[0].mxu0
        %v617 = vpop.f32.mrb[0].mxu0
        %v618 = vadd.f32 0.0, %v617
        %v619 = vpop.f32.mrb[0].mxu0
        %620 = vmatprep.mubr.bf16.mxu0 0
        %621 = vmatmul.mubr.bf16.gmra.mrb[0].mxu0 %v455
        %v622 = vpop.f32.mrb[0].mxu0
        %v623 = vadd.f32 0.0, %v622
        %v624 = vpop.f32.mrb[0].mxu0
        %v625 = vpop.f32.mrb[0].mxu0
        %v626 = vadd.f32 0.0, %v625
        %v627 = vpop.f32.mrb[0].mxu0
        %628 = vmatprep.mubr.bf16.mxu0 0
        %629 = vmatmul.mubr.bf16.gmra.mrb[0].mxu0 %v456
        %v630 = vpop.f32.mrb[0].mxu0
        %v631 = vadd.f32 0.0, %v630
        %v632 = vpop.f32.mrb[0].mxu0
        %v633 = vpop.f32.mrb[0].mxu0
        %v634 = vadd.f32 0.0, %v633
        %v635 = vpop.f32.mrb[0].mxu0
        %636 = vmatprep.mubr.bf16.mxu0 0
        %637 = vmatmul.mubr.bf16.gmra.mrb[0].mxu0 %v457
        %v638 = vpop.f32.mrb[0].mxu0
        %v639 = vadd.f32 0.0, %v638
        %v640 = vpop.f32.mrb[0].mxu0
        %v641 = vpop.f32.mrb[0].mxu0
        %v642 = vadd.f32 0.0, %v641
        %v643 = vpop.f32.mrb[0].mxu0
        %644 = vmatprep.mubr.bf16.mxu0 0
        %645 = vmatmul.mubr.bf16.gmra.mrb[0].mxu0 %v458
        %v646 = vpop.f32.mrb[0].mxu0
        %v647 = vadd.f32 0.0, %v646
        %v648 = vpop.f32.mrb[0].mxu0
        %v649 = vpop.f32.mrb[0].mxu0
        %v650 = vadd.f32 0.0, %v649
        %v651 = vpop.f32.mrb[0].mxu0
        %652 = vmatprep.mubr.bf16.mxu0 0
        %653 = vmatmul.mubr.bf16.gmra.mrb[0].mxu0 %v459
        %v654 = vpop.f32.mrb[0].mxu0
        %v655 = vadd.f32 0.0, %v654
        %v656 = vpop.f32.mrb[0].mxu0
        %v657 = vpop.f32.mrb[0].mxu0
        %v658 = vadd.f32 0.0, %v657
        %v659 = vpop.f32.mrb[0].mxu0
        %660 = vmatprep.mubr.bf16.mxu0 0
        %661 = vmatmul.mubr.bf16.gmra.mrb[0].mxu0 %v460
        %v662 = vpop.f32.mrb[0].mxu0
        %v663 = vadd.f32 0.0, %v662
        %v664 = vpop.f32.mrb[0].mxu0
        %v665 = vpop.f32.mrb[0].mxu0
        %v666 = vadd.f32 0.0, %v665
        %v667 = vpop.f32.mrb[0].mxu0
        %668 = vmatprep.mubr.bf16.mxu0 0
        %669 = vmatmul.mubr.bf16.gmra.mrb[0].mxu0 %v461
        %v670 = vpop.f32.mrb[0].mxu0
        %v671 = vadd.f32 0.0, %v670
        %v672 = vpop.f32.mrb[0].mxu0
        %v673 = vpop.f32.mrb[0].mxu0
        %v674 = vadd.f32 0.0, %v673
        %v675 = vpop.f32.mrb[0].mxu0
        %676 = vmatprep.mubr.bf16.mxu0 0
        %677 = vmatmul.mubr.bf16.gmra.mrb[0].mxu0 %v462
        %v678 = vpop.f32.mrb[0].mxu0
        %v679 = vadd.f32 0.0, %v678
        %v680 = vpop.f32.mrb[0].mxu0
        %v681 = vpop.f32.mrb[0].mxu0
        %v682 = vadd.f32 0.0, %v681
        %v683 = vpop.f32.mrb[0].mxu0
        %684 = vmatprep.mubr.bf16.mxu0 0
        %685 = vmatmul.mubr.bf16.gmra.mrb[0].mxu0 %v463
        %v686 = vpop.f32.mrb[0].mxu0
        %v687 = vadd.f32 0.0, %v686
        %v688 = vpop.f32.mrb[0].mxu0
        %v689 = vpop.f32.mrb[0].mxu0
        %v690 = vadd.f32 0.0, %v689
        %v691 = vpop.f32.mrb[0].mxu0
        %692 = vmatprep.mubr.bf16.mxu0 0
        %693 = vmatmul.mubr.bf16.gmra.mrb[0].mxu0 %v464
        %v694 = vpop.f32.mrb[0].mxu0
        %v695 = vadd.f32 0.0, %v694
        %v696 = vpop.f32.mrb[0].mxu0
        %v697 = vpop.f32.mrb[0].mxu0
        %v698 = vadd.f32 0.0, %v697
        %v699 = vpop.f32.mrb[0].mxu0
        %700 = vmatprep.mubr.bf16.mxu0 0
        %701 = vmatmul.mubr.bf16.gmra.mrb[0].mxu0 %v465
        %v702 = vpop.f32.mrb[0].mxu0
        %v703 = vadd.f32 0.0, %v702
        %v704 = vpop.f32.mrb[0].mxu0
        %v705 = vpop.f32.mrb[0].mxu0
        %v706 = vadd.f32 0.0, %v705
        %v707 = vpop.f32.mrb[0].mxu0
        %708 = vmatprep.mubr.bf16.mxu0 0
        %709 = vmatmul.mubr.bf16.gmra.mrb[0].mxu0 %v466
        %v710 = vpop.f32.mrb[0].mxu0
        %v711 = vadd.f32 0.0, %v710
        %v712 = vpop.f32.mrb[0].mxu0
        %v713 = vpop.f32.mrb[0].mxu0
        %v714 = vadd.f32 0.0, %v713
        %v715 = vpop.f32.mrb[0].mxu0
        %716 = vmatprep.mubr.bf16.mxu0 0
        %717 = vmatmul.mubr.bf16.gmra.mrb[0].mxu0 %v467
        %v718 = vpop.f32.mrb[0].mxu0
        %v719 = vadd.f32 0.0, %v718
        %v720 = vpop.f32.mrb[0].mxu0
        %v721 = vpop.f32.mrb[0].mxu0
        %v722 = vadd.f32 0.0, %v721
        %v723 = vpop.f32.mrb[0].mxu0
        %724 = vmatprep.mubr.bf16.mxu0 0
        %725 = vmatmul.mubr.bf16.gmra.mrb[0].mxu0 %v468
        %v726 = vpop.f32.mrb[0].mxu0
        %v727 = vadd.f32 0.0, %v726
        %v728 = vpop.f32.mrb[0].mxu0
        %v729 = vpop.f32.mrb[0].mxu0
        %v730 = vadd.f32 0.0, %v729
        %v731 = vpop.f32.mrb[0].mxu0
        %732 = vmatprep.mubr.bf16.mxu0 0
        %733 = vmatmul.mubr.bf16.gmra.mrb[0].mxu0 %v469
        %v734 = vpop.f32.mrb[0].mxu0
        %v735 = vadd.f32 0.0, %v734
        %v736 = vpop.f32.mrb[0].mxu0
        %v737 = vpop.f32.mrb[0].mxu0
        %v738 = vadd.f32 0.0, %v737
        %v739 = vpop.f32.mrb[0].mxu0
        %740 = vmatprep.mubr.bf16.mxu0 0
        %741 = vmatmul.mubr.bf16.gmra.mrb[0].mxu0 %v470
        %v742 = vpop.f32.mrb[0].mxu0
        %v743 = vadd.f32 0.0, %v742
        %v744 = vpop.f32.mrb[0].mxu0
        %v745 = vpop.f32.mrb[0].mxu0
        %v746 = vadd.f32 0.0, %v745
        %v747 = vpop.f32.mrb[0].mxu0
        %748 = vmatprep.mubr.bf16.mxu0 0
        %749 = vmatmul.mubr.bf16.gmra.mrb[0].mxu0 %v471
        %v750 = vpop.f32.mrb[0].mxu0
        %v751 = vadd.f32 0.0, %v750
        %v752 = vpop.f32.mrb[0].mxu0
        %v753 = vpop.f32.mrb[0].mxu0
        %v754 = vadd.f32 0.0, %v753
        %v755 = vpop.f32.mrb[0].mxu0
        %756 = vmatprep.mubr.bf16.mxu0 0
        %757 = vmatmul.mubr.bf16.gmra.mrb[0].mxu0 %v472
        %v758 = vpop.f32.mrb[0].mxu0
        %v759 = vadd.f32 0.0, %v758
        %v760 = vpop.f32.mrb[0].mxu0
        %v761 = vpop.f32.mrb[0].mxu0
        %v762 = vadd.f32 0.0, %v761
        %v763 = vpop.f32.mrb[0].mxu0
        %764 = vmatprep.mubr.bf16.mxu0 0
        %765 = vmatmul.mubr.bf16.gmra.mrb[0].mxu0 %v473
        %v766 = vpop.f32.mrb[0].mxu0
        %v767 = vadd.f32 0.0, %v766
        %v768 = vpop.f32.mrb[0].mxu0
        %v769 = vpop.f32.mrb[0].mxu0
        %v770 = vadd.f32 0.0, %v769
        %v771 = vpop.f32.mrb[0].mxu0
        %772 = vmatprep.mubr.bf16.mxu0 0
        %773 = vmatmul.mubr.bf16.gmra.mrb[0].mxu0 %v474
        %v774 = vpop.f32.mrb[0].mxu0
        %v775 = vadd.f32 0.0, %v774
        %v776 = vpop.f32.mrb[0].mxu0
        %v777 = vpop.f32.mrb[0].mxu0
        %v778 = vadd.f32 0.0, %v777
        %v779 = vpop.f32.mrb[0].mxu0
        %780 = vmatprep.mubr.bf16.mxu0 0
        %781 = vmatmul.mubr.bf16.gmra.mrb[0].mxu0 %v475
        %v782 = vpop.f32.mrb[0].mxu0
        %v783 = vadd.f32 0.0, %v782
        %v784 = vpop.f32.mrb[0].mxu0
        %v785 = vpop.f32.mrb[0].mxu0
        %v786 = vadd.f32 0.0, %v785
        %v787 = vpop.f32.mrb[0].mxu0
        %788 = vmatprep.mubr.bf16.mxu0 0
        %789 = vmatmul.mubr.bf16.gmra.mrb[0].mxu0 %v476
        %v790 = vpop.f32.mrb[0].mxu0
        %v791 = vadd.f32 0.0, %v790
        %v792 = vpop.f32.mrb[0].mxu0
        %v793 = vpop.f32.mrb[0].mxu0
        %v794 = vadd.f32 0.0, %v793
        %v795 = vpop.f32.mrb[0].mxu0
        %796 = vmatprep.mubr.bf16.mxu0 0
        %797 = vmatmul.mubr.bf16.gmra.mrb[0].mxu0 %v477
        %v798 = vpop.f32.mrb[0].mxu0
        %v799 = vadd.f32 0.0, %v798
        %v800 = vpop.f32.mrb[0].mxu0
        %v801 = vpop.f32.mrb[0].mxu0
        %v802 = vadd.f32 0.0, %v801
        %v803 = vpop.f32.mrb[0].mxu0
        %804 = vmatprep.mubr.bf16.mxu0 0
        %805 = vmatmul.mubr.bf16.gmra.mrb[0].mxu0 %v478
        %v806 = vpop.f32.mrb[0].mxu0
        %v807 = vadd.f32 0.0, %v806
        %v808 = vpop.f32.mrb[0].mxu0
        %v809 = vpop.f32.mrb[0].mxu0
        %v810 = vadd.f32 0.0, %v809
        %v811 = vpop.f32.mrb[0].mxu0
        %812 = vmatprep.mubr.bf16.mxu0 0
        %813 = vmatmul.mubr.bf16.gmra.mrb[0].mxu0 %v479
        %v814 = vpop.f32.mrb[0].mxu0
        %v815 = vadd.f32 0.0, %v814
        %v816 = vpop.f32.mrb[0].mxu0
        %v817 = vpop.f32.mrb[0].mxu0
        %v818 = vadd.f32 0.0, %v817
        %v819 = vpop.f32.mrb[0].mxu0
        %820 = vmatprep.mubr.bf16.mxu0 0
        %821 = vmatmul.mubr.bf16.gmra.mrb[0].mxu0 %v480
        %v822 = vpop.f32.mrb[0].mxu0
        %v823 = vadd.f32 0.0, %v822
        %v824 = vpop.f32.mrb[0].mxu0
        %v825 = vpop.f32.mrb[0].mxu0
        %v826 = vadd.f32 0.0, %v825
        %v827 = vpop.f32.mrb[0].mxu0
        %828 = vmatprep.mubr.bf16.mxu0 0
        %829 = vmatmul.mubr.bf16.gmra.mrb[0].mxu0 %v481
        %v830 = vpop.f32.mrb[0].mxu0
        %v831 = vadd.f32 0.0, %v830
        %v832 = vpop.f32.mrb[0].mxu0
        %v833 = vpop.f32.mrb[0].mxu0
        %v834 = vadd.f32 0.0, %v833
        %v835 = vpop.f32.mrb[0].mxu0
        %836 = vmatprep.mubr.bf16.mxu0 0
        %837 = vmatmul.mubr.bf16.gmra.mrb[0].mxu0 %v482
        %v838 = vpop.f32.mrb[0].mxu0
        %v839 = vadd.f32 0.0, %v838
        %v840 = vpop.f32.mrb[0].mxu0
        %v841 = vpop.f32.mrb[0].mxu0
        %v842 = vadd.f32 0.0, %v841
        %v843 = vpop.f32.mrb[0].mxu0
        %844 = vmatprep.mubr.bf16.mxu0 0
        %845 = vmatmul.mubr.bf16.gmra.mrb[0].mxu0 %v483
        %v846 = vpop.f32.mrb[0].mxu0
        %v847 = vadd.f32 0.0, %v846
        %v848 = vpop.f32.mrb[0].mxu0
        %v849 = vpop.f32.mrb[0].mxu0
        %v850 = vadd.f32 0.0, %v849
        %v851 = vpop.f32.mrb[0].mxu0
        %852 = vdwg.mxu0
        %s853 = smul.u32 %s20, 512
        %s854 = scalar_lea.vmem [#allocation2], %s853
        %855 = vst [vmem:[%s854] sm:$0xff] %v599
        %856 = vst [vmem:[%s854 + $0x8] sm:$0xff] %v602
        %857 = vst [vmem:[%s854 + $0x10] sm:$0xff] %v607
        %858 = vst [vmem:[%s854 + $0x18] sm:$0xff] %v610
        %859 = vst [vmem:[%s854 + $0x20] sm:$0xff] %v615
        %860 = vst [vmem:[%s854 + $0x28] sm:$0xff] %v618
        %861 = vst [vmem:[%s854 + $0x30] sm:$0xff] %v623
        %862 = vst [vmem:[%s854 + $0x38] sm:$0xff] %v626
        %863 = vst [vmem:[%s854 + $0x40] sm:$0xff] %v631
        %864 = vst [vmem:[%s854 + $0x48] sm:$0xff] %v634
        %865 = vst [vmem:[%s854 + $0x50] sm:$0xff] %v639
        %866 = vst [vmem:[%s854 + $0x58] sm:$0xff] %v642
        %867 = vst [vmem:[%s854 + $0x60] sm:$0xff] %v647
        %868 = vst [vmem:[%s854 + $0x68] sm:$0xff] %v650
        %869 = vst [vmem:[%s854 + $0x70] sm:$0xff] %v655
        %870 = vst [vmem:[%s854 + $0x78] sm:$0xff] %v658
        %871 = vst [vmem:[%s854 + $0x80] sm:$0xff] %v663
        %872 = vst [vmem:[%s854 + $0x88] sm:$0xff] %v666
        %873 = vst [vmem:[%s854 + $0x90] sm:$0xff] %v671
        %874 = vst [vmem:[%s854 + $0x98] sm:$0xff] %v674
        %875 = vst [vmem:[%s854 + $0xa0] sm:$0xff] %v679
        %876 = vst [vmem:[%s854 + $0xa8] sm:$0xff] %v682
        %877 = vst [vmem:[%s854 + $0xb0] sm:$0xff] %v687
        %878 = vst [vmem:[%s854 + $0xb8] sm:$0xff] %v690
        %879 = vst [vmem:[%s854 + $0xc0] sm:$0xff] %v695
        %880 = vst [vmem:[%s854 + $0xc8] sm:$0xff] %v698
        %881 = vst [vmem:[%s854 + $0xd0] sm:$0xff] %v703
        %882 = vst [vmem:[%s854 + $0xd8] sm:$0xff] %v706
        %883 = vst [vmem:[%s854 + $0xe0] sm:$0xff] %v711
        %884 = vst [vmem:[%s854 + $0xe8] sm:$0xff] %v714
        %885 = vst [vmem:[%s854 + $0xf0] sm:$0xff] %v719
        %886 = vst [vmem:[%s854 + $0xf8] sm:$0xff] %v722
        %887 = vst [vmem:[%s854 + $0x100] sm:$0xff] %v727
        %888 = vst [vmem:[%s854 + $0x108] sm:$0xff] %v730
        %889 = vst [vmem:[%s854 + $0x110] sm:$0xff] %v735
        %890 = vst [vmem:[%s854 + $0x118] sm:$0xff] %v738
        %891 = vst [vmem:[%s854 + $0x120] sm:$0xff] %v743
        %892 = vst [vmem:[%s854 + $0x128] sm:$0xff] %v746
        %893 = vst [vmem:[%s854 + $0x130] sm:$0xff] %v751
        %894 = vst [vmem:[%s854 + $0x138] sm:$0xff] %v754
        %895 = vst [vmem:[%s854 + $0x140] sm:$0xff] %v759
        %896 = vst [vmem:[%s854 + $0x148] sm:$0xff] %v762
        %897 = vst [vmem:[%s854 + $0x150] sm:$0xff] %v767
        %898 = vst [vmem:[%s854 + $0x158] sm:$0xff] %v770
        %899 = vst [vmem:[%s854 + $0x160] sm:$0xff] %v775
        %900 = vst [vmem:[%s854 + $0x168] sm:$0xff] %v778
        %901 = vst [vmem:[%s854 + $0x170] sm:$0xff] %v783
        %902 = vst [vmem:[%s854 + $0x178] sm:$0xff] %v786
        %903 = vst [vmem:[%s854 + $0x180] sm:$0xff] %v791
        %904 = vst [vmem:[%s854 + $0x188] sm:$0xff] %v794
        %905 = vst [vmem:[%s854 + $0x190] sm:$0xff] %v799
        %906 = vst [vmem:[%s854 + $0x198] sm:$0xff] %v802
        %907 = vst [vmem:[%s854 + $0x1a0] sm:$0xff] %v807
        %908 = vst [vmem:[%s854 + $0x1a8] sm:$0xff] %v810
        %909 = vst [vmem:[%s854 + $0x1b0] sm:$0xff] %v815
        %910 = vst [vmem:[%s854 + $0x1b8] sm:$0xff] %v818
        %911 = vst [vmem:[%s854 + $0x1c0] sm:$0xff] %v823
        %912 = vst [vmem:[%s854 + $0x1c8] sm:$0xff] %v826
        %913 = vst [vmem:[%s854 + $0x1d0] sm:$0xff] %v831
        %914 = vst [vmem:[%s854 + $0x1d8] sm:$0xff] %v834
        %915 = vst [vmem:[%s854 + $0x1e0] sm:$0xff] %v839
        %916 = vst [vmem:[%s854 + $0x1e8] sm:$0xff] %v842
        %917 = vst [vmem:[%s854 + $0x1f0] sm:$0xff] %v847
        %918 = vst [vmem:[%s854 + $0x1f8] sm:$0xff] %v850
        %v919 = vld [vmem:[#allocation3] sm:$0x1]
        %v920 = vadd.f32 %v599, %v602
        %v921 = vadd.f32 %v920, %v607
        %v922 = vadd.f32 %v921, %v610
        %v923 = vadd.f32 %v922, %v615
        %v924 = vadd.f32 %v923, %v618
        %v925 = vadd.f32 %v924, %v623
        %v926 = vadd.f32 %v925, %v626
        %v927 = vadd.f32 %v926, %v631
        %v928 = vadd.f32 %v927, %v634
        %v929 = vadd.f32 %v928, %v639
        %v930 = vadd.f32 %v929, %v642
        %v931 = vadd.f32 %v930, %v647
        %v932 = vadd.f32 %v931, %v650
        %v933 = vadd.f32 %v932, %v655
        %v934 = vadd.f32 %v933, %v658
        %v935 = vadd.f32 %v934, %v663
        %v936 = vadd.f32 %v935, %v666
        %v937 = vadd.f32 %v936, %v671
        %v938 = vadd.f32 %v937, %v674
        %v939 = vadd.f32 %v938, %v679
        %v940 = vadd.f32 %v939, %v682
        %v941 = vadd.f32 %v940, %v687
        %v942 = vadd.f32 %v941, %v690
        %v943 = vadd.f32 %v942, %v695
        %v944 = vadd.f32 %v943, %v698
        %v945 = vadd.f32 %v944, %v703
        %v946 = vadd.f32 %v945, %v706
        %v947 = vadd.f32 %v946, %v711
        %v948 = vadd.f32 %v947, %v714
        %v949 = vadd.f32 %v948, %v719
        %v950 = vadd.f32 %v949, %v722
        %v951 = vadd.f32 %v950, %v727
        %v952 = vadd.f32 %v951, %v730
        %v953 = vadd.f32 %v952, %v735
        %v954 = vadd.f32 %v953, %v738
        %v955 = vadd.f32 %v954, %v743
        %v956 = vadd.f32 %v955, %v746
        %v957 = vadd.f32 %v956, %v751
        %v958 = vadd.f32 %v957, %v754
        %v959 = vadd.f32 %v958, %v759
        %v960 = vadd.f32 %v959, %v762
        %v961 = vadd.f32 %v960, %v767
        %v962 = vadd.f32 %v961, %v770
        %v963 = vadd.f32 %v962, %v775
        %v964 = vadd.f32 %v963, %v778
        %v965 = vadd.f32 %v964, %v783
        %v966 = vadd.f32 %v965, %v786
        %v967 = vadd.f32 %v966, %v791
        %v968 = vadd.f32 %v967, %v794
        %v969 = vadd.f32 %v968, %v799
        %v970 = vadd.f32 %v969, %v802
        %v971 = vadd.f32 %v970, %v807
        %v972 = vadd.f32 %v971, %v810
        %v973 = vadd.f32 %v972, %v815
        %v974 = vadd.f32 %v973, %v818
        %v975 = vadd.f32 %v974, %v823
        %v976 = vadd.f32 %v975, %v826
        %v977 = vadd.f32 %v976, %v831
        %v978 = vadd.f32 %v977, %v834
        %v979 = vadd.f32 %v978, %v839
        %v980 = vadd.f32 %v979, %v842
        %v981 = vadd.f32 %v980, %v847
        %v982 = vadd.f32 %v981, %v850
        %v983 = vrot.slane %v982, 4
        %v984 = vadd.f32 %v982, %v983
        %v985 = vrot.slane %v984, 2
        %v986 = vadd.f32 %v984, %v985
        %v987 = vrot.slane %v986, 1
        %v988 = vadd.f32 %v986, %v987
        %v989 = vadd.f32 %v919, %v988
        %990 = vst [vmem:[#allocation3] sm:$0x1] %v989
        %v991 = vld [vmem:[#allocation4] sm:$0x1]
        %v992 = vmul.f32 %v599, %v599
        %v993 = vmul.f32 %v602, %v602
        %v994 = vmul.f32 %v607, %v607
        %v995 = vmul.f32 %v610, %v610
        %v996 = vmul.f32 %v615, %v615
        %v997 = vmul.f32 %v618, %v618
        %v998 = vmul.f32 %v623, %v623
        %v999 = vmul.f32 %v626, %v626
        %v1000 = vmul.f32 %v631, %v631
        %v1001 = vmul.f32 %v634, %v634
        %v1002 = vmul.f32 %v639, %v639
        %v1003 = vmul.f32 %v642, %v642
        %v1004 = vmul.f32 %v647, %v647
        %v1005 = vmul.f32 %v650, %v650
        %v1006 = vmul.f32 %v655, %v655
        %v1007 = vmul.f32 %v658, %v658
        %v1008 = vmul.f32 %v663, %v663
        %v1009 = vmul.f32 %v666, %v666
        %v1010 = vmul.f32 %v671, %v671
        %v1011 = vmul.f32 %v674, %v674
        %v1012 = vmul.f32 %v679, %v679
        %v1013 = vmul.f32 %v682, %v682
        %v1014 = vmul.f32 %v687, %v687
        %v1015 = vmul.f32 %v690, %v690
        %v1016 = vmul.f32 %v695, %v695
        %v1017 = vmul.f32 %v698, %v698
        %v1018 = vmul.f32 %v703, %v703
        %v1019 = vmul.f32 %v706, %v706
        %v1020 = vmul.f32 %v711, %v711
        %v1021 = vmul.f32 %v714, %v714
        %v1022 = vmul.f32 %v719, %v719
        %v1023 = vmul.f32 %v722, %v722
        %v1024 = vmul.f32 %v727, %v727
        %v1025 = vmul.f32 %v730, %v730
        %v1026 = vmul.f32 %v735, %v735
        %v1027 = vmul.f32 %v738, %v738
        %v1028 = vmul.f32 %v743, %v743
        %v1029 = vmul.f32 %v746, %v746
        %v1030 = vmul.f32 %v751, %v751
        %v1031 = vmul.f32 %v754, %v754
        %v1032 = vmul.f32 %v759, %v759
        %v1033 = vmul.f32 %v762, %v762
        %v1034 = vmul.f32 %v767, %v767
        %v1035 = vmul.f32 %v770, %v770
        %v1036 = vmul.f32 %v775, %v775
        %v1037 = vmul.f32 %v778, %v778
        %v1038 = vmul.f32 %v783, %v783
        %v1039 = vmul.f32 %v786, %v786
        %v1040 = vmul.f32 %v791, %v791
        %v1041 = vmul.f32 %v794, %v794
        %v1042 = vmul.f32 %v799, %v799
        %v1043 = vmul.f32 %v802, %v802
        %v1044 = vmul.f32 %v807, %v807
        %v1045 = vmul.f32 %v810, %v810
        %v1046 = vmul.f32 %v815, %v815
        %v1047 = vmul.f32 %v818, %v818
        %v1048 = vmul.f32 %v823, %v823
        %v1049 = vmul.f32 %v826, %v826
        %v1050 = vmul.f32 %v831, %v831
        %v1051 = vmul.f32 %v834, %v834
        %v1052 = vmul.f32 %v839, %v839
        %v1053 = vmul.f32 %v842, %v842
        %v1054 = vmul.f32 %v847, %v847
        %v1055 = vmul.f32 %v850, %v850
        %v1056 = vadd.f32 %v992, %v993
        %v1057 = vadd.f32 %v1056, %v994
        %v1058 = vadd.f32 %v1057, %v995
        %v1059 = vadd.f32 %v1058, %v996
        %v1060 = vadd.f32 %v1059, %v997
        %v1061 = vadd.f32 %v1060, %v998
        %v1062 = vadd.f32 %v1061, %v999
        %v1063 = vadd.f32 %v1062, %v1000
        %v1064 = vadd.f32 %v1063, %v1001
        %v1065 = vadd.f32 %v1064, %v1002
        %v1066 = vadd.f32 %v1065, %v1003
        %v1067 = vadd.f32 %v1066, %v1004
        %v1068 = vadd.f32 %v1067, %v1005
        %v1069 = vadd.f32 %v1068, %v1006
        %v1070 = vadd.f32 %v1069, %v1007
        %v1071 = vadd.f32 %v1070, %v1008
        %v1072 = vadd.f32 %v1071, %v1009
        %v1073 = vadd.f32 %v1072, %v1010
        %v1074 = vadd.f32 %v1073, %v1011
        %v1075 = vadd.f32 %v1074, %v1012
        %v1076 = vadd.f32 %v1075, %v1013
        %v1077 = vadd.f32 %v1076, %v1014
        %v1078 = vadd.f32 %v1077, %v1015
        %v1079 = vadd.f32 %v1078, %v1016
        %v1080 = vadd.f32 %v1079, %v1017
        %v1081 = vadd.f32 %v1080, %v1018
        %v1082 = vadd.f32 %v1081, %v1019
        %v1083 = vadd.f32 %v1082, %v1020
        %v1084 = vadd.f32 %v1083, %v1021
        %v1085 = vadd.f32 %v1084, %v1022
        %v1086 = vadd.f32 %v1085, %v1023
        %v1087 = vadd.f32 %v1086, %v1024
        %v1088 = vadd.f32 %v1087, %v1025
        %v1089 = vadd.f32 %v1088, %v1026
        %v1090 = vadd.f32 %v1089, %v1027
        %v1091 = vadd.f32 %v1090, %v1028
        %v1092 = vadd.f32 %v1091, %v1029
        %v1093 = vadd.f32 %v1092, %v1030
        %v1094 = vadd.f32 %v1093, %v1031
        %v1095 = vadd.f32 %v1094, %v1032
        %v1096 = vadd.f32 %v1095, %v1033
        %v1097 = vadd.f32 %v1096, %v1034
        %v1098 = vadd.f32 %v1097, %v1035
        %v1099 = vadd.f32 %v1098, %v1036
        %v1100 = vadd.f32 %v1099, %v1037
        %v1101 = vadd.f32 %v1100, %v1038
        %v1102 = vadd.f32 %v1101, %v1039
        %v1103 = vadd.f32 %v1102, %v1040
        %v1104 = vadd.f32 %v1103, %v1041
        %v1105 = vadd.f32 %v1104, %v1042
        %v1106 = vadd.f32 %v1105, %v1043
        %v1107 = vadd.f32 %v1106, %v1044
        %v1108 = vadd.f32 %v1107, %v1045
        %v1109 = vadd.f32 %v1108, %v1046
        %v1110 = vadd.f32 %v1109, %v1047
        %v1111 = vadd.f32 %v1110, %v1048
        %v1112 = vadd.f32 %v1111, %v1049
        %v1113 = vadd.f32 %v1112, %v1050
        %v1114 = vadd.f32 %v1113, %v1051
        %v1115 = vadd.f32 %v1114, %v1052
        %v1116 = vadd.f32 %v1115, %v1053
        %v1117 = vadd.f32 %v1116, %v1054
        %v1118 = vadd.f32 %v1117, %v1055
        %v1119 = vrot.slane %v1118, 4
        %v1120 = vadd.f32 %v1118, %v1119
        %v1121 = vrot.slane %v1120, 2
        %v1122 = vadd.f32 %v1120, %v1121
        %v1123 = vrot.slane %v1122, 1
        %v1124 = vadd.f32 %v1122, %v1123
        %v1125 = vadd.f32 %v991, %v1124
        %1126 = vst [vmem:[#allocation4] sm:$0x1] %v1125
      $region44: #{_lambda_.6} parent=35 // pred_fallthru
        _
      %p1127 = scmp.eq.s32.totalorder %s19, 1
      %p1128 = pnand %p1127, %p234
      %p1129 = pneg %p1128
      // Predicated region
      $region45: #{_lambda_.6} parent=35 // pred_check
        _
      $region46: #{_lambda_.6} parent=35 // pred_check_branch
        %1131 = sbr.rel (%p1128) target = $region48
      $region47: #{_lambda_.6} parent=35 // pred_region
        %v1132 = vld [vmem:[#allocation3] sm:$0x1]
        %v1133 = vmul.f32 %v1132, 0.001953125
        %v1134 = vld [vmem:[#allocation4] sm:$0x1]
        %v1135 = vmul.f32 %v1134, 0.001953125
        %v1136 = vmul.f32 %v1133, %v1133
        %v1137 = vsub.f32 %v1135, %v1136
        %v1138 = vmax.f32 %v1137, 0.0
        %v1139 = vld [vmem:[%s2] sm:$0x1]
        %v1140 = vadd.f32 %v1138, 1e-05
        %v1141 = vrsqrt.pop %v1140
        %v1142 = vmul.f32 %v1139, %v1141
        %1143 = vst [vmem:[#allocation5] sm:$0x1] %v1142
        %v1144 = vld [vmem:[%s3] sm:$0x1]
        %v1145 = vmul.f32 %v1133, %v1142
        %v1146 = vsub.f32 %v1144, %v1145
        %s1147 = scalar_lea.vmem [#allocation5], 1
        %1148 = vst [vmem:[%s1147] sm:$0x1] %v1146
      $region48: #{_lambda_.6} parent=35 // pred_fallthru
        _
      // Predicated region
      $region49: #{_lambda_.6} parent=35 // pred_check
        %p1149 = pneg %p1127
      $region50: #{_lambda_.6} parent=35 // pred_check_branch
        %1151 = sbr.rel (%p1149) target = $region52
      $region51: #{_lambda_.6} parent=35 // pred_region
        %s1152 = smul.u32 %s20, 512
        %s1153 = scalar_lea.vmem [#allocation2], %s1152
        %v1154 = vld [vmem:[%s1153] sm:$0xff]
        %v1155 = vld [vmem:[%s1153 + $0x8] sm:$0xff]
        %v1156 = vld [vmem:[%s1153 + $0x10] sm:$0xff]
        %v1157 = vld [vmem:[%s1153 + $0x18] sm:$0xff]
        %v1158 = vld [vmem:[%s1153 + $0x20] sm:$0xff]
        %v1159 = vld [vmem:[%s1153 + $0x28] sm:$0xff]
        %v1160 = vld [vmem:[%s1153 + $0x30] sm:$0xff]
        %v1161 = vld [vmem:[%s1153 + $0x38] sm:$0xff]
        %v1162 = vld [vmem:[%s1153 + $0x40] sm:$0xff]
        %v1163 = vld [vmem:[%s1153 + $0x48] sm:$0xff]
        %v1164 = vld [vmem:[%s1153 + $0x50] sm:$0xff]
        %v1165 = vld [vmem:[%s1153 + $0x58] sm:$0xff]
        %v1166 = vld [vmem:[%s1153 + $0x60] sm:$0xff]
        %v1167 = vld [vmem:[%s1153 + $0x68] sm:$0xff]
        %v1168 = vld [vmem:[%s1153 + $0x70] sm:$0xff]
        %v1169 = vld [vmem:[%s1153 + $0x78] sm:$0xff]
        %v1170 = vld [vmem:[%s1153 + $0x80] sm:$0xff]
        %v1171 = vld [vmem:[%s1153 + $0x88] sm:$0xff]
        %v1172 = vld [vmem:[%s1153 + $0x90] sm:$0xff]
        %v1173 = vld [vmem:[%s1153 + $0x98] sm:$0xff]
        %v1174 = vld [vmem:[%s1153 + $0xa0] sm:$0xff]
        %v1175 = vld [vmem:[%s1153 + $0xa8] sm:$0xff]
        %v1176 = vld [vmem:[%s1153 + $0xb0] sm:$0xff]
        %v1177 = vld [vmem:[%s1153 + $0xb8] sm:$0xff]
        %v1178 = vld [vmem:[%s1153 + $0xc0] sm:$0xff]
        %v1179 = vld [vmem:[%s1153 + $0xc8] sm:$0xff]
        %v1180 = vld [vmem:[%s1153 + $0xd0] sm:$0xff]
        %v1181 = vld [vmem:[%s1153 + $0xd8] sm:$0xff]
        %v1182 = vld [vmem:[%s1153 + $0xe0] sm:$0xff]
        %v1183 = vld [vmem:[%s1153 + $0xe8] sm:$0xff]
        %v1184 = vld [vmem:[%s1153 + $0xf0] sm:$0xff]
        %v1185 = vld [vmem:[%s1153 + $0xf8] sm:$0xff]
        %v1186 = vld [vmem:[%s1153 + $0x100] sm:$0xff]
        %v1187 = vld [vmem:[%s1153 + $0x108] sm:$0xff]
        %v1188 = vld [vmem:[%s1153 + $0x110] sm:$0xff]
        %v1189 = vld [vmem:[%s1153 + $0x118] sm:$0xff]
        %v1190 = vld [vmem:[%s1153 + $0x120] sm:$0xff]
        %v1191 = vld [vmem:[%s1153 + $0x128] sm:$0xff]
        %v1192 = vld [vmem:[%s1153 + $0x130] sm:$0xff]
        %v1193 = vld [vmem:[%s1153 + $0x138] sm:$0xff]
        %v1194 = vld [vmem:[%s1153 + $0x140] sm:$0xff]
        %v1195 = vld [vmem:[%s1153 + $0x148] sm:$0xff]
        %v1196 = vld [vmem:[%s1153 + $0x150] sm:$0xff]
        %v1197 = vld [vmem:[%s1153 + $0x158] sm:$0xff]
        %v1198 = vld [vmem:[%s1153 + $0x160] sm:$0xff]
        %v1199 = vld [vmem:[%s1153 + $0x168] sm:$0xff]
        %v1200 = vld [vmem:[%s1153 + $0x170] sm:$0xff]
        %v1201 = vld [vmem:[%s1153 + $0x178] sm:$0xff]
        %v1202 = vld [vmem:[%s1153 + $0x180] sm:$0xff]
        %v1203 = vld [vmem:[%s1153 + $0x188] sm:$0xff]
        %v1204 = vld [vmem:[%s1153 + $0x190] sm:$0xff]
        %v1205 = vld [vmem:[%s1153 + $0x198] sm:$0xff]
        %v1206 = vld [vmem:[%s1153 + $0x1a0] sm:$0xff]
        %v1207 = vld [vmem:[%s1153 + $0x1a8] sm:$0xff]
        %v1208 = vld [vmem:[%s1153 + $0x1b0] sm:$0xff]
        %v1209 = vld [vmem:[%s1153 + $0x1b8] sm:$0xff]
        %v1210 = vld [vmem:[%s1153 + $0x1c0] sm:$0xff]
        %v1211 = vld [vmem:[%s1153 + $0x1c8] sm:$0xff]
        %v1212 = vld [vmem:[%s1153 + $0x1d0] sm:$0xff]
        %v1213 = vld [vmem:[%s1153 + $0x1d8] sm:$0xff]
        %v1214 = vld [vmem:[%s1153 + $0x1e0] sm:$0xff]
        %v1215 = vld [vmem:[%s1153 + $0x1e8] sm:$0xff]
        %v1216 = vld [vmem:[%s1153 + $0x1f0] sm:$0xff]
        %v1217 = vld [vmem:[%s1153 + $0x1f8] sm:$0xff]
        %v1218 = vld [vmem:[#allocation5] sm:$0x1]
        %v1220 = vlaneseq
        %v1221 = vshrl.u32 %v1220, 7
        %v1222 = vsub.s32 0, %v1221
        %v1223 = vrot.slane %v1218, %v1222
        %v1225 = vmul.f32 %v1154, %v1223
        %v1226 = vmul.f32 %v1155, %v1223
        %v1227 = vmul.f32 %v1156, %v1223
        %v1228 = vmul.f32 %v1157, %v1223
        %v1229 = vmul.f32 %v1158, %v1223
        %v1230 = vmul.f32 %v1159, %v1223
        %v1231 = vmul.f32 %v1160, %v1223
        %v1232 = vmul.f32 %v1161, %v1223
        %v1233 = vmul.f32 %v1162, %v1223
        %v1234 = vmul.f32 %v1163, %v1223
        %v1235 = vmul.f32 %v1164, %v1223
        %v1236 = vmul.f32 %v1165, %v1223
        %v1237 = vmul.f32 %v1166, %v1223
        %v1238 = vmul.f32 %v1167, %v1223
        %v1239 = vmul.f32 %v1168, %v1223
        %v1240 = vmul.f32 %v1169, %v1223
        %v1241 = vmul.f32 %v1170, %v1223
        %v1242 = vmul.f32 %v1171, %v1223
        %v1243 = vmul.f32 %v1172, %v1223
        %v1244 = vmul.f32 %v1173, %v1223
        %v1245 = vmul.f32 %v1174, %v1223
        %v1246 = vmul.f32 %v1175, %v1223
        %v1247 = vmul.f32 %v1176, %v1223
        %v1248 = vmul.f32 %v1177, %v1223
        %v1249 = vmul.f32 %v1178, %v1223
        %v1250 = vmul.f32 %v1179, %v1223
        %v1251 = vmul.f32 %v1180, %v1223
        %v1252 = vmul.f32 %v1181, %v1223
        %v1253 = vmul.f32 %v1182, %v1223
        %v1254 = vmul.f32 %v1183, %v1223
        %v1255 = vmul.f32 %v1184, %v1223
        %v1256 = vmul.f32 %v1185, %v1223
        %v1257 = vmul.f32 %v1186, %v1223
        %v1258 = vmul.f32 %v1187, %v1223
        %v1259 = vmul.f32 %v1188, %v1223
        %v1260 = vmul.f32 %v1189, %v1223
        %v1261 = vmul.f32 %v1190, %v1223
        %v1262 = vmul.f32 %v1191, %v1223
        %v1263 = vmul.f32 %v1192, %v1223
        %v1264 = vmul.f32 %v1193, %v1223
        %v1265 = vmul.f32 %v1194, %v1223
        %v1266 = vmul.f32 %v1195, %v1223
        %v1267 = vmul.f32 %v1196, %v1223
        %v1268 = vmul.f32 %v1197, %v1223
        %v1269 = vmul.f32 %v1198, %v1223
        %v1270 = vmul.f32 %v1199, %v1223
        %v1271 = vmul.f32 %v1200, %v1223
        %v1272 = vmul.f32 %v1201, %v1223
        %v1273 = vmul.f32 %v1202, %v1223
        %v1274 = vmul.f32 %v1203, %v1223
        %v1275 = vmul.f32 %v1204, %v1223
        %v1276 = vmul.f32 %v1205, %v1223
        %v1277 = vmul.f32 %v1206, %v1223
        %v1278 = vmul.f32 %v1207, %v1223
        %v1279 = vmul.f32 %v1208, %v1223
        %v1280 = vmul.f32 %v1209, %v1223
        %v1281 = vmul.f32 %v1210, %v1223
        %v1282 = vmul.f32 %v1211, %v1223
        %v1283 = vmul.f32 %v1212, %v1223
        %v1284 = vmul.f32 %v1213, %v1223
        %v1285 = vmul.f32 %v1214, %v1223
        %v1286 = vmul.f32 %v1215, %v1223
        %v1287 = vmul.f32 %v1216, %v1223
        %v1288 = vmul.f32 %v1217, %v1223
        %s1289 = scalar_lea.vmem [#allocation5], 1
        %v1290 = vld [vmem:[%s1289] sm:$0x1]
        %v1292 = vlaneseq
        %v1293 = vshrl.u32 %v1292, 7
        %v1294 = vsub.s32 0, %v1293
        %v1295 = vrot.slane %v1290, %v1294
        %v1297 = vadd.f32 %v1225, %v1295
        %v1298 = vadd.f32 %v1226, %v1295
        %v1299 = vadd.f32 %v1227, %v1295
        %v1300 = vadd.f32 %v1228, %v1295
        %v1301 = vadd.f32 %v1229, %v1295
        %v1302 = vadd.f32 %v1230, %v1295
        %v1303 = vadd.f32 %v1231, %v1295
        %v1304 = vadd.f32 %v1232, %v1295
        %v1305 = vadd.f32 %v1233, %v1295
        %v1306 = vadd.f32 %v1234, %v1295
        %v1307 = vadd.f32 %v1235, %v1295
        %v1308 = vadd.f32 %v1236, %v1295
        %v1309 = vadd.f32 %v1237, %v1295
        %v1310 = vadd.f32 %v1238, %v1295
        %v1311 = vadd.f32 %v1239, %v1295
        %v1312 = vadd.f32 %v1240, %v1295
        %v1313 = vadd.f32 %v1241, %v1295
        %v1314 = vadd.f32 %v1242, %v1295
        %v1315 = vadd.f32 %v1243, %v1295
        %v1316 = vadd.f32 %v1244, %v1295
        %v1317 = vadd.f32 %v1245, %v1295
        %v1318 = vadd.f32 %v1246, %v1295
        %v1319 = vadd.f32 %v1247, %v1295
        %v1320 = vadd.f32 %v1248, %v1295
        %v1321 = vadd.f32 %v1249, %v1295
        %v1322 = vadd.f32 %v1250, %v1295
        %v1323 = vadd.f32 %v1251, %v1295
        %v1324 = vadd.f32 %v1252, %v1295
        %v1325 = vadd.f32 %v1253, %v1295
        %v1326 = vadd.f32 %v1254, %v1295
        %v1327 = vadd.f32 %v1255, %v1295
        %v1328 = vadd.f32 %v1256, %v1295
        %v1329 = vadd.f32 %v1257, %v1295
        %v1330 = vadd.f32 %v1258, %v1295
        %v1331 = vadd.f32 %v1259, %v1295
        %v1332 = vadd.f32 %v1260, %v1295
        %v1333 = vadd.f32 %v1261, %v1295
        %v1334 = vadd.f32 %v1262, %v1295
        %v1335 = vadd.f32 %v1263, %v1295
        %v1336 = vadd.f32 %v1264, %v1295
        %v1337 = vadd.f32 %v1265, %v1295
        %v1338 = vadd.f32 %v1266, %v1295
        %v1339 = vadd.f32 %v1267, %v1295
        %v1340 = vadd.f32 %v1268, %v1295
        %v1341 = vadd.f32 %v1269, %v1295
        %v1342 = vadd.f32 %v1270, %v1295
        %v1343 = vadd.f32 %v1271, %v1295
        %v1344 = vadd.f32 %v1272, %v1295
        %v1345 = vadd.f32 %v1273, %v1295
        %v1346 = vadd.f32 %v1274, %v1295
        %v1347 = vadd.f32 %v1275, %v1295
        %v1348 = vadd.f32 %v1276, %v1295
        %v1349 = vadd.f32 %v1277, %v1295
        %v1350 = vadd.f32 %v1278, %v1295
        %v1351 = vadd.f32 %v1279, %v1295
        %v1352 = vadd.f32 %v1280, %v1295
        %v1353 = vadd.f32 %v1281, %v1295
        %v1354 = vadd.f32 %v1282, %v1295
        %v1355 = vadd.f32 %v1283, %v1295
        %v1356 = vadd.f32 %v1284, %v1295
        %v1357 = vadd.f32 %v1285, %v1295
        %v1358 = vadd.f32 %v1286, %v1295
        %v1359 = vadd.f32 %v1287, %v1295
        %v1360 = vadd.f32 %v1288, %v1295
        %vm1361 = vcmp.ge.f32.partialorder %v1297, 0.0
        %vm1362 = vcmp.ge.f32.partialorder %v1298, 0.0
        %vm1363 = vcmp.ge.f32.partialorder %v1299, 0.0
        %vm1364 = vcmp.ge.f32.partialorder %v1300, 0.0
        %vm1365 = vcmp.ge.f32.partialorder %v1301, 0.0
        %vm1366 = vcmp.ge.f32.partialorder %v1302, 0.0
        %vm1367 = vcmp.ge.f32.partialorder %v1303, 0.0
        %vm1368 = vcmp.ge.f32.partialorder %v1304, 0.0
        %vm1369 = vcmp.ge.f32.partialorder %v1305, 0.0
        %vm1370 = vcmp.ge.f32.partialorder %v1306, 0.0
        %vm1371 = vcmp.ge.f32.partialorder %v1307, 0.0
        %vm1372 = vcmp.ge.f32.partialorder %v1308, 0.0
        %vm1373 = vcmp.ge.f32.partialorder %v1309, 0.0
        %vm1374 = vcmp.ge.f32.partialorder %v1310, 0.0
        %vm1375 = vcmp.ge.f32.partialorder %v1311, 0.0
        %vm1376 = vcmp.ge.f32.partialorder %v1312, 0.0
        %vm1377 = vcmp.ge.f32.partialorder %v1313, 0.0
        %vm1378 = vcmp.ge.f32.partialorder %v1314, 0.0
        %vm1379 = vcmp.ge.f32.partialorder %v1315, 0.0
        %vm1380 = vcmp.ge.f32.partialorder %v1316, 0.0
        %vm1381 = vcmp.ge.f32.partialorder %v1317, 0.0
        %vm1382 = vcmp.ge.f32.partialorder %v1318, 0.0
        %vm1383 = vcmp.ge.f32.partialorder %v1319, 0.0
        %vm1384 = vcmp.ge.f32.partialorder %v1320, 0.0
        %vm1385 = vcmp.ge.f32.partialorder %v1321, 0.0
        %vm1386 = vcmp.ge.f32.partialorder %v1322, 0.0
        %vm1387 = vcmp.ge.f32.partialorder %v1323, 0.0
        %vm1388 = vcmp.ge.f32.partialorder %v1324, 0.0
        %vm1389 = vcmp.ge.f32.partialorder %v1325, 0.0
        %vm1390 = vcmp.ge.f32.partialorder %v1326, 0.0
        %vm1391 = vcmp.ge.f32.partialorder %v1327, 0.0
        %vm1392 = vcmp.ge.f32.partialorder %v1328, 0.0
        %vm1393 = vcmp.ge.f32.partialorder %v1329, 0.0
        %vm1394 = vcmp.ge.f32.partialorder %v1330, 0.0
        %vm1395 = vcmp.ge.f32.partialorder %v1331, 0.0
        %vm1396 = vcmp.ge.f32.partialorder %v1332, 0.0
        %vm1397 = vcmp.ge.f32.partialorder %v1333, 0.0
        %vm1398 = vcmp.ge.f32.partialorder %v1334, 0.0
        %vm1399 = vcmp.ge.f32.partialorder %v1335, 0.0
        %vm1400 = vcmp.ge.f32.partialorder %v1336, 0.0
        %vm1401 = vcmp.ge.f32.partialorder %v1337, 0.0
        %vm1402 = vcmp.ge.f32.partialorder %v1338, 0.0
        %vm1403 = vcmp.ge.f32.partialorder %v1339, 0.0
        %vm1404 = vcmp.ge.f32.partialorder %v1340, 0.0
        %vm1405 = vcmp.ge.f32.partialorder %v1341, 0.0
        %vm1406 = vcmp.ge.f32.partialorder %v1342, 0.0
        %vm1407 = vcmp.ge.f32.partialorder %v1343, 0.0
        %vm1408 = vcmp.ge.f32.partialorder %v1344, 0.0
        %vm1409 = vcmp.ge.f32.partialorder %v1345, 0.0
        %vm1410 = vcmp.ge.f32.partialorder %v1346, 0.0
        %vm1411 = vcmp.ge.f32.partialorder %v1347, 0.0
        %vm1412 = vcmp.ge.f32.partialorder %v1348, 0.0
        %vm1413 = vcmp.ge.f32.partialorder %v1349, 0.0
        %vm1414 = vcmp.ge.f32.partialorder %v1350, 0.0
        %vm1415 = vcmp.ge.f32.partialorder %v1351, 0.0
        %vm1416 = vcmp.ge.f32.partialorder %v1352, 0.0
        %vm1417 = vcmp.ge.f32.partialorder %v1353, 0.0
        %vm1418 = vcmp.ge.f32.partialorder %v1354, 0.0
        %vm1419 = vcmp.ge.f32.partialorder %v1355, 0.0
        %vm1420 = vcmp.ge.f32.partialorder %v1356, 0.0
        %vm1421 = vcmp.ge.f32.partialorder %v1357, 0.0
        %vm1422 = vcmp.ge.f32.partialorder %v1358, 0.0
        %vm1423 = vcmp.ge.f32.partialorder %v1359, 0.0
        %vm1424 = vcmp.ge.f32.partialorder %v1360, 0.0
        %v1425 = vmul.f32 %v1297, 0.2
        %v1426 = vmul.f32 %v1298, 0.2
        %v1427 = vmul.f32 %v1299, 0.2
        %v1428 = vmul.f32 %v1300, 0.2
        %v1429 = vmul.f32 %v1301, 0.2
        %v1430 = vmul.f32 %v1302, 0.2
        %v1431 = vmul.f32 %v1303, 0.2
        %v1432 = vmul.f32 %v1304, 0.2
        %v1433 = vmul.f32 %v1305, 0.2
        %v1434 = vmul.f32 %v1306, 0.2
        %v1435 = vmul.f32 %v1307, 0.2
        %v1436 = vmul.f32 %v1308, 0.2
        %v1437 = vmul.f32 %v1309, 0.2
        %v1438 = vmul.f32 %v1310, 0.2
        %v1439 = vmul.f32 %v1311, 0.2
        %v1440 = vmul.f32 %v1312, 0.2
        %v1441 = vmul.f32 %v1313, 0.2
        %v1442 = vmul.f32 %v1314, 0.2
        %v1443 = vmul.f32 %v1315, 0.2
        %v1444 = vmul.f32 %v1316, 0.2
        %v1445 = vmul.f32 %v1317, 0.2
        %v1446 = vmul.f32 %v1318, 0.2
        %v1447 = vmul.f32 %v1319, 0.2
        %v1448 = vmul.f32 %v1320, 0.2
        %v1449 = vmul.f32 %v1321, 0.2
        %v1450 = vmul.f32 %v1322, 0.2
        %v1451 = vmul.f32 %v1323, 0.2
        %v1452 = vmul.f32 %v1324, 0.2
        %v1453 = vmul.f32 %v1325, 0.2
        %v1454 = vmul.f32 %v1326, 0.2
        %v1455 = vmul.f32 %v1327, 0.2
        %v1456 = vmul.f32 %v1328, 0.2
        %v1457 = vmul.f32 %v1329, 0.2
        %v1458 = vmul.f32 %v1330, 0.2
        %v1459 = vmul.f32 %v1331, 0.2
        %v1460 = vmul.f32 %v1332, 0.2
        %v1461 = vmul.f32 %v1333, 0.2
        %v1462 = vmul.f32 %v1334, 0.2
        %v1463 = vmul.f32 %v1335, 0.2
        %v1464 = vmul.f32 %v1336, 0.2
        %v1465 = vmul.f32 %v1337, 0.2
        %v1466 = vmul.f32 %v1338, 0.2
        %v1467 = vmul.f32 %v1339, 0.2
        %v1468 = vmul.f32 %v1340, 0.2
        %v1469 = vmul.f32 %v1341, 0.2
        %v1470 = vmul.f32 %v1342, 0.2
        %v1471 = vmul.f32 %v1343, 0.2
        %v1472 = vmul.f32 %v1344, 0.2
        %v1473 = vmul.f32 %v1345, 0.2
        %v1474 = vmul.f32 %v1346, 0.2
        %v1475 = vmul.f32 %v1347, 0.2
        %v1476 = vmul.f32 %v1348, 0.2
        %v1477 = vmul.f32 %v1349, 0.2
        %v1478 = vmul.f32 %v1350, 0.2
        %v1479 = vmul.f32 %v1351, 0.2
        %v1480 = vmul.f32 %v1352, 0.2
        %v1481 = vmul.f32 %v1353, 0.2
        %v1482 = vmul.f32 %v1354, 0.2
        %v1483 = vmul.f32 %v1355, 0.2
        %v1484 = vmul.f32 %v1356, 0.2
        %v1485 = vmul.f32 %v1357, 0.2
        %v1486 = vmul.f32 %v1358, 0.2
        %v1487 = vmul.f32 %v1359, 0.2
        %v1488 = vmul.f32 %v1360, 0.2
        %v1489 = vsel %vm1361, %v1297, %v1425
        %v1490 = vsel %vm1362, %v1298, %v1426
        %v1491 = vsel %vm1363, %v1299, %v1427
        %v1492 = vsel %vm1364, %v1300, %v1428
        %v1493 = vsel %vm1365, %v1301, %v1429
        %v1494 = vsel %vm1366, %v1302, %v1430
        %v1495 = vsel %vm1367, %v1303, %v1431
        %v1496 = vsel %vm1368, %v1304, %v1432
        %v1497 = vsel %vm1369, %v1305, %v1433
        %v1498 = vsel %vm1370, %v1306, %v1434
        %v1499 = vsel %vm1371, %v1307, %v1435
        %v1500 = vsel %vm1372, %v1308, %v1436
        %v1501 = vsel %vm1373, %v1309, %v1437
        %v1502 = vsel %vm1374, %v1310, %v1438
        %v1503 = vsel %vm1375, %v1311, %v1439
        %v1504 = vsel %vm1376, %v1312, %v1440
        %v1505 = vsel %vm1377, %v1313, %v1441
        %v1506 = vsel %vm1378, %v1314, %v1442
        %v1507 = vsel %vm1379, %v1315, %v1443
        %v1508 = vsel %vm1380, %v1316, %v1444
        %v1509 = vsel %vm1381, %v1317, %v1445
        %v1510 = vsel %vm1382, %v1318, %v1446
        %v1511 = vsel %vm1383, %v1319, %v1447
        %v1512 = vsel %vm1384, %v1320, %v1448
        %v1513 = vsel %vm1385, %v1321, %v1449
        %v1514 = vsel %vm1386, %v1322, %v1450
        %v1515 = vsel %vm1387, %v1323, %v1451
        %v1516 = vsel %vm1388, %v1324, %v1452
        %v1517 = vsel %vm1389, %v1325, %v1453
        %v1518 = vsel %vm1390, %v1326, %v1454
        %v1519 = vsel %vm1391, %v1327, %v1455
        %v1520 = vsel %vm1392, %v1328, %v1456
        %v1521 = vsel %vm1393, %v1329, %v1457
        %v1522 = vsel %vm1394, %v1330, %v1458
        %v1523 = vsel %vm1395, %v1331, %v1459
        %v1524 = vsel %vm1396, %v1332, %v1460
        %v1525 = vsel %vm1397, %v1333, %v1461
        %v1526 = vsel %vm1398, %v1334, %v1462
        %v1527 = vsel %vm1399, %v1335, %v1463
        %v1528 = vsel %vm1400, %v1336, %v1464
        %v1529 = vsel %vm1401, %v1337, %v1465
        %v1530 = vsel %vm1402, %v1338, %v1466
        %v1531 = vsel %vm1403, %v1339, %v1467
        %v1532 = vsel %vm1404, %v1340, %v1468
        %v1533 = vsel %vm1405, %v1341, %v1469
        %v1534 = vsel %vm1406, %v1342, %v1470
        %v1535 = vsel %vm1407, %v1343, %v1471
        %v1536 = vsel %vm1408, %v1344, %v1472
        %v1537 = vsel %vm1409, %v1345, %v1473
        %v1538 = vsel %vm1410, %v1346, %v1474
        %v1539 = vsel %vm1411, %v1347, %v1475
        %v1540 = vsel %vm1412, %v1348, %v1476
        %v1541 = vsel %vm1413, %v1349, %v1477
        %v1542 = vsel %vm1414, %v1350, %v1478
        %v1543 = vsel %vm1415, %v1351, %v1479
        %v1544 = vsel %vm1416, %v1352, %v1480
        %v1545 = vsel %vm1417, %v1353, %v1481
        %v1546 = vsel %vm1418, %v1354, %v1482
        %v1547 = vsel %vm1419, %v1355, %v1483
        %v1548 = vsel %vm1420, %v1356, %v1484
        %v1549 = vsel %vm1421, %v1357, %v1485
        %v1550 = vsel %vm1422, %v1358, %v1486
        %v1551 = vsel %vm1423, %v1359, %v1487
        %v1552 = vsel %vm1424, %v1360, %v1488
        %v1553 = vpack.c.bf16 %v1490, %v1489
        %v1554 = vpack.c.bf16 %v1492, %v1491
        %v1555 = vpack.c.bf16 %v1494, %v1493
        %v1556 = vpack.c.bf16 %v1496, %v1495
        %v1557 = vpack.c.bf16 %v1498, %v1497
        %v1558 = vpack.c.bf16 %v1500, %v1499
        %v1559 = vpack.c.bf16 %v1502, %v1501
        %v1560 = vpack.c.bf16 %v1504, %v1503
        %v1561 = vpack.c.bf16 %v1506, %v1505
        %v1562 = vpack.c.bf16 %v1508, %v1507
        %v1563 = vpack.c.bf16 %v1510, %v1509
        %v1564 = vpack.c.bf16 %v1512, %v1511
        %v1565 = vpack.c.bf16 %v1514, %v1513
        %v1566 = vpack.c.bf16 %v1516, %v1515
        %v1567 = vpack.c.bf16 %v1518, %v1517
        %v1568 = vpack.c.bf16 %v1520, %v1519
        %v1569 = vpack.c.bf16 %v1522, %v1521
        %v1570 = vpack.c.bf16 %v1524, %v1523
        %v1571 = vpack.c.bf16 %v1526, %v1525
        %v1572 = vpack.c.bf16 %v1528, %v1527
        %v1573 = vpack.c.bf16 %v1530, %v1529
        %v1574 = vpack.c.bf16 %v1532, %v1531
        %v1575 = vpack.c.bf16 %v1534, %v1533
        %v1576 = vpack.c.bf16 %v1536, %v1535
        %v1577 = vpack.c.bf16 %v1538, %v1537
        %v1578 = vpack.c.bf16 %v1540, %v1539
        %v1579 = vpack.c.bf16 %v1542, %v1541
        %v1580 = vpack.c.bf16 %v1544, %v1543
        %v1581 = vpack.c.bf16 %v1546, %v1545
        %v1582 = vpack.c.bf16 %v1548, %v1547
        %v1583 = vpack.c.bf16 %v1550, %v1549
        %v1584 = vpack.c.bf16 %v1552, %v1551
        %v1617 = vunpack.c.l.b16 %v1553
        %v1618 = vunpack.c.h.b16 %v1553
        %v1619 = vunpack.c.l.b16 %v1554
        %v1620 = vunpack.c.h.b16 %v1554
        %v1621 = vunpack.c.l.b16 %v1555
        %v1622 = vunpack.c.h.b16 %v1555
        %v1623 = vunpack.c.l.b16 %v1556
        %v1624 = vunpack.c.h.b16 %v1556
        %v1625 = vunpack.c.l.b16 %v1557
        %v1626 = vunpack.c.h.b16 %v1557
        %v1627 = vunpack.c.l.b16 %v1558
        %v1628 = vunpack.c.h.b16 %v1558
        %v1629 = vunpack.c.l.b16 %v1559
        %v1630 = vunpack.c.h.b16 %v1559
        %v1631 = vunpack.c.l.b16 %v1560
        %v1632 = vunpack.c.h.b16 %v1560
        %v1633 = vunpack.c.l.b16 %v1561
        %v1634 = vunpack.c.h.b16 %v1561
        %v1635 = vunpack.c.l.b16 %v1562
        %v1636 = vunpack.c.h.b16 %v1562
        %v1637 = vunpack.c.l.b16 %v1563
        %v1638 = vunpack.c.h.b16 %v1563
        %v1639 = vunpack.c.l.b16 %v1564
        %v1640 = vunpack.c.h.b16 %v1564
        %v1641 = vunpack.c.l.b16 %v1565
        %v1642 = vunpack.c.h.b16 %v1565
        %v1643 = vunpack.c.l.b16 %v1566
        %v1644 = vunpack.c.h.b16 %v1566
        %v1645 = vunpack.c.l.b16 %v1567
        %v1646 = vunpack.c.h.b16 %v1567
        %v1647 = vunpack.c.l.b16 %v1568
        %v1648 = vunpack.c.h.b16 %v1568
        %v1649 = vunpack.c.l.b16 %v1569
        %v1650 = vunpack.c.h.b16 %v1569
        %v1651 = vunpack.c.l.b16 %v1570
        %v1652 = vunpack.c.h.b16 %v1570
        %v1653 = vunpack.c.l.b16 %v1571
        %v1654 = vunpack.c.h.b16 %v1571
        %v1655 = vunpack.c.l.b16 %v1572
        %v1656 = vunpack.c.h.b16 %v1572
        %v1657 = vunpack.c.l.b16 %v1573
        %v1658 = vunpack.c.h.b16 %v1573
        %v1659 = vunpack.c.l.b16 %v1574
        %v1660 = vunpack.c.h.b16 %v1574
        %v1661 = vunpack.c.l.b16 %v1575
        %v1662 = vunpack.c.h.b16 %v1575
        %v1663 = vunpack.c.l.b16 %v1576
        %v1664 = vunpack.c.h.b16 %v1576
        %v1665 = vunpack.c.l.b16 %v1577
        %v1666 = vunpack.c.h.b16 %v1577
        %v1667 = vunpack.c.l.b16 %v1578
        %v1668 = vunpack.c.h.b16 %v1578
        %v1669 = vunpack.c.l.b16 %v1579
        %v1670 = vunpack.c.h.b16 %v1579
        %v1671 = vunpack.c.l.b16 %v1580
        %v1672 = vunpack.c.h.b16 %v1580
        %v1673 = vunpack.c.l.b16 %v1581
        %v1674 = vunpack.c.h.b16 %v1581
        %v1675 = vunpack.c.l.b16 %v1582
        %v1676 = vunpack.c.h.b16 %v1582
        %v1677 = vunpack.c.l.b16 %v1583
        %v1678 = vunpack.c.h.b16 %v1583
        %v1679 = vunpack.c.l.b16 %v1584
        %v1680 = vunpack.c.h.b16 %v1584
        %v1681 = vpack.c.b16 %v1617, %v1617
        %v1682 = vpack.c.b16 %v1618, %v1618
        %v1683 = vpack.c.b16 %v1619, %v1619
        %v1684 = vpack.c.b16 %v1620, %v1620
        %v1685 = vpack.c.b16 %v1621, %v1621
        %v1686 = vpack.c.b16 %v1622, %v1622
        %v1687 = vpack.c.b16 %v1623, %v1623
        %v1688 = vpack.c.b16 %v1624, %v1624
        %v1689 = vpack.c.b16 %v1625, %v1625
        %v1690 = vpack.c.b16 %v1626, %v1626
        %v1691 = vpack.c.b16 %v1627, %v1627
        %v1692 = vpack.c.b16 %v1628, %v1628
        %v1693 = vpack.c.b16 %v1629, %v1629
        %v1694 = vpack.c.b16 %v1630, %v1630
        %v1695 = vpack.c.b16 %v1631, %v1631
        %v1696 = vpack.c.b16 %v1632, %v1632
        %v1697 = vpack.c.b16 %v1633, %v1633
        %v1698 = vpack.c.b16 %v1634, %v1634
        %v1699 = vpack.c.b16 %v1635, %v1635
        %v1700 = vpack.c.b16 %v1636, %v1636
        %v1701 = vpack.c.b16 %v1637, %v1637
        %v1702 = vpack.c.b16 %v1638, %v1638
        %v1703 = vpack.c.b16 %v1639, %v1639
        %v1704 = vpack.c.b16 %v1640, %v1640
        %v1705 = vpack.c.b16 %v1641, %v1641
        %v1706 = vpack.c.b16 %v1642, %v1642
        %v1707 = vpack.c.b16 %v1643, %v1643
        %v1708 = vpack.c.b16 %v1644, %v1644
        %v1709 = vpack.c.b16 %v1645, %v1645
        %v1710 = vpack.c.b16 %v1646, %v1646
        %v1711 = vpack.c.b16 %v1647, %v1647
        %v1712 = vpack.c.b16 %v1648, %v1648
        %v1713 = vpack.c.b16 %v1649, %v1649
        %v1714 = vpack.c.b16 %v1650, %v1650
        %v1715 = vpack.c.b16 %v1651, %v1651
        %v1716 = vpack.c.b16 %v1652, %v1652
        %v1717 = vpack.c.b16 %v1653, %v1653
        %v1718 = vpack.c.b16 %v1654, %v1654
        %v1719 = vpack.c.b16 %v1655, %v1655
        %v1720 = vpack.c.b16 %v1656, %v1656
        %v1721 = vpack.c.b16 %v1657, %v1657
        %v1722 = vpack.c.b16 %v1658, %v1658
        %v1723 = vpack.c.b16 %v1659, %v1659
        %v1724 = vpack.c.b16 %v1660, %v1660
        %v1725 = vpack.c.b16 %v1661, %v1661
        %v1726 = vpack.c.b16 %v1662, %v1662
        %v1727 = vpack.c.b16 %v1663, %v1663
        %v1728 = vpack.c.b16 %v1664, %v1664
        %v1729 = vpack.c.b16 %v1665, %v1665
        %v1730 = vpack.c.b16 %v1666, %v1666
        %v1731 = vpack.c.b16 %v1667, %v1667
        %v1732 = vpack.c.b16 %v1668, %v1668
        %v1733 = vpack.c.b16 %v1669, %v1669
        %v1734 = vpack.c.b16 %v1670, %v1670
        %v1735 = vpack.c.b16 %v1671, %v1671
        %v1736 = vpack.c.b16 %v1672, %v1672
        %v1737 = vpack.c.b16 %v1673, %v1673
        %v1738 = vpack.c.b16 %v1674, %v1674
        %v1739 = vpack.c.b16 %v1675, %v1675
        %v1740 = vpack.c.b16 %v1676, %v1676
        %v1741 = vpack.c.b16 %v1677, %v1677
        %v1742 = vpack.c.b16 %v1678, %v1678
        %v1743 = vpack.c.b16 %v1679, %v1679
        %v1744 = vpack.c.b16 %v1680, %v1680
        %1809 = vst [vmem:[%s229] sm:$0xf] %v1681
        %1810 = vst [vmem:[%s229 + $0x4] sm:$0xf] %v1682
        %1811 = vst [vmem:[%s229 + $0x8] sm:$0xf] %v1683
        %1812 = vst [vmem:[%s229 + $0xc] sm:$0xf] %v1684
        %1813 = vst [vmem:[%s229 + $0x10] sm:$0xf] %v1685
        %1814 = vst [vmem:[%s229 + $0x14] sm:$0xf] %v1686
        %1815 = vst [vmem:[%s229 + $0x18] sm:$0xf] %v1687
        %1816 = vst [vmem:[%s229 + $0x1c] sm:$0xf] %v1688
        %1817 = vst [vmem:[%s229 + $0x20] sm:$0xf] %v1689
        %1818 = vst [vmem:[%s229 + $0x24] sm:$0xf] %v1690
        %1819 = vst [vmem:[%s229 + $0x28] sm:$0xf] %v1691
        %1820 = vst [vmem:[%s229 + $0x2c] sm:$0xf] %v1692
        %1821 = vst [vmem:[%s229 + $0x30] sm:$0xf] %v1693
        %1822 = vst [vmem:[%s229 + $0x34] sm:$0xf] %v1694
        %1823 = vst [vmem:[%s229 + $0x38] sm:$0xf] %v1695
        %1824 = vst [vmem:[%s229 + $0x3c] sm:$0xf] %v1696
        %1825 = vst [vmem:[%s229 + $0x40] sm:$0xf] %v1697
        %1826 = vst [vmem:[%s229 + $0x44] sm:$0xf] %v1698
        %1827 = vst [vmem:[%s229 + $0x48] sm:$0xf] %v1699
        %1828 = vst [vmem:[%s229 + $0x4c] sm:$0xf] %v1700
        %1829 = vst [vmem:[%s229 + $0x50] sm:$0xf] %v1701
        %1830 = vst [vmem:[%s229 + $0x54] sm:$0xf] %v1702
        %1831 = vst [vmem:[%s229 + $0x58] sm:$0xf] %v1703
        %1832 = vst [vmem:[%s229 + $0x5c] sm:$0xf] %v1704
        %1833 = vst [vmem:[%s229 + $0x60] sm:$0xf] %v1705
        %1834 = vst [vmem:[%s229 + $0x64] sm:$0xf] %v1706
        %1835 = vst [vmem:[%s229 + $0x68] sm:$0xf] %v1707
        %1836 = vst [vmem:[%s229 + $0x6c] sm:$0xf] %v1708
        %1837 = vst [vmem:[%s229 + $0x70] sm:$0xf] %v1709
        %1838 = vst [vmem:[%s229 + $0x74] sm:$0xf] %v1710
        %1839 = vst [vmem:[%s229 + $0x78] sm:$0xf] %v1711
        %1840 = vst [vmem:[%s229 + $0x7c] sm:$0xf] %v1712
        %1841 = vst [vmem:[%s229 + $0x80] sm:$0xf] %v1713
        %1842 = vst [vmem:[%s229 + $0x84] sm:$0xf] %v1714
        %1843 = vst [vmem:[%s229 + $0x88] sm:$0xf] %v1715
        %1844 = vst [vmem:[%s229 + $0x8c] sm:$0xf] %v1716
        %1845 = vst [vmem:[%s229 + $0x90] sm:$0xf] %v1717
        %1846 = vst [vmem:[%s229 + $0x94] sm:$0xf] %v1718
        %1847 = vst [vmem:[%s229 + $0x98] sm:$0xf] %v1719
        %1848 = vst [vmem:[%s229 + $0x9c] sm:$0xf] %v1720
        %1849 = vst [vmem:[%s229 + $0xa0] sm:$0xf] %v1721
        %1850 = vst [vmem:[%s229 + $0xa4] sm:$0xf] %v1722
        %1851 = vst [vmem:[%s229 + $0xa8] sm:$0xf] %v1723
        %1852 = vst [vmem:[%s229 + $0xac] sm:$0xf] %v1724
        %1853 = vst [vmem:[%s229 + $0xb0] sm:$0xf] %v1725
        %1854 = vst [vmem:[%s229 + $0xb4] sm:$0xf] %v1726
        %1855 = vst [vmem:[%s229 + $0xb8] sm:$0xf] %v1727
        %1856 = vst [vmem:[%s229 + $0xbc] sm:$0xf] %v1728
        %1857 = vst [vmem:[%s229 + $0xc0] sm:$0xf] %v1729
        %1858 = vst [vmem:[%s229 + $0xc4] sm:$0xf] %v1730
        %1859 = vst [vmem:[%s229 + $0xc8] sm:$0xf] %v1731
        %1860 = vst [vmem:[%s229 + $0xcc] sm:$0xf] %v1732
        %1861 = vst [vmem:[%s229 + $0xd0] sm:$0xf] %v1733
        %1862 = vst [vmem:[%s229 + $0xd4] sm:$0xf] %v1734
        %1863 = vst [vmem:[%s229 + $0xd8] sm:$0xf] %v1735
        %1864 = vst [vmem:[%s229 + $0xdc] sm:$0xf] %v1736
        %1865 = vst [vmem:[%s229 + $0xe0] sm:$0xf] %v1737
        %1866 = vst [vmem:[%s229 + $0xe4] sm:$0xf] %v1738
        %1867 = vst [vmem:[%s229 + $0xe8] sm:$0xf] %v1739
        %1868 = vst [vmem:[%s229 + $0xec] sm:$0xf] %v1740
        %1869 = vst [vmem:[%s229 + $0xf0] sm:$0xf] %v1741
        %1870 = vst [vmem:[%s229 + $0xf4] sm:$0xf] %v1742
        %1871 = vst [vmem:[%s229 + $0xf8] sm:$0xf] %v1743
        %1872 = vst [vmem:[%s229 + $0xfc] sm:$0xf] %v1744
      $region52: #{_lambda_.6} parent=35 // pred_fallthru
        _
      %s1873 = smul.u32 %s19, %s20
      %s1874 = smul.u32 64, %s1873
      %p1875 = scmp.lt.s32.totalorder %s1874, 63
      %s1876 = scalar_select %p1875, %s1874, 63
      %s1877 = smul.addr %s1876, 4
      %s1878 = scalar_lea.vmem %s4, %s1877
      // Predicated region
      $region53: #{_lambda_.6} parent=35 // pred_check
        %p1879 = pneg %p140
      $region54: #{_lambda_.6} parent=35 // pred_check_branch
        %1881 = sbr.rel (%p1879) target = $region56
      $region55: #{_lambda_.6} parent=35 // pred_region
        %s1882 = smul.u32 %s19, %s20
        %s1883 = smul.u32 64, %s1882
      $region56: #{_lambda_.6} parent=35 // pred_fallthru
        _
    $region36: #{_lambda_.6} parent=5 // pred_fallthru
      _
    %p1884 = scmp.le.s32.totalorder 2, %s10
    // Predicated region
    $region57: #{_lambda_.6} parent=5 // pred_check
      %p1885 = pneg %p1884
    $region58: #{_lambda_.6} parent=5 // pred_check_branch
      %1887 = sbr.rel (%p1885) target = $region60
    $region59: #{_lambda_.6} parent=5 // pred_region
      %s1888 = ssub.s32 %s10, 2
      // Predicated region
      $region61: #{_lambda_.6} parent=59 // pred_check
        %p1889 = pneg %p146
      $region62: #{_lambda_.6} parent=59 // pred_check_branch
        %1891 = sbr.rel (%p1889) target = $region64
      $region63: #{_lambda_.6} parent=59 // pred_region
        %s1892 = smul.u32 %s21, %s22
        %s1893 = smul.u32 64, %s1892
        %p1894 = scmp.lt.s32.totalorder %s1893, 63
        %s1895 = scalar_select %p1894, %s1893, 63
        %s1896 = smul.addr %s1895, 4
        %s1897 = scalar_lea.vmem %s4, %s1896
      $region64: #{_lambda_.6} parent=59 // pred_fallthru
        _
    $region60: #{_lambda_.6} parent=5 // pred_fallthru
      _
  $region6: #{_lambda_.6} parent=0 // loop_footer
    %s14 = sadd.s32 1, %s10
  $region7: #{_lambda_.6} parent=0 // loop_footer_branch
    %9 = sbr.rel target = $region3
  $region8: #{_lambda_.6} parent=0 // loop_exit
    _

// kernel: _lambda_.7
$region0: #{_lambda_.7}
  #allocation0 [shape = 'u32[]', space=smem, size = 0x4, offset = 0x4, fixed_abs, tag = 'smem constant byte address 0x4 - core index']
  #allocation1 [shape = 'u32[144,128]{1,0:T(1,128)}', space=vmem, size = 0x12000, scoped, tag = 'internal scratch']
  #allocation2 [shape = 'f32[1,128,128]{2,1,0:T(8,128)}', space=vmem, size = 0x10000, scoped, tag = 'scratch operand']
  #allocation3 [shape = 'f32[1,128]{1,0:T(1,128)}', space=vmem, size = 0x200, scoped, tag = 'scratch operand']
  #allocation4 [shape = 'f32[1,128]{1,0:T(1,128)}', space=vmem, size = 0x200, scoped, tag = 'scratch operand']
  #allocation5 [shape = 'f32[2,1,128]{2,1,0:T(1,128)}', space=vmem, size = 0x400, scoped, tag = 'scratch operand']
  %s0 = inlined_call_operand.vmem [shape: bf16[128,256], index: 0, kind: input, shape index: {}]
  %s1 = inlined_call_operand.vmem [shape: bf16[256,128], index: 1, kind: input, shape index: {}]
  %s2 = inlined_call_operand.vmem [shape: f32[1,128], index: 2, kind: input, shape index: {}]
  %s3 = inlined_call_operand.vmem [shape: f32[1,128], index: 3, kind: input, shape index: {}]
  %s4 = inlined_call_operand.vmem [shape: bf16[128,128], index: 4, kind: output, shape index: {}]
  %s5 = sld [smem:[#allocation0]]
  $region65: #{_lambda_.7} parent=0
    _
  %s7 = ssub.s32 1, %s5
  %s8 = scalar_select 0, %s7, %s5
  loop: start=0, step=1, limit=4
  $region2: #{_lambda_.7} parent=0 // loop_pre_header
    _
  $region3: #{_lambda_.7} parent=0 // loop_header
    %s10 = sphi 0, %s14
    %p11 = scmp.ge.s32.totalorder %s10, 4
    %s17 = sphi 0, %s29
    %s18 = sphi 0, %s25
    %s19 = sphi 0, %s17
    %s20 = sphi 0, %s18
    %s21 = sphi 0, %s19
    %s22 = sphi 0, %s20
    %s36 = sphi 0, %s38
    %s39 = sphi 0, %s36
    %s40 = sphi 0, %s39
    %s56 = sphi 0, %s40
    %s60 = sphi 0, %s60
    %s62 = sphi 0, %s60
    %s63 = sphi 0, %s62
    %s77 = sphi 0, %s63
    %s81 = sphi 0, %s81
    %s83 = sphi 0, %s81
    %s84 = sphi 0, %s83
    %s98 = sphi 0, %s84
    %s102 = sphi 0, %s102
    %s104 = sphi 0, %s102
    %s105 = sphi 0, %s104
    %s119 = sphi 0, %s105
    %s127 = sphi 0, %s129
    %s130 = sphi 0, %s127
    %s131 = sphi 0, %s130
    %s147 = sphi 0, %s131
  $region4: #{_lambda_.7} parent=0 // loop_header_branch
    %13 = sbr.rel (%p11) target = $region8
  $region5: #{_lambda_.7} parent=0 // loop_body
    %s15 = ssub.s32 %s10, 1
    %s16 = ssub.s32 %s10, 2
    %s23 = sadd.s32 1, %s18
    %p24 = scmp.ge.s32.totalorder %s23, 1
    %s25 = scalar_select %p24, 0, %s23
    %s26 = sadd.s32 1, %s17
    %s27 = scalar_select %p24, %s26, %s17
    %p28 = scmp.ge.s32.totalorder %s27, 2
    %s29 = scalar_select %p28, 0, %s27
    %s30 = ssub.s32 1, %s17
    %s31 = smul.u32 %s30, %s18
    %s32 = ssub.s32 1, %s29
    %s33 = smul.u32 %s32, %s25
    %s34 = ssub.s32 %s31, %s33
    %p35 = scmp.eq.s32.totalorder %s34, 0
    %s37 = sadd.s32 %s36, 1
    %s38 = scalar_select %p35, %s36, %s37
    %p41 = pneg %p35
    %p42 = scmp.eq.s32.totalorder %s10, 1
    %p43 = por %p41, %p42
    %p44 = scmp.ne.s32.totalorder %s36, %s39
    %p45 = scmp.eq.s32.totalorder %s10, 0
    %p46 = por %p44, %p45
    %p47 = scmp.ne.s32.totalorder %s36, %s39
    %p48 = scmp.eq.s32.totalorder %s15, 1
    %p49 = por %p47, %p48
    %p50 = scmp.ne.s32.totalorder %s39, %s40
    %p51 = scmp.eq.s32.totalorder %s15, 0
    %p52 = por %p50, %p51
    %p53 = scmp.ne.s32.totalorder %s39, %s40
    %p54 = scmp.eq.s32.totalorder %s16, 1
    %p55 = por %p53, %p54
    %p57 = scmp.ne.s32.totalorder %s40, %s56
    %p58 = scmp.eq.s32.totalorder %s16, 0
    %p59 = por %p57, %p58
    %s61 = sadd.s32 %s60, 1
    %p64 = scmp.eq.s32.totalorder %s10, 1
    %p65 = scmp.ne.s32.totalorder %s60, %s62
    %p66 = scmp.eq.s32.totalorder %s10, 0
    %p67 = por %p65, %p66
    %p68 = scmp.ne.s32.totalorder %s60, %s62
    %p69 = scmp.eq.s32.totalorder %s15, 1
    %p70 = por %p68, %p69
    %p71 = scmp.ne.s32.totalorder %s62, %s63
    %p72 = scmp.eq.s32.totalorder %s15, 0
    %p73 = por %p71, %p72
    %p74 = scmp.ne.s32.totalorder %s62, %s63
    %p75 = scmp.eq.s32.totalorder %s16, 1
    %p76 = por %p74, %p75
    %p78 = scmp.ne.s32.totalorder %s63, %s77
    %p79 = scmp.eq.s32.totalorder %s16, 0
    %p80 = por %p78, %p79
    %s82 = sadd.s32 %s81, 1
    %p85 = scmp.eq.s32.totalorder %s10, 1
    %p86 = scmp.ne.s32.totalorder %s81, %s83
    %p87 = scmp.eq.s32.totalorder %s10, 0
    %p88 = por %p86, %p87
    %p89 = scmp.ne.s32.totalorder %s81, %s83
    %p90 = scmp.eq.s32.totalorder %s15, 1
    %p91 = por %p89, %p90
    %p92 = scmp.ne.s32.totalorder %s83, %s84
    %p93 = scmp.eq.s32.totalorder %s15, 0
    %p94 = por %p92, %p93
    %p95 = scmp.ne.s32.totalorder %s83, %s84
    %p96 = scmp.eq.s32.totalorder %s16, 1
    %p97 = por %p95, %p96
    %p99 = scmp.ne.s32.totalorder %s84, %s98
    %p100 = scmp.eq.s32.totalorder %s16, 0
    %p101 = por %p99, %p100
    %s103 = sadd.s32 %s102, 1
    %p106 = scmp.eq.s32.totalorder %s10, 1
    %p107 = scmp.ne.s32.totalorder %s102, %s104
    %p108 = scmp.eq.s32.totalorder %s10, 0
    %p109 = por %p107, %p108
    %p110 = scmp.ne.s32.totalorder %s102, %s104
    %p111 = scmp.eq.s32.totalorder %s15, 1
    %p112 = por %p110, %p111
    %p113 = scmp.ne.s32.totalorder %s104, %s105
    %p114 = scmp.eq.s32.totalorder %s15, 0
    %p115 = por %p113, %p114
    %p116 = scmp.ne.s32.totalorder %s104, %s105
    %p117 = scmp.eq.s32.totalorder %s16, 1
    %p118 = por %p116, %p117
    %p120 = scmp.ne.s32.totalorder %s105, %s119
    %p121 = scmp.eq.s32.totalorder %s16, 0
    %p122 = por %p120, %p121
    %s123 = smul.u32 %s17, %s18
    %s124 = smul.u32 %s29, %s25
    %s125 = ssub.s32 %s123, %s124
    %p126 = scmp.eq.s32.totalorder %s125, 0
    %s128 = sadd.s32 %s127, 1
    %s129 = scalar_select %p126, %s127, %s128
    %p132 = pneg %p126
    %p133 = scmp.eq.s32.totalorder %s10, 1
    %p134 = por %p132, %p133
    %p135 = scmp.ne.s32.totalorder %s127, %s130
    %p136 = scmp.eq.s32.totalorder %s10, 0
    %p137 = por %p135, %p136
    %p138 = scmp.ne.s32.totalorder %s127, %s130
    %p139 = scmp.eq.s32.totalorder %s15, 1
    %p140 = por %p138, %p139
    %p141 = scmp.ne.s32.totalorder %s130, %s131
    %p142 = scmp.eq.s32.totalorder %s15, 0
    %p143 = por %p141, %p142
    %p144 = scmp.ne.s32.totalorder %s130, %s131
    %p145 = scmp.eq.s32.totalorder %s16, 1
    %p146 = por %p144, %p145
    %p148 = scmp.ne.s32.totalorder %s131, %s147
    %p149 = scmp.eq.s32.totalorder %s16, 0
    %p150 = por %p148, %p149
    %p151 = scmp.le.s32.totalorder 1, %s10
    %p152 = scmp.lt.s32.totalorder %s10, 3
    %p153 = pnand %p151, %p152
    %p154 = pneg %p153
    // Predicated region
    $region9: #{_lambda_.7} parent=5 // pred_check
      _
    $region10: #{_lambda_.7} parent=5 // pred_check_branch
      %156 = sbr.rel (%p153) target = $region12
    $region11: #{_lambda_.7} parent=5 // pred_region
      %s157 = ssub.s32 %s10, 1
      // Predicated region
      $region13: #{_lambda_.7} parent=11 // pred_check
        %p158 = pneg %p73
      $region14: #{_lambda_.7} parent=11 // pred_check_branch
        %160 = sbr.rel (%p158) target = $region16
      $region15: #{_lambda_.7} parent=11 // pred_region
        _
      $region16: #{_lambda_.7} parent=11 // pred_fallthru
        _
      // Predicated region
      $region17: #{_lambda_.7} parent=11 // pred_check
        %p161 = pneg %p94
      $region18: #{_lambda_.7} parent=11 // pred_check_branch
        %163 = sbr.rel (%p161) target = $region20
      $region19: #{_lambda_.7} parent=11 // pred_region
        _
      $region20: #{_lambda_.7} parent=11 // pred_fallthru
        _
      // Predicated region
      $region21: #{_lambda_.7} parent=11 // pred_check
        %p164 = pneg %p115
      $region22: #{_lambda_.7} parent=11 // pred_check_branch
        %166 = sbr.rel (%p164) target = $region24
      $region23: #{_lambda_.7} parent=11 // pred_region
        _
      $region24: #{_lambda_.7} parent=11 // pred_fallthru
        _
    $region12: #{_lambda_.7} parent=5 // pred_fallthru
      _
    %p167 = scmp.lt.s32.totalorder %s10, 2
    // Predicated region
    $region25: #{_lambda_.7} parent=5 // pred_check
      %p168 = pneg %p167
    $region26: #{_lambda_.7} parent=5 // pred_check_branch
      %170 = sbr.rel (%p168) target = $region28
    $region27: #{_lambda_.7} parent=5 // pred_region
      // Predicated region
      $region29: #{_lambda_.7} parent=27 // pred_check
        %p171 = pneg %p46
      $region30: #{_lambda_.7} parent=27 // pred_check_branch
        %173 = sbr.rel (%p171) target = $region32
      $region31: #{_lambda_.7} parent=27 // pred_region
        %s174 = ssub.s32 1, %s17
        %s175 = smul.u32 %s174, %s18
        %s176 = smul.u32 16, %s175
        %p177 = scmp.lt.s32.totalorder %s176, 15
        %s178 = scalar_select %p177, %s176, 15
        %s179 = smul.addr %s178, 2
        %s180 = smul.addr %s179, 4
        %s181 = scalar_lea.vmem %s0, %s180
        %s182 = ssub.s32 1, %s17
        %s183 = smul.u32 %s182, %s18
        %s184 = smul.u32 16, %s183
      $region32: #{_lambda_.7} parent=27 // pred_fallthru
        _
    $region28: #{_lambda_.7} parent=5 // pred_fallthru
      _
    %p185 = scmp.le.s32.totalorder 1, %s10
    %p186 = scmp.lt.s32.totalorder %s10, 3
    %p187 = pnand %p185, %p186
    %p188 = pneg %p187
    // Predicated region
    $region33: #{_lambda_.7} parent=5 // pred_check
      _
    $region34: #{_lambda_.7} parent=5 // pred_check_branch
      %190 = sbr.rel (%p187) target = $region36
    $region35: #{_lambda_.7} parent=5 // pred_region
      %s191 = ssub.s32 %s10, 1
      %s192 = ssub.s32 1, %s19
      %s193 = smul.u32 %s192, %s20
      %s194 = smul.u32 16, %s193
      %p195 = scmp.lt.s32.totalorder %s194, 15
      %s196 = scalar_select %p195, %s194, 15
      %s197 = smul.addr %s196, 2
      %s198 = smul.addr %s197, 4
      %s199 = scalar_lea.vmem %s0, %s198
      %p200 = pneg %p52
      %p201 = pneg %p49
      %p202 = pneg %p73
      %p203 = pneg %p70
      %p204 = pneg %p94
      %p205 = pneg %p91
      %p206 = pneg %p115
      %p207 = pneg %p112
      %p208 = pneg %p143
      %p209 = pneg %p140
      %s210 = smul.u32 %s19, %s20
      %s211 = smul.u32 16, %s210
      %p212 = scmp.lt.s32.totalorder %s211, 15
      %s213 = scalar_select %p212, %s211, 15
      %s214 = smul.addr %s213, 4
      %s215 = scalar_lea.vmem %s4, %s214
      %s216 = ssub.s32 1, %s19
      %s217 = smul.u32 %s216, %s20
      %s218 = smul.u32 16, %s217
      %p219 = scmp.lt.s32.totalorder %s218, 15
      %s220 = scalar_select %p219, %s218, 15
      %s221 = smul.addr %s220, 2
      %s222 = smul.addr %s221, 4
      %s223 = scalar_lea.vmem %s0, %s222
      %s224 = ssub.s32 1, %s19
      %s225 = smul.u32 %s224, %s20
      %s226 = smul.u32 16, %s225
      %s227 = smul.u32 %s19, %s20
      %s228 = smul.u32 16, %s227
      %p229 = scmp.lt.s32.totalorder %s228, 15
      %s230 = scalar_select %p229, %s228, 15
      %s231 = smul.addr %s230, 4
      %s232 = scalar_lea.vmem %s4, %s231
      %s233 = smul.u32 %s19, %s20
      %s234 = smul.u32 16, %s233
      %p236 = scmp.eq.s32.totalorder %s19, 0
      %p237 = scmp.eq.s32.totalorder %s20, 0
      %p238 = pnand %p236, %p237
      %p239 = pneg %p238
      // Predicated region
      $region37: #{_lambda_.7} parent=35 // pred_check
        _
      $region38: #{_lambda_.7} parent=35 // pred_check_branch
        %241 = sbr.rel (%p238) target = $region40
      $region39: #{_lambda_.7} parent=35 // pred_region
        %242 = vst [vmem:[#allocation3] sm:$0x1] 0.0
        %243 = vst [vmem:[#allocation4] sm:$0x1] 0.0
      $region40: #{_lambda_.7} parent=35 // pred_fallthru
        _
      // Predicated region
      $region41: #{_lambda_.7} parent=35 // pred_check
        %p244 = pneg %p236
      $region42: #{_lambda_.7} parent=35 // pred_check_branch
        %246 = sbr.rel (%p244) target = $region44
      $region43: #{_lambda_.7} parent=35 // pred_region
        %v247 = vld [vmem:[%s223] sm:$0xff]
        %v248 = vld [vmem:[%s223 + $0x8] sm:$0xff]
        %v249 = vld [vmem:[%s223 + $0x10] sm:$0xff]
        %v250 = vld [vmem:[%s223 + $0x18] sm:$0xff]
        %v251 = vld [vmem:[%s223 + $0x20] sm:$0xff]
        %v252 = vld [vmem:[%s223 + $0x28] sm:$0xff]
        %v253 = vld [vmem:[%s223 + $0x30] sm:$0xff]
        %v254 = vld [vmem:[%s223 + $0x38] sm:$0xff]
        %v255 = vld [vmem:[%s223 + $0x40] sm:$0xff]
        %v256 = vld [vmem:[%s223 + $0x48] sm:$0xff]
        %v257 = vld [vmem:[%s223 + $0x50] sm:$0xff]
        %v258 = vld [vmem:[%s223 + $0x58] sm:$0xff]
        %v259 = vld [vmem:[%s223 + $0x60] sm:$0xff]
        %v260 = vld [vmem:[%s223 + $0x68] sm:$0xff]
        %v261 = vld [vmem:[%s223 + $0x70] sm:$0xff]
        %v262 = vld [vmem:[%s223 + $0x78] sm:$0xff]
        %v263 = vld [vmem:[%s1] sm:$0xf]
        %v264 = vld [vmem:[%s1 + $0x4] sm:$0xf]
        %v265 = vld [vmem:[%s1 + $0x8] sm:$0xf]
        %v266 = vld [vmem:[%s1 + $0xc] sm:$0xf]
        %v267 = vld [vmem:[%s1 + $0x10] sm:$0xf]
        %v268 = vld [vmem:[%s1 + $0x14] sm:$0xf]
        %v269 = vld [vmem:[%s1 + $0x18] sm:$0xf]
        %v270 = vld [vmem:[%s1 + $0x1c] sm:$0xf]
        %v271 = vld [vmem:[%s1 + $0x20] sm:$0xf]
        %v272 = vld [vmem:[%s1 + $0x24] sm:$0xf]
        %v273 = vld [vmem:[%s1 + $0x28] sm:$0xf]
        %v274 = vld [vmem:[%s1 + $0x2c] sm:$0xf]
        %v275 = vld [vmem:[%s1 + $0x30] sm:$0xf]
        %v276 = vld [vmem:[%s1 + $0x34] sm:$0xf]
        %v277 = vld [vmem:[%s1 + $0x38] sm:$0xf]
        %v278 = vld [vmem:[%s1 + $0x3c] sm:$0xf]
        %v279 = vld [vmem:[%s1 + $0x40] sm:$0xf]
        %v280 = vld [vmem:[%s1 + $0x44] sm:$0xf]
        %v281 = vld [vmem:[%s1 + $0x48] sm:$0xf]
        %v282 = vld [vmem:[%s1 + $0x4c] sm:$0xf]
        %v283 = vld [vmem:[%s1 + $0x50] sm:$0xf]
        %v284 = vld [vmem:[%s1 + $0x54] sm:$0xf]
        %v285 = vld [vmem:[%s1 + $0x58] sm:$0xf]
        %v286 = vld [vmem:[%s1 + $0x5c] sm:$0xf]
        %v287 = vld [vmem:[%s1 + $0x60] sm:$0xf]
        %v288 = vld [vmem:[%s1 + $0x64] sm:$0xf]
        %v289 = vld [vmem:[%s1 + $0x68] sm:$0xf]
        %v290 = vld [vmem:[%s1 + $0x6c] sm:$0xf]
        %v291 = vld [vmem:[%s1 + $0x70] sm:$0xf]
        %v292 = vld [vmem:[%s1 + $0x74] sm:$0xf]
        %v293 = vld [vmem:[%s1 + $0x78] sm:$0xf]
        %v294 = vld [vmem:[%s1 + $0x7c] sm:$0xf]
        %v311 = vunpack.c.l.b16 %v247
        %v312 = vunpack.c.h.b16 %v247
        %v313 = vunpack.c.l.b16 %v248
        %v314 = vunpack.c.h.b16 %v248
        %v315 = vunpack.c.l.b16 %v249
        %v316 = vunpack.c.h.b16 %v249
        %v317 = vunpack.c.l.b16 %v250
        %v318 = vunpack.c.h.b16 %v250
        %v319 = vunpack.c.l.b16 %v251
        %v320 = vunpack.c.h.b16 %v251
        %v321 = vunpack.c.l.b16 %v252
        %v322 = vunpack.c.h.b16 %v252
        %v323 = vunpack.c.l.b16 %v253
        %v324 = vunpack.c.h.b16 %v253
        %v325 = vunpack.c.l.b16 %v254
        %v326 = vunpack.c.h.b16 %v254
        %v327 = vunpack.c.l.b16 %v255
        %v328 = vunpack.c.h.b16 %v255
        %v329 = vunpack.c.l.b16 %v256
        %v330 = vunpack.c.h.b16 %v256
        %v331 = vunpack.c.l.b16 %v257
        %v332 = vunpack.c.h.b16 %v257
        %v333 = vunpack.c.l.b16 %v258
        %v334 = vunpack.c.h.b16 %v258
        %v335 = vunpack.c.l.b16 %v259
        %v336 = vunpack.c.h.b16 %v259
        %v337 = vunpack.c.l.b16 %v260
        %v338 = vunpack.c.h.b16 %v260
        %v339 = vunpack.c.l.b16 %v261
        %v340 = vunpack.c.h.b16 %v261
        %v341 = vunpack.c.l.b16 %v262
        %v342 = vunpack.c.h.b16 %v262
        %v343 = vpack.c.b16 %v313, %v311
        %v344 = vpack.c.b16 %v314, %v312
        %v345 = vpack.c.b16 %v317, %v315
        %v346 = vpack.c.b16 %v318, %v316
        %v347 = vpack.c.b16 %v321, %v319
        %v348 = vpack.c.b16 %v322, %v320
        %v349 = vpack.c.b16 %v325, %v323
        %v350 = vpack.c.b16 %v326, %v324
        %v351 = vpack.c.b16 %v329, %v327
        %v352 = vpack.c.b16 %v330, %v328
        %v353 = vpack.c.b16 %v333, %v331
        %v354 = vpack.c.b16 %v334, %v332
        %v355 = vpack.c.b16 %v337, %v335
        %v356 = vpack.c.b16 %v338, %v336
        %v357 = vpack.c.b16 %v341, %v339
        %v358 = vpack.c.b16 %v342, %v340
        %v407 = vunpack.c.l.b16 %v263
        %v408 = vunpack.c.l.b16 %v264
        %v409 = vunpack.c.l.b16 %v265
        %v410 = vunpack.c.l.b16 %v266
        %v411 = vunpack.c.l.b16 %v267
        %v412 = vunpack.c.l.b16 %v268
        %v413 = vunpack.c.l.b16 %v269
        %v414 = vunpack.c.l.b16 %v270
        %v415 = vunpack.c.l.b16 %v271
        %v416 = vunpack.c.l.b16 %v272
        %v417 = vunpack.c.l.b16 %v273
        %v418 = vunpack.c.l.b16 %v274
        %v419 = vunpack.c.l.b16 %v275
        %v420 = vunpack.c.l.b16 %v276
        %v421 = vunpack.c.l.b16 %v277
        %v422 = vunpack.c.l.b16 %v278
        %v423 = vunpack.c.l.b16 %v279
        %v424 = vunpack.c.l.b16 %v280
        %v425 = vunpack.c.l.b16 %v281
        %v426 = vunpack.c.l.b16 %v282
        %v427 = vunpack.c.l.b16 %v283
        %v428 = vunpack.c.l.b16 %v284
        %v429 = vunpack.c.l.b16 %v285
        %v430 = vunpack.c.l.b16 %v286
        %v431 = vunpack.c.l.b16 %v287
        %v432 = vunpack.c.l.b16 %v288
        %v433 = vunpack.c.l.b16 %v289
        %v434 = vunpack.c.l.b16 %v290
        %v435 = vunpack.c.l.b16 %v291
        %v436 = vunpack.c.l.b16 %v292
        %v437 = vunpack.c.l.b16 %v293
        %v438 = vunpack.c.l.b16 %v294
        %v439 = vpack.c.b16 %v408, %v407
        %v440 = vpack.c.b16 %v410, %v409
        %v441 = vpack.c.b16 %v412, %v411
        %v442 = vpack.c.b16 %v414, %v413
        %v443 = vpack.c.b16 %v416, %v415
        %v444 = vpack.c.b16 %v418, %v417
        %v445 = vpack.c.b16 %v420, %v419
        %v446 = vpack.c.b16 %v422, %v421
        %v447 = vpack.c.b16 %v424, %v423
        %v448 = vpack.c.b16 %v426, %v425
        %v449 = vpack.c.b16 %v428, %v427
        %v450 = vpack.c.b16 %v430, %v429
        %v451 = vpack.c.b16 %v432, %v431
        %v452 = vpack.c.b16 %v434, %v433
        %v453 = vpack.c.b16 %v436, %v435
        %v454 = vpack.c.b16 %v438, %v437
        %471 = vmatprep.subr.bf16.mxu0 0
        %472 = vmatpush1.bf16.msra.mxu0 %v439
        %473 = vmatprep.subr.bf16.mxu0 0
        %474 = vmatpush1.bf16.msra.mxu0 %v440
        %475 = vmatprep.subr.bf16.mxu0 0
        %476 = vmatpush1.bf16.msra.mxu0 %v441
        %477 = vmatprep.subr.bf16.mxu0 0
        %478 = vmatpush1.bf16.msra.mxu0 %v442
        %479 = vmatprep.subr.bf16.mxu0 0
        %480 = vmatpush1.bf16.msra.mxu0 %v443
        %481 = vmatprep.subr.bf16.mxu0 0
        %482 = vmatpush1.bf16.msra.mxu0 %v444
        %483 = vmatprep.subr.bf16.mxu0 0
        %484 = vmatpush1.bf16.msra.mxu0 %v445
        %485 = vmatprep.subr.bf16.mxu0 0
        %486 = vmatpush1.bf16.msra.mxu0 %v446
        %487 = vmatprep.subr.bf16.mxu0 0
        %488 = vmatpush1.bf16.msra.mxu0 %v447
        %489 = vmatprep.subr.bf16.mxu0 0
        %490 = vmatpush1.bf16.msra.mxu0 %v448
        %491 = vmatprep.subr.bf16.mxu0 0
        %492 = vmatpush1.bf16.msra.mxu0 %v449
        %493 = vmatprep.subr.bf16.mxu0 0
        %494 = vmatpush1.bf16.msra.mxu0 %v450
        %495 = vmatprep.subr.bf16.mxu0 0
        %496 = vmatpush1.bf16.msra.mxu0 %v451
        %497 = vmatprep.subr.bf16.mxu0 0
        %498 = vmatpush1.bf16.msra.mxu0 %v452
        %499 = vmatprep.subr.bf16.mxu0 0
        %500 = vmatpush1.bf16.msra.mxu0 %v453
        %501 = vmatprep.subr.bf16.mxu0 0
        %502 = vmatpush1.bf16.msra.mxu0 %v454
        %503 = vmatprep.mubr.bf16.mxu0 %v344
        %504 = vmatmul.mubr.bf16.gmra.mrb[0].mxu0 %v343
        %v505 = vpop.f32.mrb[0].mxu0
        %v506 = vadd.f32 0.0, %v505
        %v507 = vpop.f32.mrb[0].mxu0
        %v508 = vpop.f32.mrb[0].mxu0
        %v509 = vadd.f32 0.0, %v508
        %v510 = vpop.f32.mrb[0].mxu0
        %511 = vmatprep.mubr.bf16.mxu0 %v346
        %512 = vmatmul.mubr.bf16.gmra.mrb[0].mxu0 %v345
        %v513 = vpop.f32.mrb[0].mxu0
        %v514 = vadd.f32 0.0, %v513
        %v515 = vpop.f32.mrb[0].mxu0
        %v516 = vpop.f32.mrb[0].mxu0
        %v517 = vadd.f32 0.0, %v516
        %v518 = vpop.f32.mrb[0].mxu0
        %519 = vmatprep.mubr.bf16.mxu0 %v348
        %520 = vmatmul.mubr.bf16.gmra.mrb[0].mxu0 %v347
        %v521 = vpop.f32.mrb[0].mxu0
        %v522 = vadd.f32 0.0, %v521
        %v523 = vpop.f32.mrb[0].mxu0
        %v524 = vpop.f32.mrb[0].mxu0
        %v525 = vadd.f32 0.0, %v524
        %v526 = vpop.f32.mrb[0].mxu0
        %527 = vmatprep.mubr.bf16.mxu0 %v350
        %528 = vmatmul.mubr.bf16.gmra.mrb[0].mxu0 %v349
        %v529 = vpop.f32.mrb[0].mxu0
        %v530 = vadd.f32 0.0, %v529
        %v531 = vpop.f32.mrb[0].mxu0
        %v532 = vpop.f32.mrb[0].mxu0
        %v533 = vadd.f32 0.0, %v532
        %v534 = vpop.f32.mrb[0].mxu0
        %535 = vmatprep.mubr.bf16.mxu0 %v352
        %536 = vmatmul.mubr.bf16.gmra.mrb[0].mxu0 %v351
        %v537 = vpop.f32.mrb[0].mxu0
        %v538 = vadd.f32 0.0, %v537
        %v539 = vpop.f32.mrb[0].mxu0
        %v540 = vpop.f32.mrb[0].mxu0
        %v541 = vadd.f32 0.0, %v540
        %v542 = vpop.f32.mrb[0].mxu0
        %543 = vmatprep.mubr.bf16.mxu0 %v354
        %544 = vmatmul.mubr.bf16.gmra.mrb[0].mxu0 %v353
        %v545 = vpop.f32.mrb[0].mxu0
        %v546 = vadd.f32 0.0, %v545
        %v547 = vpop.f32.mrb[0].mxu0
        %v548 = vpop.f32.mrb[0].mxu0
        %v549 = vadd.f32 0.0, %v548
        %v550 = vpop.f32.mrb[0].mxu0
        %551 = vmatprep.mubr.bf16.mxu0 %v356
        %552 = vmatmul.mubr.bf16.gmra.mrb[0].mxu0 %v355
        %v553 = vpop.f32.mrb[0].mxu0
        %v554 = vadd.f32 0.0, %v553
        %v555 = vpop.f32.mrb[0].mxu0
        %v556 = vpop.f32.mrb[0].mxu0
        %v557 = vadd.f32 0.0, %v556
        %v558 = vpop.f32.mrb[0].mxu0
        %559 = vmatprep.mubr.bf16.mxu0 %v358
        %560 = vmatmul.mubr.bf16.gmra.mrb[0].mxu0 %v357
        %v561 = vpop.f32.mrb[0].mxu0
        %v562 = vadd.f32 0.0, %v561
        %v563 = vpop.f32.mrb[0].mxu0
        %v564 = vpop.f32.mrb[0].mxu0
        %v565 = vadd.f32 0.0, %v564
        %v566 = vpop.f32.mrb[0].mxu0
        %567 = vdwg.mxu0
        %s568 = smul.u32 %s20, 128
        %s569 = scalar_lea.vmem [#allocation2], %s568
        %570 = vst [vmem:[%s569] sm:$0xff] %v506
        %571 = vst [vmem:[%s569 + $0x8] sm:$0xff] %v509
        %572 = vst [vmem:[%s569 + $0x10] sm:$0xff] %v514
        %573 = vst [vmem:[%s569 + $0x18] sm:$0xff] %v517
        %574 = vst [vmem:[%s569 + $0x20] sm:$0xff] %v522
        %575 = vst [vmem:[%s569 + $0x28] sm:$0xff] %v525
        %576 = vst [vmem:[%s569 + $0x30] sm:$0xff] %v530
        %577 = vst [vmem:[%s569 + $0x38] sm:$0xff] %v533
        %578 = vst [vmem:[%s569 + $0x40] sm:$0xff] %v538
        %579 = vst [vmem:[%s569 + $0x48] sm:$0xff] %v541
        %580 = vst [vmem:[%s569 + $0x50] sm:$0xff] %v546
        %581 = vst [vmem:[%s569 + $0x58] sm:$0xff] %v549
        %582 = vst [vmem:[%s569 + $0x60] sm:$0xff] %v554
        %583 = vst [vmem:[%s569 + $0x68] sm:$0xff] %v557
        %584 = vst [vmem:[%s569 + $0x70] sm:$0xff] %v562
        %585 = vst [vmem:[%s569 + $0x78] sm:$0xff] %v565
        %v586 = vld [vmem:[#allocation3] sm:$0x1]
        %v587 = vadd.f32 %v506, %v509
        %v588 = vadd.f32 %v587, %v514
        %v589 = vadd.f32 %v588, %v517
        %v590 = vadd.f32 %v589, %v522
        %v591 = vadd.f32 %v590, %v525
        %v592 = vadd.f32 %v591, %v530
        %v593 = vadd.f32 %v592, %v533
        %v594 = vadd.f32 %v593, %v538
        %v595 = vadd.f32 %v594, %v541
        %v596 = vadd.f32 %v595, %v546
        %v597 = vadd.f32 %v596, %v549
        %v598 = vadd.f32 %v597, %v554
        %v599 = vadd.f32 %v598, %v557
        %v600 = vadd.f32 %v599, %v562
        %v601 = vadd.f32 %v600, %v565
        %v602 = vrot.slane %v601, 4
        %v603 = vadd.f32 %v601, %v602
        %v604 = vrot.slane %v603, 2
        %v605 = vadd.f32 %v603, %v604
        %v606 = vrot.slane %v605, 1
        %v607 = vadd.f32 %v605, %v606
        %v608 = vadd.f32 %v586, %v607
        %609 = vst [vmem:[#allocation3] sm:$0x1] %v608
        %v610 = vld [vmem:[#allocation4] sm:$0x1]
        %v611 = vmul.f32 %v506, %v506
        %v612 = vmul.f32 %v509, %v509
        %v613 = vmul.f32 %v514, %v514
        %v614 = vmul.f32 %v517, %v517
        %v615 = vmul.f32 %v522, %v522
        %v616 = vmul.f32 %v525, %v525
        %v617 = vmul.f32 %v530, %v530
        %v618 = vmul.f32 %v533, %v533
        %v619 = vmul.f32 %v538, %v538
        %v620 = vmul.f32 %v541, %v541
        %v621 = vmul.f32 %v546, %v546
        %v622 = vmul.f32 %v549, %v549
        %v623 = vmul.f32 %v554, %v554
        %v624 = vmul.f32 %v557, %v557
        %v625 = vmul.f32 %v562, %v562
        %v626 = vmul.f32 %v565, %v565
        %v627 = vadd.f32 %v611, %v612
        %v628 = vadd.f32 %v627, %v613
        %v629 = vadd.f32 %v628, %v614
        %v630 = vadd.f32 %v629, %v615
        %v631 = vadd.f32 %v630, %v616
        %v632 = vadd.f32 %v631, %v617
        %v633 = vadd.f32 %v632, %v618
        %v634 = vadd.f32 %v633, %v619
        %v635 = vadd.f32 %v634, %v620
        %v636 = vadd.f32 %v635, %v621
        %v637 = vadd.f32 %v636, %v622
        %v638 = vadd.f32 %v637, %v623
        %v639 = vadd.f32 %v638, %v624
        %v640 = vadd.f32 %v639, %v625
        %v641 = vadd.f32 %v640, %v626
        %v642 = vrot.slane %v641, 4
        %v643 = vadd.f32 %v641, %v642
        %v644 = vrot.slane %v643, 2
        %v645 = vadd.f32 %v643, %v644
        %v646 = vrot.slane %v645, 1
        %v647 = vadd.f32 %v645, %v646
        %v648 = vadd.f32 %v610, %v647
        %649 = vst [vmem:[#allocation4] sm:$0x1] %v648
      $region44: #{_lambda_.7} parent=35 // pred_fallthru
        _
      %p650 = scmp.eq.s32.totalorder %s19, 1
      %p651 = pnand %p650, %p237
      %p652 = pneg %p651
      // Predicated region
      $region45: #{_lambda_.7} parent=35 // pred_check
        _
      $region46: #{_lambda_.7} parent=35 // pred_check_branch
        %654 = sbr.rel (%p651) target = $region48
      $region47: #{_lambda_.7} parent=35 // pred_region
        %v655 = vld [vmem:[#allocation3] sm:$0x1]
        %v656 = vmul.f32 %v655, 0.0078125
        %v657 = vld [vmem:[#allocation4] sm:$0x1]
        %v658 = vmul.f32 %v657, 0.0078125
        %v659 = vmul.f32 %v656, %v656
        %v660 = vsub.f32 %v658, %v659
        %v661 = vmax.f32 %v660, 0.0
        %v662 = vld [vmem:[%s2] sm:$0x1]
        %v663 = vadd.f32 %v661, 1e-05
        %v664 = vrsqrt.pop %v663
        %v665 = vmul.f32 %v662, %v664
        %666 = vst [vmem:[#allocation5] sm:$0x1] %v665
        %v667 = vld [vmem:[%s3] sm:$0x1]
        %v668 = vmul.f32 %v656, %v665
        %v669 = vsub.f32 %v667, %v668
        %s670 = scalar_lea.vmem [#allocation5], 1
        %671 = vst [vmem:[%s670] sm:$0x1] %v669
      $region48: #{_lambda_.7} parent=35 // pred_fallthru
        _
      // Predicated region
      $region49: #{_lambda_.7} parent=35 // pred_check
        %p672 = pneg %p650
      $region50: #{_lambda_.7} parent=35 // pred_check_branch
        %674 = sbr.rel (%p672) target = $region52
      $region51: #{_lambda_.7} parent=35 // pred_region
        %s675 = smul.u32 %s20, 128
        %s676 = scalar_lea.vmem [#allocation2], %s675
        %v677 = vld [vmem:[%s676] sm:$0xff]
        %v678 = vld [vmem:[%s676 + $0x8] sm:$0xff]
        %v679 = vld [vmem:[%s676 + $0x10] sm:$0xff]
        %v680 = vld [vmem:[%s676 + $0x18] sm:$0xff]
        %v681 = vld [vmem:[%s676 + $0x20] sm:$0xff]
        %v682 = vld [vmem:[%s676 + $0x28] sm:$0xff]
        %v683 = vld [vmem:[%s676 + $0x30] sm:$0xff]
        %v684 = vld [vmem:[%s676 + $0x38] sm:$0xff]
        %v685 = vld [vmem:[%s676 + $0x40] sm:$0xff]
        %v686 = vld [vmem:[%s676 + $0x48] sm:$0xff]
        %v687 = vld [vmem:[%s676 + $0x50] sm:$0xff]
        %v688 = vld [vmem:[%s676 + $0x58] sm:$0xff]
        %v689 = vld [vmem:[%s676 + $0x60] sm:$0xff]
        %v690 = vld [vmem:[%s676 + $0x68] sm:$0xff]
        %v691 = vld [vmem:[%s676 + $0x70] sm:$0xff]
        %v692 = vld [vmem:[%s676 + $0x78] sm:$0xff]
        %v693 = vld [vmem:[#allocation5] sm:$0x1]
        %v695 = vlaneseq
        %v696 = vshrl.u32 %v695, 7
        %v697 = vsub.s32 0, %v696
        %v698 = vrot.slane %v693, %v697
        %v700 = vmul.f32 %v677, %v698
        %v701 = vmul.f32 %v678, %v698
        %v702 = vmul.f32 %v679, %v698
        %v703 = vmul.f32 %v680, %v698
        %v704 = vmul.f32 %v681, %v698
        %v705 = vmul.f32 %v682, %v698
        %v706 = vmul.f32 %v683, %v698
        %v707 = vmul.f32 %v684, %v698
        %v708 = vmul.f32 %v685, %v698
        %v709 = vmul.f32 %v686, %v698
        %v710 = vmul.f32 %v687, %v698
        %v711 = vmul.f32 %v688, %v698
        %v712 = vmul.f32 %v689, %v698
        %v713 = vmul.f32 %v690, %v698
        %v714 = vmul.f32 %v691, %v698
        %v715 = vmul.f32 %v692, %v698
        %s716 = scalar_lea.vmem [#allocation5], 1
        %v717 = vld [vmem:[%s716] sm:$0x1]
        %v719 = vlaneseq
        %v720 = vshrl.u32 %v719, 7
        %v721 = vsub.s32 0, %v720
        %v722 = vrot.slane %v717, %v721
        %v724 = vadd.f32 %v700, %v722
        %v725 = vadd.f32 %v701, %v722
        %v726 = vadd.f32 %v702, %v722
        %v727 = vadd.f32 %v703, %v722
        %v728 = vadd.f32 %v704, %v722
        %v729 = vadd.f32 %v705, %v722
        %v730 = vadd.f32 %v706, %v722
        %v731 = vadd.f32 %v707, %v722
        %v732 = vadd.f32 %v708, %v722
        %v733 = vadd.f32 %v709, %v722
        %v734 = vadd.f32 %v710, %v722
        %v735 = vadd.f32 %v711, %v722
        %v736 = vadd.f32 %v712, %v722
        %v737 = vadd.f32 %v713, %v722
        %v738 = vadd.f32 %v714, %v722
        %v739 = vadd.f32 %v715, %v722
        %vm740 = vcmp.ge.f32.partialorder %v724, 0.0
        %vm741 = vcmp.ge.f32.partialorder %v725, 0.0
        %vm742 = vcmp.ge.f32.partialorder %v726, 0.0
        %vm743 = vcmp.ge.f32.partialorder %v727, 0.0
        %vm744 = vcmp.ge.f32.partialorder %v728, 0.0
        %vm745 = vcmp.ge.f32.partialorder %v729, 0.0
        %vm746 = vcmp.ge.f32.partialorder %v730, 0.0
        %vm747 = vcmp.ge.f32.partialorder %v731, 0.0
        %vm748 = vcmp.ge.f32.partialorder %v732, 0.0
        %vm749 = vcmp.ge.f32.partialorder %v733, 0.0
        %vm750 = vcmp.ge.f32.partialorder %v734, 0.0
        %vm751 = vcmp.ge.f32.partialorder %v735, 0.0
        %vm752 = vcmp.ge.f32.partialorder %v736, 0.0
        %vm753 = vcmp.ge.f32.partialorder %v737, 0.0
        %vm754 = vcmp.ge.f32.partialorder %v738, 0.0
        %vm755 = vcmp.ge.f32.partialorder %v739, 0.0
        %v756 = vmul.f32 %v724, 0.2
        %v757 = vmul.f32 %v725, 0.2
        %v758 = vmul.f32 %v726, 0.2
        %v759 = vmul.f32 %v727, 0.2
        %v760 = vmul.f32 %v728, 0.2
        %v761 = vmul.f32 %v729, 0.2
        %v762 = vmul.f32 %v730, 0.2
        %v763 = vmul.f32 %v731, 0.2
        %v764 = vmul.f32 %v732, 0.2
        %v765 = vmul.f32 %v733, 0.2
        %v766 = vmul.f32 %v734, 0.2
        %v767 = vmul.f32 %v735, 0.2
        %v768 = vmul.f32 %v736, 0.2
        %v769 = vmul.f32 %v737, 0.2
        %v770 = vmul.f32 %v738, 0.2
        %v771 = vmul.f32 %v739, 0.2
        %v772 = vsel %vm740, %v724, %v756
        %v773 = vsel %vm741, %v725, %v757
        %v774 = vsel %vm742, %v726, %v758
        %v775 = vsel %vm743, %v727, %v759
        %v776 = vsel %vm744, %v728, %v760
        %v777 = vsel %vm745, %v729, %v761
        %v778 = vsel %vm746, %v730, %v762
        %v779 = vsel %vm747, %v731, %v763
        %v780 = vsel %vm748, %v732, %v764
        %v781 = vsel %vm749, %v733, %v765
        %v782 = vsel %vm750, %v734, %v766
        %v783 = vsel %vm751, %v735, %v767
        %v784 = vsel %vm752, %v736, %v768
        %v785 = vsel %vm753, %v737, %v769
        %v786 = vsel %vm754, %v738, %v770
        %v787 = vsel %vm755, %v739, %v771
        %v788 = vpack.c.bf16 %v773, %v772
        %v789 = vpack.c.bf16 %v775, %v774
        %v790 = vpack.c.bf16 %v777, %v776
        %v791 = vpack.c.bf16 %v779, %v778
        %v792 = vpack.c.bf16 %v781, %v780
        %v793 = vpack.c.bf16 %v783, %v782
        %v794 = vpack.c.bf16 %v785, %v784
        %v795 = vpack.c.bf16 %v787, %v786
        %v804 = vunpack.c.l.b16 %v788
        %v805 = vunpack.c.h.b16 %v788
        %v806 = vunpack.c.l.b16 %v789
        %v807 = vunpack.c.h.b16 %v789
        %v808 = vunpack.c.l.b16 %v790
        %v809 = vunpack.c.h.b16 %v790
        %v810 = vunpack.c.l.b16 %v791
        %v811 = vunpack.c.h.b16 %v791
        %v812 = vunpack.c.l.b16 %v792
        %v813 = vunpack.c.h.b16 %v792
        %v814 = vunpack.c.l.b16 %v793
        %v815 = vunpack.c.h.b16 %v793
        %v816 = vunpack.c.l.b16 %v794
        %v817 = vunpack.c.h.b16 %v794
        %v818 = vunpack.c.l.b16 %v795
        %v819 = vunpack.c.h.b16 %v795
        %v820 = vpack.c.b16 %v804, %v804
        %v821 = vpack.c.b16 %v805, %v805
        %v822 = vpack.c.b16 %v806, %v806
        %v823 = vpack.c.b16 %v807, %v807
        %v824 = vpack.c.b16 %v808, %v808
        %v825 = vpack.c.b16 %v809, %v809
        %v826 = vpack.c.b16 %v810, %v810
        %v827 = vpack.c.b16 %v811, %v811
        %v828 = vpack.c.b16 %v812, %v812
        %v829 = vpack.c.b16 %v813, %v813
        %v830 = vpack.c.b16 %v814, %v814
        %v831 = vpack.c.b16 %v815, %v815
        %v832 = vpack.c.b16 %v816, %v816
        %v833 = vpack.c.b16 %v817, %v817
        %v834 = vpack.c.b16 %v818, %v818
        %v835 = vpack.c.b16 %v819, %v819
        %852 = vst [vmem:[%s232] sm:$0xf] %v820
        %853 = vst [vmem:[%s232 + $0x4] sm:$0xf] %v821
        %854 = vst [vmem:[%s232 + $0x8] sm:$0xf] %v822
        %855 = vst [vmem:[%s232 + $0xc] sm:$0xf] %v823
        %856 = vst [vmem:[%s232 + $0x10] sm:$0xf] %v824
        %857 = vst [vmem:[%s232 + $0x14] sm:$0xf] %v825
        %858 = vst [vmem:[%s232 + $0x18] sm:$0xf] %v826
        %859 = vst [vmem:[%s232 + $0x1c] sm:$0xf] %v827
        %860 = vst [vmem:[%s232 + $0x20] sm:$0xf] %v828
        %861 = vst [vmem:[%s232 + $0x24] sm:$0xf] %v829
        %862 = vst [vmem:[%s232 + $0x28] sm:$0xf] %v830
        %863 = vst [vmem:[%s232 + $0x2c] sm:$0xf] %v831
        %864 = vst [vmem:[%s232 + $0x30] sm:$0xf] %v832
        %865 = vst [vmem:[%s232 + $0x34] sm:$0xf] %v833
        %866 = vst [vmem:[%s232 + $0x38] sm:$0xf] %v834
        %867 = vst [vmem:[%s232 + $0x3c] sm:$0xf] %v835
      $region52: #{_lambda_.7} parent=35 // pred_fallthru
        _
      %s868 = smul.u32 %s19, %s20
      %s869 = smul.u32 16, %s868
      %p870 = scmp.lt.s32.totalorder %s869, 15
      %s871 = scalar_select %p870, %s869, 15
      %s872 = smul.addr %s871, 4
      %s873 = scalar_lea.vmem %s4, %s872
      // Predicated region
      $region53: #{_lambda_.7} parent=35 // pred_check
        %p874 = pneg %p140
      $region54: #{_lambda_.7} parent=35 // pred_check_branch
        %876 = sbr.rel (%p874) target = $region56
      $region55: #{_lambda_.7} parent=35 // pred_region
        %s877 = smul.u32 %s19, %s20
        %s878 = smul.u32 16, %s877
      $region56: #{_lambda_.7} parent=35 // pred_fallthru
        _
    $region36: #{_lambda_.7} parent=5 // pred_fallthru
      _
    %p879 = scmp.le.s32.totalorder 2, %s10
    // Predicated region
    $region57: #{_lambda_.7} parent=5 // pred_check
      %p880 = pneg %p879
    $region58: #{_lambda_.7} parent=5 // pred_check_branch
      %882 = sbr.rel (%p880) target = $region60
    $region59: #{_lambda_.7} parent=5 // pred_region
      %s883 = ssub.s32 %s10, 2
      // Predicated region
      $region61: #{_lambda_.7} parent=59 // pred_check
        %p884 = pneg %p146
      $region62: #{_lambda_.7} parent=59 // pred_check_branch
        %886 = sbr.rel (%p884) target = $region64
      $region63: #{_lambda_.7} parent=59 // pred_region
        %s887 = smul.u32 %s21, %s22
        %s888 = smul.u32 16, %s887
        %p889 = scmp.lt.s32.totalorder %s888, 15
        %s890 = scalar_select %p889, %s888, 15
        %s891 = smul.addr %s890, 4
        %s892 = scalar_lea.vmem %s4, %s891
      $region64: #{_lambda_.7} parent=59 // pred_fallthru
        _
    $region60: #{_lambda_.7} parent=5 // pred_fallthru
      _
  $region6: #{_lambda_.7} parent=0 // loop_footer
    %s14 = sadd.s32 1, %s10
  $region7: #{_lambda_.7} parent=0 // loop_footer_branch
    %9 = sbr.rel target = $region3
  $region8: #{_lambda_.7} parent=0 // loop_exit
    _

// kernel: _lambda_.8
$region0: #{_lambda_.8}
  #allocation0 [shape = 'u32[]', space=smem, size = 0x4, offset = 0x4, fixed_abs, tag = 'smem constant byte address 0x4 - core index']
  #allocation1 [shape = 'u32[144,128]{1,0:T(1,128)}', space=vmem, size = 0x12000, scoped, tag = 'internal scratch']
  #allocation2 [shape = 'f32[1,32,128]{2,1,0:T(8,128)}', space=vmem, size = 0x4000, scoped, tag = 'scratch operand']
  #allocation3 [shape = 'f32[1,128]{1,0:T(1,128)}', space=vmem, size = 0x200, scoped, tag = 'scratch operand']
  #allocation4 [shape = 'f32[1,128]{1,0:T(1,128)}', space=vmem, size = 0x200, scoped, tag = 'scratch operand']
  #allocation5 [shape = 'f32[2,1,128]{2,1,0:T(1,128)}', space=vmem, size = 0x400, scoped, tag = 'scratch operand']
  %s0 = inlined_call_operand.vmem [shape: bf16[32,512], index: 0, kind: input, shape index: {}]
  %s1 = inlined_call_operand.vmem [shape: bf16[512,128], index: 1, kind: input, shape index: {}]
  %s2 = inlined_call_operand.vmem [shape: f32[1,128], index: 2, kind: input, shape index: {}]
  %s3 = inlined_call_operand.vmem [shape: f32[1,128], index: 3, kind: input, shape index: {}]
  %s4 = inlined_call_operand.vmem [shape: bf16[32,128], index: 4, kind: output, shape index: {}]
  %s5 = sld [smem:[#allocation0]]
  $region65: #{_lambda_.8} parent=0
    _
  %s7 = ssub.s32 1, %s5
  %s8 = scalar_select 0, %s7, %s5
  loop: start=0, step=1, limit=4
  $region2: #{_lambda_.8} parent=0 // loop_pre_header
    _
  $region3: #{_lambda_.8} parent=0 // loop_header
    %s10 = sphi 0, %s14
    %p11 = scmp.ge.s32.totalorder %s10, 4
    %s17 = sphi 0, %s29
    %s18 = sphi 0, %s25
    %s19 = sphi 0, %s17
    %s20 = sphi 0, %s18
    %s21 = sphi 0, %s19
    %s22 = sphi 0, %s20
    %s36 = sphi 0, %s38
    %s39 = sphi 0, %s36
    %s40 = sphi 0, %s39
    %s56 = sphi 0, %s40
    %s60 = sphi 0, %s60
    %s62 = sphi 0, %s60
    %s63 = sphi 0, %s62
    %s77 = sphi 0, %s63
    %s81 = sphi 0, %s81
    %s83 = sphi 0, %s81
    %s84 = sphi 0, %s83
    %s98 = sphi 0, %s84
    %s102 = sphi 0, %s102
    %s104 = sphi 0, %s102
    %s105 = sphi 0, %s104
    %s119 = sphi 0, %s105
    %s127 = sphi 0, %s129
    %s130 = sphi 0, %s127
    %s131 = sphi 0, %s130
    %s147 = sphi 0, %s131
  $region4: #{_lambda_.8} parent=0 // loop_header_branch
    %13 = sbr.rel (%p11) target = $region8
  $region5: #{_lambda_.8} parent=0 // loop_body
    %s15 = ssub.s32 %s10, 1
    %s16 = ssub.s32 %s10, 2
    %s23 = sadd.s32 1, %s18
    %p24 = scmp.ge.s32.totalorder %s23, 1
    %s25 = scalar_select %p24, 0, %s23
    %s26 = sadd.s32 1, %s17
    %s27 = scalar_select %p24, %s26, %s17
    %p28 = scmp.ge.s32.totalorder %s27, 2
    %s29 = scalar_select %p28, 0, %s27
    %s30 = ssub.s32 1, %s17
    %s31 = smul.u32 %s30, %s18
    %s32 = ssub.s32 1, %s29
    %s33 = smul.u32 %s32, %s25
    %s34 = ssub.s32 %s31, %s33
    %p35 = scmp.eq.s32.totalorder %s34, 0
    %s37 = sadd.s32 %s36, 1
    %s38 = scalar_select %p35, %s36, %s37
    %p41 = pneg %p35
    %p42 = scmp.eq.s32.totalorder %s10, 1
    %p43 = por %p41, %p42
    %p44 = scmp.ne.s32.totalorder %s36, %s39
    %p45 = scmp.eq.s32.totalorder %s10, 0
    %p46 = por %p44, %p45
    %p47 = scmp.ne.s32.totalorder %s36, %s39
    %p48 = scmp.eq.s32.totalorder %s15, 1
    %p49 = por %p47, %p48
    %p50 = scmp.ne.s32.totalorder %s39, %s40
    %p51 = scmp.eq.s32.totalorder %s15, 0
    %p52 = por %p50, %p51
    %p53 = scmp.ne.s32.totalorder %s39, %s40
    %p54 = scmp.eq.s32.totalorder %s16, 1
    %p55 = por %p53, %p54
    %p57 = scmp.ne.s32.totalorder %s40, %s56
    %p58 = scmp.eq.s32.totalorder %s16, 0
    %p59 = por %p57, %p58
    %s61 = sadd.s32 %s60, 1
    %p64 = scmp.eq.s32.totalorder %s10, 1
    %p65 = scmp.ne.s32.totalorder %s60, %s62
    %p66 = scmp.eq.s32.totalorder %s10, 0
    %p67 = por %p65, %p66
    %p68 = scmp.ne.s32.totalorder %s60, %s62
    %p69 = scmp.eq.s32.totalorder %s15, 1
    %p70 = por %p68, %p69
    %p71 = scmp.ne.s32.totalorder %s62, %s63
    %p72 = scmp.eq.s32.totalorder %s15, 0
    %p73 = por %p71, %p72
    %p74 = scmp.ne.s32.totalorder %s62, %s63
    %p75 = scmp.eq.s32.totalorder %s16, 1
    %p76 = por %p74, %p75
    %p78 = scmp.ne.s32.totalorder %s63, %s77
    %p79 = scmp.eq.s32.totalorder %s16, 0
    %p80 = por %p78, %p79
    %s82 = sadd.s32 %s81, 1
    %p85 = scmp.eq.s32.totalorder %s10, 1
    %p86 = scmp.ne.s32.totalorder %s81, %s83
    %p87 = scmp.eq.s32.totalorder %s10, 0
    %p88 = por %p86, %p87
    %p89 = scmp.ne.s32.totalorder %s81, %s83
    %p90 = scmp.eq.s32.totalorder %s15, 1
    %p91 = por %p89, %p90
    %p92 = scmp.ne.s32.totalorder %s83, %s84
    %p93 = scmp.eq.s32.totalorder %s15, 0
    %p94 = por %p92, %p93
    %p95 = scmp.ne.s32.totalorder %s83, %s84
    %p96 = scmp.eq.s32.totalorder %s16, 1
    %p97 = por %p95, %p96
    %p99 = scmp.ne.s32.totalorder %s84, %s98
    %p100 = scmp.eq.s32.totalorder %s16, 0
    %p101 = por %p99, %p100
    %s103 = sadd.s32 %s102, 1
    %p106 = scmp.eq.s32.totalorder %s10, 1
    %p107 = scmp.ne.s32.totalorder %s102, %s104
    %p108 = scmp.eq.s32.totalorder %s10, 0
    %p109 = por %p107, %p108
    %p110 = scmp.ne.s32.totalorder %s102, %s104
    %p111 = scmp.eq.s32.totalorder %s15, 1
    %p112 = por %p110, %p111
    %p113 = scmp.ne.s32.totalorder %s104, %s105
    %p114 = scmp.eq.s32.totalorder %s15, 0
    %p115 = por %p113, %p114
    %p116 = scmp.ne.s32.totalorder %s104, %s105
    %p117 = scmp.eq.s32.totalorder %s16, 1
    %p118 = por %p116, %p117
    %p120 = scmp.ne.s32.totalorder %s105, %s119
    %p121 = scmp.eq.s32.totalorder %s16, 0
    %p122 = por %p120, %p121
    %s123 = smul.u32 %s17, %s18
    %s124 = smul.u32 %s29, %s25
    %s125 = ssub.s32 %s123, %s124
    %p126 = scmp.eq.s32.totalorder %s125, 0
    %s128 = sadd.s32 %s127, 1
    %s129 = scalar_select %p126, %s127, %s128
    %p132 = pneg %p126
    %p133 = scmp.eq.s32.totalorder %s10, 1
    %p134 = por %p132, %p133
    %p135 = scmp.ne.s32.totalorder %s127, %s130
    %p136 = scmp.eq.s32.totalorder %s10, 0
    %p137 = por %p135, %p136
    %p138 = scmp.ne.s32.totalorder %s127, %s130
    %p139 = scmp.eq.s32.totalorder %s15, 1
    %p140 = por %p138, %p139
    %p141 = scmp.ne.s32.totalorder %s130, %s131
    %p142 = scmp.eq.s32.totalorder %s15, 0
    %p143 = por %p141, %p142
    %p144 = scmp.ne.s32.totalorder %s130, %s131
    %p145 = scmp.eq.s32.totalorder %s16, 1
    %p146 = por %p144, %p145
    %p148 = scmp.ne.s32.totalorder %s131, %s147
    %p149 = scmp.eq.s32.totalorder %s16, 0
    %p150 = por %p148, %p149
    %p151 = scmp.le.s32.totalorder 1, %s10
    %p152 = scmp.lt.s32.totalorder %s10, 3
    %p153 = pnand %p151, %p152
    %p154 = pneg %p153
    // Predicated region
    $region9: #{_lambda_.8} parent=5 // pred_check
      _
    $region10: #{_lambda_.8} parent=5 // pred_check_branch
      %156 = sbr.rel (%p153) target = $region12
    $region11: #{_lambda_.8} parent=5 // pred_region
      %s157 = ssub.s32 %s10, 1
      // Predicated region
      $region13: #{_lambda_.8} parent=11 // pred_check
        %p158 = pneg %p73
      $region14: #{_lambda_.8} parent=11 // pred_check_branch
        %160 = sbr.rel (%p158) target = $region16
      $region15: #{_lambda_.8} parent=11 // pred_region
        _
      $region16: #{_lambda_.8} parent=11 // pred_fallthru
        _
      // Predicated region
      $region17: #{_lambda_.8} parent=11 // pred_check
        %p161 = pneg %p94
      $region18: #{_lambda_.8} parent=11 // pred_check_branch
        %163 = sbr.rel (%p161) target = $region20
      $region19: #{_lambda_.8} parent=11 // pred_region
        _
      $region20: #{_lambda_.8} parent=11 // pred_fallthru
        _
      // Predicated region
      $region21: #{_lambda_.8} parent=11 // pred_check
        %p164 = pneg %p115
      $region22: #{_lambda_.8} parent=11 // pred_check_branch
        %166 = sbr.rel (%p164) target = $region24
      $region23: #{_lambda_.8} parent=11 // pred_region
        _
      $region24: #{_lambda_.8} parent=11 // pred_fallthru
        _
    $region12: #{_lambda_.8} parent=5 // pred_fallthru
      _
    %p167 = scmp.lt.s32.totalorder %s10, 2
    // Predicated region
    $region25: #{_lambda_.8} parent=5 // pred_check
      %p168 = pneg %p167
    $region26: #{_lambda_.8} parent=5 // pred_check_branch
      %170 = sbr.rel (%p168) target = $region28
    $region27: #{_lambda_.8} parent=5 // pred_region
      // Predicated region
      $region29: #{_lambda_.8} parent=27 // pred_check
        %p171 = pneg %p46
      $region30: #{_lambda_.8} parent=27 // pred_check_branch
        %173 = sbr.rel (%p171) target = $region32
      $region31: #{_lambda_.8} parent=27 // pred_region
        %s174 = ssub.s32 1, %s17
        %s175 = smul.u32 %s174, %s18
        %s176 = smul.u32 4, %s175
        %p177 = scmp.lt.s32.totalorder %s176, 3
        %s178 = scalar_select %p177, %s176, 3
        %s179 = smul.addr %s178, 4
        %s180 = smul.addr %s179, 4
        %s181 = scalar_lea.vmem %s0, %s180
        %s182 = ssub.s32 1, %s17
        %s183 = smul.u32 %s182, %s18
        %s184 = smul.u32 4, %s183
      $region32: #{_lambda_.8} parent=27 // pred_fallthru
        _
    $region28: #{_lambda_.8} parent=5 // pred_fallthru
      _
    %p185 = scmp.le.s32.totalorder 1, %s10
    %p186 = scmp.lt.s32.totalorder %s10, 3
    %p187 = pnand %p185, %p186
    %p188 = pneg %p187
    // Predicated region
    $region33: #{_lambda_.8} parent=5 // pred_check
      _
    $region34: #{_lambda_.8} parent=5 // pred_check_branch
      %190 = sbr.rel (%p187) target = $region36
    $region35: #{_lambda_.8} parent=5 // pred_region
      %s191 = ssub.s32 %s10, 1
      %s192 = ssub.s32 1, %s19
      %s193 = smul.u32 %s192, %s20
      %s194 = smul.u32 4, %s193
      %p195 = scmp.lt.s32.totalorder %s194, 3
      %s196 = scalar_select %p195, %s194, 3
      %s197 = smul.addr %s196, 4
      %s198 = smul.addr %s197, 4
      %s199 = scalar_lea.vmem %s0, %s198
      %p200 = pneg %p52
      %p201 = pneg %p49
      %p202 = pneg %p73
      %p203 = pneg %p70
      %p204 = pneg %p94
      %p205 = pneg %p91
      %p206 = pneg %p115
      %p207 = pneg %p112
      %p208 = pneg %p143
      %p209 = pneg %p140
      %s210 = smul.u32 %s19, %s20
      %s211 = smul.u32 4, %s210
      %p212 = scmp.lt.s32.totalorder %s211, 3
      %s213 = scalar_select %p212, %s211, 3
      %s214 = smul.addr %s213, 4
      %s215 = scalar_lea.vmem %s4, %s214
      %s216 = ssub.s32 1, %s19
      %s217 = smul.u32 %s216, %s20
      %s218 = smul.u32 4, %s217
      %p219 = scmp.lt.s32.totalorder %s218, 3
      %s220 = scalar_select %p219, %s218, 3
      %s221 = smul.addr %s220, 4
      %s222 = smul.addr %s221, 4
      %s223 = scalar_lea.vmem %s0, %s222
      %s224 = ssub.s32 1, %s19
      %s225 = smul.u32 %s224, %s20
      %s226 = smul.u32 4, %s225
      %s227 = smul.u32 %s19, %s20
      %s228 = smul.u32 4, %s227
      %p229 = scmp.lt.s32.totalorder %s228, 3
      %s230 = scalar_select %p229, %s228, 3
      %s231 = smul.addr %s230, 4
      %s232 = scalar_lea.vmem %s4, %s231
      %s233 = smul.u32 %s19, %s20
      %s234 = smul.u32 4, %s233
      %p236 = scmp.eq.s32.totalorder %s19, 0
      %p237 = scmp.eq.s32.totalorder %s20, 0
      %p238 = pnand %p236, %p237
      %p239 = pneg %p238
      // Predicated region
      $region37: #{_lambda_.8} parent=35 // pred_check
        _
      $region38: #{_lambda_.8} parent=35 // pred_check_branch
        %241 = sbr.rel (%p238) target = $region40
      $region39: #{_lambda_.8} parent=35 // pred_region
        %242 = vst [vmem:[#allocation3] sm:$0x1] 0.0
        %243 = vst [vmem:[#allocation4] sm:$0x1] 0.0
      $region40: #{_lambda_.8} parent=35 // pred_fallthru
        _
      // Predicated region
      $region41: #{_lambda_.8} parent=35 // pred_check
        %p244 = pneg %p236
      $region42: #{_lambda_.8} parent=35 // pred_check_branch
        %246 = sbr.rel (%p244) target = $region44
      $region43: #{_lambda_.8} parent=35 // pred_region
        %v247 = vld [vmem:[%s223] sm:$0xff]
        %v248 = vld [vmem:[%s223 + $0x8] sm:$0xff]
        %v249 = vld [vmem:[%s223 + $0x10] sm:$0xff]
        %v250 = vld [vmem:[%s223 + $0x18] sm:$0xff]
        %v251 = vld [vmem:[%s223 + $0x20] sm:$0xff]
        %v252 = vld [vmem:[%s223 + $0x28] sm:$0xff]
        %v253 = vld [vmem:[%s223 + $0x30] sm:$0xff]
        %v254 = vld [vmem:[%s223 + $0x38] sm:$0xff]
        %v255 = vld [vmem:[%s1] sm:$0xf]
        %v256 = vld [vmem:[%s1 + $0x4] sm:$0xf]
        %v257 = vld [vmem:[%s1 + $0x8] sm:$0xf]
        %v258 = vld [vmem:[%s1 + $0xc] sm:$0xf]
        %v259 = vld [vmem:[%s1 + $0x10] sm:$0xf]
        %v260 = vld [vmem:[%s1 + $0x14] sm:$0xf]
        %v261 = vld [vmem:[%s1 + $0x18] sm:$0xf]
        %v262 = vld [vmem:[%s1 + $0x1c] sm:$0xf]
        %v263 = vld [vmem:[%s1 + $0x20] sm:$0xf]
        %v264 = vld [vmem:[%s1 + $0x24] sm:$0xf]
        %v265 = vld [vmem:[%s1 + $0x28] sm:$0xf]
        %v266 = vld [vmem:[%s1 + $0x2c] sm:$0xf]
        %v267 = vld [vmem:[%s1 + $0x30] sm:$0xf]
        %v268 = vld [vmem:[%s1 + $0x34] sm:$0xf]
        %v269 = vld [vmem:[%s1 + $0x38] sm:$0xf]
        %v270 = vld [vmem:[%s1 + $0x3c] sm:$0xf]
        %v271 = vld [vmem:[%s1 + $0x40] sm:$0xf]
        %v272 = vld [vmem:[%s1 + $0x44] sm:$0xf]
        %v273 = vld [vmem:[%s1 + $0x48] sm:$0xf]
        %v274 = vld [vmem:[%s1 + $0x4c] sm:$0xf]
        %v275 = vld [vmem:[%s1 + $0x50] sm:$0xf]
        %v276 = vld [vmem:[%s1 + $0x54] sm:$0xf]
        %v277 = vld [vmem:[%s1 + $0x58] sm:$0xf]
        %v278 = vld [vmem:[%s1 + $0x5c] sm:$0xf]
        %v279 = vld [vmem:[%s1 + $0x60] sm:$0xf]
        %v280 = vld [vmem:[%s1 + $0x64] sm:$0xf]
        %v281 = vld [vmem:[%s1 + $0x68] sm:$0xf]
        %v282 = vld [vmem:[%s1 + $0x6c] sm:$0xf]
        %v283 = vld [vmem:[%s1 + $0x70] sm:$0xf]
        %v284 = vld [vmem:[%s1 + $0x74] sm:$0xf]
        %v285 = vld [vmem:[%s1 + $0x78] sm:$0xf]
        %v286 = vld [vmem:[%s1 + $0x7c] sm:$0xf]
        %v287 = vld [vmem:[%s1 + $0x80] sm:$0xf]
        %v288 = vld [vmem:[%s1 + $0x84] sm:$0xf]
        %v289 = vld [vmem:[%s1 + $0x88] sm:$0xf]
        %v290 = vld [vmem:[%s1 + $0x8c] sm:$0xf]
        %v291 = vld [vmem:[%s1 + $0x90] sm:$0xf]
        %v292 = vld [vmem:[%s1 + $0x94] sm:$0xf]
        %v293 = vld [vmem:[%s1 + $0x98] sm:$0xf]
        %v294 = vld [vmem:[%s1 + $0x9c] sm:$0xf]
        %v295 = vld [vmem:[%s1 + $0xa0] sm:$0xf]
        %v296 = vld [vmem:[%s1 + $0xa4] sm:$0xf]
        %v297 = vld [vmem:[%s1 + $0xa8] sm:$0xf]
        %v298 = vld [vmem:[%s1 + $0xac] sm:$0xf]
        %v299 = vld [vmem:[%s1 + $0xb0] sm:$0xf]
        %v300 = vld [vmem:[%s1 + $0xb4] sm:$0xf]
        %v301 = vld [vmem:[%s1 + $0xb8] sm:$0xf]
        %v302 = vld [vmem:[%s1 + $0xbc] sm:$0xf]
        %v303 = vld [vmem:[%s1 + $0xc0] sm:$0xf]
        %v304 = vld [vmem:[%s1 + $0xc4] sm:$0xf]
        %v305 = vld [vmem:[%s1 + $0xc8] sm:$0xf]
        %v306 = vld [vmem:[%s1 + $0xcc] sm:$0xf]
        %v307 = vld [vmem:[%s1 + $0xd0] sm:$0xf]
        %v308 = vld [vmem:[%s1 + $0xd4] sm:$0xf]
        %v309 = vld [vmem:[%s1 + $0xd8] sm:$0xf]
        %v310 = vld [vmem:[%s1 + $0xdc] sm:$0xf]
        %v311 = vld [vmem:[%s1 + $0xe0] sm:$0xf]
        %v312 = vld [vmem:[%s1 + $0xe4] sm:$0xf]
        %v313 = vld [vmem:[%s1 + $0xe8] sm:$0xf]
        %v314 = vld [vmem:[%s1 + $0xec] sm:$0xf]
        %v315 = vld [vmem:[%s1 + $0xf0] sm:$0xf]
        %v316 = vld [vmem:[%s1 + $0xf4] sm:$0xf]
        %v317 = vld [vmem:[%s1 + $0xf8] sm:$0xf]
        %v318 = vld [vmem:[%s1 + $0xfc] sm:$0xf]
        %v327 = vunpack.c.l.b16 %v247
        %v328 = vunpack.c.h.b16 %v247
        %v329 = vunpack.c.l.b16 %v248
        %v330 = vunpack.c.h.b16 %v248
        %v331 = vunpack.c.l.b16 %v249
        %v332 = vunpack.c.h.b16 %v249
        %v333 = vunpack.c.l.b16 %v250
        %v334 = vunpack.c.h.b16 %v250
        %v335 = vunpack.c.l.b16 %v251
        %v336 = vunpack.c.h.b16 %v251
        %v337 = vunpack.c.l.b16 %v252
        %v338 = vunpack.c.h.b16 %v252
        %v339 = vunpack.c.l.b16 %v253
        %v340 = vunpack.c.h.b16 %v253
        %v341 = vunpack.c.l.b16 %v254
        %v342 = vunpack.c.h.b16 %v254
        %v343 = vpack.c.b16 %v331, %v327
        %v344 = vpack.c.b16 %v332, %v328
        %v345 = vpack.c.b16 %v333, %v329
        %v346 = vpack.c.b16 %v334, %v330
        %v347 = vpack.c.b16 %v339, %v335
        %v348 = vpack.c.b16 %v340, %v336
        %v349 = vpack.c.b16 %v341, %v337
        %v350 = vpack.c.b16 %v342, %v338
        %v423 = vunpack.c.l.b16 %v255
        %v424 = vunpack.c.l.b16 %v256
        %v425 = vunpack.c.l.b16 %v257
        %v426 = vunpack.c.l.b16 %v258
        %v427 = vunpack.c.l.b16 %v259
        %v428 = vunpack.c.l.b16 %v260
        %v429 = vunpack.c.l.b16 %v261
        %v430 = vunpack.c.l.b16 %v262
        %v431 = vunpack.c.l.b16 %v263
        %v432 = vunpack.c.l.b16 %v264
        %v433 = vunpack.c.l.b16 %v265
        %v434 = vunpack.c.l.b16 %v266
        %v435 = vunpack.c.l.b16 %v267
        %v436 = vunpack.c.l.b16 %v268
        %v437 = vunpack.c.l.b16 %v269
        %v438 = vunpack.c.l.b16 %v270
        %v439 = vunpack.c.l.b16 %v271
        %v440 = vunpack.c.l.b16 %v272
        %v441 = vunpack.c.l.b16 %v273
        %v442 = vunpack.c.l.b16 %v274
        %v443 = vunpack.c.l.b16 %v275
        %v444 = vunpack.c.l.b16 %v276
        %v445 = vunpack.c.l.b16 %v277
        %v446 = vunpack.c.l.b16 %v278
        %v447 = vunpack.c.l.b16 %v279
        %v448 = vunpack.c.l.b16 %v280
        %v449 = vunpack.c.l.b16 %v281
        %v450 = vunpack.c.l.b16 %v282
        %v451 = vunpack.c.l.b16 %v283
        %v452 = vunpack.c.l.b16 %v284
        %v453 = vunpack.c.l.b16 %v285
        %v454 = vunpack.c.l.b16 %v286
        %v455 = vunpack.c.l.b16 %v287
        %v456 = vunpack.c.l.b16 %v288
        %v457 = vunpack.c.l.b16 %v289
        %v458 = vunpack.c.l.b16 %v290
        %v459 = vunpack.c.l.b16 %v291
        %v460 = vunpack.c.l.b16 %v292
        %v461 = vunpack.c.l.b16 %v293
        %v462 = vunpack.c.l.b16 %v294
        %v463 = vunpack.c.l.b16 %v295
        %v464 = vunpack.c.l.b16 %v296
        %v465 = vunpack.c.l.b16 %v297
        %v466 = vunpack.c.l.b16 %v298
        %v467 = vunpack.c.l.b16 %v299
        %v468 = vunpack.c.l.b16 %v300
        %v469 = vunpack.c.l.b16 %v301
        %v470 = vunpack.c.l.b16 %v302
        %v471 = vunpack.c.l.b16 %v303
        %v472 = vunpack.c.l.b16 %v304
        %v473 = vunpack.c.l.b16 %v305
        %v474 = vunpack.c.l.b16 %v306
        %v475 = vunpack.c.l.b16 %v307
        %v476 = vunpack.c.l.b16 %v308
        %v477 = vunpack.c.l.b16 %v309
        %v478 = vunpack.c.l.b16 %v310
        %v479 = vunpack.c.l.b16 %v311
        %v480 = vunpack.c.l.b16 %v312
        %v481 = vunpack.c.l.b16 %v313
        %v482 = vunpack.c.l.b16 %v314
        %v483 = vunpack.c.l.b16 %v315
        %v484 = vunpack.c.l.b16 %v316
        %v485 = vunpack.c.l.b16 %v317
        %v486 = vunpack.c.l.b16 %v318
        %v487 = vpack.c.b16 %v424, %v423
        %v488 = vpack.c.b16 %v426, %v425
        %v489 = vpack.c.b16 %v428, %v427
        %v490 = vpack.c.b16 %v430, %v429
        %v491 = vpack.c.b16 %v432, %v431
        %v492 = vpack.c.b16 %v434, %v433
        %v493 = vpack.c.b16 %v436, %v435
        %v494 = vpack.c.b16 %v438, %v437
        %v495 = vpack.c.b16 %v440, %v439
        %v496 = vpack.c.b16 %v442, %v441
        %v497 = vpack.c.b16 %v444, %v443
        %v498 = vpack.c.b16 %v446, %v445
        %v499 = vpack.c.b16 %v448, %v447
        %v500 = vpack.c.b16 %v450, %v449
        %v501 = vpack.c.b16 %v452, %v451
        %v502 = vpack.c.b16 %v454, %v453
        %v503 = vpack.c.b16 %v456, %v455
        %v504 = vpack.c.b16 %v458, %v457
        %v505 = vpack.c.b16 %v460, %v459
        %v506 = vpack.c.b16 %v462, %v461
        %v507 = vpack.c.b16 %v464, %v463
        %v508 = vpack.c.b16 %v466, %v465
        %v509 = vpack.c.b16 %v468, %v467
        %v510 = vpack.c.b16 %v470, %v469
        %v511 = vpack.c.b16 %v472, %v471
        %v512 = vpack.c.b16 %v474, %v473
        %v513 = vpack.c.b16 %v476, %v475
        %v514 = vpack.c.b16 %v478, %v477
        %v515 = vpack.c.b16 %v480, %v479
        %v516 = vpack.c.b16 %v482, %v481
        %v517 = vpack.c.b16 %v484, %v483
        %v518 = vpack.c.b16 %v486, %v485
        %551 = vmatprep.subr.bf16.mxu0 0
        %552 = vmatpush1.bf16.msra.mxu0 %v487
        %553 = vmatprep.subr.bf16.mxu0 0
        %554 = vmatpush1.bf16.msra.mxu0 %v488
        %555 = vmatprep.subr.bf16.mxu0 0
        %556 = vmatpush1.bf16.msra.mxu0 %v489
        %557 = vmatprep.subr.bf16.mxu0 0
        %558 = vmatpush1.bf16.msra.mxu0 %v490
        %559 = vmatprep.subr.bf16.mxu0 0
        %560 = vmatpush1.bf16.msra.mxu0 %v491
        %561 = vmatprep.subr.bf16.mxu0 0
        %562 = vmatpush1.bf16.msra.mxu0 %v492
        %563 = vmatprep.subr.bf16.mxu0 0
        %564 = vmatpush1.bf16.msra.mxu0 %v493
        %565 = vmatprep.subr.bf16.mxu0 0
        %566 = vmatpush1.bf16.msra.mxu0 %v494
        %567 = vmatprep.subr.bf16.mxu0 0
        %568 = vmatpush1.bf16.msra.mxu0 %v495
        %569 = vmatprep.subr.bf16.mxu0 0
        %570 = vmatpush1.bf16.msra.mxu0 %v496
        %571 = vmatprep.subr.bf16.mxu0 0
        %572 = vmatpush1.bf16.msra.mxu0 %v497
        %573 = vmatprep.subr.bf16.mxu0 0
        %574 = vmatpush1.bf16.msra.mxu0 %v498
        %575 = vmatprep.subr.bf16.mxu0 0
        %576 = vmatpush1.bf16.msra.mxu0 %v499
        %577 = vmatprep.subr.bf16.mxu0 0
        %578 = vmatpush1.bf16.msra.mxu0 %v500
        %579 = vmatprep.subr.bf16.mxu0 0
        %580 = vmatpush1.bf16.msra.mxu0 %v501
        %581 = vmatprep.subr.bf16.mxu0 0
        %582 = vmatpush1.bf16.msra.mxu0 %v502
        %583 = vmatprep.mubr.bf16.mxu0 %v344
        %584 = vmatmul.mubr.bf16.gmra.mrb[0].mxu0 %v343
        %v585 = vpop.f32.mrb[0].mxu0
        %v586 = vadd.f32 0.0, %v585
        %v587 = vpop.f32.mrb[0].mxu0
        %v588 = vpop.f32.mrb[0].mxu0
        %v589 = vadd.f32 0.0, %v588
        %v590 = vpop.f32.mrb[0].mxu0
        %591 = vmatprep.mubr.bf16.mxu0 %v348
        %592 = vmatmul.mubr.bf16.gmra.mrb[0].mxu0 %v347
        %v593 = vpop.f32.mrb[0].mxu0
        %v594 = vadd.f32 0.0, %v593
        %v595 = vpop.f32.mrb[0].mxu0
        %v596 = vpop.f32.mrb[0].mxu0
        %v597 = vadd.f32 0.0, %v596
        %v598 = vpop.f32.mrb[0].mxu0
        %599 = vdwg.mxu0
        %600 = vmatprep.subr.bf16.mxu0 0
        %601 = vmatpush1.bf16.msra.mxu0 %v503
        %602 = vmatprep.subr.bf16.mxu0 0
        %603 = vmatpush1.bf16.msra.mxu0 %v504
        %604 = vmatprep.subr.bf16.mxu0 0
        %605 = vmatpush1.bf16.msra.mxu0 %v505
        %606 = vmatprep.subr.bf16.mxu0 0
        %607 = vmatpush1.bf16.msra.mxu0 %v506
        %608 = vmatprep.subr.bf16.mxu0 0
        %609 = vmatpush1.bf16.msra.mxu0 %v507
        %610 = vmatprep.subr.bf16.mxu0 0
        %611 = vmatpush1.bf16.msra.mxu0 %v508
        %612 = vmatprep.subr.bf16.mxu0 0
        %613 = vmatpush1.bf16.msra.mxu0 %v509
        %614 = vmatprep.subr.bf16.mxu0 0
        %615 = vmatpush1.bf16.msra.mxu0 %v510
        %616 = vmatprep.subr.bf16.mxu0 0
        %617 = vmatpush1.bf16.msra.mxu0 %v511
        %618 = vmatprep.subr.bf16.mxu0 0
        %619 = vmatpush1.bf16.msra.mxu0 %v512
        %620 = vmatprep.subr.bf16.mxu0 0
        %621 = vmatpush1.bf16.msra.mxu0 %v513
        %622 = vmatprep.subr.bf16.mxu0 0
        %623 = vmatpush1.bf16.msra.mxu0 %v514
        %624 = vmatprep.subr.bf16.mxu0 0
        %625 = vmatpush1.bf16.msra.mxu0 %v515
        %626 = vmatprep.subr.bf16.mxu0 0
        %627 = vmatpush1.bf16.msra.mxu0 %v516
        %628 = vmatprep.subr.bf16.mxu0 0
        %629 = vmatpush1.bf16.msra.mxu0 %v517
        %630 = vmatprep.subr.bf16.mxu0 0
        %631 = vmatpush1.bf16.msra.mxu0 %v518
        %632 = vmatprep.mubr.bf16.mxu0 %v346
        %633 = vmatmul.mubr.bf16.gmra.mrb[0].mxu0 %v345
        %v634 = vpop.f32.mrb[0].mxu0
        %v635 = vadd.f32 %v586, %v634
        %v636 = vpop.f32.mrb[0].mxu0
        %v637 = vpop.f32.mrb[0].mxu0
        %v638 = vadd.f32 %v589, %v637
        %v639 = vpop.f32.mrb[0].mxu0
        %640 = vmatprep.mubr.bf16.mxu0 %v350
        %641 = vmatmul.mubr.bf16.gmra.mrb[0].mxu0 %v349
        %v642 = vpop.f32.mrb[0].mxu0
        %v643 = vadd.f32 %v594, %v642
        %v644 = vpop.f32.mrb[0].mxu0
        %v645 = vpop.f32.mrb[0].mxu0
        %v646 = vadd.f32 %v597, %v645
        %v647 = vpop.f32.mrb[0].mxu0
        %648 = vdwg.mxu0
        %s649 = smul.u32 %s20, 32
        %s650 = scalar_lea.vmem [#allocation2], %s649
        %651 = vst [vmem:[%s650] sm:$0xff] %v635
        %652 = vst [vmem:[%s650 + $0x8] sm:$0xff] %v638
        %653 = vst [vmem:[%s650 + $0x10] sm:$0xff] %v643
        %654 = vst [vmem:[%s650 + $0x18] sm:$0xff] %v646
        %v655 = vld [vmem:[#allocation3] sm:$0x1]
        %v656 = vadd.f32 %v635, %v638
        %v657 = vadd.f32 %v656, %v643
        %v658 = vadd.f32 %v657, %v646
        %v659 = vrot.slane %v658, 4
        %v660 = vadd.f32 %v658, %v659
        %v661 = vrot.slane %v660, 2
        %v662 = vadd.f32 %v660, %v661
        %v663 = vrot.slane %v662, 1
        %v664 = vadd.f32 %v662, %v663
        %v665 = vadd.f32 %v655, %v664
        %666 = vst [vmem:[#allocation3] sm:$0x1] %v665
        %v667 = vld [vmem:[#allocation4] sm:$0x1]
        %v668 = vmul.f32 %v635, %v635
        %v669 = vmul.f32 %v638, %v638
        %v670 = vmul.f32 %v643, %v643
        %v671 = vmul.f32 %v646, %v646
        %v672 = vadd.f32 %v668, %v669
        %v673 = vadd.f32 %v672, %v670
        %v674 = vadd.f32 %v673, %v671
        %v675 = vrot.slane %v674, 4
        %v676 = vadd.f32 %v674, %v675
        %v677 = vrot.slane %v676, 2
        %v678 = vadd.f32 %v676, %v677
        %v679 = vrot.slane %v678, 1
        %v680 = vadd.f32 %v678, %v679
        %v681 = vadd.f32 %v667, %v680
        %682 = vst [vmem:[#allocation4] sm:$0x1] %v681
      $region44: #{_lambda_.8} parent=35 // pred_fallthru
        _
      %p683 = scmp.eq.s32.totalorder %s19, 1
      %p684 = pnand %p683, %p237
      %p685 = pneg %p684
      // Predicated region
      $region45: #{_lambda_.8} parent=35 // pred_check
        _
      $region46: #{_lambda_.8} parent=35 // pred_check_branch
        %687 = sbr.rel (%p684) target = $region48
      $region47: #{_lambda_.8} parent=35 // pred_region
        %v688 = vld [vmem:[#allocation3] sm:$0x1]
        %v689 = vmul.f32 %v688, 0.03125
        %v690 = vld [vmem:[#allocation4] sm:$0x1]
        %v691 = vmul.f32 %v690, 0.03125
        %v692 = vmul.f32 %v689, %v689
        %v693 = vsub.f32 %v691, %v692
        %v694 = vmax.f32 %v693, 0.0
        %v695 = vld [vmem:[%s2] sm:$0x1]
        %v696 = vadd.f32 %v694, 1e-05
        %v697 = vrsqrt.pop %v696
        %v698 = vmul.f32 %v695, %v697
        %699 = vst [vmem:[#allocation5] sm:$0x1] %v698
        %v700 = vld [vmem:[%s3] sm:$0x1]
        %v701 = vmul.f32 %v689, %v698
        %v702 = vsub.f32 %v700, %v701
        %s703 = scalar_lea.vmem [#allocation5], 1
        %704 = vst [vmem:[%s703] sm:$0x1] %v702
      $region48: #{_lambda_.8} parent=35 // pred_fallthru
        _
      // Predicated region
      $region49: #{_lambda_.8} parent=35 // pred_check
        %p705 = pneg %p683
      $region50: #{_lambda_.8} parent=35 // pred_check_branch
        %707 = sbr.rel (%p705) target = $region52
      $region51: #{_lambda_.8} parent=35 // pred_region
        %s708 = smul.u32 %s20, 32
        %s709 = scalar_lea.vmem [#allocation2], %s708
        %v710 = vld [vmem:[%s709] sm:$0xff]
        %v711 = vld [vmem:[%s709 + $0x8] sm:$0xff]
        %v712 = vld [vmem:[%s709 + $0x10] sm:$0xff]
        %v713 = vld [vmem:[%s709 + $0x18] sm:$0xff]
        %v714 = vld [vmem:[#allocation5] sm:$0x1]
        %v716 = vlaneseq
        %v717 = vshrl.u32 %v716, 7
        %v718 = vsub.s32 0, %v717
        %v719 = vrot.slane %v714, %v718
        %v721 = vmul.f32 %v710, %v719
        %v722 = vmul.f32 %v711, %v719
        %v723 = vmul.f32 %v712, %v719
        %v724 = vmul.f32 %v713, %v719
        %s725 = scalar_lea.vmem [#allocation5], 1
        %v726 = vld [vmem:[%s725] sm:$0x1]
        %v728 = vlaneseq
        %v729 = vshrl.u32 %v728, 7
        %v730 = vsub.s32 0, %v729
        %v731 = vrot.slane %v726, %v730
        %v733 = vadd.f32 %v721, %v731
        %v734 = vadd.f32 %v722, %v731
        %v735 = vadd.f32 %v723, %v731
        %v736 = vadd.f32 %v724, %v731
        %vm737 = vcmp.ge.f32.partialorder %v733, 0.0
        %vm738 = vcmp.ge.f32.partialorder %v734, 0.0
        %vm739 = vcmp.ge.f32.partialorder %v735, 0.0
        %vm740 = vcmp.ge.f32.partialorder %v736, 0.0
        %v741 = vmul.f32 %v733, 0.2
        %v742 = vmul.f32 %v734, 0.2
        %v743 = vmul.f32 %v735, 0.2
        %v744 = vmul.f32 %v736, 0.2
        %v745 = vsel %vm737, %v733, %v741
        %v746 = vsel %vm738, %v734, %v742
        %v747 = vsel %vm739, %v735, %v743
        %v748 = vsel %vm740, %v736, %v744
        %v749 = vpack.c.bf16 %v746, %v745
        %v750 = vpack.c.bf16 %v748, %v747
        %v753 = vunpack.c.l.b16 %v749
        %v754 = vunpack.c.h.b16 %v749
        %v755 = vunpack.c.l.b16 %v750
        %v756 = vunpack.c.h.b16 %v750
        %v757 = vpack.c.b16 %v753, %v753
        %v758 = vpack.c.b16 %v754, %v754
        %v759 = vpack.c.b16 %v755, %v755
        %v760 = vpack.c.b16 %v756, %v756
        %765 = vst [vmem:[%s232] sm:$0xf] %v757
        %766 = vst [vmem:[%s232 + $0x4] sm:$0xf] %v758
        %767 = vst [vmem:[%s232 + $0x8] sm:$0xf] %v759
        %768 = vst [vmem:[%s232 + $0xc] sm:$0xf] %v760
      $region52: #{_lambda_.8} parent=35 // pred_fallthru
        _
      %s769 = smul.u32 %s19, %s20
      %s770 = smul.u32 4, %s769
      %p771 = scmp.lt.s32.totalorder %s770, 3
      %s772 = scalar_select %p771, %s770, 3
      %s773 = smul.addr %s772, 4
      %s774 = scalar_lea.vmem %s4, %s773
      // Predicated region
      $region53: #{_lambda_.8} parent=35 // pred_check
        %p775 = pneg %p140
      $region54: #{_lambda_.8} parent=35 // pred_check_branch
        %777 = sbr.rel (%p775) target = $region56
      $region55: #{_lambda_.8} parent=35 // pred_region
        %s778 = smul.u32 %s19, %s20
        %s779 = smul.u32 4, %s778
      $region56: #{_lambda_.8} parent=35 // pred_fallthru
        _
    $region36: #{_lambda_.8} parent=5 // pred_fallthru
      _
    %p780 = scmp.le.s32.totalorder 2, %s10
    // Predicated region
    $region57: #{_lambda_.8} parent=5 // pred_check
      %p781 = pneg %p780
    $region58: #{_lambda_.8} parent=5 // pred_check_branch
      %783 = sbr.rel (%p781) target = $region60
    $region59: #{_lambda_.8} parent=5 // pred_region
      %s784 = ssub.s32 %s10, 2
      // Predicated region
      $region61: #{_lambda_.8} parent=59 // pred_check
        %p785 = pneg %p146
      $region62: #{_lambda_.8} parent=59 // pred_check_branch
        %787 = sbr.rel (%p785) target = $region64
      $region63: #{_lambda_.8} parent=59 // pred_region
        %s788 = smul.u32 %s21, %s22
        %s789 = smul.u32 4, %s788
        %p790 = scmp.lt.s32.totalorder %s789, 3
        %s791 = scalar_select %p790, %s789, 3
        %s792 = smul.addr %s791, 4
        %s793 = scalar_lea.vmem %s4, %s792
      $region64: #{_lambda_.8} parent=59 // pred_fallthru
        _
    $region60: #{_lambda_.8} parent=5 // pred_fallthru
      _
  $region6: #{_lambda_.8} parent=0 // loop_footer
    %s14 = sadd.s32 1, %s10
  $region7: #{_lambda_.8} parent=0 // loop_footer_branch
    %9 = sbr.rel target = $region3
  $region8: #{_lambda_.8} parent=0 // loop_exit
    _

// kernel: _lambda_.9
$region0: #{_lambda_.9}
  #allocation0 [shape = 'u32[]', space=smem, size = 0x4, offset = 0x4, fixed_abs, tag = 'smem constant byte address 0x4 - core index']
  #allocation1 [shape = 'u32[144,128]{1,0:T(1,128)}', space=vmem, size = 0x12000, scoped, tag = 'internal scratch']
  #allocation2 [shape = 'f32[1,16,128]{2,1,0:T(8,128)}', space=vmem, size = 0x2000, scoped, tag = 'scratch operand']
  #allocation3 [shape = 'f32[1,128]{1,0:T(1,128)}', space=vmem, size = 0x200, scoped, tag = 'scratch operand']
  #allocation4 [shape = 'f32[1,128]{1,0:T(1,128)}', space=vmem, size = 0x200, scoped, tag = 'scratch operand']
  #allocation5 [shape = 'f32[2,1,128]{2,1,0:T(1,128)}', space=vmem, size = 0x400, scoped, tag = 'scratch operand']
  %s0 = inlined_call_operand.vmem [shape: bf16[16,1024], index: 0, kind: input, shape index: {}]
  %s1 = inlined_call_operand.vmem [shape: bf16[1024,128], index: 1, kind: input, shape index: {}]
  %s2 = inlined_call_operand.vmem [shape: f32[1,128], index: 2, kind: input, shape index: {}]
  %s3 = inlined_call_operand.vmem [shape: f32[1,128], index: 3, kind: input, shape index: {}]
  %s4 = inlined_call_operand.vmem [shape: f32[16,128], index: 4, kind: output, shape index: {}]
  %s5 = sld [smem:[#allocation0]]
  $region57: #{_lambda_.9} parent=0
    _
  %s7 = ssub.s32 1, %s5
  %s8 = scalar_select 0, %s7, %s5
  loop: start=0, step=1, limit=4
  $region2: #{_lambda_.9} parent=0 // loop_pre_header
    _
  $region3: #{_lambda_.9} parent=0 // loop_header
    %s10 = sphi 0, %s14
    %p11 = scmp.ge.s32.totalorder %s10, 4
    %s17 = sphi 0, %s29
    %s18 = sphi 0, %s25
    %s19 = sphi 0, %s17
    %s20 = sphi 0, %s18
    %s21 = sphi 0, %s19
    %s22 = sphi 0, %s20
    %s36 = sphi 0, %s38
    %s39 = sphi 0, %s36
    %s40 = sphi 0, %s39
    %s56 = sphi 0, %s40
    %s60 = sphi 0, %s60
    %s62 = sphi 0, %s60
    %s63 = sphi 0, %s62
    %s77 = sphi 0, %s63
    %s81 = sphi 0, %s81
    %s83 = sphi 0, %s81
    %s84 = sphi 0, %s83
    %s98 = sphi 0, %s84
    %s102 = sphi 0, %s102
    %s104 = sphi 0, %s102
    %s105 = sphi 0, %s104
    %s119 = sphi 0, %s105
    %s127 = sphi 0, %s129
    %s130 = sphi 0, %s127
    %s131 = sphi 0, %s130
    %s147 = sphi 0, %s131
  $region4: #{_lambda_.9} parent=0 // loop_header_branch
    %13 = sbr.rel (%p11) target = $region8
  $region5: #{_lambda_.9} parent=0 // loop_body
    %s15 = ssub.s32 %s10, 1
    %s16 = ssub.s32 %s10, 2
    %s23 = sadd.s32 1, %s18
    %p24 = scmp.ge.s32.totalorder %s23, 1
    %s25 = scalar_select %p24, 0, %s23
    %s26 = sadd.s32 1, %s17
    %s27 = scalar_select %p24, %s26, %s17
    %p28 = scmp.ge.s32.totalorder %s27, 2
    %s29 = scalar_select %p28, 0, %s27
    %s30 = ssub.s32 1, %s17
    %s31 = smul.u32 %s30, %s18
    %s32 = ssub.s32 1, %s29
    %s33 = smul.u32 %s32, %s25
    %s34 = ssub.s32 %s31, %s33
    %p35 = scmp.eq.s32.totalorder %s34, 0
    %s37 = sadd.s32 %s36, 1
    %s38 = scalar_select %p35, %s36, %s37
    %p41 = pneg %p35
    %p42 = scmp.eq.s32.totalorder %s10, 1
    %p43 = por %p41, %p42
    %p44 = scmp.ne.s32.totalorder %s36, %s39
    %p45 = scmp.eq.s32.totalorder %s10, 0
    %p46 = por %p44, %p45
    %p47 = scmp.ne.s32.totalorder %s36, %s39
    %p48 = scmp.eq.s32.totalorder %s15, 1
    %p49 = por %p47, %p48
    %p50 = scmp.ne.s32.totalorder %s39, %s40
    %p51 = scmp.eq.s32.totalorder %s15, 0
    %p52 = por %p50, %p51
    %p53 = scmp.ne.s32.totalorder %s39, %s40
    %p54 = scmp.eq.s32.totalorder %s16, 1
    %p55 = por %p53, %p54
    %p57 = scmp.ne.s32.totalorder %s40, %s56
    %p58 = scmp.eq.s32.totalorder %s16, 0
    %p59 = por %p57, %p58
    %s61 = sadd.s32 %s60, 1
    %p64 = scmp.eq.s32.totalorder %s10, 1
    %p65 = scmp.ne.s32.totalorder %s60, %s62
    %p66 = scmp.eq.s32.totalorder %s10, 0
    %p67 = por %p65, %p66
    %p68 = scmp.ne.s32.totalorder %s60, %s62
    %p69 = scmp.eq.s32.totalorder %s15, 1
    %p70 = por %p68, %p69
    %p71 = scmp.ne.s32.totalorder %s62, %s63
    %p72 = scmp.eq.s32.totalorder %s15, 0
    %p73 = por %p71, %p72
    %p74 = scmp.ne.s32.totalorder %s62, %s63
    %p75 = scmp.eq.s32.totalorder %s16, 1
    %p76 = por %p74, %p75
    %p78 = scmp.ne.s32.totalorder %s63, %s77
    %p79 = scmp.eq.s32.totalorder %s16, 0
    %p80 = por %p78, %p79
    %s82 = sadd.s32 %s81, 1
    %p85 = scmp.eq.s32.totalorder %s10, 1
    %p86 = scmp.ne.s32.totalorder %s81, %s83
    %p87 = scmp.eq.s32.totalorder %s10, 0
    %p88 = por %p86, %p87
    %p89 = scmp.ne.s32.totalorder %s81, %s83
    %p90 = scmp.eq.s32.totalorder %s15, 1
    %p91 = por %p89, %p90
    %p92 = scmp.ne.s32.totalorder %s83, %s84
    %p93 = scmp.eq.s32.totalorder %s15, 0
    %p94 = por %p92, %p93
    %p95 = scmp.ne.s32.totalorder %s83, %s84
    %p96 = scmp.eq.s32.totalorder %s16, 1
    %p97 = por %p95, %p96
    %p99 = scmp.ne.s32.totalorder %s84, %s98
    %p100 = scmp.eq.s32.totalorder %s16, 0
    %p101 = por %p99, %p100
    %s103 = sadd.s32 %s102, 1
    %p106 = scmp.eq.s32.totalorder %s10, 1
    %p107 = scmp.ne.s32.totalorder %s102, %s104
    %p108 = scmp.eq.s32.totalorder %s10, 0
    %p109 = por %p107, %p108
    %p110 = scmp.ne.s32.totalorder %s102, %s104
    %p111 = scmp.eq.s32.totalorder %s15, 1
    %p112 = por %p110, %p111
    %p113 = scmp.ne.s32.totalorder %s104, %s105
    %p114 = scmp.eq.s32.totalorder %s15, 0
    %p115 = por %p113, %p114
    %p116 = scmp.ne.s32.totalorder %s104, %s105
    %p117 = scmp.eq.s32.totalorder %s16, 1
    %p118 = por %p116, %p117
    %p120 = scmp.ne.s32.totalorder %s105, %s119
    %p121 = scmp.eq.s32.totalorder %s16, 0
    %p122 = por %p120, %p121
    %s123 = smul.u32 %s17, %s18
    %s124 = smul.u32 %s29, %s25
    %s125 = ssub.s32 %s123, %s124
    %p126 = scmp.eq.s32.totalorder %s125, 0
    %s128 = sadd.s32 %s127, 1
    %s129 = scalar_select %p126, %s127, %s128
    %p132 = pneg %p126
    %p133 = scmp.eq.s32.totalorder %s10, 1
    %p134 = por %p132, %p133
    %p135 = scmp.ne.s32.totalorder %s127, %s130
    %p136 = scmp.eq.s32.totalorder %s10, 0
    %p137 = por %p135, %p136
    %p138 = scmp.ne.s32.totalorder %s127, %s130
    %p139 = scmp.eq.s32.totalorder %s15, 1
    %p140 = por %p138, %p139
    %p141 = scmp.ne.s32.totalorder %s130, %s131
    %p142 = scmp.eq.s32.totalorder %s15, 0
    %p143 = por %p141, %p142
    %p144 = scmp.ne.s32.totalorder %s130, %s131
    %p145 = scmp.eq.s32.totalorder %s16, 1
    %p146 = por %p144, %p145
    %p148 = scmp.ne.s32.totalorder %s131, %s147
    %p149 = scmp.eq.s32.totalorder %s16, 0
    %p150 = por %p148, %p149
    %p151 = scmp.le.s32.totalorder 1, %s10
    %p152 = scmp.lt.s32.totalorder %s10, 3
    %p153 = pnand %p151, %p152
    %p154 = pneg %p153
    // Predicated region
    $region9: #{_lambda_.9} parent=5 // pred_check
      _
    $region10: #{_lambda_.9} parent=5 // pred_check_branch
      %156 = sbr.rel (%p153) target = $region12
    $region11: #{_lambda_.9} parent=5 // pred_region
      %s157 = ssub.s32 %s10, 1
      // Predicated region
      $region13: #{_lambda_.9} parent=11 // pred_check
        %p158 = pneg %p73
      $region14: #{_lambda_.9} parent=11 // pred_check_branch
        %160 = sbr.rel (%p158) target = $region16
      $region15: #{_lambda_.9} parent=11 // pred_region
        _
      $region16: #{_lambda_.9} parent=11 // pred_fallthru
        _
      // Predicated region
      $region17: #{_lambda_.9} parent=11 // pred_check
        %p161 = pneg %p94
      $region18: #{_lambda_.9} parent=11 // pred_check_branch
        %163 = sbr.rel (%p161) target = $region20
      $region19: #{_lambda_.9} parent=11 // pred_region
        _
      $region20: #{_lambda_.9} parent=11 // pred_fallthru
        _
      // Predicated region
      $region21: #{_lambda_.9} parent=11 // pred_check
        %p164 = pneg %p115
      $region22: #{_lambda_.9} parent=11 // pred_check_branch
        %166 = sbr.rel (%p164) target = $region24
      $region23: #{_lambda_.9} parent=11 // pred_region
        _
      $region24: #{_lambda_.9} parent=11 // pred_fallthru
        _
    $region12: #{_lambda_.9} parent=5 // pred_fallthru
      _
    %p167 = scmp.lt.s32.totalorder %s10, 2
    // Predicated region
    $region25: #{_lambda_.9} parent=5 // pred_check
      %p168 = pneg %p167
    $region26: #{_lambda_.9} parent=5 // pred_check_branch
      %170 = sbr.rel (%p168) target = $region28
    $region27: #{_lambda_.9} parent=5 // pred_region
      // Predicated region
      $region29: #{_lambda_.9} parent=27 // pred_check
        %p171 = pneg %p46
      $region30: #{_lambda_.9} parent=27 // pred_check_branch
        %173 = sbr.rel (%p171) target = $region32
      $region31: #{_lambda_.9} parent=27 // pred_region
        %s174 = ssub.s32 1, %s17
        %s175 = smul.u32 %s174, %s18
        %s176 = smul.u32 2, %s175
        %p177 = scmp.lt.s32.totalorder %s176, 1
        %s178 = scalar_select %p177, %s176, 1
        %s179 = smul.addr %s178, 8
        %s180 = smul.addr %s179, 4
        %s181 = scalar_lea.vmem %s0, %s180
        %s182 = ssub.s32 1, %s17
        %s183 = smul.u32 %s182, %s18
        %s184 = smul.u32 2, %s183
      $region32: #{_lambda_.9} parent=27 // pred_fallthru
        _
    $region28: #{_lambda_.9} parent=5 // pred_fallthru
      _
    %p185 = scmp.le.s32.totalorder 1, %s10
    %p186 = scmp.lt.s32.totalorder %s10, 3
    %p187 = pnand %p185, %p186
    %p188 = pneg %p187
    // Predicated region
    $region33: #{_lambda_.9} parent=5 // pred_check
      _
    $region34: #{_lambda_.9} parent=5 // pred_check_branch
      %190 = sbr.rel (%p187) target = $region36
    $region35: #{_lambda_.9} parent=5 // pred_region
      %s191 = ssub.s32 %s10, 1
      %s192 = ssub.s32 1, %s19
      %s193 = smul.u32 %s192, %s20
      %s194 = smul.u32 2, %s193
      %p195 = scmp.lt.s32.totalorder %s194, 1
      %s196 = scalar_select %p195, %s194, 1
      %s197 = smul.addr %s196, 8
      %s198 = smul.addr %s197, 4
      %s199 = scalar_lea.vmem %s0, %s198
      %p200 = pneg %p52
      %p201 = pneg %p49
      %p202 = pneg %p73
      %p203 = pneg %p70
      %p204 = pneg %p94
      %p205 = pneg %p91
      %p206 = pneg %p115
      %p207 = pneg %p112
      %p208 = pneg %p143
      %p209 = pneg %p140
      %s210 = smul.u32 %s19, %s20
      %s211 = smul.u32 2, %s210
      %p212 = scmp.lt.s32.totalorder %s211, 1
      %s213 = scalar_select %p212, %s211, 1
      %s214 = smul.addr %s213, 8
      %s215 = scalar_lea.vmem %s4, %s214
      %s216 = ssub.s32 1, %s19
      %s217 = smul.u32 %s216, %s20
      %s218 = smul.u32 2, %s217
      %p219 = scmp.lt.s32.totalorder %s218, 1
      %s220 = scalar_select %p219, %s218, 1
      %s221 = smul.addr %s220, 8
      %s222 = smul.addr %s221, 4
      %s223 = scalar_lea.vmem %s0, %s222
      %s224 = ssub.s32 1, %s19
      %s225 = smul.u32 %s224, %s20
      %s226 = smul.u32 2, %s225
      %s227 = smul.u32 %s19, %s20
      %s228 = smul.u32 2, %s227
      %p229 = scmp.lt.s32.totalorder %s228, 1
      %s230 = scalar_select %p229, %s228, 1
      %s231 = smul.addr %s230, 8
      %s232 = scalar_lea.vmem %s4, %s231
      %s233 = smul.u32 %s19, %s20
      %s234 = smul.u32 2, %s233
      %p236 = scmp.eq.s32.totalorder %s19, 0
      // Predicated region
      $region37: #{_lambda_.9} parent=35 // pred_check
        %p237 = pneg %p236
      $region38: #{_lambda_.9} parent=35 // pred_check_branch
        %239 = sbr.rel (%p237) target = $region40
      $region39: #{_lambda_.9} parent=35 // pred_region
        %v240 = vld [vmem:[%s223] sm:$0xff]
        %v241 = vld [vmem:[%s223 + $0x8] sm:$0xff]
        %v242 = vld [vmem:[%s223 + $0x10] sm:$0xff]
        %v243 = vld [vmem:[%s223 + $0x18] sm:$0xff]
        %v244 = vld [vmem:[%s223 + $0x20] sm:$0xff]
        %v245 = vld [vmem:[%s223 + $0x28] sm:$0xff]
        %v246 = vld [vmem:[%s223 + $0x30] sm:$0xff]
        %v247 = vld [vmem:[%s223 + $0x38] sm:$0xff]
        %v248 = vld [vmem:[%s1] sm:$0xf]
        %v249 = vld [vmem:[%s1 + $0x4] sm:$0xf]
        %v250 = vld [vmem:[%s1 + $0x8] sm:$0xf]
        %v251 = vld [vmem:[%s1 + $0xc] sm:$0xf]
        %v252 = vld [vmem:[%s1 + $0x10] sm:$0xf]
        %v253 = vld [vmem:[%s1 + $0x14] sm:$0xf]
        %v254 = vld [vmem:[%s1 + $0x18] sm:$0xf]
        %v255 = vld [vmem:[%s1 + $0x1c] sm:$0xf]
        %v256 = vld [vmem:[%s1 + $0x20] sm:$0xf]
        %v257 = vld [vmem:[%s1 + $0x24] sm:$0xf]
        %v258 = vld [vmem:[%s1 + $0x28] sm:$0xf]
        %v259 = vld [vmem:[%s1 + $0x2c] sm:$0xf]
        %v260 = vld [vmem:[%s1 + $0x30] sm:$0xf]
        %v261 = vld [vmem:[%s1 + $0x34] sm:$0xf]
        %v262 = vld [vmem:[%s1 + $0x38] sm:$0xf]
        %v263 = vld [vmem:[%s1 + $0x3c] sm:$0xf]
        %v264 = vld [vmem:[%s1 + $0x40] sm:$0xf]
        %v265 = vld [vmem:[%s1 + $0x44] sm:$0xf]
        %v266 = vld [vmem:[%s1 + $0x48] sm:$0xf]
        %v267 = vld [vmem:[%s1 + $0x4c] sm:$0xf]
        %v268 = vld [vmem:[%s1 + $0x50] sm:$0xf]
        %v269 = vld [vmem:[%s1 + $0x54] sm:$0xf]
        %v270 = vld [vmem:[%s1 + $0x58] sm:$0xf]
        %v271 = vld [vmem:[%s1 + $0x5c] sm:$0xf]
        %v272 = vld [vmem:[%s1 + $0x60] sm:$0xf]
        %v273 = vld [vmem:[%s1 + $0x64] sm:$0xf]
        %v274 = vld [vmem:[%s1 + $0x68] sm:$0xf]
        %v275 = vld [vmem:[%s1 + $0x6c] sm:$0xf]
        %v276 = vld [vmem:[%s1 + $0x70] sm:$0xf]
        %v277 = vld [vmem:[%s1 + $0x74] sm:$0xf]
        %v278 = vld [vmem:[%s1 + $0x78] sm:$0xf]
        %v279 = vld [vmem:[%s1 + $0x7c] sm:$0xf]
        %v280 = vld [vmem:[%s1 + $0x80] sm:$0xf]
        %v281 = vld [vmem:[%s1 + $0x84] sm:$0xf]
        %v282 = vld [vmem:[%s1 + $0x88] sm:$0xf]
        %v283 = vld [vmem:[%s1 + $0x8c] sm:$0xf]
        %v284 = vld [vmem:[%s1 + $0x90] sm:$0xf]
        %v285 = vld [vmem:[%s1 + $0x94] sm:$0xf]
        %v286 = vld [vmem:[%s1 + $0x98] sm:$0xf]
        %v287 = vld [vmem:[%s1 + $0x9c] sm:$0xf]
        %v288 = vld [vmem:[%s1 + $0xa0] sm:$0xf]
        %v289 = vld [vmem:[%s1 + $0xa4] sm:$0xf]
        %v290 = vld [vmem:[%s1 + $0xa8] sm:$0xf]
        %v291 = vld [vmem:[%s1 + $0xac] sm:$0xf]
        %v292 = vld [vmem:[%s1 + $0xb0] sm:$0xf]
        %v293 = vld [vmem:[%s1 + $0xb4] sm:$0xf]
        %v294 = vld [vmem:[%s1 + $0xb8] sm:$0xf]
        %v295 = vld [vmem:[%s1 + $0xbc] sm:$0xf]
        %v296 = vld [vmem:[%s1 + $0xc0] sm:$0xf]
        %v297 = vld [vmem:[%s1 + $0xc4] sm:$0xf]
        %v298 = vld [vmem:[%s1 + $0xc8] sm:$0xf]
        %v299 = vld [vmem:[%s1 + $0xcc] sm:$0xf]
        %v300 = vld [vmem:[%s1 + $0xd0] sm:$0xf]
        %v301 = vld [vmem:[%s1 + $0xd4] sm:$0xf]
        %v302 = vld [vmem:[%s1 + $0xd8] sm:$0xf]
        %v303 = vld [vmem:[%s1 + $0xdc] sm:$0xf]
        %v304 = vld [vmem:[%s1 + $0xe0] sm:$0xf]
        %v305 = vld [vmem:[%s1 + $0xe4] sm:$0xf]
        %v306 = vld [vmem:[%s1 + $0xe8] sm:$0xf]
        %v307 = vld [vmem:[%s1 + $0xec] sm:$0xf]
        %v308 = vld [vmem:[%s1 + $0xf0] sm:$0xf]
        %v309 = vld [vmem:[%s1 + $0xf4] sm:$0xf]
        %v310 = vld [vmem:[%s1 + $0xf8] sm:$0xf]
        %v311 = vld [vmem:[%s1 + $0xfc] sm:$0xf]
        %v312 = vld [vmem:[%s1 + $0x100] sm:$0xf]
        %v313 = vld [vmem:[%s1 + $0x104] sm:$0xf]
        %v314 = vld [vmem:[%s1 + $0x108] sm:$0xf]
        %v315 = vld [vmem:[%s1 + $0x10c] sm:$0xf]
        %v316 = vld [vmem:[%s1 + $0x110] sm:$0xf]
        %v317 = vld [vmem:[%s1 + $0x114] sm:$0xf]
        %v318 = vld [vmem:[%s1 + $0x118] sm:$0xf]
        %v319 = vld [vmem:[%s1 + $0x11c] sm:$0xf]
        %v320 = vld [vmem:[%s1 + $0x120] sm:$0xf]
        %v321 = vld [vmem:[%s1 + $0x124] sm:$0xf]
        %v322 = vld [vmem:[%s1 + $0x128] sm:$0xf]
        %v323 = vld [vmem:[%s1 + $0x12c] sm:$0xf]
        %v324 = vld [vmem:[%s1 + $0x130] sm:$0xf]
        %v325 = vld [vmem:[%s1 + $0x134] sm:$0xf]
        %v326 = vld [vmem:[%s1 + $0x138] sm:$0xf]
        %v327 = vld [vmem:[%s1 + $0x13c] sm:$0xf]
        %v328 = vld [vmem:[%s1 + $0x140] sm:$0xf]
        %v329 = vld [vmem:[%s1 + $0x144] sm:$0xf]
        %v330 = vld [vmem:[%s1 + $0x148] sm:$0xf]
        %v331 = vld [vmem:[%s1 + $0x14c] sm:$0xf]
        %v332 = vld [vmem:[%s1 + $0x150] sm:$0xf]
        %v333 = vld [vmem:[%s1 + $0x154] sm:$0xf]
        %v334 = vld [vmem:[%s1 + $0x158] sm:$0xf]
        %v335 = vld [vmem:[%s1 + $0x15c] sm:$0xf]
        %v336 = vld [vmem:[%s1 + $0x160] sm:$0xf]
        %v337 = vld [vmem:[%s1 + $0x164] sm:$0xf]
        %v338 = vld [vmem:[%s1 + $0x168] sm:$0xf]
        %v339 = vld [vmem:[%s1 + $0x16c] sm:$0xf]
        %v340 = vld [vmem:[%s1 + $0x170] sm:$0xf]
        %v341 = vld [vmem:[%s1 + $0x174] sm:$0xf]
        %v342 = vld [vmem:[%s1 + $0x178] sm:$0xf]
        %v343 = vld [vmem:[%s1 + $0x17c] sm:$0xf]
        %v344 = vld [vmem:[%s1 + $0x180] sm:$0xf]
        %v345 = vld [vmem:[%s1 + $0x184] sm:$0xf]
        %v346 = vld [vmem:[%s1 + $0x188] sm:$0xf]
        %v347 = vld [vmem:[%s1 + $0x18c] sm:$0xf]
        %v348 = vld [vmem:[%s1 + $0x190] sm:$0xf]
        %v349 = vld [vmem:[%s1 + $0x194] sm:$0xf]
        %v350 = vld [vmem:[%s1 + $0x198] sm:$0xf]
        %v351 = vld [vmem:[%s1 + $0x19c] sm:$0xf]
        %v352 = vld [vmem:[%s1 + $0x1a0] sm:$0xf]
        %v353 = vld [vmem:[%s1 + $0x1a4] sm:$0xf]
        %v354 = vld [vmem:[%s1 + $0x1a8] sm:$0xf]
        %v355 = vld [vmem:[%s1 + $0x1ac] sm:$0xf]
        %v356 = vld [vmem:[%s1 + $0x1b0] sm:$0xf]
        %v357 = vld [vmem:[%s1 + $0x1b4] sm:$0xf]
        %v358 = vld [vmem:[%s1 + $0x1b8] sm:$0xf]
        %v359 = vld [vmem:[%s1 + $0x1bc] sm:$0xf]
        %v360 = vld [vmem:[%s1 + $0x1c0] sm:$0xf]
        %v361 = vld [vmem:[%s1 + $0x1c4] sm:$0xf]
        %v362 = vld [vmem:[%s1 + $0x1c8] sm:$0xf]
        %v363 = vld [vmem:[%s1 + $0x1cc] sm:$0xf]
        %v364 = vld [vmem:[%s1 + $0x1d0] sm:$0xf]
        %v365 = vld [vmem:[%s1 + $0x1d4] sm:$0xf]
        %v366 = vld [vmem:[%s1 + $0x1d8] sm:$0xf]
        %v367 = vld [vmem:[%s1 + $0x1dc] sm:$0xf]
        %v368 = vld [vmem:[%s1 + $0x1e0] sm:$0xf]
        %v369 = vld [vmem:[%s1 + $0x1e4] sm:$0xf]
        %v370 = vld [vmem:[%s1 + $0x1e8] sm:$0xf]
        %v371 = vld [vmem:[%s1 + $0x1ec] sm:$0xf]
        %v372 = vld [vmem:[%s1 + $0x1f0] sm:$0xf]
        %v373 = vld [vmem:[%s1 + $0x1f4] sm:$0xf]
        %v374 = vld [vmem:[%s1 + $0x1f8] sm:$0xf]
        %v375 = vld [vmem:[%s1 + $0x1fc] sm:$0xf]
        %v384 = vunpack.c.l.b16 %v240
        %v385 = vunpack.c.h.b16 %v240
        %v386 = vunpack.c.l.b16 %v241
        %v387 = vunpack.c.h.b16 %v241
        %v388 = vunpack.c.l.b16 %v242
        %v389 = vunpack.c.h.b16 %v242
        %v390 = vunpack.c.l.b16 %v243
        %v391 = vunpack.c.h.b16 %v243
        %v392 = vunpack.c.l.b16 %v244
        %v393 = vunpack.c.h.b16 %v244
        %v394 = vunpack.c.l.b16 %v245
        %v395 = vunpack.c.h.b16 %v245
        %v396 = vunpack.c.l.b16 %v246
        %v397 = vunpack.c.h.b16 %v246
        %v398 = vunpack.c.l.b16 %v247
        %v399 = vunpack.c.h.b16 %v247
        %v400 = vpack.c.b16 %v392, %v384
        %v401 = vpack.c.b16 %v393, %v385
        %v402 = vpack.c.b16 %v394, %v386
        %v403 = vpack.c.b16 %v395, %v387
        %v404 = vpack.c.b16 %v396, %v388
        %v405 = vpack.c.b16 %v397, %v389
        %v406 = vpack.c.b16 %v398, %v390
        %v407 = vpack.c.b16 %v399, %v391
        %v544 = vunpack.c.l.b16 %v248
        %v545 = vunpack.c.l.b16 %v249
        %v546 = vunpack.c.l.b16 %v250
        %v547 = vunpack.c.l.b16 %v251
        %v548 = vunpack.c.l.b16 %v252
        %v549 = vunpack.c.l.b16 %v253
        %v550 = vunpack.c.l.b16 %v254
        %v551 = vunpack.c.l.b16 %v255
        %v552 = vunpack.c.l.b16 %v256
        %v553 = vunpack.c.l.b16 %v257
        %v554 = vunpack.c.l.b16 %v258
        %v555 = vunpack.c.l.b16 %v259
        %v556 = vunpack.c.l.b16 %v260
        %v557 = vunpack.c.l.b16 %v261
        %v558 = vunpack.c.l.b16 %v262
        %v559 = vunpack.c.l.b16 %v263
        %v560 = vunpack.c.l.b16 %v264
        %v561 = vunpack.c.l.b16 %v265
        %v562 = vunpack.c.l.b16 %v266
        %v563 = vunpack.c.l.b16 %v267
        %v564 = vunpack.c.l.b16 %v268
        %v565 = vunpack.c.l.b16 %v269
        %v566 = vunpack.c.l.b16 %v270
        %v567 = vunpack.c.l.b16 %v271
        %v568 = vunpack.c.l.b16 %v272
        %v569 = vunpack.c.l.b16 %v273
        %v570 = vunpack.c.l.b16 %v274
        %v571 = vunpack.c.l.b16 %v275
        %v572 = vunpack.c.l.b16 %v276
        %v573 = vunpack.c.l.b16 %v277
        %v574 = vunpack.c.l.b16 %v278
        %v575 = vunpack.c.l.b16 %v279
        %v576 = vunpack.c.l.b16 %v280
        %v577 = vunpack.c.l.b16 %v281
        %v578 = vunpack.c.l.b16 %v282
        %v579 = vunpack.c.l.b16 %v283
        %v580 = vunpack.c.l.b16 %v284
        %v581 = vunpack.c.l.b16 %v285
        %v582 = vunpack.c.l.b16 %v286
        %v583 = vunpack.c.l.b16 %v287
        %v584 = vunpack.c.l.b16 %v288
        %v585 = vunpack.c.l.b16 %v289
        %v586 = vunpack.c.l.b16 %v290
        %v587 = vunpack.c.l.b16 %v291
        %v588 = vunpack.c.l.b16 %v292
        %v589 = vunpack.c.l.b16 %v293
        %v590 = vunpack.c.l.b16 %v294
        %v591 = vunpack.c.l.b16 %v295
        %v592 = vunpack.c.l.b16 %v296
        %v593 = vunpack.c.l.b16 %v297
        %v594 = vunpack.c.l.b16 %v298
        %v595 = vunpack.c.l.b16 %v299
        %v596 = vunpack.c.l.b16 %v300
        %v597 = vunpack.c.l.b16 %v301
        %v598 = vunpack.c.l.b16 %v302
        %v599 = vunpack.c.l.b16 %v303
        %v600 = vunpack.c.l.b16 %v304
        %v601 = vunpack.c.l.b16 %v305
        %v602 = vunpack.c.l.b16 %v306
        %v603 = vunpack.c.l.b16 %v307
        %v604 = vunpack.c.l.b16 %v308
        %v605 = vunpack.c.l.b16 %v309
        %v606 = vunpack.c.l.b16 %v310
        %v607 = vunpack.c.l.b16 %v311
        %v608 = vunpack.c.l.b16 %v312
        %v609 = vunpack.c.l.b16 %v313
        %v610 = vunpack.c.l.b16 %v314
        %v611 = vunpack.c.l.b16 %v315
        %v612 = vunpack.c.l.b16 %v316
        %v613 = vunpack.c.l.b16 %v317
        %v614 = vunpack.c.l.b16 %v318
        %v615 = vunpack.c.l.b16 %v319
        %v616 = vunpack.c.l.b16 %v320
        %v617 = vunpack.c.l.b16 %v321
        %v618 = vunpack.c.l.b16 %v322
        %v619 = vunpack.c.l.b16 %v323
        %v620 = vunpack.c.l.b16 %v324
        %v621 = vunpack.c.l.b16 %v325
        %v622 = vunpack.c.l.b16 %v326
        %v623 = vunpack.c.l.b16 %v327
        %v624 = vunpack.c.l.b16 %v328
        %v625 = vunpack.c.l.b16 %v329
        %v626 = vunpack.c.l.b16 %v330
        %v627 = vunpack.c.l.b16 %v331
        %v628 = vunpack.c.l.b16 %v332
        %v629 = vunpack.c.l.b16 %v333
        %v630 = vunpack.c.l.b16 %v334
        %v631 = vunpack.c.l.b16 %v335
        %v632 = vunpack.c.l.b16 %v336
        %v633 = vunpack.c.l.b16 %v337
        %v634 = vunpack.c.l.b16 %v338
        %v635 = vunpack.c.l.b16 %v339
        %v636 = vunpack.c.l.b16 %v340
        %v637 = vunpack.c.l.b16 %v341
        %v638 = vunpack.c.l.b16 %v342
        %v639 = vunpack.c.l.b16 %v343
        %v640 = vunpack.c.l.b16 %v344
        %v641 = vunpack.c.l.b16 %v345
        %v642 = vunpack.c.l.b16 %v346
        %v643 = vunpack.c.l.b16 %v347
        %v644 = vunpack.c.l.b16 %v348
        %v645 = vunpack.c.l.b16 %v349
        %v646 = vunpack.c.l.b16 %v350
        %v647 = vunpack.c.l.b16 %v351
        %v648 = vunpack.c.l.b16 %v352
        %v649 = vunpack.c.l.b16 %v353
        %v650 = vunpack.c.l.b16 %v354
        %v651 = vunpack.c.l.b16 %v355
        %v652 = vunpack.c.l.b16 %v356
        %v653 = vunpack.c.l.b16 %v357
        %v654 = vunpack.c.l.b16 %v358
        %v655 = vunpack.c.l.b16 %v359
        %v656 = vunpack.c.l.b16 %v360
        %v657 = vunpack.c.l.b16 %v361
        %v658 = vunpack.c.l.b16 %v362
        %v659 = vunpack.c.l.b16 %v363
        %v660 = vunpack.c.l.b16 %v364
        %v661 = vunpack.c.l.b16 %v365
        %v662 = vunpack.c.l.b16 %v366
        %v663 = vunpack.c.l.b16 %v367
        %v664 = vunpack.c.l.b16 %v368
        %v665 = vunpack.c.l.b16 %v369
        %v666 = vunpack.c.l.b16 %v370
        %v667 = vunpack.c.l.b16 %v371
        %v668 = vunpack.c.l.b16 %v372
        %v669 = vunpack.c.l.b16 %v373
        %v670 = vunpack.c.l.b16 %v374
        %v671 = vunpack.c.l.b16 %v375
        %v672 = vpack.c.b16 %v545, %v544
        %v673 = vpack.c.b16 %v547, %v546
        %v674 = vpack.c.b16 %v549, %v548
        %v675 = vpack.c.b16 %v551, %v550
        %v676 = vpack.c.b16 %v553, %v552
        %v677 = vpack.c.b16 %v555, %v554
        %v678 = vpack.c.b16 %v557, %v556
        %v679 = vpack.c.b16 %v559, %v558
        %v680 = vpack.c.b16 %v561, %v560
        %v681 = vpack.c.b16 %v563, %v562
        %v682 = vpack.c.b16 %v565, %v564
        %v683 = vpack.c.b16 %v567, %v566
        %v684 = vpack.c.b16 %v569, %v568
        %v685 = vpack.c.b16 %v571, %v570
        %v686 = vpack.c.b16 %v573, %v572
        %v687 = vpack.c.b16 %v575, %v574
        %v688 = vpack.c.b16 %v577, %v576
        %v689 = vpack.c.b16 %v579, %v578
        %v690 = vpack.c.b16 %v581, %v580
        %v691 = vpack.c.b16 %v583, %v582
        %v692 = vpack.c.b16 %v585, %v584
        %v693 = vpack.c.b16 %v587, %v586
        %v694 = vpack.c.b16 %v589, %v588
        %v695 = vpack.c.b16 %v591, %v590
        %v696 = vpack.c.b16 %v593, %v592
        %v697 = vpack.c.b16 %v595, %v594
        %v698 = vpack.c.b16 %v597, %v596
        %v699 = vpack.c.b16 %v599, %v598
        %v700 = vpack.c.b16 %v601, %v600
        %v701 = vpack.c.b16 %v603, %v602
        %v702 = vpack.c.b16 %v605, %v604
        %v703 = vpack.c.b16 %v607, %v606
        %v704 = vpack.c.b16 %v609, %v608
        %v705 = vpack.c.b16 %v611, %v610
        %v706 = vpack.c.b16 %v613, %v612
        %v707 = vpack.c.b16 %v615, %v614
        %v708 = vpack.c.b16 %v617, %v616
        %v709 = vpack.c.b16 %v619, %v618
        %v710 = vpack.c.b16 %v621, %v620
        %v711 = vpack.c.b16 %v623, %v622
        %v712 = vpack.c.b16 %v625, %v624
        %v713 = vpack.c.b16 %v627, %v626
        %v714 = vpack.c.b16 %v629, %v628
        %v715 = vpack.c.b16 %v631, %v630
        %v716 = vpack.c.b16 %v633, %v632
        %v717 = vpack.c.b16 %v635, %v634
        %v718 = vpack.c.b16 %v637, %v636
        %v719 = vpack.c.b16 %v639, %v638
        %v720 = vpack.c.b16 %v641, %v640
        %v721 = vpack.c.b16 %v643, %v642
        %v722 = vpack.c.b16 %v645, %v644
        %v723 = vpack.c.b16 %v647, %v646
        %v724 = vpack.c.b16 %v649, %v648
        %v725 = vpack.c.b16 %v651, %v650
        %v726 = vpack.c.b16 %v653, %v652
        %v727 = vpack.c.b16 %v655, %v654
        %v728 = vpack.c.b16 %v657, %v656
        %v729 = vpack.c.b16 %v659, %v658
        %v730 = vpack.c.b16 %v661, %v660
        %v731 = vpack.c.b16 %v663, %v662
        %v732 = vpack.c.b16 %v665, %v664
        %v733 = vpack.c.b16 %v667, %v666
        %v734 = vpack.c.b16 %v669, %v668
        %v735 = vpack.c.b16 %v671, %v670
        %800 = vmatprep.subr.bf16.mxu0 0
        %801 = vmatpush1.bf16.msra.mxu0 %v672
        %802 = vmatprep.subr.bf16.mxu0 0
        %803 = vmatpush1.bf16.msra.mxu0 %v673
        %804 = vmatprep.subr.bf16.mxu0 0
        %805 = vmatpush1.bf16.msra.mxu0 %v674
        %806 = vmatprep.subr.bf16.mxu0 0
        %807 = vmatpush1.bf16.msra.mxu0 %v675
        %808 = vmatprep.subr.bf16.mxu0 0
        %809 = vmatpush1.bf16.msra.mxu0 %v676
        %810 = vmatprep.subr.bf16.mxu0 0
        %811 = vmatpush1.bf16.msra.mxu0 %v677
        %812 = vmatprep.subr.bf16.mxu0 0
        %813 = vmatpush1.bf16.msra.mxu0 %v678
        %814 = vmatprep.subr.bf16.mxu0 0
        %815 = vmatpush1.bf16.msra.mxu0 %v679
        %816 = vmatprep.subr.bf16.mxu0 0
        %817 = vmatpush1.bf16.msra.mxu0 %v680
        %818 = vmatprep.subr.bf16.mxu0 0
        %819 = vmatpush1.bf16.msra.mxu0 %v681
        %820 = vmatprep.subr.bf16.mxu0 0
        %821 = vmatpush1.bf16.msra.mxu0 %v682
        %822 = vmatprep.subr.bf16.mxu0 0
        %823 = vmatpush1.bf16.msra.mxu0 %v683
        %824 = vmatprep.subr.bf16.mxu0 0
        %825 = vmatpush1.bf16.msra.mxu0 %v684
        %826 = vmatprep.subr.bf16.mxu0 0
        %827 = vmatpush1.bf16.msra.mxu0 %v685
        %828 = vmatprep.subr.bf16.mxu0 0
        %829 = vmatpush1.bf16.msra.mxu0 %v686
        %830 = vmatprep.subr.bf16.mxu0 0
        %831 = vmatpush1.bf16.msra.mxu0 %v687
        %832 = vmatprep.mubr.bf16.mxu0 %v401
        %833 = vmatmul.mubr.bf16.gmra.mrb[0].mxu0 %v400
        %v834 = vpop.f32.mrb[0].mxu0
        %v835 = vadd.f32 0.0, %v834
        %v836 = vpop.f32.mrb[0].mxu0
        %v837 = vpop.f32.mrb[0].mxu0
        %v838 = vadd.f32 0.0, %v837
        %v839 = vpop.f32.mrb[0].mxu0
        %840 = vdwg.mxu0
        %841 = vmatprep.subr.bf16.mxu0 0
        %842 = vmatpush1.bf16.msra.mxu0 %v688
        %843 = vmatprep.subr.bf16.mxu0 0
        %844 = vmatpush1.bf16.msra.mxu0 %v689
        %845 = vmatprep.subr.bf16.mxu0 0
        %846 = vmatpush1.bf16.msra.mxu0 %v690
        %847 = vmatprep.subr.bf16.mxu0 0
        %848 = vmatpush1.bf16.msra.mxu0 %v691
        %849 = vmatprep.subr.bf16.mxu0 0
        %850 = vmatpush1.bf16.msra.mxu0 %v692
        %851 = vmatprep.subr.bf16.mxu0 0
        %852 = vmatpush1.bf16.msra.mxu0 %v693
        %853 = vmatprep.subr.bf16.mxu0 0
        %854 = vmatpush1.bf16.msra.mxu0 %v694
        %855 = vmatprep.subr.bf16.mxu0 0
        %856 = vmatpush1.bf16.msra.mxu0 %v695
        %857 = vmatprep.subr.bf16.mxu0 0
        %858 = vmatpush1.bf16.msra.mxu0 %v696
        %859 = vmatprep.subr.bf16.mxu0 0
        %860 = vmatpush1.bf16.msra.mxu0 %v697
        %861 = vmatprep.subr.bf16.mxu0 0
        %862 = vmatpush1.bf16.msra.mxu0 %v698
        %863 = vmatprep.subr.bf16.mxu0 0
        %864 = vmatpush1.bf16.msra.mxu0 %v699
        %865 = vmatprep.subr.bf16.mxu0 0
        %866 = vmatpush1.bf16.msra.mxu0 %v700
        %867 = vmatprep.subr.bf16.mxu0 0
        %868 = vmatpush1.bf16.msra.mxu0 %v701
        %869 = vmatprep.subr.bf16.mxu0 0
        %870 = vmatpush1.bf16.msra.mxu0 %v702
        %871 = vmatprep.subr.bf16.mxu0 0
        %872 = vmatpush1.bf16.msra.mxu0 %v703
        %873 = vmatprep.mubr.bf16.mxu0 %v403
        %874 = vmatmul.mubr.bf16.gmra.mrb[0].mxu0 %v402
        %v875 = vpop.f32.mrb[0].mxu0
        %v876 = vadd.f32 %v835, %v875
        %v877 = vpop.f32.mrb[0].mxu0
        %v878 = vpop.f32.mrb[0].mxu0
        %v879 = vadd.f32 %v838, %v878
        %v880 = vpop.f32.mrb[0].mxu0
        %881 = vdwg.mxu0
        %882 = vmatprep.subr.bf16.mxu0 0
        %883 = vmatpush1.bf16.msra.mxu0 %v704
        %884 = vmatprep.subr.bf16.mxu0 0
        %885 = vmatpush1.bf16.msra.mxu0 %v705
        %886 = vmatprep.subr.bf16.mxu0 0
        %887 = vmatpush1.bf16.msra.mxu0 %v706
        %888 = vmatprep.subr.bf16.mxu0 0
        %889 = vmatpush1.bf16.msra.mxu0 %v707
        %890 = vmatprep.subr.bf16.mxu0 0
        %891 = vmatpush1.bf16.msra.mxu0 %v708
        %892 = vmatprep.subr.bf16.mxu0 0
        %893 = vmatpush1.bf16.msra.mxu0 %v709
        %894 = vmatprep.subr.bf16.mxu0 0
        %895 = vmatpush1.bf16.msra.mxu0 %v710
        %896 = vmatprep.subr.bf16.mxu0 0
        %897 = vmatpush1.bf16.msra.mxu0 %v711
        %898 = vmatprep.subr.bf16.mxu0 0
        %899 = vmatpush1.bf16.msra.mxu0 %v712
        %900 = vmatprep.subr.bf16.mxu0 0
        %901 = vmatpush1.bf16.msra.mxu0 %v713
        %902 = vmatprep.subr.bf16.mxu0 0
        %903 = vmatpush1.bf16.msra.mxu0 %v714
        %904 = vmatprep.subr.bf16.mxu0 0
        %905 = vmatpush1.bf16.msra.mxu0 %v715
        %906 = vmatprep.subr.bf16.mxu0 0
        %907 = vmatpush1.bf16.msra.mxu0 %v716
        %908 = vmatprep.subr.bf16.mxu0 0
        %909 = vmatpush1.bf16.msra.mxu0 %v717
        %910 = vmatprep.subr.bf16.mxu0 0
        %911 = vmatpush1.bf16.msra.mxu0 %v718
        %912 = vmatprep.subr.bf16.mxu0 0
        %913 = vmatpush1.bf16.msra.mxu0 %v719
        %914 = vmatprep.mubr.bf16.mxu0 %v405
        %915 = vmatmul.mubr.bf16.gmra.mrb[0].mxu0 %v404
        %v916 = vpop.f32.mrb[0].mxu0
        %v917 = vadd.f32 %v876, %v916
        %v918 = vpop.f32.mrb[0].mxu0
        %v919 = vpop.f32.mrb[0].mxu0
        %v920 = vadd.f32 %v879, %v919
        %v921 = vpop.f32.mrb[0].mxu0
        %922 = vdwg.mxu0
        %923 = vmatprep.subr.bf16.mxu0 0
        %924 = vmatpush1.bf16.msra.mxu0 %v720
        %925 = vmatprep.subr.bf16.mxu0 0
        %926 = vmatpush1.bf16.msra.mxu0 %v721
        %927 = vmatprep.subr.bf16.mxu0 0
        %928 = vmatpush1.bf16.msra.mxu0 %v722
        %929 = vmatprep.subr.bf16.mxu0 0
        %930 = vmatpush1.bf16.msra.mxu0 %v723
        %931 = vmatprep.subr.bf16.mxu0 0
        %932 = vmatpush1.bf16.msra.mxu0 %v724
        %933 = vmatprep.subr.bf16.mxu0 0
        %934 = vmatpush1.bf16.msra.mxu0 %v725
        %935 = vmatprep.subr.bf16.mxu0 0
        %936 = vmatpush1.bf16.msra.mxu0 %v726
        %937 = vmatprep.subr.bf16.mxu0 0
        %938 = vmatpush1.bf16.msra.mxu0 %v727
        %939 = vmatprep.subr.bf16.mxu0 0
        %940 = vmatpush1.bf16.msra.mxu0 %v728
        %941 = vmatprep.subr.bf16.mxu0 0
        %942 = vmatpush1.bf16.msra.mxu0 %v729
        %943 = vmatprep.subr.bf16.mxu0 0
        %944 = vmatpush1.bf16.msra.mxu0 %v730
        %945 = vmatprep.subr.bf16.mxu0 0
        %946 = vmatpush1.bf16.msra.mxu0 %v731
        %947 = vmatprep.subr.bf16.mxu0 0
        %948 = vmatpush1.bf16.msra.mxu0 %v732
        %949 = vmatprep.subr.bf16.mxu0 0
        %950 = vmatpush1.bf16.msra.mxu0 %v733
        %951 = vmatprep.subr.bf16.mxu0 0
        %952 = vmatpush1.bf16.msra.mxu0 %v734
        %953 = vmatprep.subr.bf16.mxu0 0
        %954 = vmatpush1.bf16.msra.mxu0 %v735
        %955 = vmatprep.mubr.bf16.mxu0 %v407
        %956 = vmatmul.mubr.bf16.gmra.mrb[0].mxu0 %v406
        %v957 = vpop.f32.mrb[0].mxu0
        %v958 = vadd.f32 %v917, %v957
        %v959 = vpop.f32.mrb[0].mxu0
        %v960 = vpop.f32.mrb[0].mxu0
        %v961 = vadd.f32 %v920, %v960
        %v962 = vpop.f32.mrb[0].mxu0
        %963 = vdwg.mxu0
        %s964 = smul.u32 %s20, 16
        %s965 = scalar_lea.vmem [#allocation2], %s964
        %966 = vst [vmem:[%s965] sm:$0xff] %v958
        %967 = vst [vmem:[%s965 + $0x8] sm:$0xff] %v961
      $region40: #{_lambda_.9} parent=35 // pred_fallthru
        _
      %p968 = scmp.eq.s32.totalorder %s19, 1
      // Predicated region
      $region41: #{_lambda_.9} parent=35 // pred_check
        %p969 = pneg %p968
      $region42: #{_lambda_.9} parent=35 // pred_check_branch
        %971 = sbr.rel (%p969) target = $region44
      $region43: #{_lambda_.9} parent=35 // pred_region
        %s972 = smul.u32 %s20, 16
        %s973 = scalar_lea.vmem [#allocation2], %s972
        %v974 = vld [vmem:[%s973] sm:$0xff]
        %v975 = vld [vmem:[%s973 + $0x8] sm:$0xff]
        %v976 = vsub.f32 0.0, %v974
        %v977 = vsub.f32 0.0, %v975
        %v978 = vmul.f32 %v976, 1.442695
        %v979 = vpow.pop %v978
        %v980 = vmul.f32 %v977, 1.442695
        %v981 = vpow.pop %v980
        %v982 = vadd.f32 %v979, 1.0
        %v983 = vadd.f32 %v981, 1.0
        %v984 = vrcp.pop %v982
        %v985 = vmul.f32 1.0, %v984
        %v986 = vrcp.pop %v983
        %v987 = vmul.f32 1.0, %v986
        %988 = vst [vmem:[%s232] sm:$0xff] %v985
        %989 = vst [vmem:[%s232 + $0x8] sm:$0xff] %v987
      $region44: #{_lambda_.9} parent=35 // pred_fallthru
        _
      %s990 = smul.u32 %s19, %s20
      %s991 = smul.u32 2, %s990
      %p992 = scmp.lt.s32.totalorder %s991, 1
      %s993 = scalar_select %p992, %s991, 1
      %s994 = smul.addr %s993, 8
      %s995 = scalar_lea.vmem %s4, %s994
      // Predicated region
      $region45: #{_lambda_.9} parent=35 // pred_check
        %p996 = pneg %p140
      $region46: #{_lambda_.9} parent=35 // pred_check_branch
        %998 = sbr.rel (%p996) target = $region48
      $region47: #{_lambda_.9} parent=35 // pred_region
        %s999 = smul.u32 %s19, %s20
        %s1000 = smul.u32 2, %s999
      $region48: #{_lambda_.9} parent=35 // pred_fallthru
        _
    $region36: #{_lambda_.9} parent=5 // pred_fallthru
      _
    %p1001 = scmp.le.s32.totalorder 2, %s10
    // Predicated region
    $region49: #{_lambda_.9} parent=5 // pred_check
      %p1002 = pneg %p1001
    $region50: #{_lambda_.9} parent=5 // pred_check_branch
      %1004 = sbr.rel (%p1002) target = $region52
    $region51: #{_lambda_.9} parent=5 // pred_region
      %s1005 = ssub.s32 %s10, 2
      // Predicated region
      $region53: #{_lambda_.9} parent=51 // pred_check
        %p1006 = pneg %p146
      $region54: #{_lambda_.9} parent=51 // pred_check_branch
        %1008 = sbr.rel (%p1006) target = $region56
      $region55: #{_lambda_.9} parent=51 // pred_region
        %s1009 = smul.u32 %s21, %s22
        %s1010 = smul.u32 2, %s1009
        %p1011 = scmp.lt.s32.totalorder %s1010, 1
        %s1012 = scalar_select %p1011, %s1010, 1
        %s1013 = smul.addr %s1012, 8
        %s1014 = scalar_lea.vmem %s4, %s1013
      $region56: #{_lambda_.9} parent=51 // pred_fallthru
        _
    $region52: #{_lambda_.9} parent=5 // pred_fallthru
      _
  $region6: #{_lambda_.9} parent=0 // loop_footer
    %s14 = sadd.s32 1, %s10
  $region7: #{_lambda_.9} parent=0 // loop_footer_branch
    %9 = sbr.rel target = $region3
  $region8: #{_lambda_.9} parent=0 // loop_exit
    _

</llo_original>
